<compile_context>
chip_gen: v7x
topology: tpu7x:2x2x1
jax: 0.10.0
libtpu: 0.0.40
codegen_flags: <defaults>
</compile_context>

<pallas_src>
import functools

import jax
import jax.numpy as jnp
import numpy as np
from jax import lax
from jax.experimental import pallas as pl
from jax.experimental.pallas import tpu as pltpu

N_FILTERS = 64
N_HIDDEN = 128
FILTER_H = 5
SEQ_LEN = 8
H_IN = 24          # 24 - 4*4 = 8  -> matches view(-1, 8, 64*3)
W_IN = 3           # 64 * 3 = 192 features per timestep
FEAT = N_FILTERS * W_IN


def _gates(g, c):
    """PyTorch LSTM gate order i, f, g, o; all math in f32."""
    H = N_HIDDEN
    i = jax.nn.sigmoid(g[:, 0:H])
    f = jax.nn.sigmoid(g[:, H:2 * H])
    gg = jnp.tanh(g[:, 2 * H:3 * H])
    o = jax.nn.sigmoid(g[:, 3 * H:4 * H])
    c_new = f * c + i * gg
    h_new = o * jnp.tanh(c_new)
    return h_new, c_new


# --------------------------- fused conv + LSTM kernel -------------------------
def _har_kernel(n_pad, x_ref, w1_ref, b1_ref, w2_ref, b2_ref, w3_ref, b3_ref,
                w4_ref, b4_ref, w1ih_ref, whh1_ref, bl1_ref,
                wih2_ref, whh2_ref, bl2_ref, o_ref, h1_ref):
    wn = W_IN * n_pad                       # rows per h-slice, multiple of 8

    # ---- conv1: C_in == 1 -> broadcast multiply on VPU (f32) ----
    x = x_ref[...]                          # (H_IN*wn, 1)
    h_o = H_IN - (FILTER_H - 1)             # 20
    acc = x[0:h_o * wn, :] * w1_ref[0:1, :]
    for k in range(1, FILTER_H):
        acc = acc + x[k * wn:(k + h_o) * wn, :] * w1_ref[k:k + 1, :]
    a = jnp.maximum(acc + b1_ref[...], 0.0)

    # ---- conv2..4: 5 shifted, sublane-aligned bf16 matmuls (f32 accumulate) --
    def conv_layer(a_in, w_ref, b_ref, h_out):
        a_bf = a_in.astype(jnp.bfloat16)
        acc = jnp.dot(a_bf[0:h_out * wn, :], w_ref[0],
                      preferred_element_type=jnp.float32)
        for k in range(1, FILTER_H):
            acc = acc + jnp.dot(a_bf[k * wn:(k + h_out) * wn, :], w_ref[k],
                                preferred_element_type=jnp.float32)
        return jnp.maximum(acc + b_ref[...], 0.0)

    a = conv_layer(a, w2_ref, b2_ref, 16)
    a = conv_layer(a, w3_ref, b3_ref, 12)
    a = conv_layer(a, w4_ref, b4_ref, SEQ_LEN)      # (8*wn, 64), rows (t, w, n)

    # ---- LSTM layer 1: hoisted input projection (bulk matmuls) ----
    # Feature f = c*W_IN + w of the PyTorch view is handled by splitting the
    # matmul over w, so no data transpose is needed.
    a4 = a.reshape(SEQ_LEN, wn, N_FILTERS).astype(jnp.bfloat16)
    z1 = None
    for w in range(W_IN):
        aw = a4[:, w * n_pad:(w + 1) * n_pad, :].reshape(
            SEQ_LEN * n_pad, N_FILTERS)                     # rows (t, n)
        d = jnp.dot(aw, w1ih_ref[w], preferred_element_type=jnp.float32)
        z1 = d if z1 is None else z1 + d
    z1 = z1 + bl1_ref[...]                                  # (8*n_pad, 512)

    # serial recurrence: only the (n_pad,128)x(128,512) hidden matmul per step
    whh1 = whh1_ref[...]
    h = jnp.zeros((n_pad, N_HIDDEN), jnp.float32)
    c = jnp.zeros((n_pad, N_HIDDEN), jnp.float32)
    for t in range(SEQ_LEN):
        g = z1[t * n_pad:(t + 1) * n_pad, :] + jnp.dot(
            h.astype(jnp.bfloat16), whh1, preferred_element_type=jnp.float32)
        h, c = _gates(g, c)
        h1_ref[t * n_pad:(t + 1) * n_pad, :] = h            # stage in VMEM

    # ---- LSTM layer 2: hoisted input projection from h1 scratch ----
    z2 = jnp.dot(h1_ref[...].astype(jnp.bfloat16), wih2_ref[...],
                 preferred_element_type=jnp.float32) + bl2_ref[...]
    whh2 = whh2_ref[...]
    h = jnp.zeros((n_pad, N_HIDDEN), jnp.float32)
    c = jnp.zeros((n_pad, N_HIDDEN), jnp.float32)
    for t in range(SEQ_LEN):
        g = z2[t * n_pad:(t + 1) * n_pad, :] + jnp.dot(
            h.astype(jnp.bfloat16), whh2, preferred_element_type=jnp.float32)
        h, c = _gates(g, c)
        o_ref[:, t * N_HIDDEN:(t + 1) * N_HIDDEN] = h       # 128-lane aligned


# ----------------------------- weight preparation ------------------------------
def prepare_params(p):
    """One-time layout transforms: transposes, bias fusion, bf16 cast."""
    def conv_w(w):   # (Co, Ci, 5, 1) -> (5, Ci, Co) bf16
        return jnp.transpose(w[:, :, :, 0], (2, 1, 0)).astype(jnp.bfloat16)

    # wih1.T has shape (192, 512) with row f = c*W_IN + w; split by w.
    w1ih = jnp.transpose(
        p['lstm1_wih'].T.reshape(N_FILTERS, W_IN, 4 * N_HIDDEN),
        (1, 0, 2)).astype(jnp.bfloat16)                     # (3, 64, 512)

    return {
        'w1': jnp.transpose(p['conv1_w'][:, 0, :, 0], (1, 0)),      # (5, 64) f32
        'b1': p['conv1_b'].reshape(1, N_FILTERS),
        'w2': conv_w(p['conv2_w']), 'b2': p['conv2_b'].reshape(1, N_FILTERS),
        'w3': conv_w(p['conv3_w']), 'b3': p['conv3_b'].reshape(1, N_FILTERS),
        'w4': conv_w(p['conv4_w']), 'b4': p['conv4_b'].reshape(1, N_FILTERS),
        'w1ih': w1ih,
        'whh1': p['lstm1_whh'].T.astype(jnp.bfloat16),               # (128, 512)
        'bl1': (p['lstm1_bih'] + p['lstm1_bhh']).reshape(1, 4 * N_HIDDEN),
        'wih2': p['lstm2_wih'].T.astype(jnp.bfloat16),
        'whh2': p['lstm2_whh'].T.astype(jnp.bfloat16),
        'bl2': (p['lstm2_bih'] + p['lstm2_bhh']).reshape(1, 4 * N_HIDDEN),
    }


# ----------------------------- forward wrapper ---------------------------------
def har_forward(x, kp):
    """x: (N, 1, H_IN, W_IN) NCHW f32 -> (N, SEQ_LEN * N_HIDDEN)."""
    n = x.shape[0]
    n_pad = max(8, ((n + 7) // 8) * 8)          # sublane-aligned batch
    wn = W_IN * n_pad

    # (N,1,H,W) -> zero-pad batch -> (H, W, N_pad, 1) -> (H*W*N_pad, 1)
    x_pad = jnp.pad(x, ((0, n_pad - n), (0, 0), (0, 0), (0, 0)))
    xk = jnp.transpose(x_pad, (2, 3, 0, 1)).reshape(H_IN * wn, 1)

    def vmem():
        return pl.BlockSpec(memory_space=pltpu.MemorySpace.VMEM)

    args = (xk, kp['w1'], kp['b1'], kp['w2'], kp['b2'], kp['w3'], kp['b3'],
            kp['w4'], kp['b4'], kp['w1ih'], kp['whh1'], kp['bl1'],
            kp['wih2'], kp['whh2'], kp['bl2'])

    # Dropout layers: eval-mode identity.
    # TODO(synk): training-mode dropout (random masking) not implemented.
    # TODO(synk): for large N, add a batch grid (dimension_semantics="parallel")
    #             to pipeline DMA and shard across v7x's 2 TensorCores.
    out = pl.pallas_call(
        functools.partial(_har_kernel, n_pad),
        out_shape=jax.ShapeDtypeStruct((n_pad, SEQ_LEN * N_HIDDEN), jnp.float32),
        in_specs=[vmem() for _ in args],
        out_specs=vmem(),
        scratch_shapes=[pltpu.VMEM((SEQ_LEN * n_pad, N_HIDDEN), jnp.float32)],
    )(*args)
    return out[:n]


# ----------------------------- params & reference ------------------------------
def init_params(key):
    ks = jax.random.split(key, 16)

    def u(k, shape, scale):
        return jax.random.uniform(k, shape, jnp.float32, -1.0, 1.0) * scale

    return {
        'conv1_w': u(ks[0], (N_FILTERS, 1, FILTER_H, 1), 0.2),
        'conv1_b': u(ks[1], (N_FILTERS,), 0.2),
        'conv2_w': u(ks[2], (N_FILTERS, N_FILTERS, FILTER_H, 1), 0.05),
        'conv2_b': u(ks[3], (N_FILTERS,), 0.05),
        'conv3_w': u(ks[4], (N_FILTERS, N_FILTERS, FILTER_H, 1), 0.05),
        'conv3_b': u(ks[5], (N_FILTERS,), 0.05),
        'conv4_w': u(ks[6], (N_FILTERS, N_FILTERS, FILTER_H, 1), 0.05),
        'conv4_b': u(ks[7], (N_FILTERS,), 0.05),
        'lstm1_wih': u(ks[8], (4 * N_HIDDEN, FEAT), 0.08),
        'lstm1_whh': u(ks[9], (4 * N_HIDDEN, N_HIDDEN), 0.08),
        'lstm1_bih': u(ks[10], (4 * N_HIDDEN,), 0.08),
        'lstm1_bhh': u(ks[11], (4 * N_HIDDEN,), 0.08),
        'lstm2_wih': u(ks[12], (4 * N_HIDDEN, N_HIDDEN), 0.08),
        'lstm2_whh': u(ks[13], (4 * N_HIDDEN, N_HIDDEN), 0.08),
        'lstm2_bih': u(ks[14], (4 * N_HIDDEN,), 0.08),
        'lstm2_bhh': u(ks[15], (4 * N_HIDDEN,), 0.08),
    }


def reference_forward(x, p):
    a = x
    for i in range(1, 5):
        w, b = p[f'conv{i}_w'], p[f'conv{i}_b']
        a = lax.conv_general_dilated(a, w, (1, 1), 'VALID',
                                     dimension_numbers=('NCHW', 'OIHW', 'NCHW'))
        a = jnp.maximum(a + b[None, :, None, None], 0.0)
    a = jnp.transpose(a, (0, 2, 1, 3)).reshape(-1, SEQ_LEN, FEAT)

    def lstm(xs, wih, whh, bih, bhh):
        nb = xs.shape[0]
        H = N_HIDDEN
        h = jnp.zeros((nb, H), jnp.float32)
        c = jnp.zeros((nb, H), jnp.float32)
        outs = []
        for t in range(xs.shape[1]):
            g = xs[:, t, :] @ wih.T + h @ whh.T + bih + bhh
            i = jax.nn.sigmoid(g[:, :H])
            f = jax.nn.sigmoid(g[:, H:2 * H])
            gg = jnp.tanh(g[:, 2 * H:3 * H])
            o = jax.nn.sigmoid(g[:, 3 * H:])
            c = f * c + i * gg
            h = o * jnp.tanh(c)
            outs.append(h)
        return jnp.stack(outs, 1)

    a = lstm(a, p['lstm1_wih'], p['lstm1_whh'], p['lstm1_bih'], p['lstm1_bhh'])
    a = lstm(a, p['lstm2_wih'], p['lstm2_whh'], p['lstm2_bih'], p['lstm2_bhh'])
    return a.reshape(-1, SEQ_LEN * N_HIDDEN)


if __name__ == "__main__":
    key = jax.random.PRNGKey(0)
    pkey, xkey = jax.random.split(key)
    params = init_params(pkey)
    kparams = prepare_params(params)          # one-time layout transforms

    N = 2
    x = jax.random.normal(xkey, (N, 1, H_IN, W_IN), jnp.float32)

    fwd = jax.jit(har_forward)
    out = jax.block_until_ready(fwd(x, kparams))
    ref = jax.block_until_ready(reference_forward(x, params))

    assert out.shape == (N, SEQ_LEN * N_HIDDEN)
    np.testing.assert_allclose(np.asarray(out), np.asarray(ref),
                               rtol=2e-2, atol=2e-2)
    print("KERNEL_OK")
</pallas_src>

<mosaic_0001>
module attributes {stable_mosaic.version = 11 : i64} {
  func.func @_har_kernel(%arg0: memref<576x1xf32, #tpu.memory_space<vmem>>, %arg1: memref<5x64xf32, #tpu.memory_space<vmem>>, %arg2: memref<1x64xf32, #tpu.memory_space<vmem>>, %arg3: memref<5x64x64xbf16, #tpu.memory_space<vmem>>, %arg4: memref<1x64xf32, #tpu.memory_space<vmem>>, %arg5: memref<5x64x64xbf16, #tpu.memory_space<vmem>>, %arg6: memref<1x64xf32, #tpu.memory_space<vmem>>, %arg7: memref<5x64x64xbf16, #tpu.memory_space<vmem>>, %arg8: memref<1x64xf32, #tpu.memory_space<vmem>>, %arg9: memref<3x64x512xbf16, #tpu.memory_space<vmem>>, %arg10: memref<128x512xbf16, #tpu.memory_space<vmem>>, %arg11: memref<1x512xf32, #tpu.memory_space<vmem>>, %arg12: memref<128x512xbf16, #tpu.memory_space<vmem>>, %arg13: memref<128x512xbf16, #tpu.memory_space<vmem>>, %arg14: memref<1x512xf32, #tpu.memory_space<vmem>>, %arg15: memref<8x1024xf32, #tpu.memory_space<vmem>>, %arg16: memref<64x128xf32, #tpu.memory_space<vmem>>) attributes {dimension_semantics = [], scalar_prefetch = 0 : i64, scratch_operands = 1 : i64, tpu.core_type = #tpu.core_type<tc>} {
    %c0 = arith.constant 0 : index
    %c0_0 = arith.constant 0 : index
    %0 = vector.load %arg0[%c0, %c0_0] : memref<576x1xf32, #tpu.memory_space<vmem>>, vector<576x1xf32>
    %1 = vector.extract_strided_slice %0 {offsets = [0, 0], sizes = [480, 1], strides = [1, 1]} : vector<576x1xf32> to vector<480x1xf32>
    %c0_1 = arith.constant 0 : index
    %c0_2 = arith.constant 0 : index
    %2 = vector.load %arg1[%c0_1, %c0_2] : memref<5x64xf32, #tpu.memory_space<vmem>>, vector<1x64xf32>
    %3 = vector.broadcast %1 : vector<480x1xf32> to vector<480x64xf32>
    %4 = vector.broadcast %2 : vector<1x64xf32> to vector<480x64xf32>
    %5 = arith.mulf %3, %4 : vector<480x64xf32>
    %6 = vector.extract_strided_slice %0 {offsets = [24, 0], sizes = [480, 1], strides = [1, 1]} : vector<576x1xf32> to vector<480x1xf32>
    %c1 = arith.constant 1 : index
    %c0_3 = arith.constant 0 : index
    %7 = vector.load %arg1[%c1, %c0_3] : memref<5x64xf32, #tpu.memory_space<vmem>>, vector<1x64xf32>
    %8 = vector.broadcast %6 : vector<480x1xf32> to vector<480x64xf32>
    %9 = vector.broadcast %7 : vector<1x64xf32> to vector<480x64xf32>
    %10 = arith.mulf %8, %9 : vector<480x64xf32>
    %11 = arith.addf %5, %10 : vector<480x64xf32>
    %12 = vector.extract_strided_slice %0 {offsets = [48, 0], sizes = [480, 1], strides = [1, 1]} : vector<576x1xf32> to vector<480x1xf32>
    %c2 = arith.constant 2 : index
    %c0_4 = arith.constant 0 : index
    %13 = vector.load %arg1[%c2, %c0_4] : memref<5x64xf32, #tpu.memory_space<vmem>>, vector<1x64xf32>
    %14 = vector.broadcast %12 : vector<480x1xf32> to vector<480x64xf32>
    %15 = vector.broadcast %13 : vector<1x64xf32> to vector<480x64xf32>
    %16 = arith.mulf %14, %15 : vector<480x64xf32>
    %17 = arith.addf %11, %16 : vector<480x64xf32>
    %18 = vector.extract_strided_slice %0 {offsets = [72, 0], sizes = [480, 1], strides = [1, 1]} : vector<576x1xf32> to vector<480x1xf32>
    %c3 = arith.constant 3 : index
    %c0_5 = arith.constant 0 : index
    %19 = vector.load %arg1[%c3, %c0_5] : memref<5x64xf32, #tpu.memory_space<vmem>>, vector<1x64xf32>
    %20 = vector.broadcast %18 : vector<480x1xf32> to vector<480x64xf32>
    %21 = vector.broadcast %19 : vector<1x64xf32> to vector<480x64xf32>
    %22 = arith.mulf %20, %21 : vector<480x64xf32>
    %23 = arith.addf %17, %22 : vector<480x64xf32>
    %24 = vector.extract_strided_slice %0 {offsets = [96, 0], sizes = [480, 1], strides = [1, 1]} : vector<576x1xf32> to vector<480x1xf32>
    %c4 = arith.constant 4 : index
    %c0_6 = arith.constant 0 : index
    %25 = vector.load %arg1[%c4, %c0_6] : memref<5x64xf32, #tpu.memory_space<vmem>>, vector<1x64xf32>
    %26 = vector.broadcast %24 : vector<480x1xf32> to vector<480x64xf32>
    %27 = vector.broadcast %25 : vector<1x64xf32> to vector<480x64xf32>
    %28 = arith.mulf %26, %27 : vector<480x64xf32>
    %29 = arith.addf %23, %28 : vector<480x64xf32>
    %c0_7 = arith.constant 0 : index
    %c0_8 = arith.constant 0 : index
    %30 = vector.load %arg2[%c0_7, %c0_8] : memref<1x64xf32, #tpu.memory_space<vmem>>, vector<1x64xf32>
    %31 = vector.broadcast %30 : vector<1x64xf32> to vector<480x64xf32>
    %32 = arith.addf %29, %31 : vector<480x64xf32>
    %cst = arith.constant 0.000000e+00 : f32
    %33 = vector.broadcast %cst : f32 to vector<480x64xf32>
    %34 = arith.maximumf %32, %33 : vector<480x64xf32>
    %35 = arith.truncf %34 : vector<480x64xf32> to vector<480x64xbf16>
    %36 = vector.extract_strided_slice %35 {offsets = [0, 0], sizes = [384, 64], strides = [1, 1]} : vector<480x64xbf16> to vector<384x64xbf16>
    %c0_9 = arith.constant 0 : index
    %c0_10 = arith.constant 0 : index
    %c0_11 = arith.constant 0 : index
    %37 = vector.load %arg3[%c0_9, %c0_10, %c0_11] : memref<5x64x64xbf16, #tpu.memory_space<vmem>>, vector<1x64x64xbf16>
    %38 = vector.shape_cast %37 : vector<1x64x64xbf16> to vector<64x64xbf16>
    %cst_12 = arith.constant dense<0.000000e+00> : vector<384x64xf32>
    %39 = tpu.matmul %36, %38, %cst_12 {dimension_numbers = #tpu.dot_dimension_numbers<[1], [0], [0], [1], [0, 0, 1, 1], [], []>} : vector<384x64xbf16>, vector<64x64xbf16>, vector<384x64xf32> -> vector<384x64xf32>
    %40 = vector.extract_strided_slice %35 {offsets = [24, 0], sizes = [384, 64], strides = [1, 1]} : vector<480x64xbf16> to vector<384x64xbf16>
    %c1_13 = arith.constant 1 : index
    %c0_14 = arith.constant 0 : index
    %c0_15 = arith.constant 0 : index
    %41 = vector.load %arg3[%c1_13, %c0_14, %c0_15] : memref<5x64x64xbf16, #tpu.memory_space<vmem>>, vector<1x64x64xbf16>
    %42 = vector.shape_cast %41 : vector<1x64x64xbf16> to vector<64x64xbf16>
    %cst_16 = arith.constant dense<0.000000e+00> : vector<384x64xf32>
    %43 = tpu.matmul %40, %42, %cst_16 {dimension_numbers = #tpu.dot_dimension_numbers<[1], [0], [0], [1], [0, 0, 1, 1], [], []>} : vector<384x64xbf16>, vector<64x64xbf16>, vector<384x64xf32> -> vector<384x64xf32>
    %44 = arith.addf %39, %43 : vector<384x64xf32>
    %45 = vector.extract_strided_slice %35 {offsets = [48, 0], sizes = [384, 64], strides = [1, 1]} : vector<480x64xbf16> to vector<384x64xbf16>
    %c2_17 = arith.constant 2 : index
    %c0_18 = arith.constant 0 : index
    %c0_19 = arith.constant 0 : index
    %46 = vector.load %arg3[%c2_17, %c0_18, %c0_19] : memref<5x64x64xbf16, #tpu.memory_space<vmem>>, vector<1x64x64xbf16>
    %47 = vector.shape_cast %46 : vector<1x64x64xbf16> to vector<64x64xbf16>
    %cst_20 = arith.constant dense<0.000000e+00> : vector<384x64xf32>
    %48 = tpu.matmul %45, %47, %cst_20 {dimension_numbers = #tpu.dot_dimension_numbers<[1], [0], [0], [1], [0, 0, 1, 1], [], []>} : vector<384x64xbf16>, vector<64x64xbf16>, vector<384x64xf32> -> vector<384x64xf32>
    %49 = arith.addf %44, %48 : vector<384x64xf32>
    %50 = vector.extract_strided_slice %35 {offsets = [72, 0], sizes = [384, 64], strides = [1, 1]} : vector<480x64xbf16> to vector<384x64xbf16>
    %c3_21 = arith.constant 3 : index
    %c0_22 = arith.constant 0 : index
    %c0_23 = arith.constant 0 : index
    %51 = vector.load %arg3[%c3_21, %c0_22, %c0_23] : memref<5x64x64xbf16, #tpu.memory_space<vmem>>, vector<1x64x64xbf16>
    %52 = vector.shape_cast %51 : vector<1x64x64xbf16> to vector<64x64xbf16>
    %cst_24 = arith.constant dense<0.000000e+00> : vector<384x64xf32>
    %53 = tpu.matmul %50, %52, %cst_24 {dimension_numbers = #tpu.dot_dimension_numbers<[1], [0], [0], [1], [0, 0, 1, 1], [], []>} : vector<384x64xbf16>, vector<64x64xbf16>, vector<384x64xf32> -> vector<384x64xf32>
    %54 = arith.addf %49, %53 : vector<384x64xf32>
    %55 = vector.extract_strided_slice %35 {offsets = [96, 0], sizes = [384, 64], strides = [1, 1]} : vector<480x64xbf16> to vector<384x64xbf16>
    %c4_25 = arith.constant 4 : index
    %c0_26 = arith.constant 0 : index
    %c0_27 = arith.constant 0 : index
    %56 = vector.load %arg3[%c4_25, %c0_26, %c0_27] : memref<5x64x64xbf16, #tpu.memory_space<vmem>>, vector<1x64x64xbf16>
    %57 = vector.shape_cast %56 : vector<1x64x64xbf16> to vector<64x64xbf16>
    %cst_28 = arith.constant dense<0.000000e+00> : vector<384x64xf32>
    %58 = tpu.matmul %55, %57, %cst_28 {dimension_numbers = #tpu.dot_dimension_numbers<[1], [0], [0], [1], [0, 0, 1, 1], [], []>} : vector<384x64xbf16>, vector<64x64xbf16>, vector<384x64xf32> -> vector<384x64xf32>
    %59 = arith.addf %54, %58 : vector<384x64xf32>
    %c0_29 = arith.constant 0 : index
    %c0_30 = arith.constant 0 : index
    %60 = vector.load %arg4[%c0_29, %c0_30] : memref<1x64xf32, #tpu.memory_space<vmem>>, vector<1x64xf32>
    %61 = vector.broadcast %60 : vector<1x64xf32> to vector<384x64xf32>
    %62 = arith.addf %59, %61 : vector<384x64xf32>
    %cst_31 = arith.constant 0.000000e+00 : f32
    %63 = vector.broadcast %cst_31 : f32 to vector<384x64xf32>
    %64 = arith.maximumf %62, %63 : vector<384x64xf32>
    %65 = arith.truncf %64 : vector<384x64xf32> to vector<384x64xbf16>
    %66 = vector.extract_strided_slice %65 {offsets = [0, 0], sizes = [288, 64], strides = [1, 1]} : vector<384x64xbf16> to vector<288x64xbf16>
    %c0_32 = arith.constant 0 : index
    %c0_33 = arith.constant 0 : index
    %c0_34 = arith.constant 0 : index
    %67 = vector.load %arg5[%c0_32, %c0_33, %c0_34] : memref<5x64x64xbf16, #tpu.memory_space<vmem>>, vector<1x64x64xbf16>
    %68 = vector.shape_cast %67 : vector<1x64x64xbf16> to vector<64x64xbf16>
    %cst_35 = arith.constant dense<0.000000e+00> : vector<288x64xf32>
    %69 = tpu.matmul %66, %68, %cst_35 {dimension_numbers = #tpu.dot_dimension_numbers<[1], [0], [0], [1], [0, 0, 1, 1], [], []>} : vector<288x64xbf16>, vector<64x64xbf16>, vector<288x64xf32> -> vector<288x64xf32>
    %70 = vector.extract_strided_slice %65 {offsets = [24, 0], sizes = [288, 64], strides = [1, 1]} : vector<384x64xbf16> to vector<288x64xbf16>
    %c1_36 = arith.constant 1 : index
    %c0_37 = arith.constant 0 : index
    %c0_38 = arith.constant 0 : index
    %71 = vector.load %arg5[%c1_36, %c0_37, %c0_38] : memref<5x64x64xbf16, #tpu.memory_space<vmem>>, vector<1x64x64xbf16>
    %72 = vector.shape_cast %71 : vector<1x64x64xbf16> to vector<64x64xbf16>
    %cst_39 = arith.constant dense<0.000000e+00> : vector<288x64xf32>
    %73 = tpu.matmul %70, %72, %cst_39 {dimension_numbers = #tpu.dot_dimension_numbers<[1], [0], [0], [1], [0, 0, 1, 1], [], []>} : vector<288x64xbf16>, vector<64x64xbf16>, vector<288x64xf32> -> vector<288x64xf32>
    %74 = arith.addf %69, %73 : vector<288x64xf32>
    %75 = vector.extract_strided_slice %65 {offsets = [48, 0], sizes = [288, 64], strides = [1, 1]} : vector<384x64xbf16> to vector<288x64xbf16>
    %c2_40 = arith.constant 2 : index
    %c0_41 = arith.constant 0 : index
    %c0_42 = arith.constant 0 : index
    %76 = vector.load %arg5[%c2_40, %c0_41, %c0_42] : memref<5x64x64xbf16, #tpu.memory_space<vmem>>, vector<1x64x64xbf16>
    %77 = vector.shape_cast %76 : vector<1x64x64xbf16> to vector<64x64xbf16>
    %cst_43 = arith.constant dense<0.000000e+00> : vector<288x64xf32>
    %78 = tpu.matmul %75, %77, %cst_43 {dimension_numbers = #tpu.dot_dimension_numbers<[1], [0], [0], [1], [0, 0, 1, 1], [], []>} : vector<288x64xbf16>, vector<64x64xbf16>, vector<288x64xf32> -> vector<288x64xf32>
    %79 = arith.addf %74, %78 : vector<288x64xf32>
    %80 = vector.extract_strided_slice %65 {offsets = [72, 0], sizes = [288, 64], strides = [1, 1]} : vector<384x64xbf16> to vector<288x64xbf16>
    %c3_44 = arith.constant 3 : index
    %c0_45 = arith.constant 0 : index
    %c0_46 = arith.constant 0 : index
    %81 = vector.load %arg5[%c3_44, %c0_45, %c0_46] : memref<5x64x64xbf16, #tpu.memory_space<vmem>>, vector<1x64x64xbf16>
    %82 = vector.shape_cast %81 : vector<1x64x64xbf16> to vector<64x64xbf16>
    %cst_47 = arith.constant dense<0.000000e+00> : vector<288x64xf32>
    %83 = tpu.matmul %80, %82, %cst_47 {dimension_numbers = #tpu.dot_dimension_numbers<[1], [0], [0], [1], [0, 0, 1, 1], [], []>} : vector<288x64xbf16>, vector<64x64xbf16>, vector<288x64xf32> -> vector<288x64xf32>
    %84 = arith.addf %79, %83 : vector<288x64xf32>
    %85 = vector.extract_strided_slice %65 {offsets = [96, 0], sizes = [288, 64], strides = [1, 1]} : vector<384x64xbf16> to vector<288x64xbf16>
    %c4_48 = arith.constant 4 : index
    %c0_49 = arith.constant 0 : index
    %c0_50 = arith.constant 0 : index
    %86 = vector.load %arg5[%c4_48, %c0_49, %c0_50] : memref<5x64x64xbf16, #tpu.memory_space<vmem>>, vector<1x64x64xbf16>
    %87 = vector.shape_cast %86 : vector<1x64x64xbf16> to vector<64x64xbf16>
    %cst_51 = arith.constant dense<0.000000e+00> : vector<288x64xf32>
    %88 = tpu.matmul %85, %87, %cst_51 {dimension_numbers = #tpu.dot_dimension_numbers<[1], [0], [0], [1], [0, 0, 1, 1], [], []>} : vector<288x64xbf16>, vector<64x64xbf16>, vector<288x64xf32> -> vector<288x64xf32>
    %89 = arith.addf %84, %88 : vector<288x64xf32>
    %c0_52 = arith.constant 0 : index
    %c0_53 = arith.constant 0 : index
    %90 = vector.load %arg6[%c0_52, %c0_53] : memref<1x64xf32, #tpu.memory_space<vmem>>, vector<1x64xf32>
    %91 = vector.broadcast %90 : vector<1x64xf32> to vector<288x64xf32>
    %92 = arith.addf %89, %91 : vector<288x64xf32>
    %cst_54 = arith.constant 0.000000e+00 : f32
    %93 = vector.broadcast %cst_54 : f32 to vector<288x64xf32>
    %94 = arith.maximumf %92, %93 : vector<288x64xf32>
    %95 = arith.truncf %94 : vector<288x64xf32> to vector<288x64xbf16>
    %96 = vector.extract_strided_slice %95 {offsets = [0, 0], sizes = [192, 64], strides = [1, 1]} : vector<288x64xbf16> to vector<192x64xbf16>
    %c0_55 = arith.constant 0 : index
    %c0_56 = arith.constant 0 : index
    %c0_57 = arith.constant 0 : index
    %97 = vector.load %arg7[%c0_55, %c0_56, %c0_57] : memref<5x64x64xbf16, #tpu.memory_space<vmem>>, vector<1x64x64xbf16>
    %98 = vector.shape_cast %97 : vector<1x64x64xbf16> to vector<64x64xbf16>
    %cst_58 = arith.constant dense<0.000000e+00> : vector<192x64xf32>
    %99 = tpu.matmul %96, %98, %cst_58 {dimension_numbers = #tpu.dot_dimension_numbers<[1], [0], [0], [1], [0, 0, 1, 1], [], []>} : vector<192x64xbf16>, vector<64x64xbf16>, vector<192x64xf32> -> vector<192x64xf32>
    %100 = vector.extract_strided_slice %95 {offsets = [24, 0], sizes = [192, 64], strides = [1, 1]} : vector<288x64xbf16> to vector<192x64xbf16>
    %c1_59 = arith.constant 1 : index
    %c0_60 = arith.constant 0 : index
    %c0_61 = arith.constant 0 : index
    %101 = vector.load %arg7[%c1_59, %c0_60, %c0_61] : memref<5x64x64xbf16, #tpu.memory_space<vmem>>, vector<1x64x64xbf16>
    %102 = vector.shape_cast %101 : vector<1x64x64xbf16> to vector<64x64xbf16>
    %cst_62 = arith.constant dense<0.000000e+00> : vector<192x64xf32>
    %103 = tpu.matmul %100, %102, %cst_62 {dimension_numbers = #tpu.dot_dimension_numbers<[1], [0], [0], [1], [0, 0, 1, 1], [], []>} : vector<192x64xbf16>, vector<64x64xbf16>, vector<192x64xf32> -> vector<192x64xf32>
    %104 = arith.addf %99, %103 : vector<192x64xf32>
    %105 = vector.extract_strided_slice %95 {offsets = [48, 0], sizes = [192, 64], strides = [1, 1]} : vector<288x64xbf16> to vector<192x64xbf16>
    %c2_63 = arith.constant 2 : index
    %c0_64 = arith.constant 0 : index
    %c0_65 = arith.constant 0 : index
    %106 = vector.load %arg7[%c2_63, %c0_64, %c0_65] : memref<5x64x64xbf16, #tpu.memory_space<vmem>>, vector<1x64x64xbf16>
    %107 = vector.shape_cast %106 : vector<1x64x64xbf16> to vector<64x64xbf16>
    %cst_66 = arith.constant dense<0.000000e+00> : vector<192x64xf32>
    %108 = tpu.matmul %105, %107, %cst_66 {dimension_numbers = #tpu.dot_dimension_numbers<[1], [0], [0], [1], [0, 0, 1, 1], [], []>} : vector<192x64xbf16>, vector<64x64xbf16>, vector<192x64xf32> -> vector<192x64xf32>
    %109 = arith.addf %104, %108 : vector<192x64xf32>
    %110 = vector.extract_strided_slice %95 {offsets = [72, 0], sizes = [192, 64], strides = [1, 1]} : vector<288x64xbf16> to vector<192x64xbf16>
    %c3_67 = arith.constant 3 : index
    %c0_68 = arith.constant 0 : index
    %c0_69 = arith.constant 0 : index
    %111 = vector.load %arg7[%c3_67, %c0_68, %c0_69] : memref<5x64x64xbf16, #tpu.memory_space<vmem>>, vector<1x64x64xbf16>
    %112 = vector.shape_cast %111 : vector<1x64x64xbf16> to vector<64x64xbf16>
    %cst_70 = arith.constant dense<0.000000e+00> : vector<192x64xf32>
    %113 = tpu.matmul %110, %112, %cst_70 {dimension_numbers = #tpu.dot_dimension_numbers<[1], [0], [0], [1], [0, 0, 1, 1], [], []>} : vector<192x64xbf16>, vector<64x64xbf16>, vector<192x64xf32> -> vector<192x64xf32>
    %114 = arith.addf %109, %113 : vector<192x64xf32>
    %115 = vector.extract_strided_slice %95 {offsets = [96, 0], sizes = [192, 64], strides = [1, 1]} : vector<288x64xbf16> to vector<192x64xbf16>
    %c4_71 = arith.constant 4 : index
    %c0_72 = arith.constant 0 : index
    %c0_73 = arith.constant 0 : index
    %116 = vector.load %arg7[%c4_71, %c0_72, %c0_73] : memref<5x64x64xbf16, #tpu.memory_space<vmem>>, vector<1x64x64xbf16>
    %117 = vector.shape_cast %116 : vector<1x64x64xbf16> to vector<64x64xbf16>
    %cst_74 = arith.constant dense<0.000000e+00> : vector<192x64xf32>
    %118 = tpu.matmul %115, %117, %cst_74 {dimension_numbers = #tpu.dot_dimension_numbers<[1], [0], [0], [1], [0, 0, 1, 1], [], []>} : vector<192x64xbf16>, vector<64x64xbf16>, vector<192x64xf32> -> vector<192x64xf32>
    %119 = arith.addf %114, %118 : vector<192x64xf32>
    %c0_75 = arith.constant 0 : index
    %c0_76 = arith.constant 0 : index
    %120 = vector.load %arg8[%c0_75, %c0_76] : memref<1x64xf32, #tpu.memory_space<vmem>>, vector<1x64xf32>
    %121 = vector.broadcast %120 : vector<1x64xf32> to vector<192x64xf32>
    %122 = arith.addf %119, %121 : vector<192x64xf32>
    %cst_77 = arith.constant 0.000000e+00 : f32
    %123 = vector.broadcast %cst_77 : f32 to vector<192x64xf32>
    %124 = arith.maximumf %122, %123 : vector<192x64xf32>
    %125 = vector.shape_cast %124 : vector<192x64xf32> to vector<8x24x64xf32>
    %126 = arith.truncf %125 : vector<8x24x64xf32> to vector<8x24x64xbf16>
    %127 = vector.extract_strided_slice %126 {offsets = [0, 0, 0], sizes = [8, 8, 64], strides = [1, 1, 1]} : vector<8x24x64xbf16> to vector<8x8x64xbf16>
    %128 = vector.shape_cast %127 : vector<8x8x64xbf16> to vector<64x64xbf16>
    %c0_78 = arith.constant 0 : index
    %c0_79 = arith.constant 0 : index
    %c0_80 = arith.constant 0 : index
    %129 = vector.load %arg9[%c0_78, %c0_79, %c0_80] : memref<3x64x512xbf16, #tpu.memory_space<vmem>>, vector<1x64x512xbf16>
    %130 = vector.shape_cast %129 : vector<1x64x512xbf16> to vector<64x512xbf16>
    %cst_81 = arith.constant dense<0.000000e+00> : vector<64x512xf32>
    %131 = tpu.matmul %128, %130, %cst_81 {dimension_numbers = #tpu.dot_dimension_numbers<[1], [0], [0], [1], [0, 0, 1, 1], [], []>} : vector<64x64xbf16>, vector<64x512xbf16>, vector<64x512xf32> -> vector<64x512xf32>
    %132 = vector.extract_strided_slice %126 {offsets = [0, 8, 0], sizes = [8, 8, 64], strides = [1, 1, 1]} : vector<8x24x64xbf16> to vector<8x8x64xbf16>
    %133 = vector.shape_cast %132 : vector<8x8x64xbf16> to vector<64x64xbf16>
    %c1_82 = arith.constant 1 : index
    %c0_83 = arith.constant 0 : index
    %c0_84 = arith.constant 0 : index
    %134 = vector.load %arg9[%c1_82, %c0_83, %c0_84] : memref<3x64x512xbf16, #tpu.memory_space<vmem>>, vector<1x64x512xbf16>
    %135 = vector.shape_cast %134 : vector<1x64x512xbf16> to vector<64x512xbf16>
    %cst_85 = arith.constant dense<0.000000e+00> : vector<64x512xf32>
    %136 = tpu.matmul %133, %135, %cst_85 {dimension_numbers = #tpu.dot_dimension_numbers<[1], [0], [0], [1], [0, 0, 1, 1], [], []>} : vector<64x64xbf16>, vector<64x512xbf16>, vector<64x512xf32> -> vector<64x512xf32>
    %137 = arith.addf %131, %136 : vector<64x512xf32>
    %138 = vector.extract_strided_slice %126 {offsets = [0, 16, 0], sizes = [8, 8, 64], strides = [1, 1, 1]} : vector<8x24x64xbf16> to vector<8x8x64xbf16>
    %139 = vector.shape_cast %138 : vector<8x8x64xbf16> to vector<64x64xbf16>
    %c2_86 = arith.constant 2 : index
    %c0_87 = arith.constant 0 : index
    %c0_88 = arith.constant 0 : index
    %140 = vector.load %arg9[%c2_86, %c0_87, %c0_88] : memref<3x64x512xbf16, #tpu.memory_space<vmem>>, vector<1x64x512xbf16>
    %141 = vector.shape_cast %140 : vector<1x64x512xbf16> to vector<64x512xbf16>
    %cst_89 = arith.constant dense<0.000000e+00> : vector<64x512xf32>
    %142 = tpu.matmul %139, %141, %cst_89 {dimension_numbers = #tpu.dot_dimension_numbers<[1], [0], [0], [1], [0, 0, 1, 1], [], []>} : vector<64x64xbf16>, vector<64x512xbf16>, vector<64x512xf32> -> vector<64x512xf32>
    %143 = arith.addf %137, %142 : vector<64x512xf32>
    %c0_90 = arith.constant 0 : index
    %c0_91 = arith.constant 0 : index
    %144 = vector.load %arg11[%c0_90, %c0_91] : memref<1x512xf32, #tpu.memory_space<vmem>>, vector<1x512xf32>
    %145 = vector.broadcast %144 : vector<1x512xf32> to vector<64x512xf32>
    %146 = arith.addf %143, %145 : vector<64x512xf32>
    %c0_92 = arith.constant 0 : index
    %c0_93 = arith.constant 0 : index
    %147 = vector.load %arg10[%c0_92, %c0_93] : memref<128x512xbf16, #tpu.memory_space<vmem>>, vector<128x512xbf16>
    %cst_94 = arith.constant 0.000000e+00 : f32
    %148 = vector.broadcast %cst_94 : f32 to vector<8x128xf32>
    %cst_95 = arith.constant 0.000000e+00 : f32
    %149 = vector.broadcast %cst_95 : f32 to vector<8x128xf32>
    %150 = vector.extract_strided_slice %146 {offsets = [0, 0], sizes = [8, 512], strides = [1, 1]} : vector<64x512xf32> to vector<8x512xf32>
    %151 = arith.truncf %148 : vector<8x128xf32> to vector<8x128xbf16>
    %cst_96 = arith.constant dense<0.000000e+00> : vector<8x512xf32>
    %152 = tpu.matmul %151, %147, %cst_96 {dimension_numbers = #tpu.dot_dimension_numbers<[1], [0], [0], [1], [0, 0, 1, 1], [], []>} : vector<8x128xbf16>, vector<128x512xbf16>, vector<8x512xf32> -> vector<8x512xf32>
    %153 = arith.addf %150, %152 : vector<8x512xf32>
    %154 = vector.extract_strided_slice %153 {offsets = [0, 0], sizes = [8, 128], strides = [1, 1]} : vector<8x512xf32> to vector<8x128xf32>
    %155 = arith.negf %154 : vector<8x128xf32>
    %156 = math.exp %155 : vector<8x128xf32>
    %cst_97 = arith.constant 1.000000e+00 : f32
    %157 = vector.broadcast %cst_97 : f32 to vector<8x128xf32>
    %158 = arith.addf %157, %156 : vector<8x128xf32>
    %159 = arith.divf %157, %158 : vector<8x128xf32>
    %160 = vector.extract_strided_slice %153 {offsets = [0, 128], sizes = [8, 128], strides = [1, 1]} : vector<8x512xf32> to vector<8x128xf32>
    %161 = arith.negf %160 : vector<8x128xf32>
    %162 = math.exp %161 : vector<8x128xf32>
    %cst_98 = arith.constant 1.000000e+00 : f32
    %163 = vector.broadcast %cst_98 : f32 to vector<8x128xf32>
    %164 = arith.addf %163, %162 : vector<8x128xf32>
    %165 = arith.divf %163, %164 : vector<8x128xf32>
    %166 = vector.extract_strided_slice %153 {offsets = [0, 256], sizes = [8, 128], strides = [1, 1]} : vector<8x512xf32> to vector<8x128xf32>
    %167 = math.tanh %166 : vector<8x128xf32>
    %168 = vector.extract_strided_slice %153 {offsets = [0, 384], sizes = [8, 128], strides = [1, 1]} : vector<8x512xf32> to vector<8x128xf32>
    %169 = arith.negf %168 : vector<8x128xf32>
    %170 = math.exp %169 : vector<8x128xf32>
    %cst_99 = arith.constant 1.000000e+00 : f32
    %171 = vector.broadcast %cst_99 : f32 to vector<8x128xf32>
    %172 = arith.addf %171, %170 : vector<8x128xf32>
    %173 = arith.divf %171, %172 : vector<8x128xf32>
    %174 = arith.mulf %165, %149 : vector<8x128xf32>
    %175 = arith.mulf %159, %167 : vector<8x128xf32>
    %176 = arith.addf %174, %175 : vector<8x128xf32>
    %177 = math.tanh %176 : vector<8x128xf32>
    %178 = arith.mulf %173, %177 : vector<8x128xf32>
    %c0_100 = arith.constant 0 : index
    %c0_101 = arith.constant 0 : index
    %179 = vector.load %arg16[%c0_100, %c0_101] : memref<64x128xf32, #tpu.memory_space<vmem>>, vector<8x128xf32>
    tpu.vector_store %arg16[%c0_100, %c0_101], %178 {strides = array<i32>} : memref<64x128xf32, #tpu.memory_space<vmem>>, vector<8x128xf32>,
    %180 = vector.extract_strided_slice %146 {offsets = [8, 0], sizes = [8, 512], strides = [1, 1]} : vector<64x512xf32> to vector<8x512xf32>
    %181 = arith.truncf %178 : vector<8x128xf32> to vector<8x128xbf16>
    %cst_102 = arith.constant dense<0.000000e+00> : vector<8x512xf32>
    %182 = tpu.matmul %181, %147, %cst_102 {dimension_numbers = #tpu.dot_dimension_numbers<[1], [0], [0], [1], [0, 0, 1, 1], [], []>} : vector<8x128xbf16>, vector<128x512xbf16>, vector<8x512xf32> -> vector<8x512xf32>
    %183 = arith.addf %180, %182 : vector<8x512xf32>
    %184 = vector.extract_strided_slice %183 {offsets = [0, 0], sizes = [8, 128], strides = [1, 1]} : vector<8x512xf32> to vector<8x128xf32>
    %185 = arith.negf %184 : vector<8x128xf32>
    %186 = math.exp %185 : vector<8x128xf32>
    %cst_103 = arith.constant 1.000000e+00 : f32
    %187 = vector.broadcast %cst_103 : f32 to vector<8x128xf32>
    %188 = arith.addf %187, %186 : vector<8x128xf32>
    %189 = arith.divf %187, %188 : vector<8x128xf32>
    %190 = vector.extract_strided_slice %183 {offsets = [0, 128], sizes = [8, 128], strides = [1, 1]} : vector<8x512xf32> to vector<8x128xf32>
    %191 = arith.negf %190 : vector<8x128xf32>
    %192 = math.exp %191 : vector<8x128xf32>
    %cst_104 = arith.constant 1.000000e+00 : f32
    %193 = vector.broadcast %cst_104 : f32 to vector<8x128xf32>
    %194 = arith.addf %193, %192 : vector<8x128xf32>
    %195 = arith.divf %193, %194 : vector<8x128xf32>
    %196 = vector.extract_strided_slice %183 {offsets = [0, 256], sizes = [8, 128], strides = [1, 1]} : vector<8x512xf32> to vector<8x128xf32>
    %197 = math.tanh %196 : vector<8x128xf32>
    %198 = vector.extract_strided_slice %183 {offsets = [0, 384], sizes = [8, 128], strides = [1, 1]} : vector<8x512xf32> to vector<8x128xf32>
    %199 = arith.negf %198 : vector<8x128xf32>
    %200 = math.exp %199 : vector<8x128xf32>
    %cst_105 = arith.constant 1.000000e+00 : f32
    %201 = vector.broadcast %cst_105 : f32 to vector<8x128xf32>
    %202 = arith.addf %201, %200 : vector<8x128xf32>
    %203 = arith.divf %201, %202 : vector<8x128xf32>
    %204 = arith.mulf %195, %176 : vector<8x128xf32>
    %205 = arith.mulf %189, %197 : vector<8x128xf32>
    %206 = arith.addf %204, %205 : vector<8x128xf32>
    %207 = math.tanh %206 : vector<8x128xf32>
    %208 = arith.mulf %203, %207 : vector<8x128xf32>
    %c8 = arith.constant 8 : index
    %c0_106 = arith.constant 0 : index
    %209 = vector.load %arg16[%c8, %c0_106] : memref<64x128xf32, #tpu.memory_space<vmem>>, vector<8x128xf32>
    tpu.vector_store %arg16[%c8, %c0_106], %208 {strides = array<i32>} : memref<64x128xf32, #tpu.memory_space<vmem>>, vector<8x128xf32>,
    %210 = vector.extract_strided_slice %146 {offsets = [16, 0], sizes = [8, 512], strides = [1, 1]} : vector<64x512xf32> to vector<8x512xf32>
    %211 = arith.truncf %208 : vector<8x128xf32> to vector<8x128xbf16>
    %cst_107 = arith.constant dense<0.000000e+00> : vector<8x512xf32>
    %212 = tpu.matmul %211, %147, %cst_107 {dimension_numbers = #tpu.dot_dimension_numbers<[1], [0], [0], [1], [0, 0, 1, 1], [], []>} : vector<8x128xbf16>, vector<128x512xbf16>, vector<8x512xf32> -> vector<8x512xf32>
    %213 = arith.addf %210, %212 : vector<8x512xf32>
    %214 = vector.extract_strided_slice %213 {offsets = [0, 0], sizes = [8, 128], strides = [1, 1]} : vector<8x512xf32> to vector<8x128xf32>
    %215 = arith.negf %214 : vector<8x128xf32>
    %216 = math.exp %215 : vector<8x128xf32>
    %cst_108 = arith.constant 1.000000e+00 : f32
    %217 = vector.broadcast %cst_108 : f32 to vector<8x128xf32>
    %218 = arith.addf %217, %216 : vector<8x128xf32>
    %219 = arith.divf %217, %218 : vector<8x128xf32>
    %220 = vector.extract_strided_slice %213 {offsets = [0, 128], sizes = [8, 128], strides = [1, 1]} : vector<8x512xf32> to vector<8x128xf32>
    %221 = arith.negf %220 : vector<8x128xf32>
    %222 = math.exp %221 : vector<8x128xf32>
    %cst_109 = arith.constant 1.000000e+00 : f32
    %223 = vector.broadcast %cst_109 : f32 to vector<8x128xf32>
    %224 = arith.addf %223, %222 : vector<8x128xf32>
    %225 = arith.divf %223, %224 : vector<8x128xf32>
    %226 = vector.extract_strided_slice %213 {offsets = [0, 256], sizes = [8, 128], strides = [1, 1]} : vector<8x512xf32> to vector<8x128xf32>
    %227 = math.tanh %226 : vector<8x128xf32>
    %228 = vector.extract_strided_slice %213 {offsets = [0, 384], sizes = [8, 128], strides = [1, 1]} : vector<8x512xf32> to vector<8x128xf32>
    %229 = arith.negf %228 : vector<8x128xf32>
    %230 = math.exp %229 : vector<8x128xf32>
    %cst_110 = arith.constant 1.000000e+00 : f32
    %231 = vector.broadcast %cst_110 : f32 to vector<8x128xf32>
    %232 = arith.addf %231, %230 : vector<8x128xf32>
    %233 = arith.divf %231, %232 : vector<8x128xf32>
    %234 = arith.mulf %225, %206 : vector<8x128xf32>
    %235 = arith.mulf %219, %227 : vector<8x128xf32>
    %236 = arith.addf %234, %235 : vector<8x128xf32>
    %237 = math.tanh %236 : vector<8x128xf32>
    %238 = arith.mulf %233, %237 : vector<8x128xf32>
    %c16 = arith.constant 16 : index
    %c0_111 = arith.constant 0 : index
    %239 = vector.load %arg16[%c16, %c0_111] : memref<64x128xf32, #tpu.memory_space<vmem>>, vector<8x128xf32>
    tpu.vector_store %arg16[%c16, %c0_111], %238 {strides = array<i32>} : memref<64x128xf32, #tpu.memory_space<vmem>>, vector<8x128xf32>,
    %240 = vector.extract_strided_slice %146 {offsets = [24, 0], sizes = [8, 512], strides = [1, 1]} : vector<64x512xf32> to vector<8x512xf32>
    %241 = arith.truncf %238 : vector<8x128xf32> to vector<8x128xbf16>
    %cst_112 = arith.constant dense<0.000000e+00> : vector<8x512xf32>
    %242 = tpu.matmul %241, %147, %cst_112 {dimension_numbers = #tpu.dot_dimension_numbers<[1], [0], [0], [1], [0, 0, 1, 1], [], []>} : vector<8x128xbf16>, vector<128x512xbf16>, vector<8x512xf32> -> vector<8x512xf32>
    %243 = arith.addf %240, %242 : vector<8x512xf32>
    %244 = vector.extract_strided_slice %243 {offsets = [0, 0], sizes = [8, 128], strides = [1, 1]} : vector<8x512xf32> to vector<8x128xf32>
    %245 = arith.negf %244 : vector<8x128xf32>
    %246 = math.exp %245 : vector<8x128xf32>
    %cst_113 = arith.constant 1.000000e+00 : f32
    %247 = vector.broadcast %cst_113 : f32 to vector<8x128xf32>
    %248 = arith.addf %247, %246 : vector<8x128xf32>
    %249 = arith.divf %247, %248 : vector<8x128xf32>
    %250 = vector.extract_strided_slice %243 {offsets = [0, 128], sizes = [8, 128], strides = [1, 1]} : vector<8x512xf32> to vector<8x128xf32>
    %251 = arith.negf %250 : vector<8x128xf32>
    %252 = math.exp %251 : vector<8x128xf32>
    %cst_114 = arith.constant 1.000000e+00 : f32
    %253 = vector.broadcast %cst_114 : f32 to vector<8x128xf32>
    %254 = arith.addf %253, %252 : vector<8x128xf32>
    %255 = arith.divf %253, %254 : vector<8x128xf32>
    %256 = vector.extract_strided_slice %243 {offsets = [0, 256], sizes = [8, 128], strides = [1, 1]} : vector<8x512xf32> to vector<8x128xf32>
    %257 = math.tanh %256 : vector<8x128xf32>
    %258 = vector.extract_strided_slice %243 {offsets = [0, 384], sizes = [8, 128], strides = [1, 1]} : vector<8x512xf32> to vector<8x128xf32>
    %259 = arith.negf %258 : vector<8x128xf32>
    %260 = math.exp %259 : vector<8x128xf32>
    %cst_115 = arith.constant 1.000000e+00 : f32
    %261 = vector.broadcast %cst_115 : f32 to vector<8x128xf32>
    %262 = arith.addf %261, %260 : vector<8x128xf32>
    %263 = arith.divf %261, %262 : vector<8x128xf32>
    %264 = arith.mulf %255, %236 : vector<8x128xf32>
    %265 = arith.mulf %249, %257 : vector<8x128xf32>
    %266 = arith.addf %264, %265 : vector<8x128xf32>
    %267 = math.tanh %266 : vector<8x128xf32>
    %268 = arith.mulf %263, %267 : vector<8x128xf32>
    %c24 = arith.constant 24 : index
    %c0_116 = arith.constant 0 : index
    %269 = vector.load %arg16[%c24, %c0_116] : memref<64x128xf32, #tpu.memory_space<vmem>>, vector<8x128xf32>
    tpu.vector_store %arg16[%c24, %c0_116], %268 {strides = array<i32>} : memref<64x128xf32, #tpu.memory_space<vmem>>, vector<8x128xf32>,
    %270 = vector.extract_strided_slice %146 {offsets = [32, 0], sizes = [8, 512], strides = [1, 1]} : vector<64x512xf32> to vector<8x512xf32>
    %271 = arith.truncf %268 : vector<8x128xf32> to vector<8x128xbf16>
    %cst_117 = arith.constant dense<0.000000e+00> : vector<8x512xf32>
    %272 = tpu.matmul %271, %147, %cst_117 {dimension_numbers = #tpu.dot_dimension_numbers<[1], [0], [0], [1], [0, 0, 1, 1], [], []>} : vector<8x128xbf16>, vector<128x512xbf16>, vector<8x512xf32> -> vector<8x512xf32>
    %273 = arith.addf %270, %272 : vector<8x512xf32>
    %274 = vector.extract_strided_slice %273 {offsets = [0, 0], sizes = [8, 128], strides = [1, 1]} : vector<8x512xf32> to vector<8x128xf32>
    %275 = arith.negf %274 : vector<8x128xf32>
    %276 = math.exp %275 : vector<8x128xf32>
    %cst_118 = arith.constant 1.000000e+00 : f32
    %277 = vector.broadcast %cst_118 : f32 to vector<8x128xf32>
    %278 = arith.addf %277, %276 : vector<8x128xf32>
    %279 = arith.divf %277, %278 : vector<8x128xf32>
    %280 = vector.extract_strided_slice %273 {offsets = [0, 128], sizes = [8, 128], strides = [1, 1]} : vector<8x512xf32> to vector<8x128xf32>
    %281 = arith.negf %280 : vector<8x128xf32>
    %282 = math.exp %281 : vector<8x128xf32>
    %cst_119 = arith.constant 1.000000e+00 : f32
    %283 = vector.broadcast %cst_119 : f32 to vector<8x128xf32>
    %284 = arith.addf %283, %282 : vector<8x128xf32>
    %285 = arith.divf %283, %284 : vector<8x128xf32>
    %286 = vector.extract_strided_slice %273 {offsets = [0, 256], sizes = [8, 128], strides = [1, 1]} : vector<8x512xf32> to vector<8x128xf32>
    %287 = math.tanh %286 : vector<8x128xf32>
    %288 = vector.extract_strided_slice %273 {offsets = [0, 384], sizes = [8, 128], strides = [1, 1]} : vector<8x512xf32> to vector<8x128xf32>
    %289 = arith.negf %288 : vector<8x128xf32>
    %290 = math.exp %289 : vector<8x128xf32>
    %cst_120 = arith.constant 1.000000e+00 : f32
    %291 = vector.broadcast %cst_120 : f32 to vector<8x128xf32>
    %292 = arith.addf %291, %290 : vector<8x128xf32>
    %293 = arith.divf %291, %292 : vector<8x128xf32>
    %294 = arith.mulf %285, %266 : vector<8x128xf32>
    %295 = arith.mulf %279, %287 : vector<8x128xf32>
    %296 = arith.addf %294, %295 : vector<8x128xf32>
    %297 = math.tanh %296 : vector<8x128xf32>
    %298 = arith.mulf %293, %297 : vector<8x128xf32>
    %c32 = arith.constant 32 : index
    %c0_121 = arith.constant 0 : index
    %299 = vector.load %arg16[%c32, %c0_121] : memref<64x128xf32, #tpu.memory_space<vmem>>, vector<8x128xf32>
    tpu.vector_store %arg16[%c32, %c0_121], %298 {strides = array<i32>} : memref<64x128xf32, #tpu.memory_space<vmem>>, vector<8x128xf32>,
    %300 = vector.extract_strided_slice %146 {offsets = [40, 0], sizes = [8, 512], strides = [1, 1]} : vector<64x512xf32> to vector<8x512xf32>
    %301 = arith.truncf %298 : vector<8x128xf32> to vector<8x128xbf16>
    %cst_122 = arith.constant dense<0.000000e+00> : vector<8x512xf32>
    %302 = tpu.matmul %301, %147, %cst_122 {dimension_numbers = #tpu.dot_dimension_numbers<[1], [0], [0], [1], [0, 0, 1, 1], [], []>} : vector<8x128xbf16>, vector<128x512xbf16>, vector<8x512xf32> -> vector<8x512xf32>
    %303 = arith.addf %300, %302 : vector<8x512xf32>
    %304 = vector.extract_strided_slice %303 {offsets = [0, 0], sizes = [8, 128], strides = [1, 1]} : vector<8x512xf32> to vector<8x128xf32>
    %305 = arith.negf %304 : vector<8x128xf32>
    %306 = math.exp %305 : vector<8x128xf32>
    %cst_123 = arith.constant 1.000000e+00 : f32
    %307 = vector.broadcast %cst_123 : f32 to vector<8x128xf32>
    %308 = arith.addf %307, %306 : vector<8x128xf32>
    %309 = arith.divf %307, %308 : vector<8x128xf32>
    %310 = vector.extract_strided_slice %303 {offsets = [0, 128], sizes = [8, 128], strides = [1, 1]} : vector<8x512xf32> to vector<8x128xf32>
    %311 = arith.negf %310 : vector<8x128xf32>
    %312 = math.exp %311 : vector<8x128xf32>
    %cst_124 = arith.constant 1.000000e+00 : f32
    %313 = vector.broadcast %cst_124 : f32 to vector<8x128xf32>
    %314 = arith.addf %313, %312 : vector<8x128xf32>
    %315 = arith.divf %313, %314 : vector<8x128xf32>
    %316 = vector.extract_strided_slice %303 {offsets = [0, 256], sizes = [8, 128], strides = [1, 1]} : vector<8x512xf32> to vector<8x128xf32>
    %317 = math.tanh %316 : vector<8x128xf32>
    %318 = vector.extract_strided_slice %303 {offsets = [0, 384], sizes = [8, 128], strides = [1, 1]} : vector<8x512xf32> to vector<8x128xf32>
    %319 = arith.negf %318 : vector<8x128xf32>
    %320 = math.exp %319 : vector<8x128xf32>
    %cst_125 = arith.constant 1.000000e+00 : f32
    %321 = vector.broadcast %cst_125 : f32 to vector<8x128xf32>
    %322 = arith.addf %321, %320 : vector<8x128xf32>
    %323 = arith.divf %321, %322 : vector<8x128xf32>
    %324 = arith.mulf %315, %296 : vector<8x128xf32>
    %325 = arith.mulf %309, %317 : vector<8x128xf32>
    %326 = arith.addf %324, %325 : vector<8x128xf32>
    %327 = math.tanh %326 : vector<8x128xf32>
    %328 = arith.mulf %323, %327 : vector<8x128xf32>
    %c40 = arith.constant 40 : index
    %c0_126 = arith.constant 0 : index
    %329 = vector.load %arg16[%c40, %c0_126] : memref<64x128xf32, #tpu.memory_space<vmem>>, vector<8x128xf32>
    tpu.vector_store %arg16[%c40, %c0_126], %328 {strides = array<i32>} : memref<64x128xf32, #tpu.memory_space<vmem>>, vector<8x128xf32>,
    %330 = vector.extract_strided_slice %146 {offsets = [48, 0], sizes = [8, 512], strides = [1, 1]} : vector<64x512xf32> to vector<8x512xf32>
    %331 = arith.truncf %328 : vector<8x128xf32> to vector<8x128xbf16>
    %cst_127 = arith.constant dense<0.000000e+00> : vector<8x512xf32>
    %332 = tpu.matmul %331, %147, %cst_127 {dimension_numbers = #tpu.dot_dimension_numbers<[1], [0], [0], [1], [0, 0, 1, 1], [], []>} : vector<8x128xbf16>, vector<128x512xbf16>, vector<8x512xf32> -> vector<8x512xf32>
    %333 = arith.addf %330, %332 : vector<8x512xf32>
    %334 = vector.extract_strided_slice %333 {offsets = [0, 0], sizes = [8, 128], strides = [1, 1]} : vector<8x512xf32> to vector<8x128xf32>
    %335 = arith.negf %334 : vector<8x128xf32>
    %336 = math.exp %335 : vector<8x128xf32>
    %cst_128 = arith.constant 1.000000e+00 : f32
    %337 = vector.broadcast %cst_128 : f32 to vector<8x128xf32>
    %338 = arith.addf %337, %336 : vector<8x128xf32>
    %339 = arith.divf %337, %338 : vector<8x128xf32>
    %340 = vector.extract_strided_slice %333 {offsets = [0, 128], sizes = [8, 128], strides = [1, 1]} : vector<8x512xf32> to vector<8x128xf32>
    %341 = arith.negf %340 : vector<8x128xf32>
    %342 = math.exp %341 : vector<8x128xf32>
    %cst_129 = arith.constant 1.000000e+00 : f32
    %343 = vector.broadcast %cst_129 : f32 to vector<8x128xf32>
    %344 = arith.addf %343, %342 : vector<8x128xf32>
    %345 = arith.divf %343, %344 : vector<8x128xf32>
    %346 = vector.extract_strided_slice %333 {offsets = [0, 256], sizes = [8, 128], strides = [1, 1]} : vector<8x512xf32> to vector<8x128xf32>
    %347 = math.tanh %346 : vector<8x128xf32>
    %348 = vector.extract_strided_slice %333 {offsets = [0, 384], sizes = [8, 128], strides = [1, 1]} : vector<8x512xf32> to vector<8x128xf32>
    %349 = arith.negf %348 : vector<8x128xf32>
    %350 = math.exp %349 : vector<8x128xf32>
    %cst_130 = arith.constant 1.000000e+00 : f32
    %351 = vector.broadcast %cst_130 : f32 to vector<8x128xf32>
    %352 = arith.addf %351, %350 : vector<8x128xf32>
    %353 = arith.divf %351, %352 : vector<8x128xf32>
    %354 = arith.mulf %345, %326 : vector<8x128xf32>
    %355 = arith.mulf %339, %347 : vector<8x128xf32>
    %356 = arith.addf %354, %355 : vector<8x128xf32>
    %357 = math.tanh %356 : vector<8x128xf32>
    %358 = arith.mulf %353, %357 : vector<8x128xf32>
    %c48 = arith.constant 48 : index
    %c0_131 = arith.constant 0 : index
    %359 = vector.load %arg16[%c48, %c0_131] : memref<64x128xf32, #tpu.memory_space<vmem>>, vector<8x128xf32>
    tpu.vector_store %arg16[%c48, %c0_131], %358 {strides = array<i32>} : memref<64x128xf32, #tpu.memory_space<vmem>>, vector<8x128xf32>,
    %360 = vector.extract_strided_slice %146 {offsets = [56, 0], sizes = [8, 512], strides = [1, 1]} : vector<64x512xf32> to vector<8x512xf32>
    %361 = arith.truncf %358 : vector<8x128xf32> to vector<8x128xbf16>
    %cst_132 = arith.constant dense<0.000000e+00> : vector<8x512xf32>
    %362 = tpu.matmul %361, %147, %cst_132 {dimension_numbers = #tpu.dot_dimension_numbers<[1], [0], [0], [1], [0, 0, 1, 1], [], []>} : vector<8x128xbf16>, vector<128x512xbf16>, vector<8x512xf32> -> vector<8x512xf32>
    %363 = arith.addf %360, %362 : vector<8x512xf32>
    %364 = vector.extract_strided_slice %363 {offsets = [0, 0], sizes = [8, 128], strides = [1, 1]} : vector<8x512xf32> to vector<8x128xf32>
    %365 = arith.negf %364 : vector<8x128xf32>
    %366 = math.exp %365 : vector<8x128xf32>
    %cst_133 = arith.constant 1.000000e+00 : f32
    %367 = vector.broadcast %cst_133 : f32 to vector<8x128xf32>
    %368 = arith.addf %367, %366 : vector<8x128xf32>
    %369 = arith.divf %367, %368 : vector<8x128xf32>
    %370 = vector.extract_strided_slice %363 {offsets = [0, 128], sizes = [8, 128], strides = [1, 1]} : vector<8x512xf32> to vector<8x128xf32>
    %371 = arith.negf %370 : vector<8x128xf32>
    %372 = math.exp %371 : vector<8x128xf32>
    %cst_134 = arith.constant 1.000000e+00 : f32
    %373 = vector.broadcast %cst_134 : f32 to vector<8x128xf32>
    %374 = arith.addf %373, %372 : vector<8x128xf32>
    %375 = arith.divf %373, %374 : vector<8x128xf32>
    %376 = vector.extract_strided_slice %363 {offsets = [0, 256], sizes = [8, 128], strides = [1, 1]} : vector<8x512xf32> to vector<8x128xf32>
    %377 = math.tanh %376 : vector<8x128xf32>
    %378 = vector.extract_strided_slice %363 {offsets = [0, 384], sizes = [8, 128], strides = [1, 1]} : vector<8x512xf32> to vector<8x128xf32>
    %379 = arith.negf %378 : vector<8x128xf32>
    %380 = math.exp %379 : vector<8x128xf32>
    %cst_135 = arith.constant 1.000000e+00 : f32
    %381 = vector.broadcast %cst_135 : f32 to vector<8x128xf32>
    %382 = arith.addf %381, %380 : vector<8x128xf32>
    %383 = arith.divf %381, %382 : vector<8x128xf32>
    %384 = arith.mulf %375, %356 : vector<8x128xf32>
    %385 = arith.mulf %369, %377 : vector<8x128xf32>
    %386 = arith.addf %384, %385 : vector<8x128xf32>
    %387 = math.tanh %386 : vector<8x128xf32>
    %388 = arith.mulf %383, %387 : vector<8x128xf32>
    %c56 = arith.constant 56 : index
    %c0_136 = arith.constant 0 : index
    %389 = vector.load %arg16[%c56, %c0_136] : memref<64x128xf32, #tpu.memory_space<vmem>>, vector<8x128xf32>
    tpu.vector_store %arg16[%c56, %c0_136], %388 {strides = array<i32>} : memref<64x128xf32, #tpu.memory_space<vmem>>, vector<8x128xf32>,
    %c0_137 = arith.constant 0 : index
    %c0_138 = arith.constant 0 : index
    %390 = vector.load %arg16[%c0_137, %c0_138] : memref<64x128xf32, #tpu.memory_space<vmem>>, vector<64x128xf32>
    %391 = arith.truncf %390 : vector<64x128xf32> to vector<64x128xbf16>
    %c0_139 = arith.constant 0 : index
    %c0_140 = arith.constant 0 : index
    %392 = vector.load %arg12[%c0_139, %c0_140] : memref<128x512xbf16, #tpu.memory_space<vmem>>, vector<128x512xbf16>
    %cst_141 = arith.constant dense<0.000000e+00> : vector<64x512xf32>
    %393 = tpu.matmul %391, %392, %cst_141 {dimension_numbers = #tpu.dot_dimension_numbers<[1], [0], [0], [1], [0, 0, 1, 1], [], []>} : vector<64x128xbf16>, vector<128x512xbf16>, vector<64x512xf32> -> vector<64x512xf32>
    %c0_142 = arith.constant 0 : index
    %c0_143 = arith.constant 0 : index
    %394 = vector.load %arg14[%c0_142, %c0_143] : memref<1x512xf32, #tpu.memory_space<vmem>>, vector<1x512xf32>
    %395 = vector.broadcast %394 : vector<1x512xf32> to vector<64x512xf32>
    %396 = arith.addf %393, %395 : vector<64x512xf32>
    %c0_144 = arith.constant 0 : index
    %c0_145 = arith.constant 0 : index
    %397 = vector.load %arg13[%c0_144, %c0_145] : memref<128x512xbf16, #tpu.memory_space<vmem>>, vector<128x512xbf16>
    %cst_146 = arith.constant 0.000000e+00 : f32
    %398 = vector.broadcast %cst_146 : f32 to vector<8x128xf32>
    %cst_147 = arith.constant 0.000000e+00 : f32
    %399 = vector.broadcast %cst_147 : f32 to vector<8x128xf32>
    %400 = vector.extract_strided_slice %396 {offsets = [0, 0], sizes = [8, 512], strides = [1, 1]} : vector<64x512xf32> to vector<8x512xf32>
    %401 = arith.truncf %398 : vector<8x128xf32> to vector<8x128xbf16>
    %cst_148 = arith.constant dense<0.000000e+00> : vector<8x512xf32>
    %402 = tpu.matmul %401, %397, %cst_148 {dimension_numbers = #tpu.dot_dimension_numbers<[1], [0], [0], [1], [0, 0, 1, 1], [], []>} : vector<8x128xbf16>, vector<128x512xbf16>, vector<8x512xf32> -> vector<8x512xf32>
    %403 = arith.addf %400, %402 : vector<8x512xf32>
    %404 = vector.extract_strided_slice %403 {offsets = [0, 0], sizes = [8, 128], strides = [1, 1]} : vector<8x512xf32> to vector<8x128xf32>
    %405 = arith.negf %404 : vector<8x128xf32>
    %406 = math.exp %405 : vector<8x128xf32>
    %cst_149 = arith.constant 1.000000e+00 : f32
    %407 = vector.broadcast %cst_149 : f32 to vector<8x128xf32>
    %408 = arith.addf %407, %406 : vector<8x128xf32>
    %409 = arith.divf %407, %408 : vector<8x128xf32>
    %410 = vector.extract_strided_slice %403 {offsets = [0, 128], sizes = [8, 128], strides = [1, 1]} : vector<8x512xf32> to vector<8x128xf32>
    %411 = arith.negf %410 : vector<8x128xf32>
    %412 = math.exp %411 : vector<8x128xf32>
    %cst_150 = arith.constant 1.000000e+00 : f32
    %413 = vector.broadcast %cst_150 : f32 to vector<8x128xf32>
    %414 = arith.addf %413, %412 : vector<8x128xf32>
    %415 = arith.divf %413, %414 : vector<8x128xf32>
    %416 = vector.extract_strided_slice %403 {offsets = [0, 256], sizes = [8, 128], strides = [1, 1]} : vector<8x512xf32> to vector<8x128xf32>
    %417 = math.tanh %416 : vector<8x128xf32>
    %418 = vector.extract_strided_slice %403 {offsets = [0, 384], sizes = [8, 128], strides = [1, 1]} : vector<8x512xf32> to vector<8x128xf32>
    %419 = arith.negf %418 : vector<8x128xf32>
    %420 = math.exp %419 : vector<8x128xf32>
    %cst_151 = arith.constant 1.000000e+00 : f32
    %421 = vector.broadcast %cst_151 : f32 to vector<8x128xf32>
    %422 = arith.addf %421, %420 : vector<8x128xf32>
    %423 = arith.divf %421, %422 : vector<8x128xf32>
    %424 = arith.mulf %415, %399 : vector<8x128xf32>
    %425 = arith.mulf %409, %417 : vector<8x128xf32>
    %426 = arith.addf %424, %425 : vector<8x128xf32>
    %427 = math.tanh %426 : vector<8x128xf32>
    %428 = arith.mulf %423, %427 : vector<8x128xf32>
    %c0_152 = arith.constant 0 : index
    %c0_153 = arith.constant 0 : index
    %429 = vector.load %arg15[%c0_152, %c0_153] : memref<8x1024xf32, #tpu.memory_space<vmem>>, vector<8x128xf32>
    tpu.vector_store %arg15[%c0_152, %c0_153], %428 {strides = array<i32>} : memref<8x1024xf32, #tpu.memory_space<vmem>>, vector<8x128xf32>,
    %430 = vector.extract_strided_slice %396 {offsets = [8, 0], sizes = [8, 512], strides = [1, 1]} : vector<64x512xf32> to vector<8x512xf32>
    %431 = arith.truncf %428 : vector<8x128xf32> to vector<8x128xbf16>
    %cst_154 = arith.constant dense<0.000000e+00> : vector<8x512xf32>
    %432 = tpu.matmul %431, %397, %cst_154 {dimension_numbers = #tpu.dot_dimension_numbers<[1], [0], [0], [1], [0, 0, 1, 1], [], []>} : vector<8x128xbf16>, vector<128x512xbf16>, vector<8x512xf32> -> vector<8x512xf32>
    %433 = arith.addf %430, %432 : vector<8x512xf32>
    %434 = vector.extract_strided_slice %433 {offsets = [0, 0], sizes = [8, 128], strides = [1, 1]} : vector<8x512xf32> to vector<8x128xf32>
    %435 = arith.negf %434 : vector<8x128xf32>
    %436 = math.exp %435 : vector<8x128xf32>
    %cst_155 = arith.constant 1.000000e+00 : f32
    %437 = vector.broadcast %cst_155 : f32 to vector<8x128xf32>
    %438 = arith.addf %437, %436 : vector<8x128xf32>
    %439 = arith.divf %437, %438 : vector<8x128xf32>
    %440 = vector.extract_strided_slice %433 {offsets = [0, 128], sizes = [8, 128], strides = [1, 1]} : vector<8x512xf32> to vector<8x128xf32>
    %441 = arith.negf %440 : vector<8x128xf32>
    %442 = math.exp %441 : vector<8x128xf32>
    %cst_156 = arith.constant 1.000000e+00 : f32
    %443 = vector.broadcast %cst_156 : f32 to vector<8x128xf32>
    %444 = arith.addf %443, %442 : vector<8x128xf32>
    %445 = arith.divf %443, %444 : vector<8x128xf32>
    %446 = vector.extract_strided_slice %433 {offsets = [0, 256], sizes = [8, 128], strides = [1, 1]} : vector<8x512xf32> to vector<8x128xf32>
    %447 = math.tanh %446 : vector<8x128xf32>
    %448 = vector.extract_strided_slice %433 {offsets = [0, 384], sizes = [8, 128], strides = [1, 1]} : vector<8x512xf32> to vector<8x128xf32>
    %449 = arith.negf %448 : vector<8x128xf32>
    %450 = math.exp %449 : vector<8x128xf32>
    %cst_157 = arith.constant 1.000000e+00 : f32
    %451 = vector.broadcast %cst_157 : f32 to vector<8x128xf32>
    %452 = arith.addf %451, %450 : vector<8x128xf32>
    %453 = arith.divf %451, %452 : vector<8x128xf32>
    %454 = arith.mulf %445, %426 : vector<8x128xf32>
    %455 = arith.mulf %439, %447 : vector<8x128xf32>
    %456 = arith.addf %454, %455 : vector<8x128xf32>
    %457 = math.tanh %456 : vector<8x128xf32>
    %458 = arith.mulf %453, %457 : vector<8x128xf32>
    %c0_158 = arith.constant 0 : index
    %c128 = arith.constant 128 : index
    %459 = vector.load %arg15[%c0_158, %c128] : memref<8x1024xf32, #tpu.memory_space<vmem>>, vector<8x128xf32>
    tpu.vector_store %arg15[%c0_158, %c128], %458 {strides = array<i32>} : memref<8x1024xf32, #tpu.memory_space<vmem>>, vector<8x128xf32>,
    %460 = vector.extract_strided_slice %396 {offsets = [16, 0], sizes = [8, 512], strides = [1, 1]} : vector<64x512xf32> to vector<8x512xf32>
    %461 = arith.truncf %458 : vector<8x128xf32> to vector<8x128xbf16>
    %cst_159 = arith.constant dense<0.000000e+00> : vector<8x512xf32>
    %462 = tpu.matmul %461, %397, %cst_159 {dimension_numbers = #tpu.dot_dimension_numbers<[1], [0], [0], [1], [0, 0, 1, 1], [], []>} : vector<8x128xbf16>, vector<128x512xbf16>, vector<8x512xf32> -> vector<8x512xf32>
    %463 = arith.addf %460, %462 : vector<8x512xf32>
    %464 = vector.extract_strided_slice %463 {offsets = [0, 0], sizes = [8, 128], strides = [1, 1]} : vector<8x512xf32> to vector<8x128xf32>
    %465 = arith.negf %464 : vector<8x128xf32>
    %466 = math.exp %465 : vector<8x128xf32>
    %cst_160 = arith.constant 1.000000e+00 : f32
    %467 = vector.broadcast %cst_160 : f32 to vector<8x128xf32>
    %468 = arith.addf %467, %466 : vector<8x128xf32>
    %469 = arith.divf %467, %468 : vector<8x128xf32>
    %470 = vector.extract_strided_slice %463 {offsets = [0, 128], sizes = [8, 128], strides = [1, 1]} : vector<8x512xf32> to vector<8x128xf32>
    %471 = arith.negf %470 : vector<8x128xf32>
    %472 = math.exp %471 : vector<8x128xf32>
    %cst_161 = arith.constant 1.000000e+00 : f32
    %473 = vector.broadcast %cst_161 : f32 to vector<8x128xf32>
    %474 = arith.addf %473, %472 : vector<8x128xf32>
    %475 = arith.divf %473, %474 : vector<8x128xf32>
    %476 = vector.extract_strided_slice %463 {offsets = [0, 256], sizes = [8, 128], strides = [1, 1]} : vector<8x512xf32> to vector<8x128xf32>
    %477 = math.tanh %476 : vector<8x128xf32>
    %478 = vector.extract_strided_slice %463 {offsets = [0, 384], sizes = [8, 128], strides = [1, 1]} : vector<8x512xf32> to vector<8x128xf32>
    %479 = arith.negf %478 : vector<8x128xf32>
    %480 = math.exp %479 : vector<8x128xf32>
    %cst_162 = arith.constant 1.000000e+00 : f32
    %481 = vector.broadcast %cst_162 : f32 to vector<8x128xf32>
    %482 = arith.addf %481, %480 : vector<8x128xf32>
    %483 = arith.divf %481, %482 : vector<8x128xf32>
    %484 = arith.mulf %475, %456 : vector<8x128xf32>
    %485 = arith.mulf %469, %477 : vector<8x128xf32>
    %486 = arith.addf %484, %485 : vector<8x128xf32>
    %487 = math.tanh %486 : vector<8x128xf32>
    %488 = arith.mulf %483, %487 : vector<8x128xf32>
    %c0_163 = arith.constant 0 : index
    %c256 = arith.constant 256 : index
    %489 = vector.load %arg15[%c0_163, %c256] : memref<8x1024xf32, #tpu.memory_space<vmem>>, vector<8x128xf32>
    tpu.vector_store %arg15[%c0_163, %c256], %488 {strides = array<i32>} : memref<8x1024xf32, #tpu.memory_space<vmem>>, vector<8x128xf32>,
    %490 = vector.extract_strided_slice %396 {offsets = [24, 0], sizes = [8, 512], strides = [1, 1]} : vector<64x512xf32> to vector<8x512xf32>
    %491 = arith.truncf %488 : vector<8x128xf32> to vector<8x128xbf16>
    %cst_164 = arith.constant dense<0.000000e+00> : vector<8x512xf32>
    %492 = tpu.matmul %491, %397, %cst_164 {dimension_numbers = #tpu.dot_dimension_numbers<[1], [0], [0], [1], [0, 0, 1, 1], [], []>} : vector<8x128xbf16>, vector<128x512xbf16>, vector<8x512xf32> -> vector<8x512xf32>
    %493 = arith.addf %490, %492 : vector<8x512xf32>
    %494 = vector.extract_strided_slice %493 {offsets = [0, 0], sizes = [8, 128], strides = [1, 1]} : vector<8x512xf32> to vector<8x128xf32>
    %495 = arith.negf %494 : vector<8x128xf32>
    %496 = math.exp %495 : vector<8x128xf32>
    %cst_165 = arith.constant 1.000000e+00 : f32
    %497 = vector.broadcast %cst_165 : f32 to vector<8x128xf32>
    %498 = arith.addf %497, %496 : vector<8x128xf32>
    %499 = arith.divf %497, %498 : vector<8x128xf32>
    %500 = vector.extract_strided_slice %493 {offsets = [0, 128], sizes = [8, 128], strides = [1, 1]} : vector<8x512xf32> to vector<8x128xf32>
    %501 = arith.negf %500 : vector<8x128xf32>
    %502 = math.exp %501 : vector<8x128xf32>
    %cst_166 = arith.constant 1.000000e+00 : f32
    %503 = vector.broadcast %cst_166 : f32 to vector<8x128xf32>
    %504 = arith.addf %503, %502 : vector<8x128xf32>
    %505 = arith.divf %503, %504 : vector<8x128xf32>
    %506 = vector.extract_strided_slice %493 {offsets = [0, 256], sizes = [8, 128], strides = [1, 1]} : vector<8x512xf32> to vector<8x128xf32>
    %507 = math.tanh %506 : vector<8x128xf32>
    %508 = vector.extract_strided_slice %493 {offsets = [0, 384], sizes = [8, 128], strides = [1, 1]} : vector<8x512xf32> to vector<8x128xf32>
    %509 = arith.negf %508 : vector<8x128xf32>
    %510 = math.exp %509 : vector<8x128xf32>
    %cst_167 = arith.constant 1.000000e+00 : f32
    %511 = vector.broadcast %cst_167 : f32 to vector<8x128xf32>
    %512 = arith.addf %511, %510 : vector<8x128xf32>
    %513 = arith.divf %511, %512 : vector<8x128xf32>
    %514 = arith.mulf %505, %486 : vector<8x128xf32>
    %515 = arith.mulf %499, %507 : vector<8x128xf32>
    %516 = arith.addf %514, %515 : vector<8x128xf32>
    %517 = math.tanh %516 : vector<8x128xf32>
    %518 = arith.mulf %513, %517 : vector<8x128xf32>
    %c0_168 = arith.constant 0 : index
    %c384 = arith.constant 384 : index
    %519 = vector.load %arg15[%c0_168, %c384] : memref<8x1024xf32, #tpu.memory_space<vmem>>, vector<8x128xf32>
    tpu.vector_store %arg15[%c0_168, %c384], %518 {strides = array<i32>} : memref<8x1024xf32, #tpu.memory_space<vmem>>, vector<8x128xf32>,
    %520 = vector.extract_strided_slice %396 {offsets = [32, 0], sizes = [8, 512], strides = [1, 1]} : vector<64x512xf32> to vector<8x512xf32>
    %521 = arith.truncf %518 : vector<8x128xf32> to vector<8x128xbf16>
    %cst_169 = arith.constant dense<0.000000e+00> : vector<8x512xf32>
    %522 = tpu.matmul %521, %397, %cst_169 {dimension_numbers = #tpu.dot_dimension_numbers<[1], [0], [0], [1], [0, 0, 1, 1], [], []>} : vector<8x128xbf16>, vector<128x512xbf16>, vector<8x512xf32> -> vector<8x512xf32>
    %523 = arith.addf %520, %522 : vector<8x512xf32>
    %524 = vector.extract_strided_slice %523 {offsets = [0, 0], sizes = [8, 128], strides = [1, 1]} : vector<8x512xf32> to vector<8x128xf32>
    %525 = arith.negf %524 : vector<8x128xf32>
    %526 = math.exp %525 : vector<8x128xf32>
    %cst_170 = arith.constant 1.000000e+00 : f32
    %527 = vector.broadcast %cst_170 : f32 to vector<8x128xf32>
    %528 = arith.addf %527, %526 : vector<8x128xf32>
    %529 = arith.divf %527, %528 : vector<8x128xf32>
    %530 = vector.extract_strided_slice %523 {offsets = [0, 128], sizes = [8, 128], strides = [1, 1]} : vector<8x512xf32> to vector<8x128xf32>
    %531 = arith.negf %530 : vector<8x128xf32>
    %532 = math.exp %531 : vector<8x128xf32>
    %cst_171 = arith.constant 1.000000e+00 : f32
    %533 = vector.broadcast %cst_171 : f32 to vector<8x128xf32>
    %534 = arith.addf %533, %532 : vector<8x128xf32>
    %535 = arith.divf %533, %534 : vector<8x128xf32>
    %536 = vector.extract_strided_slice %523 {offsets = [0, 256], sizes = [8, 128], strides = [1, 1]} : vector<8x512xf32> to vector<8x128xf32>
    %537 = math.tanh %536 : vector<8x128xf32>
    %538 = vector.extract_strided_slice %523 {offsets = [0, 384], sizes = [8, 128], strides = [1, 1]} : vector<8x512xf32> to vector<8x128xf32>
    %539 = arith.negf %538 : vector<8x128xf32>
    %540 = math.exp %539 : vector<8x128xf32>
    %cst_172 = arith.constant 1.000000e+00 : f32
    %541 = vector.broadcast %cst_172 : f32 to vector<8x128xf32>
    %542 = arith.addf %541, %540 : vector<8x128xf32>
    %543 = arith.divf %541, %542 : vector<8x128xf32>
    %544 = arith.mulf %535, %516 : vector<8x128xf32>
    %545 = arith.mulf %529, %537 : vector<8x128xf32>
    %546 = arith.addf %544, %545 : vector<8x128xf32>
    %547 = math.tanh %546 : vector<8x128xf32>
    %548 = arith.mulf %543, %547 : vector<8x128xf32>
    %c0_173 = arith.constant 0 : index
    %c512 = arith.constant 512 : index
    %549 = vector.load %arg15[%c0_173, %c512] : memref<8x1024xf32, #tpu.memory_space<vmem>>, vector<8x128xf32>
    tpu.vector_store %arg15[%c0_173, %c512], %548 {strides = array<i32>} : memref<8x1024xf32, #tpu.memory_space<vmem>>, vector<8x128xf32>,
    %550 = vector.extract_strided_slice %396 {offsets = [40, 0], sizes = [8, 512], strides = [1, 1]} : vector<64x512xf32> to vector<8x512xf32>
    %551 = arith.truncf %548 : vector<8x128xf32> to vector<8x128xbf16>
    %cst_174 = arith.constant dense<0.000000e+00> : vector<8x512xf32>
    %552 = tpu.matmul %551, %397, %cst_174 {dimension_numbers = #tpu.dot_dimension_numbers<[1], [0], [0], [1], [0, 0, 1, 1], [], []>} : vector<8x128xbf16>, vector<128x512xbf16>, vector<8x512xf32> -> vector<8x512xf32>
    %553 = arith.addf %550, %552 : vector<8x512xf32>
    %554 = vector.extract_strided_slice %553 {offsets = [0, 0], sizes = [8, 128], strides = [1, 1]} : vector<8x512xf32> to vector<8x128xf32>
    %555 = arith.negf %554 : vector<8x128xf32>
    %556 = math.exp %555 : vector<8x128xf32>
    %cst_175 = arith.constant 1.000000e+00 : f32
    %557 = vector.broadcast %cst_175 : f32 to vector<8x128xf32>
    %558 = arith.addf %557, %556 : vector<8x128xf32>
    %559 = arith.divf %557, %558 : vector<8x128xf32>
    %560 = vector.extract_strided_slice %553 {offsets = [0, 128], sizes = [8, 128], strides = [1, 1]} : vector<8x512xf32> to vector<8x128xf32>
    %561 = arith.negf %560 : vector<8x128xf32>
    %562 = math.exp %561 : vector<8x128xf32>
    %cst_176 = arith.constant 1.000000e+00 : f32
    %563 = vector.broadcast %cst_176 : f32 to vector<8x128xf32>
    %564 = arith.addf %563, %562 : vector<8x128xf32>
    %565 = arith.divf %563, %564 : vector<8x128xf32>
    %566 = vector.extract_strided_slice %553 {offsets = [0, 256], sizes = [8, 128], strides = [1, 1]} : vector<8x512xf32> to vector<8x128xf32>
    %567 = math.tanh %566 : vector<8x128xf32>
    %568 = vector.extract_strided_slice %553 {offsets = [0, 384], sizes = [8, 128], strides = [1, 1]} : vector<8x512xf32> to vector<8x128xf32>
    %569 = arith.negf %568 : vector<8x128xf32>
    %570 = math.exp %569 : vector<8x128xf32>
    %cst_177 = arith.constant 1.000000e+00 : f32
    %571 = vector.broadcast %cst_177 : f32 to vector<8x128xf32>
    %572 = arith.addf %571, %570 : vector<8x128xf32>
    %573 = arith.divf %571, %572 : vector<8x128xf32>
    %574 = arith.mulf %565, %546 : vector<8x128xf32>
    %575 = arith.mulf %559, %567 : vector<8x128xf32>
    %576 = arith.addf %574, %575 : vector<8x128xf32>
    %577 = math.tanh %576 : vector<8x128xf32>
    %578 = arith.mulf %573, %577 : vector<8x128xf32>
    %c0_178 = arith.constant 0 : index
    %c640 = arith.constant 640 : index
    %579 = vector.load %arg15[%c0_178, %c640] : memref<8x1024xf32, #tpu.memory_space<vmem>>, vector<8x128xf32>
    tpu.vector_store %arg15[%c0_178, %c640], %578 {strides = array<i32>} : memref<8x1024xf32, #tpu.memory_space<vmem>>, vector<8x128xf32>,
    %580 = vector.extract_strided_slice %396 {offsets = [48, 0], sizes = [8, 512], strides = [1, 1]} : vector<64x512xf32> to vector<8x512xf32>
    %581 = arith.truncf %578 : vector<8x128xf32> to vector<8x128xbf16>
    %cst_179 = arith.constant dense<0.000000e+00> : vector<8x512xf32>
    %582 = tpu.matmul %581, %397, %cst_179 {dimension_numbers = #tpu.dot_dimension_numbers<[1], [0], [0], [1], [0, 0, 1, 1], [], []>} : vector<8x128xbf16>, vector<128x512xbf16>, vector<8x512xf32> -> vector<8x512xf32>
    %583 = arith.addf %580, %582 : vector<8x512xf32>
    %584 = vector.extract_strided_slice %583 {offsets = [0, 0], sizes = [8, 128], strides = [1, 1]} : vector<8x512xf32> to vector<8x128xf32>
    %585 = arith.negf %584 : vector<8x128xf32>
    %586 = math.exp %585 : vector<8x128xf32>
    %cst_180 = arith.constant 1.000000e+00 : f32
    %587 = vector.broadcast %cst_180 : f32 to vector<8x128xf32>
    %588 = arith.addf %587, %586 : vector<8x128xf32>
    %589 = arith.divf %587, %588 : vector<8x128xf32>
    %590 = vector.extract_strided_slice %583 {offsets = [0, 128], sizes = [8, 128], strides = [1, 1]} : vector<8x512xf32> to vector<8x128xf32>
    %591 = arith.negf %590 : vector<8x128xf32>
    %592 = math.exp %591 : vector<8x128xf32>
    %cst_181 = arith.constant 1.000000e+00 : f32
    %593 = vector.broadcast %cst_181 : f32 to vector<8x128xf32>
    %594 = arith.addf %593, %592 : vector<8x128xf32>
    %595 = arith.divf %593, %594 : vector<8x128xf32>
    %596 = vector.extract_strided_slice %583 {offsets = [0, 256], sizes = [8, 128], strides = [1, 1]} : vector<8x512xf32> to vector<8x128xf32>
    %597 = math.tanh %596 : vector<8x128xf32>
    %598 = vector.extract_strided_slice %583 {offsets = [0, 384], sizes = [8, 128], strides = [1, 1]} : vector<8x512xf32> to vector<8x128xf32>
    %599 = arith.negf %598 : vector<8x128xf32>
    %600 = math.exp %599 : vector<8x128xf32>
    %cst_182 = arith.constant 1.000000e+00 : f32
    %601 = vector.broadcast %cst_182 : f32 to vector<8x128xf32>
    %602 = arith.addf %601, %600 : vector<8x128xf32>
    %603 = arith.divf %601, %602 : vector<8x128xf32>
    %604 = arith.mulf %595, %576 : vector<8x128xf32>
    %605 = arith.mulf %589, %597 : vector<8x128xf32>
    %606 = arith.addf %604, %605 : vector<8x128xf32>
    %607 = math.tanh %606 : vector<8x128xf32>
    %608 = arith.mulf %603, %607 : vector<8x128xf32>
    %c0_183 = arith.constant 0 : index
    %c768 = arith.constant 768 : index
    %609 = vector.load %arg15[%c0_183, %c768] : memref<8x1024xf32, #tpu.memory_space<vmem>>, vector<8x128xf32>
    tpu.vector_store %arg15[%c0_183, %c768], %608 {strides = array<i32>} : memref<8x1024xf32, #tpu.memory_space<vmem>>, vector<8x128xf32>,
    %610 = vector.extract_strided_slice %396 {offsets = [56, 0], sizes = [8, 512], strides = [1, 1]} : vector<64x512xf32> to vector<8x512xf32>
    %611 = arith.truncf %608 : vector<8x128xf32> to vector<8x128xbf16>
    %cst_184 = arith.constant dense<0.000000e+00> : vector<8x512xf32>
    %612 = tpu.matmul %611, %397, %cst_184 {dimension_numbers = #tpu.dot_dimension_numbers<[1], [0], [0], [1], [0, 0, 1, 1], [], []>} : vector<8x128xbf16>, vector<128x512xbf16>, vector<8x512xf32> -> vector<8x512xf32>
    %613 = arith.addf %610, %612 : vector<8x512xf32>
    %614 = vector.extract_strided_slice %613 {offsets = [0, 0], sizes = [8, 128], strides = [1, 1]} : vector<8x512xf32> to vector<8x128xf32>
    %615 = arith.negf %614 : vector<8x128xf32>
    %616 = math.exp %615 : vector<8x128xf32>
    %cst_185 = arith.constant 1.000000e+00 : f32
    %617 = vector.broadcast %cst_185 : f32 to vector<8x128xf32>
    %618 = arith.addf %617, %616 : vector<8x128xf32>
    %619 = arith.divf %617, %618 : vector<8x128xf32>
    %620 = vector.extract_strided_slice %613 {offsets = [0, 128], sizes = [8, 128], strides = [1, 1]} : vector<8x512xf32> to vector<8x128xf32>
    %621 = arith.negf %620 : vector<8x128xf32>
    %622 = math.exp %621 : vector<8x128xf32>
    %cst_186 = arith.constant 1.000000e+00 : f32
    %623 = vector.broadcast %cst_186 : f32 to vector<8x128xf32>
    %624 = arith.addf %623, %622 : vector<8x128xf32>
    %625 = arith.divf %623, %624 : vector<8x128xf32>
    %626 = vector.extract_strided_slice %613 {offsets = [0, 256], sizes = [8, 128], strides = [1, 1]} : vector<8x512xf32> to vector<8x128xf32>
    %627 = math.tanh %626 : vector<8x128xf32>
    %628 = vector.extract_strided_slice %613 {offsets = [0, 384], sizes = [8, 128], strides = [1, 1]} : vector<8x512xf32> to vector<8x128xf32>
    %629 = arith.negf %628 : vector<8x128xf32>
    %630 = math.exp %629 : vector<8x128xf32>
    %cst_187 = arith.constant 1.000000e+00 : f32
    %631 = vector.broadcast %cst_187 : f32 to vector<8x128xf32>
    %632 = arith.addf %631, %630 : vector<8x128xf32>
    %633 = arith.divf %631, %632 : vector<8x128xf32>
    %634 = arith.mulf %625, %606 : vector<8x128xf32>
    %635 = arith.mulf %619, %627 : vector<8x128xf32>
    %636 = arith.addf %634, %635 : vector<8x128xf32>
    %637 = math.tanh %636 : vector<8x128xf32>
    %638 = arith.mulf %633, %637 : vector<8x128xf32>
    %c0_188 = arith.constant 0 : index
    %c896 = arith.constant 896 : index
    %639 = vector.load %arg15[%c0_188, %c896] : memref<8x1024xf32, #tpu.memory_space<vmem>>, vector<8x128xf32>
    tpu.vector_store %arg15[%c0_188, %c896], %638 {strides = array<i32>} : memref<8x1024xf32, #tpu.memory_space<vmem>>, vector<8x128xf32>,
    return
  }
}

</mosaic_0001>

<llo_original>
// kernel: har_forward.1
$region0: #{har_forward.1}
  #allocation0 [shape = 'u32[]', space=smem, size = 0x4, offset = 0x4, fixed_abs, tag = 'smem constant byte address 0x4 - core index']
  #allocation1 [shape = 'u32[144,128]{1,0:T(1,128)}', space=vmem, size = 0x12000, scoped, tag = 'internal scratch']
  #allocation2 [shape = 'f32[64,128]{1,0:T(8,128)}', space=vmem, size = 0x8000, scoped, tag = 'scratch operand']
  %s0 = inlined_call_operand.vmem [shape: f32[576,1], index: 0, kind: input, shape index: {}]
  %s1 = inlined_call_operand.vmem [shape: f32[5,64], index: 1, kind: input, shape index: {}]
  %s2 = inlined_call_operand.vmem [shape: f32[1,64], index: 2, kind: input, shape index: {}]
  %s3 = inlined_call_operand.vmem [shape: bf16[5,64,64], index: 3, kind: input, shape index: {}]
  %s4 = inlined_call_operand.vmem [shape: f32[1,64], index: 4, kind: input, shape index: {}]
  %s5 = inlined_call_operand.hbm [shape: bf16[5,64,64], index: 5, kind: input, shape index: {}]
  %s6 = inlined_call_operand.vmem [shape: f32[1,64], index: 6, kind: input, shape index: {}]
  %s7 = inlined_call_operand.hbm [shape: bf16[5,64,64], index: 7, kind: input, shape index: {}]
  %s8 = inlined_call_operand.vmem [shape: f32[1,64], index: 8, kind: input, shape index: {}]
  %s9 = inlined_call_operand.vmem [shape: bf16[3,64,512], index: 9, kind: input, shape index: {}]
  %s10 = inlined_call_operand.vmem [shape: bf16[128,512], index: 10, kind: input, shape index: {}]
  %s11 = inlined_call_operand.vmem [shape: f32[1,512], index: 11, kind: input, shape index: {}]
  %s12 = inlined_call_operand.hbm [shape: bf16[128,512], index: 12, kind: input, shape index: {}]
  %s13 = inlined_call_operand.hbm [shape: bf16[128,512], index: 13, kind: input, shape index: {}]
  %s14 = inlined_call_operand.vmem [shape: f32[1,512], index: 14, kind: input, shape index: {}]
  %s15 = inlined_call_operand.vmem [shape: f32[8,1024], index: 15, kind: output, shape index: {}]
  %s16 = sld [smem:[#allocation0]]
  $region86: #{har_forward.1} parent=0
    _
  %s18 = ssub.s32 1, %s16
  %s19 = scalar_select 0, %s18, %s16
  $region1: #{har_forward.1} parent=0
    #allocation3 [shape = 'u8[81920]{0}', space=vmem, size = 0x14000, scoped, tag = 'input window, operand 5, single buffered']
    #allocation4 [shape = 's32[1]{0}', space=sflag, size = 0x4, scoped, tag = 'scoped memory for har_forward.1']
    #allocation5 [shape = 'u8[81920]{0}', space=vmem, size = 0x14000, scoped, tag = 'input window, operand 7, single buffered']
    #allocation6 [shape = 's32[1]{0}', space=sflag, size = 0x4, scoped, tag = 'scoped memory for har_forward.1']
    #allocation7 [shape = 'u8[131072]{0}', space=vmem, size = 0x20000, scoped, tag = 'input window, operand 12, single buffered']
    #allocation8 [shape = 'u8[131072]{0}', space=vmem, size = 0x20000, scoped, tag = 'input window, operand 13, single buffered']
    #allocation9 [shape = 's32[1]{0}', space=sflag, size = 0x4, scoped, tag = 'scoped memory for har_forward.1']
    %20 = vsyncpa [#allocation4], 0
    %21 = vsyncpa [#allocation6], 0
    %22 = vsyncpa [#allocation9], 0
    // Predicated region
    $region2: #{har_forward.1} parent=1 // pred_check
      _
    $region3: #{har_forward.1} parent=1 // pred_check_branch
      %24 = sbr.rel (0) target = $region5
    $region4: #{har_forward.1} parent=1 // pred_region
      _
    $region5: #{har_forward.1} parent=1 // pred_fallthru
      _
    // Predicated region
    $region6: #{har_forward.1} parent=1 // pred_check
      _
    $region7: #{har_forward.1} parent=1 // pred_check_branch
      %26 = sbr.rel (0) target = $region9
    $region8: #{har_forward.1} parent=1 // pred_region
      _
    $region9: #{har_forward.1} parent=1 // pred_fallthru
      _
    // Predicated region
    $region10: #{har_forward.1} parent=1 // pred_check
      _
    $region11: #{har_forward.1} parent=1 // pred_check_branch
      %28 = sbr.rel (0) target = $region13
    $region12: #{har_forward.1} parent=1 // pred_region
      _
    $region13: #{har_forward.1} parent=1 // pred_fallthru
      _
    // Predicated region
    $region14: #{har_forward.1} parent=1 // pred_check
      _
    $region15: #{har_forward.1} parent=1 // pred_check_branch
      %30 = sbr.rel (0) target = $region17
    $region16: #{har_forward.1} parent=1 // pred_region
      _
    $region17: #{har_forward.1} parent=1 // pred_fallthru
      _
    // Predicated region
    $region18: #{har_forward.1} parent=1 // pred_check
      _
    $region19: #{har_forward.1} parent=1 // pred_check_branch
      %32 = sbr.rel (0) target = $region21
    $region20: #{har_forward.1} parent=1 // pred_region
      _
    $region21: #{har_forward.1} parent=1 // pred_fallthru
      _
    // Predicated region
    $region22: #{har_forward.1} parent=1 // pred_check
      _
    $region23: #{har_forward.1} parent=1 // pred_check_branch
      %34 = sbr.rel (0) target = $region25
    $region24: #{har_forward.1} parent=1 // pred_region
      %s36 = ssub.s32 2560, 2560
      %37 = vsyncadd [#allocation4], %s36
      %s38 = sshll.u32 [#allocation3], 4
      %s39 = int_to_ptr.vmem [resolvable:$true] %s38
      %44 = dma.hbm_to_vmem [thread:$0]  %s5, 2560, %s39, [#allocation4], 64, 64, 4
    $region25: #{har_forward.1} parent=1 // pred_fallthru
      _
    // Predicated region
    $region26: #{har_forward.1} parent=1 // pred_check
      _
    $region27: #{har_forward.1} parent=1 // pred_check_branch
      %46 = sbr.rel (0) target = $region29
    $region28: #{har_forward.1} parent=1 // pred_region
      _
    $region29: #{har_forward.1} parent=1 // pred_fallthru
      _
    // Predicated region
    $region30: #{har_forward.1} parent=1 // pred_check
      _
    $region31: #{har_forward.1} parent=1 // pred_check_branch
      %48 = sbr.rel (0) target = $region33
    $region32: #{har_forward.1} parent=1 // pred_region
      %s50 = ssub.s32 2560, 2560
      %51 = vsyncadd [#allocation6], %s50
      %s52 = sshll.u32 [#allocation5], 4
      %s53 = int_to_ptr.vmem [resolvable:$true] %s52
      %58 = dma.hbm_to_vmem [thread:$0]  %s7, 2560, %s53, [#allocation6], 64, 64, 4
    $region33: #{har_forward.1} parent=1 // pred_fallthru
      _
    // Predicated region
    $region34: #{har_forward.1} parent=1 // pred_check
      _
    $region35: #{har_forward.1} parent=1 // pred_check_branch
      %60 = sbr.rel (0) target = $region37
    $region36: #{har_forward.1} parent=1 // pred_region
      _
    $region37: #{har_forward.1} parent=1 // pred_fallthru
      _
    // Predicated region
    $region38: #{har_forward.1} parent=1 // pred_check
      _
    $region39: #{har_forward.1} parent=1 // pred_check_branch
      %62 = sbr.rel (0) target = $region41
    $region40: #{har_forward.1} parent=1 // pred_region
      _
    $region41: #{har_forward.1} parent=1 // pred_fallthru
      _
    // Predicated region
    $region42: #{har_forward.1} parent=1 // pred_check
      _
    $region43: #{har_forward.1} parent=1 // pred_check_branch
      %64 = sbr.rel (0) target = $region45
    $region44: #{har_forward.1} parent=1 // pred_region
      _
    $region45: #{har_forward.1} parent=1 // pred_fallthru
      _
    // Predicated region
    $region46: #{har_forward.1} parent=1 // pred_check
      _
    $region47: #{har_forward.1} parent=1 // pred_check_branch
      %66 = sbr.rel (0) target = $region49
    $region48: #{har_forward.1} parent=1 // pred_region
      _
    $region49: #{har_forward.1} parent=1 // pred_fallthru
      _
    // Predicated region
    $region50: #{har_forward.1} parent=1 // pred_check
      _
    $region51: #{har_forward.1} parent=1 // pred_check_branch
      %68 = sbr.rel (0) target = $region53
    $region52: #{har_forward.1} parent=1 // pred_region
      %s70 = ssub.s32 4096, 4096
      %71 = vsyncadd [#allocation6], %s70
      %s72 = sshll.u32 [#allocation7], 4
      %s73 = int_to_ptr.vmem [resolvable:$true] %s72
      %78 = dma.hbm_to_vmem [thread:$0]  %s12, 4096, %s73, [#allocation6], 256, 256, 16
    $region53: #{har_forward.1} parent=1 // pred_fallthru
      _
    // Predicated region
    $region54: #{har_forward.1} parent=1 // pred_check
      _
    $region55: #{har_forward.1} parent=1 // pred_check_branch
      %80 = sbr.rel (0) target = $region57
    $region56: #{har_forward.1} parent=1 // pred_region
      %s82 = ssub.s32 4096, 4096
      %83 = vsyncadd [#allocation9], %s82
      %s84 = sshll.u32 [#allocation8], 4
      %s85 = int_to_ptr.vmem [resolvable:$true] %s84
      %90 = dma.hbm_to_vmem [thread:$0]  %s13, 4096, %s85, [#allocation9], 256, 256, 16
    $region57: #{har_forward.1} parent=1 // pred_fallthru
      _
    // Predicated region
    $region58: #{har_forward.1} parent=1 // pred_check
      _
    $region59: #{har_forward.1} parent=1 // pred_check_branch
      %92 = sbr.rel (0) target = $region61
    $region60: #{har_forward.1} parent=1 // pred_region
      _
    $region61: #{har_forward.1} parent=1 // pred_fallthru
      _
    // Predicated region
    $region62: #{har_forward.1} parent=1 // pred_check
      _
    $region63: #{har_forward.1} parent=1 // pred_check_branch
      %94 = sbr.rel (0) target = $region65
    $region64: #{har_forward.1} parent=1 // pred_region
      %95 = dma.done [#allocation4], 2560
    $region65: #{har_forward.1} parent=1 // pred_fallthru
      _
    // Predicated region
    $region66: #{har_forward.1} parent=1 // pred_check
      _
    $region67: #{har_forward.1} parent=1 // pred_check_branch
      %97 = sbr.rel (0) target = $region69
    $region68: #{har_forward.1} parent=1 // pred_region
      %98 = dma.done [#allocation6], 2560
    $region69: #{har_forward.1} parent=1 // pred_fallthru
      _
    // Predicated region
    $region70: #{har_forward.1} parent=1 // pred_check
      _
    $region71: #{har_forward.1} parent=1 // pred_check_branch
      %100 = sbr.rel (0) target = $region73
    $region72: #{har_forward.1} parent=1 // pred_region
      %101 = dma.done [#allocation6], 4096
    $region73: #{har_forward.1} parent=1 // pred_fallthru
      _
    // Predicated region
    $region74: #{har_forward.1} parent=1 // pred_check
      _
    $region75: #{har_forward.1} parent=1 // pred_check_branch
      %103 = sbr.rel (0) target = $region77
    $region76: #{har_forward.1} parent=1 // pred_region
      %104 = dma.done [#allocation9], 4096
    $region77: #{har_forward.1} parent=1 // pred_fallthru
      _
    %v106 = vld [vmem:[%s0] sm:$0xff]
    %v107 = vld [vmem:[%s0 + $0x8] sm:$0xff]
    %v108 = vld [vmem:[%s0 + $0x10] sm:$0xff]
    %v109 = vld [vmem:[%s0 + $0x18] sm:$0xff]
    %v110 = vld [vmem:[%s0 + $0x20] sm:$0xff]
    %v111 = vld [vmem:[%s0 + $0x28] sm:$0xff]
    %v112 = vld [vmem:[%s0 + $0x30] sm:$0xff]
    %v113 = vld [vmem:[%s0 + $0x38] sm:$0xff]
    %v114 = vld [vmem:[%s0 + $0x40] sm:$0xff]
    %v115 = vld [vmem:[%s0 + $0x48] sm:$0xff]
    %v116 = vld [vmem:[%s0 + $0x50] sm:$0xff]
    %v117 = vld [vmem:[%s0 + $0x58] sm:$0xff]
    %v118 = vld [vmem:[%s0 + $0x60] sm:$0xff]
    %v119 = vld [vmem:[%s0 + $0x68] sm:$0xff]
    %v120 = vld [vmem:[%s0 + $0x70] sm:$0xff]
    %v121 = vld [vmem:[%s0 + $0x78] sm:$0xff]
    %v122 = vld [vmem:[%s0 + $0x80] sm:$0xff]
    %v123 = vld [vmem:[%s0 + $0x88] sm:$0xff]
    %v124 = vld [vmem:[%s0 + $0x90] sm:$0xff]
    %v125 = vld [vmem:[%s0 + $0x98] sm:$0xff]
    %v126 = vld [vmem:[%s0 + $0xa0] sm:$0xff]
    %v127 = vld [vmem:[%s0 + $0xa8] sm:$0xff]
    %v128 = vld [vmem:[%s0 + $0xb0] sm:$0xff]
    %v129 = vld [vmem:[%s0 + $0xb8] sm:$0xff]
    %v130 = vld [vmem:[%s0 + $0xc0] sm:$0xff]
    %v131 = vld [vmem:[%s0 + $0xc8] sm:$0xff]
    %v132 = vld [vmem:[%s0 + $0xd0] sm:$0xff]
    %v133 = vld [vmem:[%s0 + $0xd8] sm:$0xff]
    %v134 = vld [vmem:[%s0 + $0xe0] sm:$0xff]
    %v135 = vld [vmem:[%s0 + $0xe8] sm:$0xff]
    %v136 = vld [vmem:[%s0 + $0xf0] sm:$0xff]
    %v137 = vld [vmem:[%s0 + $0xf8] sm:$0xff]
    %v138 = vld [vmem:[%s0 + $0x100] sm:$0xff]
    %v139 = vld [vmem:[%s0 + $0x108] sm:$0xff]
    %v140 = vld [vmem:[%s0 + $0x110] sm:$0xff]
    %v141 = vld [vmem:[%s0 + $0x118] sm:$0xff]
    %v142 = vld [vmem:[%s0 + $0x120] sm:$0xff]
    %v143 = vld [vmem:[%s0 + $0x128] sm:$0xff]
    %v144 = vld [vmem:[%s0 + $0x130] sm:$0xff]
    %v145 = vld [vmem:[%s0 + $0x138] sm:$0xff]
    %v146 = vld [vmem:[%s0 + $0x140] sm:$0xff]
    %v147 = vld [vmem:[%s0 + $0x148] sm:$0xff]
    %v148 = vld [vmem:[%s0 + $0x150] sm:$0xff]
    %v149 = vld [vmem:[%s0 + $0x158] sm:$0xff]
    %v150 = vld [vmem:[%s0 + $0x160] sm:$0xff]
    %v151 = vld [vmem:[%s0 + $0x168] sm:$0xff]
    %v152 = vld [vmem:[%s0 + $0x170] sm:$0xff]
    %v153 = vld [vmem:[%s0 + $0x178] sm:$0xff]
    %v154 = vld [vmem:[%s0 + $0x180] sm:$0xff]
    %v155 = vld [vmem:[%s0 + $0x188] sm:$0xff]
    %v156 = vld [vmem:[%s0 + $0x190] sm:$0xff]
    %v157 = vld [vmem:[%s0 + $0x198] sm:$0xff]
    %v158 = vld [vmem:[%s0 + $0x1a0] sm:$0xff]
    %v159 = vld [vmem:[%s0 + $0x1a8] sm:$0xff]
    %v160 = vld [vmem:[%s0 + $0x1b0] sm:$0xff]
    %v161 = vld [vmem:[%s0 + $0x1b8] sm:$0xff]
    %v162 = vld [vmem:[%s0 + $0x1c0] sm:$0xff]
    %v163 = vld [vmem:[%s0 + $0x1c8] sm:$0xff]
    %v164 = vld [vmem:[%s0 + $0x1d0] sm:$0xff]
    %v165 = vld [vmem:[%s0 + $0x1d8] sm:$0xff]
    %v166 = vld [vmem:[%s0 + $0x1e0] sm:$0xff]
    %v167 = vld [vmem:[%s0 + $0x1e8] sm:$0xff]
    %v168 = vld [vmem:[%s0 + $0x1f0] sm:$0xff]
    %v169 = vld [vmem:[%s0 + $0x1f8] sm:$0xff]
    %v170 = vld [vmem:[%s0 + $0x200] sm:$0xff]
    %v171 = vld [vmem:[%s0 + $0x208] sm:$0xff]
    %v172 = vld [vmem:[%s0 + $0x210] sm:$0xff]
    %v173 = vld [vmem:[%s0 + $0x218] sm:$0xff]
    %v174 = vld [vmem:[%s0 + $0x220] sm:$0xff]
    %v175 = vld [vmem:[%s0 + $0x228] sm:$0xff]
    %v176 = vld [vmem:[%s0 + $0x230] sm:$0xff]
    %v177 = vld [vmem:[%s0 + $0x238] sm:$0xff]
    %v178 = vld [vmem:[%s1] sm:$0x1]
    %180 = vset.pattern.permute.xlu0 0
    %181 = vperm.xlu0 %180, %v106
    %v182 = vpop.permute.xlu0 %181
    %185 = vset.pattern.permute.xlu0 0
    %186 = vperm.xlu0 %185, %v107
    %v187 = vpop.permute.xlu0 %186
    %190 = vset.pattern.permute.xlu0 0
    %191 = vperm.xlu0 %190, %v108
    %v192 = vpop.permute.xlu0 %191
    %195 = vset.pattern.permute.xlu0 0
    %196 = vperm.xlu0 %195, %v109
    %v197 = vpop.permute.xlu0 %196
    %200 = vset.pattern.permute.xlu0 0
    %201 = vperm.xlu0 %200, %v110
    %v202 = vpop.permute.xlu0 %201
    %205 = vset.pattern.permute.xlu0 0
    %206 = vperm.xlu0 %205, %v111
    %v207 = vpop.permute.xlu0 %206
    %210 = vset.pattern.permute.xlu0 0
    %211 = vperm.xlu0 %210, %v112
    %v212 = vpop.permute.xlu0 %211
    %215 = vset.pattern.permute.xlu0 0
    %216 = vperm.xlu0 %215, %v113
    %v217 = vpop.permute.xlu0 %216
    %220 = vset.pattern.permute.xlu0 0
    %221 = vperm.xlu0 %220, %v114
    %v222 = vpop.permute.xlu0 %221
    %225 = vset.pattern.permute.xlu0 0
    %226 = vperm.xlu0 %225, %v115
    %v227 = vpop.permute.xlu0 %226
    %230 = vset.pattern.permute.xlu0 0
    %231 = vperm.xlu0 %230, %v116
    %v232 = vpop.permute.xlu0 %231
    %235 = vset.pattern.permute.xlu0 0
    %236 = vperm.xlu0 %235, %v117
    %v237 = vpop.permute.xlu0 %236
    %240 = vset.pattern.permute.xlu0 0
    %241 = vperm.xlu0 %240, %v118
    %v242 = vpop.permute.xlu0 %241
    %245 = vset.pattern.permute.xlu0 0
    %246 = vperm.xlu0 %245, %v119
    %v247 = vpop.permute.xlu0 %246
    %250 = vset.pattern.permute.xlu0 0
    %251 = vperm.xlu0 %250, %v120
    %v252 = vpop.permute.xlu0 %251
    %255 = vset.pattern.permute.xlu0 0
    %256 = vperm.xlu0 %255, %v121
    %v257 = vpop.permute.xlu0 %256
    %260 = vset.pattern.permute.xlu0 0
    %261 = vperm.xlu0 %260, %v122
    %v262 = vpop.permute.xlu0 %261
    %265 = vset.pattern.permute.xlu0 0
    %266 = vperm.xlu0 %265, %v123
    %v267 = vpop.permute.xlu0 %266
    %270 = vset.pattern.permute.xlu0 0
    %271 = vperm.xlu0 %270, %v124
    %v272 = vpop.permute.xlu0 %271
    %275 = vset.pattern.permute.xlu0 0
    %276 = vperm.xlu0 %275, %v125
    %v277 = vpop.permute.xlu0 %276
    %280 = vset.pattern.permute.xlu0 0
    %281 = vperm.xlu0 %280, %v126
    %v282 = vpop.permute.xlu0 %281
    %285 = vset.pattern.permute.xlu0 0
    %286 = vperm.xlu0 %285, %v127
    %v287 = vpop.permute.xlu0 %286
    %290 = vset.pattern.permute.xlu0 0
    %291 = vperm.xlu0 %290, %v128
    %v292 = vpop.permute.xlu0 %291
    %295 = vset.pattern.permute.xlu0 0
    %296 = vperm.xlu0 %295, %v129
    %v297 = vpop.permute.xlu0 %296
    %300 = vset.pattern.permute.xlu0 0
    %301 = vperm.xlu0 %300, %v130
    %v302 = vpop.permute.xlu0 %301
    %305 = vset.pattern.permute.xlu0 0
    %306 = vperm.xlu0 %305, %v131
    %v307 = vpop.permute.xlu0 %306
    %310 = vset.pattern.permute.xlu0 0
    %311 = vperm.xlu0 %310, %v132
    %v312 = vpop.permute.xlu0 %311
    %315 = vset.pattern.permute.xlu0 0
    %316 = vperm.xlu0 %315, %v133
    %v317 = vpop.permute.xlu0 %316
    %320 = vset.pattern.permute.xlu0 0
    %321 = vperm.xlu0 %320, %v134
    %v322 = vpop.permute.xlu0 %321
    %325 = vset.pattern.permute.xlu0 0
    %326 = vperm.xlu0 %325, %v135
    %v327 = vpop.permute.xlu0 %326
    %330 = vset.pattern.permute.xlu0 0
    %331 = vperm.xlu0 %330, %v136
    %v332 = vpop.permute.xlu0 %331
    %335 = vset.pattern.permute.xlu0 0
    %336 = vperm.xlu0 %335, %v137
    %v337 = vpop.permute.xlu0 %336
    %340 = vset.pattern.permute.xlu0 0
    %341 = vperm.xlu0 %340, %v138
    %v342 = vpop.permute.xlu0 %341
    %345 = vset.pattern.permute.xlu0 0
    %346 = vperm.xlu0 %345, %v139
    %v347 = vpop.permute.xlu0 %346
    %350 = vset.pattern.permute.xlu0 0
    %351 = vperm.xlu0 %350, %v140
    %v352 = vpop.permute.xlu0 %351
    %355 = vset.pattern.permute.xlu0 0
    %356 = vperm.xlu0 %355, %v141
    %v357 = vpop.permute.xlu0 %356
    %360 = vset.pattern.permute.xlu0 0
    %361 = vperm.xlu0 %360, %v142
    %v362 = vpop.permute.xlu0 %361
    %365 = vset.pattern.permute.xlu0 0
    %366 = vperm.xlu0 %365, %v143
    %v367 = vpop.permute.xlu0 %366
    %370 = vset.pattern.permute.xlu0 0
    %371 = vperm.xlu0 %370, %v144
    %v372 = vpop.permute.xlu0 %371
    %375 = vset.pattern.permute.xlu0 0
    %376 = vperm.xlu0 %375, %v145
    %v377 = vpop.permute.xlu0 %376
    %380 = vset.pattern.permute.xlu0 0
    %381 = vperm.xlu0 %380, %v146
    %v382 = vpop.permute.xlu0 %381
    %385 = vset.pattern.permute.xlu0 0
    %386 = vperm.xlu0 %385, %v147
    %v387 = vpop.permute.xlu0 %386
    %390 = vset.pattern.permute.xlu0 0
    %391 = vperm.xlu0 %390, %v148
    %v392 = vpop.permute.xlu0 %391
    %395 = vset.pattern.permute.xlu0 0
    %396 = vperm.xlu0 %395, %v149
    %v397 = vpop.permute.xlu0 %396
    %400 = vset.pattern.permute.xlu0 0
    %401 = vperm.xlu0 %400, %v150
    %v402 = vpop.permute.xlu0 %401
    %405 = vset.pattern.permute.xlu0 0
    %406 = vperm.xlu0 %405, %v151
    %v407 = vpop.permute.xlu0 %406
    %410 = vset.pattern.permute.xlu0 0
    %411 = vperm.xlu0 %410, %v152
    %v412 = vpop.permute.xlu0 %411
    %415 = vset.pattern.permute.xlu0 0
    %416 = vperm.xlu0 %415, %v153
    %v417 = vpop.permute.xlu0 %416
    %420 = vset.pattern.permute.xlu0 0
    %421 = vperm.xlu0 %420, %v154
    %v422 = vpop.permute.xlu0 %421
    %425 = vset.pattern.permute.xlu0 0
    %426 = vperm.xlu0 %425, %v155
    %v427 = vpop.permute.xlu0 %426
    %430 = vset.pattern.permute.xlu0 0
    %431 = vperm.xlu0 %430, %v156
    %v432 = vpop.permute.xlu0 %431
    %435 = vset.pattern.permute.xlu0 0
    %436 = vperm.xlu0 %435, %v157
    %v437 = vpop.permute.xlu0 %436
    %440 = vset.pattern.permute.xlu0 0
    %441 = vperm.xlu0 %440, %v158
    %v442 = vpop.permute.xlu0 %441
    %445 = vset.pattern.permute.xlu0 0
    %446 = vperm.xlu0 %445, %v159
    %v447 = vpop.permute.xlu0 %446
    %450 = vset.pattern.permute.xlu0 0
    %451 = vperm.xlu0 %450, %v160
    %v452 = vpop.permute.xlu0 %451
    %455 = vset.pattern.permute.xlu0 0
    %456 = vperm.xlu0 %455, %v161
    %v457 = vpop.permute.xlu0 %456
    %460 = vset.pattern.permute.xlu0 0
    %461 = vperm.xlu0 %460, %v162
    %v462 = vpop.permute.xlu0 %461
    %465 = vset.pattern.permute.xlu0 0
    %466 = vperm.xlu0 %465, %v163
    %v467 = vpop.permute.xlu0 %466
    %470 = vset.pattern.permute.xlu0 0
    %471 = vperm.xlu0 %470, %v164
    %v472 = vpop.permute.xlu0 %471
    %475 = vset.pattern.permute.xlu0 0
    %476 = vperm.xlu0 %475, %v165
    %v477 = vpop.permute.xlu0 %476
    %v479 = vlaneseq
    %v480 = vshrl.u32 %v479, 7
    %v481 = vsub.s32 0, %v480
    %v482 = vrot.slane %v178, %v481
    %v483 = vmul.f32 %v182, %v482
    %v484 = vmul.f32 %v187, %v482
    %v485 = vmul.f32 %v192, %v482
    %v486 = vmul.f32 %v197, %v482
    %v487 = vmul.f32 %v202, %v482
    %v488 = vmul.f32 %v207, %v482
    %v489 = vmul.f32 %v212, %v482
    %v490 = vmul.f32 %v217, %v482
    %v491 = vmul.f32 %v222, %v482
    %v492 = vmul.f32 %v227, %v482
    %v493 = vmul.f32 %v232, %v482
    %v494 = vmul.f32 %v237, %v482
    %v495 = vmul.f32 %v242, %v482
    %v496 = vmul.f32 %v247, %v482
    %v497 = vmul.f32 %v252, %v482
    %v498 = vmul.f32 %v257, %v482
    %v499 = vmul.f32 %v262, %v482
    %v500 = vmul.f32 %v267, %v482
    %v501 = vmul.f32 %v272, %v482
    %v502 = vmul.f32 %v277, %v482
    %v503 = vmul.f32 %v282, %v482
    %v504 = vmul.f32 %v287, %v482
    %v505 = vmul.f32 %v292, %v482
    %v506 = vmul.f32 %v297, %v482
    %v507 = vmul.f32 %v302, %v482
    %v508 = vmul.f32 %v307, %v482
    %v509 = vmul.f32 %v312, %v482
    %v510 = vmul.f32 %v317, %v482
    %v511 = vmul.f32 %v322, %v482
    %v512 = vmul.f32 %v327, %v482
    %v513 = vmul.f32 %v332, %v482
    %v514 = vmul.f32 %v337, %v482
    %v515 = vmul.f32 %v342, %v482
    %v516 = vmul.f32 %v347, %v482
    %v517 = vmul.f32 %v352, %v482
    %v518 = vmul.f32 %v357, %v482
    %v519 = vmul.f32 %v362, %v482
    %v520 = vmul.f32 %v367, %v482
    %v521 = vmul.f32 %v372, %v482
    %v522 = vmul.f32 %v377, %v482
    %v523 = vmul.f32 %v382, %v482
    %v524 = vmul.f32 %v387, %v482
    %v525 = vmul.f32 %v392, %v482
    %v526 = vmul.f32 %v397, %v482
    %v527 = vmul.f32 %v402, %v482
    %v528 = vmul.f32 %v407, %v482
    %v529 = vmul.f32 %v412, %v482
    %v530 = vmul.f32 %v417, %v482
    %v531 = vmul.f32 %v422, %v482
    %v532 = vmul.f32 %v427, %v482
    %v533 = vmul.f32 %v432, %v482
    %v534 = vmul.f32 %v437, %v482
    %v535 = vmul.f32 %v442, %v482
    %v536 = vmul.f32 %v447, %v482
    %v537 = vmul.f32 %v452, %v482
    %v538 = vmul.f32 %v457, %v482
    %v539 = vmul.f32 %v462, %v482
    %v540 = vmul.f32 %v467, %v482
    %v541 = vmul.f32 %v472, %v482
    %v542 = vmul.f32 %v477, %v482
    %v543 = vld [vmem:[%s1 + $0x1] sm:$0x1]
    %545 = vset.pattern.permute.xlu0 0
    %546 = vperm.xlu0 %545, %v166
    %v547 = vpop.permute.xlu0 %546
    %550 = vset.pattern.permute.xlu0 0
    %551 = vperm.xlu0 %550, %v167
    %v552 = vpop.permute.xlu0 %551
    %555 = vset.pattern.permute.xlu0 0
    %556 = vperm.xlu0 %555, %v168
    %v557 = vpop.permute.xlu0 %556
    %v559 = vlaneseq
    %v560 = vshrl.u32 %v559, 7
    %v561 = vsub.s32 0, %v560
    %v562 = vrot.slane %v543, %v561
    %v563 = vmul.f32 %v197, %v562
    %v564 = vmul.f32 %v202, %v562
    %v565 = vmul.f32 %v207, %v562
    %v566 = vmul.f32 %v212, %v562
    %v567 = vmul.f32 %v217, %v562
    %v568 = vmul.f32 %v222, %v562
    %v569 = vmul.f32 %v227, %v562
    %v570 = vmul.f32 %v232, %v562
    %v571 = vmul.f32 %v237, %v562
    %v572 = vmul.f32 %v242, %v562
    %v573 = vmul.f32 %v247, %v562
    %v574 = vmul.f32 %v252, %v562
    %v575 = vmul.f32 %v257, %v562
    %v576 = vmul.f32 %v262, %v562
    %v577 = vmul.f32 %v267, %v562
    %v578 = vmul.f32 %v272, %v562
    %v579 = vmul.f32 %v277, %v562
    %v580 = vmul.f32 %v282, %v562
    %v581 = vmul.f32 %v287, %v562
    %v582 = vmul.f32 %v292, %v562
    %v583 = vmul.f32 %v297, %v562
    %v584 = vmul.f32 %v302, %v562
    %v585 = vmul.f32 %v307, %v562
    %v586 = vmul.f32 %v312, %v562
    %v587 = vmul.f32 %v317, %v562
    %v588 = vmul.f32 %v322, %v562
    %v589 = vmul.f32 %v327, %v562
    %v590 = vmul.f32 %v332, %v562
    %v591 = vmul.f32 %v337, %v562
    %v592 = vmul.f32 %v342, %v562
    %v593 = vmul.f32 %v347, %v562
    %v594 = vmul.f32 %v352, %v562
    %v595 = vmul.f32 %v357, %v562
    %v596 = vmul.f32 %v362, %v562
    %v597 = vmul.f32 %v367, %v562
    %v598 = vmul.f32 %v372, %v562
    %v599 = vmul.f32 %v377, %v562
    %v600 = vmul.f32 %v382, %v562
    %v601 = vmul.f32 %v387, %v562
    %v602 = vmul.f32 %v392, %v562
    %v603 = vmul.f32 %v397, %v562
    %v604 = vmul.f32 %v402, %v562
    %v605 = vmul.f32 %v407, %v562
    %v606 = vmul.f32 %v412, %v562
    %v607 = vmul.f32 %v417, %v562
    %v608 = vmul.f32 %v422, %v562
    %v609 = vmul.f32 %v427, %v562
    %v610 = vmul.f32 %v432, %v562
    %v611 = vmul.f32 %v437, %v562
    %v612 = vmul.f32 %v442, %v562
    %v613 = vmul.f32 %v447, %v562
    %v614 = vmul.f32 %v452, %v562
    %v615 = vmul.f32 %v457, %v562
    %v616 = vmul.f32 %v462, %v562
    %v617 = vmul.f32 %v467, %v562
    %v618 = vmul.f32 %v472, %v562
    %v619 = vmul.f32 %v477, %v562
    %v620 = vmul.f32 %v547, %v562
    %v621 = vmul.f32 %v552, %v562
    %v622 = vmul.f32 %v557, %v562
    %v623 = vadd.f32 %v483, %v563
    %v624 = vadd.f32 %v484, %v564
    %v625 = vadd.f32 %v485, %v565
    %v626 = vadd.f32 %v486, %v566
    %v627 = vadd.f32 %v487, %v567
    %v628 = vadd.f32 %v488, %v568
    %v629 = vadd.f32 %v489, %v569
    %v630 = vadd.f32 %v490, %v570
    %v631 = vadd.f32 %v491, %v571
    %v632 = vadd.f32 %v492, %v572
    %v633 = vadd.f32 %v493, %v573
    %v634 = vadd.f32 %v494, %v574
    %v635 = vadd.f32 %v495, %v575
    %v636 = vadd.f32 %v496, %v576
    %v637 = vadd.f32 %v497, %v577
    %v638 = vadd.f32 %v498, %v578
    %v639 = vadd.f32 %v499, %v579
    %v640 = vadd.f32 %v500, %v580
    %v641 = vadd.f32 %v501, %v581
    %v642 = vadd.f32 %v502, %v582
    %v643 = vadd.f32 %v503, %v583
    %v644 = vadd.f32 %v504, %v584
    %v645 = vadd.f32 %v505, %v585
    %v646 = vadd.f32 %v506, %v586
    %v647 = vadd.f32 %v507, %v587
    %v648 = vadd.f32 %v508, %v588
    %v649 = vadd.f32 %v509, %v589
    %v650 = vadd.f32 %v510, %v590
    %v651 = vadd.f32 %v511, %v591
    %v652 = vadd.f32 %v512, %v592
    %v653 = vadd.f32 %v513, %v593
    %v654 = vadd.f32 %v514, %v594
    %v655 = vadd.f32 %v515, %v595
    %v656 = vadd.f32 %v516, %v596
    %v657 = vadd.f32 %v517, %v597
    %v658 = vadd.f32 %v518, %v598
    %v659 = vadd.f32 %v519, %v599
    %v660 = vadd.f32 %v520, %v600
    %v661 = vadd.f32 %v521, %v601
    %v662 = vadd.f32 %v522, %v602
    %v663 = vadd.f32 %v523, %v603
    %v664 = vadd.f32 %v524, %v604
    %v665 = vadd.f32 %v525, %v605
    %v666 = vadd.f32 %v526, %v606
    %v667 = vadd.f32 %v527, %v607
    %v668 = vadd.f32 %v528, %v608
    %v669 = vadd.f32 %v529, %v609
    %v670 = vadd.f32 %v530, %v610
    %v671 = vadd.f32 %v531, %v611
    %v672 = vadd.f32 %v532, %v612
    %v673 = vadd.f32 %v533, %v613
    %v674 = vadd.f32 %v534, %v614
    %v675 = vadd.f32 %v535, %v615
    %v676 = vadd.f32 %v536, %v616
    %v677 = vadd.f32 %v537, %v617
    %v678 = vadd.f32 %v538, %v618
    %v679 = vadd.f32 %v539, %v619
    %v680 = vadd.f32 %v540, %v620
    %v681 = vadd.f32 %v541, %v621
    %v682 = vadd.f32 %v542, %v622
    %v683 = vld [vmem:[%s1 + $0x2] sm:$0x1]
    %685 = vset.pattern.permute.xlu0 0
    %686 = vperm.xlu0 %685, %v169
    %v687 = vpop.permute.xlu0 %686
    %690 = vset.pattern.permute.xlu0 0
    %691 = vperm.xlu0 %690, %v170
    %v692 = vpop.permute.xlu0 %691
    %695 = vset.pattern.permute.xlu0 0
    %696 = vperm.xlu0 %695, %v171
    %v697 = vpop.permute.xlu0 %696
    %v699 = vlaneseq
    %v700 = vshrl.u32 %v699, 7
    %v701 = vsub.s32 0, %v700
    %v702 = vrot.slane %v683, %v701
    %v703 = vmul.f32 %v212, %v702
    %v704 = vmul.f32 %v217, %v702
    %v705 = vmul.f32 %v222, %v702
    %v706 = vmul.f32 %v227, %v702
    %v707 = vmul.f32 %v232, %v702
    %v708 = vmul.f32 %v237, %v702
    %v709 = vmul.f32 %v242, %v702
    %v710 = vmul.f32 %v247, %v702
    %v711 = vmul.f32 %v252, %v702
    %v712 = vmul.f32 %v257, %v702
    %v713 = vmul.f32 %v262, %v702
    %v714 = vmul.f32 %v267, %v702
    %v715 = vmul.f32 %v272, %v702
    %v716 = vmul.f32 %v277, %v702
    %v717 = vmul.f32 %v282, %v702
    %v718 = vmul.f32 %v287, %v702
    %v719 = vmul.f32 %v292, %v702
    %v720 = vmul.f32 %v297, %v702
    %v721 = vmul.f32 %v302, %v702
    %v722 = vmul.f32 %v307, %v702
    %v723 = vmul.f32 %v312, %v702
    %v724 = vmul.f32 %v317, %v702
    %v725 = vmul.f32 %v322, %v702
    %v726 = vmul.f32 %v327, %v702
    %v727 = vmul.f32 %v332, %v702
    %v728 = vmul.f32 %v337, %v702
    %v729 = vmul.f32 %v342, %v702
    %v730 = vmul.f32 %v347, %v702
    %v731 = vmul.f32 %v352, %v702
    %v732 = vmul.f32 %v357, %v702
    %v733 = vmul.f32 %v362, %v702
    %v734 = vmul.f32 %v367, %v702
    %v735 = vmul.f32 %v372, %v702
    %v736 = vmul.f32 %v377, %v702
    %v737 = vmul.f32 %v382, %v702
    %v738 = vmul.f32 %v387, %v702
    %v739 = vmul.f32 %v392, %v702
    %v740 = vmul.f32 %v397, %v702
    %v741 = vmul.f32 %v402, %v702
    %v742 = vmul.f32 %v407, %v702
    %v743 = vmul.f32 %v412, %v702
    %v744 = vmul.f32 %v417, %v702
    %v745 = vmul.f32 %v422, %v702
    %v746 = vmul.f32 %v427, %v702
    %v747 = vmul.f32 %v432, %v702
    %v748 = vmul.f32 %v437, %v702
    %v749 = vmul.f32 %v442, %v702
    %v750 = vmul.f32 %v447, %v702
    %v751 = vmul.f32 %v452, %v702
    %v752 = vmul.f32 %v457, %v702
    %v753 = vmul.f32 %v462, %v702
    %v754 = vmul.f32 %v467, %v702
    %v755 = vmul.f32 %v472, %v702
    %v756 = vmul.f32 %v477, %v702
    %v757 = vmul.f32 %v547, %v702
    %v758 = vmul.f32 %v552, %v702
    %v759 = vmul.f32 %v557, %v702
    %v760 = vmul.f32 %v687, %v702
    %v761 = vmul.f32 %v692, %v702
    %v762 = vmul.f32 %v697, %v702
    %v763 = vadd.f32 %v623, %v703
    %v764 = vadd.f32 %v624, %v704
    %v765 = vadd.f32 %v625, %v705
    %v766 = vadd.f32 %v626, %v706
    %v767 = vadd.f32 %v627, %v707
    %v768 = vadd.f32 %v628, %v708
    %v769 = vadd.f32 %v629, %v709
    %v770 = vadd.f32 %v630, %v710
    %v771 = vadd.f32 %v631, %v711
    %v772 = vadd.f32 %v632, %v712
    %v773 = vadd.f32 %v633, %v713
    %v774 = vadd.f32 %v634, %v714
    %v775 = vadd.f32 %v635, %v715
    %v776 = vadd.f32 %v636, %v716
    %v777 = vadd.f32 %v637, %v717
    %v778 = vadd.f32 %v638, %v718
    %v779 = vadd.f32 %v639, %v719
    %v780 = vadd.f32 %v640, %v720
    %v781 = vadd.f32 %v641, %v721
    %v782 = vadd.f32 %v642, %v722
    %v783 = vadd.f32 %v643, %v723
    %v784 = vadd.f32 %v644, %v724
    %v785 = vadd.f32 %v645, %v725
    %v786 = vadd.f32 %v646, %v726
    %v787 = vadd.f32 %v647, %v727
    %v788 = vadd.f32 %v648, %v728
    %v789 = vadd.f32 %v649, %v729
    %v790 = vadd.f32 %v650, %v730
    %v791 = vadd.f32 %v651, %v731
    %v792 = vadd.f32 %v652, %v732
    %v793 = vadd.f32 %v653, %v733
    %v794 = vadd.f32 %v654, %v734
    %v795 = vadd.f32 %v655, %v735
    %v796 = vadd.f32 %v656, %v736
    %v797 = vadd.f32 %v657, %v737
    %v798 = vadd.f32 %v658, %v738
    %v799 = vadd.f32 %v659, %v739
    %v800 = vadd.f32 %v660, %v740
    %v801 = vadd.f32 %v661, %v741
    %v802 = vadd.f32 %v662, %v742
    %v803 = vadd.f32 %v663, %v743
    %v804 = vadd.f32 %v664, %v744
    %v805 = vadd.f32 %v665, %v745
    %v806 = vadd.f32 %v666, %v746
    %v807 = vadd.f32 %v667, %v747
    %v808 = vadd.f32 %v668, %v748
    %v809 = vadd.f32 %v669, %v749
    %v810 = vadd.f32 %v670, %v750
    %v811 = vadd.f32 %v671, %v751
    %v812 = vadd.f32 %v672, %v752
    %v813 = vadd.f32 %v673, %v753
    %v814 = vadd.f32 %v674, %v754
    %v815 = vadd.f32 %v675, %v755
    %v816 = vadd.f32 %v676, %v756
    %v817 = vadd.f32 %v677, %v757
    %v818 = vadd.f32 %v678, %v758
    %v819 = vadd.f32 %v679, %v759
    %v820 = vadd.f32 %v680, %v760
    %v821 = vadd.f32 %v681, %v761
    %v822 = vadd.f32 %v682, %v762
    %v823 = vld [vmem:[%s1 + $0x3] sm:$0x1]
    %825 = vset.pattern.permute.xlu0 0
    %826 = vperm.xlu0 %825, %v172
    %v827 = vpop.permute.xlu0 %826
    %830 = vset.pattern.permute.xlu0 0
    %831 = vperm.xlu0 %830, %v173
    %v832 = vpop.permute.xlu0 %831
    %835 = vset.pattern.permute.xlu0 0
    %836 = vperm.xlu0 %835, %v174
    %v837 = vpop.permute.xlu0 %836
    %v839 = vlaneseq
    %v840 = vshrl.u32 %v839, 7
    %v841 = vsub.s32 0, %v840
    %v842 = vrot.slane %v823, %v841
    %v843 = vmul.f32 %v227, %v842
    %v844 = vmul.f32 %v232, %v842
    %v845 = vmul.f32 %v237, %v842
    %v846 = vmul.f32 %v242, %v842
    %v847 = vmul.f32 %v247, %v842
    %v848 = vmul.f32 %v252, %v842
    %v849 = vmul.f32 %v257, %v842
    %v850 = vmul.f32 %v262, %v842
    %v851 = vmul.f32 %v267, %v842
    %v852 = vmul.f32 %v272, %v842
    %v853 = vmul.f32 %v277, %v842
    %v854 = vmul.f32 %v282, %v842
    %v855 = vmul.f32 %v287, %v842
    %v856 = vmul.f32 %v292, %v842
    %v857 = vmul.f32 %v297, %v842
    %v858 = vmul.f32 %v302, %v842
    %v859 = vmul.f32 %v307, %v842
    %v860 = vmul.f32 %v312, %v842
    %v861 = vmul.f32 %v317, %v842
    %v862 = vmul.f32 %v322, %v842
    %v863 = vmul.f32 %v327, %v842
    %v864 = vmul.f32 %v332, %v842
    %v865 = vmul.f32 %v337, %v842
    %v866 = vmul.f32 %v342, %v842
    %v867 = vmul.f32 %v347, %v842
    %v868 = vmul.f32 %v352, %v842
    %v869 = vmul.f32 %v357, %v842
    %v870 = vmul.f32 %v362, %v842
    %v871 = vmul.f32 %v367, %v842
    %v872 = vmul.f32 %v372, %v842
    %v873 = vmul.f32 %v377, %v842
    %v874 = vmul.f32 %v382, %v842
    %v875 = vmul.f32 %v387, %v842
    %v876 = vmul.f32 %v392, %v842
    %v877 = vmul.f32 %v397, %v842
    %v878 = vmul.f32 %v402, %v842
    %v879 = vmul.f32 %v407, %v842
    %v880 = vmul.f32 %v412, %v842
    %v881 = vmul.f32 %v417, %v842
    %v882 = vmul.f32 %v422, %v842
    %v883 = vmul.f32 %v427, %v842
    %v884 = vmul.f32 %v432, %v842
    %v885 = vmul.f32 %v437, %v842
    %v886 = vmul.f32 %v442, %v842
    %v887 = vmul.f32 %v447, %v842
    %v888 = vmul.f32 %v452, %v842
    %v889 = vmul.f32 %v457, %v842
    %v890 = vmul.f32 %v462, %v842
    %v891 = vmul.f32 %v467, %v842
    %v892 = vmul.f32 %v472, %v842
    %v893 = vmul.f32 %v477, %v842
    %v894 = vmul.f32 %v547, %v842
    %v895 = vmul.f32 %v552, %v842
    %v896 = vmul.f32 %v557, %v842
    %v897 = vmul.f32 %v687, %v842
    %v898 = vmul.f32 %v692, %v842
    %v899 = vmul.f32 %v697, %v842
    %v900 = vmul.f32 %v827, %v842
    %v901 = vmul.f32 %v832, %v842
    %v902 = vmul.f32 %v837, %v842
    %v903 = vadd.f32 %v763, %v843
    %v904 = vadd.f32 %v764, %v844
    %v905 = vadd.f32 %v765, %v845
    %v906 = vadd.f32 %v766, %v846
    %v907 = vadd.f32 %v767, %v847
    %v908 = vadd.f32 %v768, %v848
    %v909 = vadd.f32 %v769, %v849
    %v910 = vadd.f32 %v770, %v850
    %v911 = vadd.f32 %v771, %v851
    %v912 = vadd.f32 %v772, %v852
    %v913 = vadd.f32 %v773, %v853
    %v914 = vadd.f32 %v774, %v854
    %v915 = vadd.f32 %v775, %v855
    %v916 = vadd.f32 %v776, %v856
    %v917 = vadd.f32 %v777, %v857
    %v918 = vadd.f32 %v778, %v858
    %v919 = vadd.f32 %v779, %v859
    %v920 = vadd.f32 %v780, %v860
    %v921 = vadd.f32 %v781, %v861
    %v922 = vadd.f32 %v782, %v862
    %v923 = vadd.f32 %v783, %v863
    %v924 = vadd.f32 %v784, %v864
    %v925 = vadd.f32 %v785, %v865
    %v926 = vadd.f32 %v786, %v866
    %v927 = vadd.f32 %v787, %v867
    %v928 = vadd.f32 %v788, %v868
    %v929 = vadd.f32 %v789, %v869
    %v930 = vadd.f32 %v790, %v870
    %v931 = vadd.f32 %v791, %v871
    %v932 = vadd.f32 %v792, %v872
    %v933 = vadd.f32 %v793, %v873
    %v934 = vadd.f32 %v794, %v874
    %v935 = vadd.f32 %v795, %v875
    %v936 = vadd.f32 %v796, %v876
    %v937 = vadd.f32 %v797, %v877
    %v938 = vadd.f32 %v798, %v878
    %v939 = vadd.f32 %v799, %v879
    %v940 = vadd.f32 %v800, %v880
    %v941 = vadd.f32 %v801, %v881
    %v942 = vadd.f32 %v802, %v882
    %v943 = vadd.f32 %v803, %v883
    %v944 = vadd.f32 %v804, %v884
    %v945 = vadd.f32 %v805, %v885
    %v946 = vadd.f32 %v806, %v886
    %v947 = vadd.f32 %v807, %v887
    %v948 = vadd.f32 %v808, %v888
    %v949 = vadd.f32 %v809, %v889
    %v950 = vadd.f32 %v810, %v890
    %v951 = vadd.f32 %v811, %v891
    %v952 = vadd.f32 %v812, %v892
    %v953 = vadd.f32 %v813, %v893
    %v954 = vadd.f32 %v814, %v894
    %v955 = vadd.f32 %v815, %v895
    %v956 = vadd.f32 %v816, %v896
    %v957 = vadd.f32 %v817, %v897
    %v958 = vadd.f32 %v818, %v898
    %v959 = vadd.f32 %v819, %v899
    %v960 = vadd.f32 %v820, %v900
    %v961 = vadd.f32 %v821, %v901
    %v962 = vadd.f32 %v822, %v902
    %v963 = vld [vmem:[%s1 + $0x4] sm:$0x1]
    %965 = vset.pattern.permute.xlu0 0
    %966 = vperm.xlu0 %965, %v175
    %v967 = vpop.permute.xlu0 %966
    %970 = vset.pattern.permute.xlu0 0
    %971 = vperm.xlu0 %970, %v176
    %v972 = vpop.permute.xlu0 %971
    %975 = vset.pattern.permute.xlu0 0
    %976 = vperm.xlu0 %975, %v177
    %v977 = vpop.permute.xlu0 %976
    %v979 = vlaneseq
    %v980 = vshrl.u32 %v979, 7
    %v981 = vsub.s32 0, %v980
    %v982 = vrot.slane %v963, %v981
    %v983 = vmul.f32 %v242, %v982
    %v984 = vmul.f32 %v247, %v982
    %v985 = vmul.f32 %v252, %v982
    %v986 = vmul.f32 %v257, %v982
    %v987 = vmul.f32 %v262, %v982
    %v988 = vmul.f32 %v267, %v982
    %v989 = vmul.f32 %v272, %v982
    %v990 = vmul.f32 %v277, %v982
    %v991 = vmul.f32 %v282, %v982
    %v992 = vmul.f32 %v287, %v982
    %v993 = vmul.f32 %v292, %v982
    %v994 = vmul.f32 %v297, %v982
    %v995 = vmul.f32 %v302, %v982
    %v996 = vmul.f32 %v307, %v982
    %v997 = vmul.f32 %v312, %v982
    %v998 = vmul.f32 %v317, %v982
    %v999 = vmul.f32 %v322, %v982
    %v1000 = vmul.f32 %v327, %v982
    %v1001 = vmul.f32 %v332, %v982
    %v1002 = vmul.f32 %v337, %v982
    %v1003 = vmul.f32 %v342, %v982
    %v1004 = vmul.f32 %v347, %v982
    %v1005 = vmul.f32 %v352, %v982
    %v1006 = vmul.f32 %v357, %v982
    %v1007 = vmul.f32 %v362, %v982
    %v1008 = vmul.f32 %v367, %v982
    %v1009 = vmul.f32 %v372, %v982
    %v1010 = vmul.f32 %v377, %v982
    %v1011 = vmul.f32 %v382, %v982
    %v1012 = vmul.f32 %v387, %v982
    %v1013 = vmul.f32 %v392, %v982
    %v1014 = vmul.f32 %v397, %v982
    %v1015 = vmul.f32 %v402, %v982
    %v1016 = vmul.f32 %v407, %v982
    %v1017 = vmul.f32 %v412, %v982
    %v1018 = vmul.f32 %v417, %v982
    %v1019 = vmul.f32 %v422, %v982
    %v1020 = vmul.f32 %v427, %v982
    %v1021 = vmul.f32 %v432, %v982
    %v1022 = vmul.f32 %v437, %v982
    %v1023 = vmul.f32 %v442, %v982
    %v1024 = vmul.f32 %v447, %v982
    %v1025 = vmul.f32 %v452, %v982
    %v1026 = vmul.f32 %v457, %v982
    %v1027 = vmul.f32 %v462, %v982
    %v1028 = vmul.f32 %v467, %v982
    %v1029 = vmul.f32 %v472, %v982
    %v1030 = vmul.f32 %v477, %v982
    %v1031 = vmul.f32 %v547, %v982
    %v1032 = vmul.f32 %v552, %v982
    %v1033 = vmul.f32 %v557, %v982
    %v1034 = vmul.f32 %v687, %v982
    %v1035 = vmul.f32 %v692, %v982
    %v1036 = vmul.f32 %v697, %v982
    %v1037 = vmul.f32 %v827, %v982
    %v1038 = vmul.f32 %v832, %v982
    %v1039 = vmul.f32 %v837, %v982
    %v1040 = vmul.f32 %v967, %v982
    %v1041 = vmul.f32 %v972, %v982
    %v1042 = vmul.f32 %v977, %v982
    %v1043 = vadd.f32 %v903, %v983
    %v1044 = vadd.f32 %v904, %v984
    %v1045 = vadd.f32 %v905, %v985
    %v1046 = vadd.f32 %v906, %v986
    %v1047 = vadd.f32 %v907, %v987
    %v1048 = vadd.f32 %v908, %v988
    %v1049 = vadd.f32 %v909, %v989
    %v1050 = vadd.f32 %v910, %v990
    %v1051 = vadd.f32 %v911, %v991
    %v1052 = vadd.f32 %v912, %v992
    %v1053 = vadd.f32 %v913, %v993
    %v1054 = vadd.f32 %v914, %v994
    %v1055 = vadd.f32 %v915, %v995
    %v1056 = vadd.f32 %v916, %v996
    %v1057 = vadd.f32 %v917, %v997
    %v1058 = vadd.f32 %v918, %v998
    %v1059 = vadd.f32 %v919, %v999
    %v1060 = vadd.f32 %v920, %v1000
    %v1061 = vadd.f32 %v921, %v1001
    %v1062 = vadd.f32 %v922, %v1002
    %v1063 = vadd.f32 %v923, %v1003
    %v1064 = vadd.f32 %v924, %v1004
    %v1065 = vadd.f32 %v925, %v1005
    %v1066 = vadd.f32 %v926, %v1006
    %v1067 = vadd.f32 %v927, %v1007
    %v1068 = vadd.f32 %v928, %v1008
    %v1069 = vadd.f32 %v929, %v1009
    %v1070 = vadd.f32 %v930, %v1010
    %v1071 = vadd.f32 %v931, %v1011
    %v1072 = vadd.f32 %v932, %v1012
    %v1073 = vadd.f32 %v933, %v1013
    %v1074 = vadd.f32 %v934, %v1014
    %v1075 = vadd.f32 %v935, %v1015
    %v1076 = vadd.f32 %v936, %v1016
    %v1077 = vadd.f32 %v937, %v1017
    %v1078 = vadd.f32 %v938, %v1018
    %v1079 = vadd.f32 %v939, %v1019
    %v1080 = vadd.f32 %v940, %v1020
    %v1081 = vadd.f32 %v941, %v1021
    %v1082 = vadd.f32 %v942, %v1022
    %v1083 = vadd.f32 %v943, %v1023
    %v1084 = vadd.f32 %v944, %v1024
    %v1085 = vadd.f32 %v945, %v1025
    %v1086 = vadd.f32 %v946, %v1026
    %v1087 = vadd.f32 %v947, %v1027
    %v1088 = vadd.f32 %v948, %v1028
    %v1089 = vadd.f32 %v949, %v1029
    %v1090 = vadd.f32 %v950, %v1030
    %v1091 = vadd.f32 %v951, %v1031
    %v1092 = vadd.f32 %v952, %v1032
    %v1093 = vadd.f32 %v953, %v1033
    %v1094 = vadd.f32 %v954, %v1034
    %v1095 = vadd.f32 %v955, %v1035
    %v1096 = vadd.f32 %v956, %v1036
    %v1097 = vadd.f32 %v957, %v1037
    %v1098 = vadd.f32 %v958, %v1038
    %v1099 = vadd.f32 %v959, %v1039
    %v1100 = vadd.f32 %v960, %v1040
    %v1101 = vadd.f32 %v961, %v1041
    %v1102 = vadd.f32 %v962, %v1042
    %v1103 = vld [vmem:[%s2] sm:$0x1]
    %v1105 = vlaneseq
    %v1106 = vshrl.u32 %v1105, 7
    %v1107 = vsub.s32 0, %v1106
    %v1108 = vrot.slane %v1103, %v1107
    %v1110 = vadd.f32 %v1043, %v1108
    %v1111 = vadd.f32 %v1044, %v1108
    %v1112 = vadd.f32 %v1045, %v1108
    %v1113 = vadd.f32 %v1046, %v1108
    %v1114 = vadd.f32 %v1047, %v1108
    %v1115 = vadd.f32 %v1048, %v1108
    %v1116 = vadd.f32 %v1049, %v1108
    %v1117 = vadd.f32 %v1050, %v1108
    %v1118 = vadd.f32 %v1051, %v1108
    %v1119 = vadd.f32 %v1052, %v1108
    %v1120 = vadd.f32 %v1053, %v1108
    %v1121 = vadd.f32 %v1054, %v1108
    %v1122 = vadd.f32 %v1055, %v1108
    %v1123 = vadd.f32 %v1056, %v1108
    %v1124 = vadd.f32 %v1057, %v1108
    %v1125 = vadd.f32 %v1058, %v1108
    %v1126 = vadd.f32 %v1059, %v1108
    %v1127 = vadd.f32 %v1060, %v1108
    %v1128 = vadd.f32 %v1061, %v1108
    %v1129 = vadd.f32 %v1062, %v1108
    %v1130 = vadd.f32 %v1063, %v1108
    %v1131 = vadd.f32 %v1064, %v1108
    %v1132 = vadd.f32 %v1065, %v1108
    %v1133 = vadd.f32 %v1066, %v1108
    %v1134 = vadd.f32 %v1067, %v1108
    %v1135 = vadd.f32 %v1068, %v1108
    %v1136 = vadd.f32 %v1069, %v1108
    %v1137 = vadd.f32 %v1070, %v1108
    %v1138 = vadd.f32 %v1071, %v1108
    %v1139 = vadd.f32 %v1072, %v1108
    %v1140 = vadd.f32 %v1073, %v1108
    %v1141 = vadd.f32 %v1074, %v1108
    %v1142 = vadd.f32 %v1075, %v1108
    %v1143 = vadd.f32 %v1076, %v1108
    %v1144 = vadd.f32 %v1077, %v1108
    %v1145 = vadd.f32 %v1078, %v1108
    %v1146 = vadd.f32 %v1079, %v1108
    %v1147 = vadd.f32 %v1080, %v1108
    %v1148 = vadd.f32 %v1081, %v1108
    %v1149 = vadd.f32 %v1082, %v1108
    %v1150 = vadd.f32 %v1083, %v1108
    %v1151 = vadd.f32 %v1084, %v1108
    %v1152 = vadd.f32 %v1085, %v1108
    %v1153 = vadd.f32 %v1086, %v1108
    %v1154 = vadd.f32 %v1087, %v1108
    %v1155 = vadd.f32 %v1088, %v1108
    %v1156 = vadd.f32 %v1089, %v1108
    %v1157 = vadd.f32 %v1090, %v1108
    %v1158 = vadd.f32 %v1091, %v1108
    %v1159 = vadd.f32 %v1092, %v1108
    %v1160 = vadd.f32 %v1093, %v1108
    %v1161 = vadd.f32 %v1094, %v1108
    %v1162 = vadd.f32 %v1095, %v1108
    %v1163 = vadd.f32 %v1096, %v1108
    %v1164 = vadd.f32 %v1097, %v1108
    %v1165 = vadd.f32 %v1098, %v1108
    %v1166 = vadd.f32 %v1099, %v1108
    %v1167 = vadd.f32 %v1100, %v1108
    %v1168 = vadd.f32 %v1101, %v1108
    %v1169 = vadd.f32 %v1102, %v1108
    %v1170 = vmax.f32 %v1110, 0.0
    %v1171 = vmax.f32 %v1111, 0.0
    %v1172 = vmax.f32 %v1112, 0.0
    %v1173 = vmax.f32 %v1113, 0.0
    %v1174 = vmax.f32 %v1114, 0.0
    %v1175 = vmax.f32 %v1115, 0.0
    %v1176 = vmax.f32 %v1116, 0.0
    %v1177 = vmax.f32 %v1117, 0.0
    %v1178 = vmax.f32 %v1118, 0.0
    %v1179 = vmax.f32 %v1119, 0.0
    %v1180 = vmax.f32 %v1120, 0.0
    %v1181 = vmax.f32 %v1121, 0.0
    %v1182 = vmax.f32 %v1122, 0.0
    %v1183 = vmax.f32 %v1123, 0.0
    %v1184 = vmax.f32 %v1124, 0.0
    %v1185 = vmax.f32 %v1125, 0.0
    %v1186 = vmax.f32 %v1126, 0.0
    %v1187 = vmax.f32 %v1127, 0.0
    %v1188 = vmax.f32 %v1128, 0.0
    %v1189 = vmax.f32 %v1129, 0.0
    %v1190 = vmax.f32 %v1130, 0.0
    %v1191 = vmax.f32 %v1131, 0.0
    %v1192 = vmax.f32 %v1132, 0.0
    %v1193 = vmax.f32 %v1133, 0.0
    %v1194 = vmax.f32 %v1134, 0.0
    %v1195 = vmax.f32 %v1135, 0.0
    %v1196 = vmax.f32 %v1136, 0.0
    %v1197 = vmax.f32 %v1137, 0.0
    %v1198 = vmax.f32 %v1138, 0.0
    %v1199 = vmax.f32 %v1139, 0.0
    %v1200 = vmax.f32 %v1140, 0.0
    %v1201 = vmax.f32 %v1141, 0.0
    %v1202 = vmax.f32 %v1142, 0.0
    %v1203 = vmax.f32 %v1143, 0.0
    %v1204 = vmax.f32 %v1144, 0.0
    %v1205 = vmax.f32 %v1145, 0.0
    %v1206 = vmax.f32 %v1146, 0.0
    %v1207 = vmax.f32 %v1147, 0.0
    %v1208 = vmax.f32 %v1148, 0.0
    %v1209 = vmax.f32 %v1149, 0.0
    %v1210 = vmax.f32 %v1150, 0.0
    %v1211 = vmax.f32 %v1151, 0.0
    %v1212 = vmax.f32 %v1152, 0.0
    %v1213 = vmax.f32 %v1153, 0.0
    %v1214 = vmax.f32 %v1154, 0.0
    %v1215 = vmax.f32 %v1155, 0.0
    %v1216 = vmax.f32 %v1156, 0.0
    %v1217 = vmax.f32 %v1157, 0.0
    %v1218 = vmax.f32 %v1158, 0.0
    %v1219 = vmax.f32 %v1159, 0.0
    %v1220 = vmax.f32 %v1160, 0.0
    %v1221 = vmax.f32 %v1161, 0.0
    %v1222 = vmax.f32 %v1162, 0.0
    %v1223 = vmax.f32 %v1163, 0.0
    %v1224 = vmax.f32 %v1164, 0.0
    %v1225 = vmax.f32 %v1165, 0.0
    %v1226 = vmax.f32 %v1166, 0.0
    %v1227 = vmax.f32 %v1167, 0.0
    %v1228 = vmax.f32 %v1168, 0.0
    %v1229 = vmax.f32 %v1169, 0.0
    %v1230 = vpack.c.bf16 %v1171, %v1170
    %v1231 = vpack.c.bf16 %v1173, %v1172
    %v1232 = vpack.c.bf16 %v1175, %v1174
    %v1233 = vpack.c.bf16 %v1177, %v1176
    %v1234 = vpack.c.bf16 %v1179, %v1178
    %v1235 = vpack.c.bf16 %v1181, %v1180
    %v1236 = vpack.c.bf16 %v1183, %v1182
    %v1237 = vpack.c.bf16 %v1185, %v1184
    %v1238 = vpack.c.bf16 %v1187, %v1186
    %v1239 = vpack.c.bf16 %v1189, %v1188
    %v1240 = vpack.c.bf16 %v1191, %v1190
    %v1241 = vpack.c.bf16 %v1193, %v1192
    %v1242 = vpack.c.bf16 %v1195, %v1194
    %v1243 = vpack.c.bf16 %v1197, %v1196
    %v1244 = vpack.c.bf16 %v1199, %v1198
    %v1245 = vpack.c.bf16 %v1201, %v1200
    %v1246 = vpack.c.bf16 %v1203, %v1202
    %v1247 = vpack.c.bf16 %v1205, %v1204
    %v1248 = vpack.c.bf16 %v1207, %v1206
    %v1249 = vpack.c.bf16 %v1209, %v1208
    %v1250 = vpack.c.bf16 %v1211, %v1210
    %v1251 = vpack.c.bf16 %v1213, %v1212
    %v1252 = vpack.c.bf16 %v1215, %v1214
    %v1253 = vpack.c.bf16 %v1217, %v1216
    %v1254 = vpack.c.bf16 %v1219, %v1218
    %v1255 = vpack.c.bf16 %v1221, %v1220
    %v1256 = vpack.c.bf16 %v1223, %v1222
    %v1257 = vpack.c.bf16 %v1225, %v1224
    %v1258 = vpack.c.bf16 %v1227, %v1226
    %v1259 = vpack.c.bf16 %v1229, %v1228
    %v1260 = vld [vmem:[%s3] sm:$0xf]
    %v1261 = vld [vmem:[%s3 + $0x4] sm:$0xf]
    %v1262 = vld [vmem:[%s3 + $0x8] sm:$0xf]
    %v1263 = vld [vmem:[%s3 + $0xc] sm:$0xf]
    %v1264 = vld [vmem:[%s3 + $0x10] sm:$0xf]
    %v1265 = vld [vmem:[%s3 + $0x14] sm:$0xf]
    %v1266 = vld [vmem:[%s3 + $0x18] sm:$0xf]
    %v1267 = vld [vmem:[%s3 + $0x1c] sm:$0xf]
    %s1268 = scalar_lea.vmem %s3, 32
    %v1269 = vld [vmem:[%s1268] sm:$0xf]
    %v1270 = vld [vmem:[%s1268 + $0x4] sm:$0xf]
    %v1271 = vld [vmem:[%s1268 + $0x8] sm:$0xf]
    %v1272 = vld [vmem:[%s1268 + $0xc] sm:$0xf]
    %v1273 = vld [vmem:[%s1268 + $0x10] sm:$0xf]
    %v1274 = vld [vmem:[%s1268 + $0x14] sm:$0xf]
    %v1275 = vld [vmem:[%s1268 + $0x18] sm:$0xf]
    %v1276 = vld [vmem:[%s1268 + $0x1c] sm:$0xf]
    %vm1302 = vcmask 1043456
    %v1303 = vrot.slane %v1231, 4
    %v1304 = vrot.slane %v1232, 4
    %v1305 = vsel %vm1302, %v1303, %v1304
    %v1306 = vrot.slane %v1233, 4
    %v1307 = vsel %vm1302, %v1304, %v1306
    %v1308 = vrot.slane %v1234, 4
    %v1309 = vsel %vm1302, %v1306, %v1308
    %v1310 = vrot.slane %v1235, 4
    %v1311 = vsel %vm1302, %v1308, %v1310
    %v1312 = vrot.slane %v1236, 4
    %v1313 = vsel %vm1302, %v1310, %v1312
    %v1314 = vrot.slane %v1237, 4
    %v1315 = vsel %vm1302, %v1312, %v1314
    %v1316 = vrot.slane %v1238, 4
    %v1317 = vsel %vm1302, %v1314, %v1316
    %v1318 = vrot.slane %v1239, 4
    %v1319 = vsel %vm1302, %v1316, %v1318
    %v1320 = vrot.slane %v1240, 4
    %v1321 = vsel %vm1302, %v1318, %v1320
    %v1322 = vrot.slane %v1241, 4
    %v1323 = vsel %vm1302, %v1320, %v1322
    %v1324 = vrot.slane %v1242, 4
    %v1325 = vsel %vm1302, %v1322, %v1324
    %v1326 = vrot.slane %v1243, 4
    %v1327 = vsel %vm1302, %v1324, %v1326
    %v1328 = vrot.slane %v1244, 4
    %v1329 = vsel %vm1302, %v1326, %v1328
    %v1330 = vrot.slane %v1245, 4
    %v1331 = vsel %vm1302, %v1328, %v1330
    %v1332 = vrot.slane %v1246, 4
    %v1333 = vsel %vm1302, %v1330, %v1332
    %v1334 = vrot.slane %v1247, 4
    %v1335 = vsel %vm1302, %v1332, %v1334
    %v1336 = vrot.slane %v1248, 4
    %v1337 = vsel %vm1302, %v1334, %v1336
    %v1338 = vrot.slane %v1249, 4
    %v1339 = vsel %vm1302, %v1336, %v1338
    %v1340 = vrot.slane %v1250, 4
    %v1341 = vsel %vm1302, %v1338, %v1340
    %v1342 = vrot.slane %v1251, 4
    %v1343 = vsel %vm1302, %v1340, %v1342
    %v1344 = vrot.slane %v1252, 4
    %v1345 = vsel %vm1302, %v1342, %v1344
    %v1346 = vrot.slane %v1253, 4
    %v1347 = vsel %vm1302, %v1344, %v1346
    %v1348 = vrot.slane %v1254, 4
    %v1349 = vsel %vm1302, %v1346, %v1348
    %v1350 = vrot.slane %v1255, 4
    %v1351 = vsel %vm1302, %v1348, %v1350
    %v1360 = vunpack.c.l.b16 %v1269
    %v1361 = vunpack.c.l.b16 %v1270
    %v1362 = vunpack.c.l.b16 %v1271
    %v1363 = vunpack.c.l.b16 %v1272
    %v1364 = vunpack.c.l.b16 %v1273
    %v1365 = vunpack.c.l.b16 %v1274
    %v1366 = vunpack.c.l.b16 %v1275
    %v1367 = vunpack.c.l.b16 %v1276
    %v1368 = vpack.c.b16 %v1361, %v1360
    %v1369 = vpack.c.b16 %v1363, %v1362
    %v1370 = vpack.c.b16 %v1365, %v1364
    %v1371 = vpack.c.b16 %v1367, %v1366
    %vm1376 = vcmask 523264
    %v1378 = vsel %vm1376, %v1305, 0
    %v1381 = vsel %vm1376, %v1307, 0
    %v1384 = vsel %vm1376, %v1309, 0
    %v1387 = vsel %vm1376, %v1311, 0
    %v1390 = vsel %vm1376, %v1313, 0
    %v1393 = vsel %vm1376, %v1315, 0
    %v1396 = vsel %vm1376, %v1317, 0
    %v1399 = vsel %vm1376, %v1319, 0
    %v1402 = vsel %vm1376, %v1321, 0
    %v1405 = vsel %vm1376, %v1323, 0
    %v1408 = vsel %vm1376, %v1325, 0
    %v1411 = vsel %vm1376, %v1327, 0
    %v1414 = vsel %vm1376, %v1329, 0
    %v1417 = vsel %vm1376, %v1331, 0
    %v1420 = vsel %vm1376, %v1333, 0
    %v1423 = vsel %vm1376, %v1335, 0
    %v1426 = vsel %vm1376, %v1337, 0
    %v1429 = vsel %vm1376, %v1339, 0
    %v1432 = vsel %vm1376, %v1341, 0
    %v1435 = vsel %vm1376, %v1343, 0
    %v1438 = vsel %vm1376, %v1345, 0
    %v1441 = vsel %vm1376, %v1347, 0
    %v1444 = vsel %vm1376, %v1349, 0
    %v1447 = vsel %vm1376, %v1351, 0
    %1449 = vmatprep.subr.bf16.mxu0 0
    %1450 = vmatpush1.bf16.msra.mxu0 %v1368
    %1451 = vmatprep.subr.bf16.mxu0 0
    %1452 = vmatpush1.bf16.msra.mxu0 %v1369
    %1453 = vmatprep.subr.bf16.mxu0 0
    %1454 = vmatpush1.bf16.msra.mxu0 %v1370
    %1455 = vmatprep.subr.bf16.mxu0 0
    %1456 = vmatpush1.bf16.msra.mxu0 %v1371
    %1457 = vmatprep.subr.bf16.mxu0 0
    %1458 = vmatpush1.bf16.msra.mxu0 0
    %1459 = vmatprep.subr.bf16.mxu0 0
    %1460 = vmatpush1.bf16.msra.mxu0 0
    %1461 = vmatprep.subr.bf16.mxu0 0
    %1462 = vmatpush1.bf16.msra.mxu0 0
    %1463 = vmatprep.subr.bf16.mxu0 0
    %1464 = vmatpush1.bf16.msra.mxu0 0
    %1465 = vmatprep.subr.bf16.mxu0 0
    %1466 = vmatpush1.bf16.msra.mxu0 0
    %1467 = vmatprep.subr.bf16.mxu0 0
    %1468 = vmatpush1.bf16.msra.mxu0 0
    %1469 = vmatprep.subr.bf16.mxu0 0
    %1470 = vmatpush1.bf16.msra.mxu0 0
    %1471 = vmatprep.subr.bf16.mxu0 0
    %1472 = vmatpush1.bf16.msra.mxu0 0
    %1473 = vmatprep.subr.bf16.mxu0 0
    %1474 = vmatpush1.bf16.msra.mxu0 0
    %1475 = vmatprep.subr.bf16.mxu0 0
    %1476 = vmatpush1.bf16.msra.mxu0 0
    %1477 = vmatprep.subr.bf16.mxu0 0
    %1478 = vmatpush1.bf16.msra.mxu0 0
    %1479 = vmatprep.subr.bf16.mxu0 0
    %1480 = vmatpush1.bf16.msra.mxu0 0
    %1481 = vmatprep.mubr.bf16.mxu0 0
    %1482 = vmatmul.mubr.bf16.gmra.mrb[0].mxu0 %v1378
    %v1483 = vpop.f32.mrb[0].mxu0
    %v1484 = vadd.f32 0.0, %v1483
    %v1485 = vpop.f32.mrb[0].mxu0
    %v1486 = vpop.f32.mrb[0].mxu0
    %v1487 = vadd.f32 0.0, %v1486
    %v1488 = vpop.f32.mrb[0].mxu0
    %1489 = vmatprep.mubr.bf16.mxu0 0
    %1490 = vmatmul.mubr.bf16.gmra.mrb[0].mxu0 %v1381
    %v1491 = vpop.f32.mrb[0].mxu0
    %v1492 = vadd.f32 0.0, %v1491
    %v1493 = vpop.f32.mrb[0].mxu0
    %v1494 = vpop.f32.mrb[0].mxu0
    %v1495 = vadd.f32 0.0, %v1494
    %v1496 = vpop.f32.mrb[0].mxu0
    %1497 = vmatprep.mubr.bf16.mxu0 0
    %1498 = vmatmul.mubr.bf16.gmra.mrb[0].mxu0 %v1384
    %v1499 = vpop.f32.mrb[0].mxu0
    %v1500 = vadd.f32 0.0, %v1499
    %v1501 = vpop.f32.mrb[0].mxu0
    %v1502 = vpop.f32.mrb[0].mxu0
    %v1503 = vadd.f32 0.0, %v1502
    %v1504 = vpop.f32.mrb[0].mxu0
    %1505 = vmatprep.mubr.bf16.mxu0 0
    %1506 = vmatmul.mubr.bf16.gmra.mrb[0].mxu0 %v1387
    %v1507 = vpop.f32.mrb[0].mxu0
    %v1508 = vadd.f32 0.0, %v1507
    %v1509 = vpop.f32.mrb[0].mxu0
    %v1510 = vpop.f32.mrb[0].mxu0
    %v1511 = vadd.f32 0.0, %v1510
    %v1512 = vpop.f32.mrb[0].mxu0
    %1513 = vmatprep.mubr.bf16.mxu0 0
    %1514 = vmatmul.mubr.bf16.gmra.mrb[0].mxu0 %v1390
    %v1515 = vpop.f32.mrb[0].mxu0
    %v1516 = vadd.f32 0.0, %v1515
    %v1517 = vpop.f32.mrb[0].mxu0
    %v1518 = vpop.f32.mrb[0].mxu0
    %v1519 = vadd.f32 0.0, %v1518
    %v1520 = vpop.f32.mrb[0].mxu0
    %1521 = vmatprep.mubr.bf16.mxu0 0
    %1522 = vmatmul.mubr.bf16.gmra.mrb[0].mxu0 %v1393
    %v1523 = vpop.f32.mrb[0].mxu0
    %v1524 = vadd.f32 0.0, %v1523
    %v1525 = vpop.f32.mrb[0].mxu0
    %v1526 = vpop.f32.mrb[0].mxu0
    %v1527 = vadd.f32 0.0, %v1526
    %v1528 = vpop.f32.mrb[0].mxu0
    %1529 = vmatprep.mubr.bf16.mxu0 0
    %1530 = vmatmul.mubr.bf16.gmra.mrb[0].mxu0 %v1396
    %v1531 = vpop.f32.mrb[0].mxu0
    %v1532 = vadd.f32 0.0, %v1531
    %v1533 = vpop.f32.mrb[0].mxu0
    %v1534 = vpop.f32.mrb[0].mxu0
    %v1535 = vadd.f32 0.0, %v1534
    %v1536 = vpop.f32.mrb[0].mxu0
    %1537 = vmatprep.mubr.bf16.mxu0 0
    %1538 = vmatmul.mubr.bf16.gmra.mrb[0].mxu0 %v1399
    %v1539 = vpop.f32.mrb[0].mxu0
    %v1540 = vadd.f32 0.0, %v1539
    %v1541 = vpop.f32.mrb[0].mxu0
    %v1542 = vpop.f32.mrb[0].mxu0
    %v1543 = vadd.f32 0.0, %v1542
    %v1544 = vpop.f32.mrb[0].mxu0
    %1545 = vmatprep.mubr.bf16.mxu0 0
    %1546 = vmatmul.mubr.bf16.gmra.mrb[0].mxu0 %v1402
    %v1547 = vpop.f32.mrb[0].mxu0
    %v1548 = vadd.f32 0.0, %v1547
    %v1549 = vpop.f32.mrb[0].mxu0
    %v1550 = vpop.f32.mrb[0].mxu0
    %v1551 = vadd.f32 0.0, %v1550
    %v1552 = vpop.f32.mrb[0].mxu0
    %1553 = vmatprep.mubr.bf16.mxu0 0
    %1554 = vmatmul.mubr.bf16.gmra.mrb[0].mxu0 %v1405
    %v1555 = vpop.f32.mrb[0].mxu0
    %v1556 = vadd.f32 0.0, %v1555
    %v1557 = vpop.f32.mrb[0].mxu0
    %v1558 = vpop.f32.mrb[0].mxu0
    %v1559 = vadd.f32 0.0, %v1558
    %v1560 = vpop.f32.mrb[0].mxu0
    %1561 = vmatprep.mubr.bf16.mxu0 0
    %1562 = vmatmul.mubr.bf16.gmra.mrb[0].mxu0 %v1408
    %v1563 = vpop.f32.mrb[0].mxu0
    %v1564 = vadd.f32 0.0, %v1563
    %v1565 = vpop.f32.mrb[0].mxu0
    %v1566 = vpop.f32.mrb[0].mxu0
    %v1567 = vadd.f32 0.0, %v1566
    %v1568 = vpop.f32.mrb[0].mxu0
    %1569 = vmatprep.mubr.bf16.mxu0 0
    %1570 = vmatmul.mubr.bf16.gmra.mrb[0].mxu0 %v1411
    %v1571 = vpop.f32.mrb[0].mxu0
    %v1572 = vadd.f32 0.0, %v1571
    %v1573 = vpop.f32.mrb[0].mxu0
    %v1574 = vpop.f32.mrb[0].mxu0
    %v1575 = vadd.f32 0.0, %v1574
    %v1576 = vpop.f32.mrb[0].mxu0
    %1577 = vmatprep.mubr.bf16.mxu0 0
    %1578 = vmatmul.mubr.bf16.gmra.mrb[0].mxu0 %v1414
    %v1579 = vpop.f32.mrb[0].mxu0
    %v1580 = vadd.f32 0.0, %v1579
    %v1581 = vpop.f32.mrb[0].mxu0
    %v1582 = vpop.f32.mrb[0].mxu0
    %v1583 = vadd.f32 0.0, %v1582
    %v1584 = vpop.f32.mrb[0].mxu0
    %1585 = vmatprep.mubr.bf16.mxu0 0
    %1586 = vmatmul.mubr.bf16.gmra.mrb[0].mxu0 %v1417
    %v1587 = vpop.f32.mrb[0].mxu0
    %v1588 = vadd.f32 0.0, %v1587
    %v1589 = vpop.f32.mrb[0].mxu0
    %v1590 = vpop.f32.mrb[0].mxu0
    %v1591 = vadd.f32 0.0, %v1590
    %v1592 = vpop.f32.mrb[0].mxu0
    %1593 = vmatprep.mubr.bf16.mxu0 0
    %1594 = vmatmul.mubr.bf16.gmra.mrb[0].mxu0 %v1420
    %v1595 = vpop.f32.mrb[0].mxu0
    %v1596 = vadd.f32 0.0, %v1595
    %v1597 = vpop.f32.mrb[0].mxu0
    %v1598 = vpop.f32.mrb[0].mxu0
    %v1599 = vadd.f32 0.0, %v1598
    %v1600 = vpop.f32.mrb[0].mxu0
    %1601 = vmatprep.mubr.bf16.mxu0 0
    %1602 = vmatmul.mubr.bf16.gmra.mrb[0].mxu0 %v1423
    %v1603 = vpop.f32.mrb[0].mxu0
    %v1604 = vadd.f32 0.0, %v1603
    %v1605 = vpop.f32.mrb[0].mxu0
    %v1606 = vpop.f32.mrb[0].mxu0
    %v1607 = vadd.f32 0.0, %v1606
    %v1608 = vpop.f32.mrb[0].mxu0
    %1609 = vmatprep.mubr.bf16.mxu0 0
    %1610 = vmatmul.mubr.bf16.gmra.mrb[0].mxu0 %v1426
    %v1611 = vpop.f32.mrb[0].mxu0
    %v1612 = vadd.f32 0.0, %v1611
    %v1613 = vpop.f32.mrb[0].mxu0
    %v1614 = vpop.f32.mrb[0].mxu0
    %v1615 = vadd.f32 0.0, %v1614
    %v1616 = vpop.f32.mrb[0].mxu0
    %1617 = vmatprep.mubr.bf16.mxu0 0
    %1618 = vmatmul.mubr.bf16.gmra.mrb[0].mxu0 %v1429
    %v1619 = vpop.f32.mrb[0].mxu0
    %v1620 = vadd.f32 0.0, %v1619
    %v1621 = vpop.f32.mrb[0].mxu0
    %v1622 = vpop.f32.mrb[0].mxu0
    %v1623 = vadd.f32 0.0, %v1622
    %v1624 = vpop.f32.mrb[0].mxu0
    %1625 = vmatprep.mubr.bf16.mxu0 0
    %1626 = vmatmul.mubr.bf16.gmra.mrb[0].mxu0 %v1432
    %v1627 = vpop.f32.mrb[0].mxu0
    %v1628 = vadd.f32 0.0, %v1627
    %v1629 = vpop.f32.mrb[0].mxu0
    %v1630 = vpop.f32.mrb[0].mxu0
    %v1631 = vadd.f32 0.0, %v1630
    %v1632 = vpop.f32.mrb[0].mxu0
    %1633 = vmatprep.mubr.bf16.mxu0 0
    %1634 = vmatmul.mubr.bf16.gmra.mrb[0].mxu0 %v1435
    %v1635 = vpop.f32.mrb[0].mxu0
    %v1636 = vadd.f32 0.0, %v1635
    %v1637 = vpop.f32.mrb[0].mxu0
    %v1638 = vpop.f32.mrb[0].mxu0
    %v1639 = vadd.f32 0.0, %v1638
    %v1640 = vpop.f32.mrb[0].mxu0
    %1641 = vmatprep.mubr.bf16.mxu0 0
    %1642 = vmatmul.mubr.bf16.gmra.mrb[0].mxu0 %v1438
    %v1643 = vpop.f32.mrb[0].mxu0
    %v1644 = vadd.f32 0.0, %v1643
    %v1645 = vpop.f32.mrb[0].mxu0
    %v1646 = vpop.f32.mrb[0].mxu0
    %v1647 = vadd.f32 0.0, %v1646
    %v1648 = vpop.f32.mrb[0].mxu0
    %1649 = vmatprep.mubr.bf16.mxu0 0
    %1650 = vmatmul.mubr.bf16.gmra.mrb[0].mxu0 %v1441
    %v1651 = vpop.f32.mrb[0].mxu0
    %v1652 = vadd.f32 0.0, %v1651
    %v1653 = vpop.f32.mrb[0].mxu0
    %v1654 = vpop.f32.mrb[0].mxu0
    %v1655 = vadd.f32 0.0, %v1654
    %v1656 = vpop.f32.mrb[0].mxu0
    %1657 = vmatprep.mubr.bf16.mxu0 0
    %1658 = vmatmul.mubr.bf16.gmra.mrb[0].mxu0 %v1444
    %v1659 = vpop.f32.mrb[0].mxu0
    %v1660 = vadd.f32 0.0, %v1659
    %v1661 = vpop.f32.mrb[0].mxu0
    %v1662 = vpop.f32.mrb[0].mxu0
    %v1663 = vadd.f32 0.0, %v1662
    %v1664 = vpop.f32.mrb[0].mxu0
    %1665 = vmatprep.mubr.bf16.mxu0 0
    %1666 = vmatmul.mubr.bf16.gmra.mrb[0].mxu0 %v1447
    %v1667 = vpop.f32.mrb[0].mxu0
    %v1668 = vadd.f32 0.0, %v1667
    %v1669 = vpop.f32.mrb[0].mxu0
    %v1670 = vpop.f32.mrb[0].mxu0
    %v1671 = vadd.f32 0.0, %v1670
    %v1672 = vpop.f32.mrb[0].mxu0
    %1673 = vdwg.mxu0
    %v1682 = vunpack.c.l.b16 %v1260
    %v1683 = vunpack.c.l.b16 %v1261
    %v1684 = vunpack.c.l.b16 %v1262
    %v1685 = vunpack.c.l.b16 %v1263
    %v1686 = vunpack.c.l.b16 %v1264
    %v1687 = vunpack.c.l.b16 %v1265
    %v1688 = vunpack.c.l.b16 %v1266
    %v1689 = vunpack.c.l.b16 %v1267
    %v1690 = vpack.c.b16 %v1683, %v1682
    %v1691 = vpack.c.b16 %v1685, %v1684
    %v1692 = vpack.c.b16 %v1687, %v1686
    %v1693 = vpack.c.b16 %v1689, %v1688
    %v1699 = vsel %vm1376, %v1230, 0
    %v1702 = vsel %vm1376, %v1231, 0
    %v1705 = vsel %vm1376, %v1232, 0
    %v1708 = vsel %vm1376, %v1233, 0
    %v1711 = vsel %vm1376, %v1234, 0
    %v1714 = vsel %vm1376, %v1235, 0
    %v1717 = vsel %vm1376, %v1236, 0
    %v1720 = vsel %vm1376, %v1237, 0
    %v1723 = vsel %vm1376, %v1238, 0
    %v1726 = vsel %vm1376, %v1239, 0
    %v1729 = vsel %vm1376, %v1240, 0
    %v1732 = vsel %vm1376, %v1241, 0
    %v1735 = vsel %vm1376, %v1242, 0
    %v1738 = vsel %vm1376, %v1243, 0
    %v1741 = vsel %vm1376, %v1244, 0
    %v1744 = vsel %vm1376, %v1245, 0
    %v1747 = vsel %vm1376, %v1246, 0
    %v1750 = vsel %vm1376, %v1247, 0
    %v1753 = vsel %vm1376, %v1248, 0
    %v1756 = vsel %vm1376, %v1249, 0
    %v1759 = vsel %vm1376, %v1250, 0
    %v1762 = vsel %vm1376, %v1251, 0
    %v1765 = vsel %vm1376, %v1252, 0
    %v1768 = vsel %vm1376, %v1253, 0
    %1770 = vmatprep.subr.bf16.mxu0 0
    %1771 = vmatpush1.bf16.msra.mxu0 %v1690
    %1772 = vmatprep.subr.bf16.mxu0 0
    %1773 = vmatpush1.bf16.msra.mxu0 %v1691
    %1774 = vmatprep.subr.bf16.mxu0 0
    %1775 = vmatpush1.bf16.msra.mxu0 %v1692
    %1776 = vmatprep.subr.bf16.mxu0 0
    %1777 = vmatpush1.bf16.msra.mxu0 %v1693
    %1778 = vmatprep.subr.bf16.mxu0 0
    %1779 = vmatpush1.bf16.msra.mxu0 0
    %1780 = vmatprep.subr.bf16.mxu0 0
    %1781 = vmatpush1.bf16.msra.mxu0 0
    %1782 = vmatprep.subr.bf16.mxu0 0
    %1783 = vmatpush1.bf16.msra.mxu0 0
    %1784 = vmatprep.subr.bf16.mxu0 0
    %1785 = vmatpush1.bf16.msra.mxu0 0
    %1786 = vmatprep.subr.bf16.mxu0 0
    %1787 = vmatpush1.bf16.msra.mxu0 0
    %1788 = vmatprep.subr.bf16.mxu0 0
    %1789 = vmatpush1.bf16.msra.mxu0 0
    %1790 = vmatprep.subr.bf16.mxu0 0
    %1791 = vmatpush1.bf16.msra.mxu0 0
    %1792 = vmatprep.subr.bf16.mxu0 0
    %1793 = vmatpush1.bf16.msra.mxu0 0
    %1794 = vmatprep.subr.bf16.mxu0 0
    %1795 = vmatpush1.bf16.msra.mxu0 0
    %1796 = vmatprep.subr.bf16.mxu0 0
    %1797 = vmatpush1.bf16.msra.mxu0 0
    %1798 = vmatprep.subr.bf16.mxu0 0
    %1799 = vmatpush1.bf16.msra.mxu0 0
    %1800 = vmatprep.subr.bf16.mxu0 0
    %1801 = vmatpush1.bf16.msra.mxu0 0
    %1802 = vmatprep.mubr.bf16.mxu0 0
    %1803 = vmatmul.mubr.bf16.gmra.mrb[0].mxu0 %v1699
    %v1804 = vpop.f32.mrb[0].mxu0
    %v1805 = vadd.f32 %v1484, %v1804
    %v1806 = vpop.f32.mrb[0].mxu0
    %v1807 = vpop.f32.mrb[0].mxu0
    %v1808 = vadd.f32 %v1487, %v1807
    %v1809 = vpop.f32.mrb[0].mxu0
    %1810 = vmatprep.mubr.bf16.mxu0 0
    %1811 = vmatmul.mubr.bf16.gmra.mrb[0].mxu0 %v1702
    %v1812 = vpop.f32.mrb[0].mxu0
    %v1813 = vadd.f32 %v1492, %v1812
    %v1814 = vpop.f32.mrb[0].mxu0
    %v1815 = vpop.f32.mrb[0].mxu0
    %v1816 = vadd.f32 %v1495, %v1815
    %v1817 = vpop.f32.mrb[0].mxu0
    %1818 = vmatprep.mubr.bf16.mxu0 0
    %1819 = vmatmul.mubr.bf16.gmra.mrb[0].mxu0 %v1705
    %v1820 = vpop.f32.mrb[0].mxu0
    %v1821 = vadd.f32 %v1500, %v1820
    %v1822 = vpop.f32.mrb[0].mxu0
    %v1823 = vpop.f32.mrb[0].mxu0
    %v1824 = vadd.f32 %v1503, %v1823
    %v1825 = vpop.f32.mrb[0].mxu0
    %1826 = vmatprep.mubr.bf16.mxu0 0
    %1827 = vmatmul.mubr.bf16.gmra.mrb[0].mxu0 %v1708
    %v1828 = vpop.f32.mrb[0].mxu0
    %v1829 = vadd.f32 %v1508, %v1828
    %v1830 = vpop.f32.mrb[0].mxu0
    %v1831 = vpop.f32.mrb[0].mxu0
    %v1832 = vadd.f32 %v1511, %v1831
    %v1833 = vpop.f32.mrb[0].mxu0
    %1834 = vmatprep.mubr.bf16.mxu0 0
    %1835 = vmatmul.mubr.bf16.gmra.mrb[0].mxu0 %v1711
    %v1836 = vpop.f32.mrb[0].mxu0
    %v1837 = vadd.f32 %v1516, %v1836
    %v1838 = vpop.f32.mrb[0].mxu0
    %v1839 = vpop.f32.mrb[0].mxu0
    %v1840 = vadd.f32 %v1519, %v1839
    %v1841 = vpop.f32.mrb[0].mxu0
    %1842 = vmatprep.mubr.bf16.mxu0 0
    %1843 = vmatmul.mubr.bf16.gmra.mrb[0].mxu0 %v1714
    %v1844 = vpop.f32.mrb[0].mxu0
    %v1845 = vadd.f32 %v1524, %v1844
    %v1846 = vpop.f32.mrb[0].mxu0
    %v1847 = vpop.f32.mrb[0].mxu0
    %v1848 = vadd.f32 %v1527, %v1847
    %v1849 = vpop.f32.mrb[0].mxu0
    %1850 = vmatprep.mubr.bf16.mxu0 0
    %1851 = vmatmul.mubr.bf16.gmra.mrb[0].mxu0 %v1717
    %v1852 = vpop.f32.mrb[0].mxu0
    %v1853 = vadd.f32 %v1532, %v1852
    %v1854 = vpop.f32.mrb[0].mxu0
    %v1855 = vpop.f32.mrb[0].mxu0
    %v1856 = vadd.f32 %v1535, %v1855
    %v1857 = vpop.f32.mrb[0].mxu0
    %1858 = vmatprep.mubr.bf16.mxu0 0
    %1859 = vmatmul.mubr.bf16.gmra.mrb[0].mxu0 %v1720
    %v1860 = vpop.f32.mrb[0].mxu0
    %v1861 = vadd.f32 %v1540, %v1860
    %v1862 = vpop.f32.mrb[0].mxu0
    %v1863 = vpop.f32.mrb[0].mxu0
    %v1864 = vadd.f32 %v1543, %v1863
    %v1865 = vpop.f32.mrb[0].mxu0
    %1866 = vmatprep.mubr.bf16.mxu0 0
    %1867 = vmatmul.mubr.bf16.gmra.mrb[0].mxu0 %v1723
    %v1868 = vpop.f32.mrb[0].mxu0
    %v1869 = vadd.f32 %v1548, %v1868
    %v1870 = vpop.f32.mrb[0].mxu0
    %v1871 = vpop.f32.mrb[0].mxu0
    %v1872 = vadd.f32 %v1551, %v1871
    %v1873 = vpop.f32.mrb[0].mxu0
    %1874 = vmatprep.mubr.bf16.mxu0 0
    %1875 = vmatmul.mubr.bf16.gmra.mrb[0].mxu0 %v1726
    %v1876 = vpop.f32.mrb[0].mxu0
    %v1877 = vadd.f32 %v1556, %v1876
    %v1878 = vpop.f32.mrb[0].mxu0
    %v1879 = vpop.f32.mrb[0].mxu0
    %v1880 = vadd.f32 %v1559, %v1879
    %v1881 = vpop.f32.mrb[0].mxu0
    %1882 = vmatprep.mubr.bf16.mxu0 0
    %1883 = vmatmul.mubr.bf16.gmra.mrb[0].mxu0 %v1729
    %v1884 = vpop.f32.mrb[0].mxu0
    %v1885 = vadd.f32 %v1564, %v1884
    %v1886 = vpop.f32.mrb[0].mxu0
    %v1887 = vpop.f32.mrb[0].mxu0
    %v1888 = vadd.f32 %v1567, %v1887
    %v1889 = vpop.f32.mrb[0].mxu0
    %1890 = vmatprep.mubr.bf16.mxu0 0
    %1891 = vmatmul.mubr.bf16.gmra.mrb[0].mxu0 %v1732
    %v1892 = vpop.f32.mrb[0].mxu0
    %v1893 = vadd.f32 %v1572, %v1892
    %v1894 = vpop.f32.mrb[0].mxu0
    %v1895 = vpop.f32.mrb[0].mxu0
    %v1896 = vadd.f32 %v1575, %v1895
    %v1897 = vpop.f32.mrb[0].mxu0
    %1898 = vmatprep.mubr.bf16.mxu0 0
    %1899 = vmatmul.mubr.bf16.gmra.mrb[0].mxu0 %v1735
    %v1900 = vpop.f32.mrb[0].mxu0
    %v1901 = vadd.f32 %v1580, %v1900
    %v1902 = vpop.f32.mrb[0].mxu0
    %v1903 = vpop.f32.mrb[0].mxu0
    %v1904 = vadd.f32 %v1583, %v1903
    %v1905 = vpop.f32.mrb[0].mxu0
    %1906 = vmatprep.mubr.bf16.mxu0 0
    %1907 = vmatmul.mubr.bf16.gmra.mrb[0].mxu0 %v1738
    %v1908 = vpop.f32.mrb[0].mxu0
    %v1909 = vadd.f32 %v1588, %v1908
    %v1910 = vpop.f32.mrb[0].mxu0
    %v1911 = vpop.f32.mrb[0].mxu0
    %v1912 = vadd.f32 %v1591, %v1911
    %v1913 = vpop.f32.mrb[0].mxu0
    %1914 = vmatprep.mubr.bf16.mxu0 0
    %1915 = vmatmul.mubr.bf16.gmra.mrb[0].mxu0 %v1741
    %v1916 = vpop.f32.mrb[0].mxu0
    %v1917 = vadd.f32 %v1596, %v1916
    %v1918 = vpop.f32.mrb[0].mxu0
    %v1919 = vpop.f32.mrb[0].mxu0
    %v1920 = vadd.f32 %v1599, %v1919
    %v1921 = vpop.f32.mrb[0].mxu0
    %1922 = vmatprep.mubr.bf16.mxu0 0
    %1923 = vmatmul.mubr.bf16.gmra.mrb[0].mxu0 %v1744
    %v1924 = vpop.f32.mrb[0].mxu0
    %v1925 = vadd.f32 %v1604, %v1924
    %v1926 = vpop.f32.mrb[0].mxu0
    %v1927 = vpop.f32.mrb[0].mxu0
    %v1928 = vadd.f32 %v1607, %v1927
    %v1929 = vpop.f32.mrb[0].mxu0
    %1930 = vmatprep.mubr.bf16.mxu0 0
    %1931 = vmatmul.mubr.bf16.gmra.mrb[0].mxu0 %v1747
    %v1932 = vpop.f32.mrb[0].mxu0
    %v1933 = vadd.f32 %v1612, %v1932
    %v1934 = vpop.f32.mrb[0].mxu0
    %v1935 = vpop.f32.mrb[0].mxu0
    %v1936 = vadd.f32 %v1615, %v1935
    %v1937 = vpop.f32.mrb[0].mxu0
    %1938 = vmatprep.mubr.bf16.mxu0 0
    %1939 = vmatmul.mubr.bf16.gmra.mrb[0].mxu0 %v1750
    %v1940 = vpop.f32.mrb[0].mxu0
    %v1941 = vadd.f32 %v1620, %v1940
    %v1942 = vpop.f32.mrb[0].mxu0
    %v1943 = vpop.f32.mrb[0].mxu0
    %v1944 = vadd.f32 %v1623, %v1943
    %v1945 = vpop.f32.mrb[0].mxu0
    %1946 = vmatprep.mubr.bf16.mxu0 0
    %1947 = vmatmul.mubr.bf16.gmra.mrb[0].mxu0 %v1753
    %v1948 = vpop.f32.mrb[0].mxu0
    %v1949 = vadd.f32 %v1628, %v1948
    %v1950 = vpop.f32.mrb[0].mxu0
    %v1951 = vpop.f32.mrb[0].mxu0
    %v1952 = vadd.f32 %v1631, %v1951
    %v1953 = vpop.f32.mrb[0].mxu0
    %1954 = vmatprep.mubr.bf16.mxu0 0
    %1955 = vmatmul.mubr.bf16.gmra.mrb[0].mxu0 %v1756
    %v1956 = vpop.f32.mrb[0].mxu0
    %v1957 = vadd.f32 %v1636, %v1956
    %v1958 = vpop.f32.mrb[0].mxu0
    %v1959 = vpop.f32.mrb[0].mxu0
    %v1960 = vadd.f32 %v1639, %v1959
    %v1961 = vpop.f32.mrb[0].mxu0
    %1962 = vmatprep.mubr.bf16.mxu0 0
    %1963 = vmatmul.mubr.bf16.gmra.mrb[0].mxu0 %v1759
    %v1964 = vpop.f32.mrb[0].mxu0
    %v1965 = vadd.f32 %v1644, %v1964
    %v1966 = vpop.f32.mrb[0].mxu0
    %v1967 = vpop.f32.mrb[0].mxu0
    %v1968 = vadd.f32 %v1647, %v1967
    %v1969 = vpop.f32.mrb[0].mxu0
    %1970 = vmatprep.mubr.bf16.mxu0 0
    %1971 = vmatmul.mubr.bf16.gmra.mrb[0].mxu0 %v1762
    %v1972 = vpop.f32.mrb[0].mxu0
    %v1973 = vadd.f32 %v1652, %v1972
    %v1974 = vpop.f32.mrb[0].mxu0
    %v1975 = vpop.f32.mrb[0].mxu0
    %v1976 = vadd.f32 %v1655, %v1975
    %v1977 = vpop.f32.mrb[0].mxu0
    %1978 = vmatprep.mubr.bf16.mxu0 0
    %1979 = vmatmul.mubr.bf16.gmra.mrb[0].mxu0 %v1765
    %v1980 = vpop.f32.mrb[0].mxu0
    %v1981 = vadd.f32 %v1660, %v1980
    %v1982 = vpop.f32.mrb[0].mxu0
    %v1983 = vpop.f32.mrb[0].mxu0
    %v1984 = vadd.f32 %v1663, %v1983
    %v1985 = vpop.f32.mrb[0].mxu0
    %1986 = vmatprep.mubr.bf16.mxu0 0
    %1987 = vmatmul.mubr.bf16.gmra.mrb[0].mxu0 %v1768
    %v1988 = vpop.f32.mrb[0].mxu0
    %v1989 = vadd.f32 %v1668, %v1988
    %v1990 = vpop.f32.mrb[0].mxu0
    %v1991 = vpop.f32.mrb[0].mxu0
    %v1992 = vadd.f32 %v1671, %v1991
    %v1993 = vpop.f32.mrb[0].mxu0
    %1994 = vdwg.mxu0
    %s1995 = scalar_lea.vmem %s3, 64
    %v1996 = vld [vmem:[%s1995] sm:$0xf]
    %v1997 = vld [vmem:[%s1995 + $0x4] sm:$0xf]
    %v1998 = vld [vmem:[%s1995 + $0x8] sm:$0xf]
    %v1999 = vld [vmem:[%s1995 + $0xc] sm:$0xf]
    %v2000 = vld [vmem:[%s1995 + $0x10] sm:$0xf]
    %v2001 = vld [vmem:[%s1995 + $0x14] sm:$0xf]
    %v2002 = vld [vmem:[%s1995 + $0x18] sm:$0xf]
    %v2003 = vld [vmem:[%s1995 + $0x1c] sm:$0xf]
    %v2012 = vunpack.c.l.b16 %v1996
    %v2013 = vunpack.c.l.b16 %v1997
    %v2014 = vunpack.c.l.b16 %v1998
    %v2015 = vunpack.c.l.b16 %v1999
    %v2016 = vunpack.c.l.b16 %v2000
    %v2017 = vunpack.c.l.b16 %v2001
    %v2018 = vunpack.c.l.b16 %v2002
    %v2019 = vunpack.c.l.b16 %v2003
    %v2020 = vpack.c.b16 %v2013, %v2012
    %v2021 = vpack.c.b16 %v2015, %v2014
    %v2022 = vpack.c.b16 %v2017, %v2016
    %v2023 = vpack.c.b16 %v2019, %v2018
    %v2029 = vsel %vm1376, %v1254, 0
    %v2032 = vsel %vm1376, %v1255, 0
    %v2035 = vsel %vm1376, %v1256, 0
    %2037 = vmatprep.subr.bf16.mxu0 0
    %2038 = vmatpush1.bf16.msra.mxu0 %v2020
    %2039 = vmatprep.subr.bf16.mxu0 0
    %2040 = vmatpush1.bf16.msra.mxu0 %v2021
    %2041 = vmatprep.subr.bf16.mxu0 0
    %2042 = vmatpush1.bf16.msra.mxu0 %v2022
    %2043 = vmatprep.subr.bf16.mxu0 0
    %2044 = vmatpush1.bf16.msra.mxu0 %v2023
    %2045 = vmatprep.subr.bf16.mxu0 0
    %2046 = vmatpush1.bf16.msra.mxu0 0
    %2047 = vmatprep.subr.bf16.mxu0 0
    %2048 = vmatpush1.bf16.msra.mxu0 0
    %2049 = vmatprep.subr.bf16.mxu0 0
    %2050 = vmatpush1.bf16.msra.mxu0 0
    %2051 = vmatprep.subr.bf16.mxu0 0
    %2052 = vmatpush1.bf16.msra.mxu0 0
    %2053 = vmatprep.subr.bf16.mxu0 0
    %2054 = vmatpush1.bf16.msra.mxu0 0
    %2055 = vmatprep.subr.bf16.mxu0 0
    %2056 = vmatpush1.bf16.msra.mxu0 0
    %2057 = vmatprep.subr.bf16.mxu0 0
    %2058 = vmatpush1.bf16.msra.mxu0 0
    %2059 = vmatprep.subr.bf16.mxu0 0
    %2060 = vmatpush1.bf16.msra.mxu0 0
    %2061 = vmatprep.subr.bf16.mxu0 0
    %2062 = vmatpush1.bf16.msra.mxu0 0
    %2063 = vmatprep.subr.bf16.mxu0 0
    %2064 = vmatpush1.bf16.msra.mxu0 0
    %2065 = vmatprep.subr.bf16.mxu0 0
    %2066 = vmatpush1.bf16.msra.mxu0 0
    %2067 = vmatprep.subr.bf16.mxu0 0
    %2068 = vmatpush1.bf16.msra.mxu0 0
    %2069 = vmatprep.mubr.bf16.mxu0 0
    %2070 = vmatmul.mubr.bf16.gmra.mrb[0].mxu0 %v1708
    %v2071 = vpop.f32.mrb[0].mxu0
    %v2072 = vadd.f32 0.0, %v2071
    %v2073 = vpop.f32.mrb[0].mxu0
    %v2074 = vpop.f32.mrb[0].mxu0
    %v2075 = vadd.f32 0.0, %v2074
    %v2076 = vpop.f32.mrb[0].mxu0
    %2077 = vmatprep.mubr.bf16.mxu0 0
    %2078 = vmatmul.mubr.bf16.gmra.mrb[0].mxu0 %v1711
    %v2079 = vpop.f32.mrb[0].mxu0
    %v2080 = vadd.f32 0.0, %v2079
    %v2081 = vpop.f32.mrb[0].mxu0
    %v2082 = vpop.f32.mrb[0].mxu0
    %v2083 = vadd.f32 0.0, %v2082
    %v2084 = vpop.f32.mrb[0].mxu0
    %2085 = vmatprep.mubr.bf16.mxu0 0
    %2086 = vmatmul.mubr.bf16.gmra.mrb[0].mxu0 %v1714
    %v2087 = vpop.f32.mrb[0].mxu0
    %v2088 = vadd.f32 0.0, %v2087
    %v2089 = vpop.f32.mrb[0].mxu0
    %v2090 = vpop.f32.mrb[0].mxu0
    %v2091 = vadd.f32 0.0, %v2090
    %v2092 = vpop.f32.mrb[0].mxu0
    %2093 = vmatprep.mubr.bf16.mxu0 0
    %2094 = vmatmul.mubr.bf16.gmra.mrb[0].mxu0 %v1717
    %v2095 = vpop.f32.mrb[0].mxu0
    %v2096 = vadd.f32 0.0, %v2095
    %v2097 = vpop.f32.mrb[0].mxu0
    %v2098 = vpop.f32.mrb[0].mxu0
    %v2099 = vadd.f32 0.0, %v2098
    %v2100 = vpop.f32.mrb[0].mxu0
    %2101 = vmatprep.mubr.bf16.mxu0 0
    %2102 = vmatmul.mubr.bf16.gmra.mrb[0].mxu0 %v1720
    %v2103 = vpop.f32.mrb[0].mxu0
    %v2104 = vadd.f32 0.0, %v2103
    %v2105 = vpop.f32.mrb[0].mxu0
    %v2106 = vpop.f32.mrb[0].mxu0
    %v2107 = vadd.f32 0.0, %v2106
    %v2108 = vpop.f32.mrb[0].mxu0
    %2109 = vmatprep.mubr.bf16.mxu0 0
    %2110 = vmatmul.mubr.bf16.gmra.mrb[0].mxu0 %v1723
    %v2111 = vpop.f32.mrb[0].mxu0
    %v2112 = vadd.f32 0.0, %v2111
    %v2113 = vpop.f32.mrb[0].mxu0
    %v2114 = vpop.f32.mrb[0].mxu0
    %v2115 = vadd.f32 0.0, %v2114
    %v2116 = vpop.f32.mrb[0].mxu0
    %2117 = vmatprep.mubr.bf16.mxu0 0
    %2118 = vmatmul.mubr.bf16.gmra.mrb[0].mxu0 %v1726
    %v2119 = vpop.f32.mrb[0].mxu0
    %v2120 = vadd.f32 0.0, %v2119
    %v2121 = vpop.f32.mrb[0].mxu0
    %v2122 = vpop.f32.mrb[0].mxu0
    %v2123 = vadd.f32 0.0, %v2122
    %v2124 = vpop.f32.mrb[0].mxu0
    %2125 = vmatprep.mubr.bf16.mxu0 0
    %2126 = vmatmul.mubr.bf16.gmra.mrb[0].mxu0 %v1729
    %v2127 = vpop.f32.mrb[0].mxu0
    %v2128 = vadd.f32 0.0, %v2127
    %v2129 = vpop.f32.mrb[0].mxu0
    %v2130 = vpop.f32.mrb[0].mxu0
    %v2131 = vadd.f32 0.0, %v2130
    %v2132 = vpop.f32.mrb[0].mxu0
    %2133 = vmatprep.mubr.bf16.mxu0 0
    %2134 = vmatmul.mubr.bf16.gmra.mrb[0].mxu0 %v1732
    %v2135 = vpop.f32.mrb[0].mxu0
    %v2136 = vadd.f32 0.0, %v2135
    %v2137 = vpop.f32.mrb[0].mxu0
    %v2138 = vpop.f32.mrb[0].mxu0
    %v2139 = vadd.f32 0.0, %v2138
    %v2140 = vpop.f32.mrb[0].mxu0
    %2141 = vmatprep.mubr.bf16.mxu0 0
    %2142 = vmatmul.mubr.bf16.gmra.mrb[0].mxu0 %v1735
    %v2143 = vpop.f32.mrb[0].mxu0
    %v2144 = vadd.f32 0.0, %v2143
    %v2145 = vpop.f32.mrb[0].mxu0
    %v2146 = vpop.f32.mrb[0].mxu0
    %v2147 = vadd.f32 0.0, %v2146
    %v2148 = vpop.f32.mrb[0].mxu0
    %2149 = vmatprep.mubr.bf16.mxu0 0
    %2150 = vmatmul.mubr.bf16.gmra.mrb[0].mxu0 %v1738
    %v2151 = vpop.f32.mrb[0].mxu0
    %v2152 = vadd.f32 0.0, %v2151
    %v2153 = vpop.f32.mrb[0].mxu0
    %v2154 = vpop.f32.mrb[0].mxu0
    %v2155 = vadd.f32 0.0, %v2154
    %v2156 = vpop.f32.mrb[0].mxu0
    %2157 = vmatprep.mubr.bf16.mxu0 0
    %2158 = vmatmul.mubr.bf16.gmra.mrb[0].mxu0 %v1741
    %v2159 = vpop.f32.mrb[0].mxu0
    %v2160 = vadd.f32 0.0, %v2159
    %v2161 = vpop.f32.mrb[0].mxu0
    %v2162 = vpop.f32.mrb[0].mxu0
    %v2163 = vadd.f32 0.0, %v2162
    %v2164 = vpop.f32.mrb[0].mxu0
    %2165 = vmatprep.mubr.bf16.mxu0 0
    %2166 = vmatmul.mubr.bf16.gmra.mrb[0].mxu0 %v1744
    %v2167 = vpop.f32.mrb[0].mxu0
    %v2168 = vadd.f32 0.0, %v2167
    %v2169 = vpop.f32.mrb[0].mxu0
    %v2170 = vpop.f32.mrb[0].mxu0
    %v2171 = vadd.f32 0.0, %v2170
    %v2172 = vpop.f32.mrb[0].mxu0
    %2173 = vmatprep.mubr.bf16.mxu0 0
    %2174 = vmatmul.mubr.bf16.gmra.mrb[0].mxu0 %v1747
    %v2175 = vpop.f32.mrb[0].mxu0
    %v2176 = vadd.f32 0.0, %v2175
    %v2177 = vpop.f32.mrb[0].mxu0
    %v2178 = vpop.f32.mrb[0].mxu0
    %v2179 = vadd.f32 0.0, %v2178
    %v2180 = vpop.f32.mrb[0].mxu0
    %2181 = vmatprep.mubr.bf16.mxu0 0
    %2182 = vmatmul.mubr.bf16.gmra.mrb[0].mxu0 %v1750
    %v2183 = vpop.f32.mrb[0].mxu0
    %v2184 = vadd.f32 0.0, %v2183
    %v2185 = vpop.f32.mrb[0].mxu0
    %v2186 = vpop.f32.mrb[0].mxu0
    %v2187 = vadd.f32 0.0, %v2186
    %v2188 = vpop.f32.mrb[0].mxu0
    %2189 = vmatprep.mubr.bf16.mxu0 0
    %2190 = vmatmul.mubr.bf16.gmra.mrb[0].mxu0 %v1753
    %v2191 = vpop.f32.mrb[0].mxu0
    %v2192 = vadd.f32 0.0, %v2191
    %v2193 = vpop.f32.mrb[0].mxu0
    %v2194 = vpop.f32.mrb[0].mxu0
    %v2195 = vadd.f32 0.0, %v2194
    %v2196 = vpop.f32.mrb[0].mxu0
    %2197 = vmatprep.mubr.bf16.mxu0 0
    %2198 = vmatmul.mubr.bf16.gmra.mrb[0].mxu0 %v1756
    %v2199 = vpop.f32.mrb[0].mxu0
    %v2200 = vadd.f32 0.0, %v2199
    %v2201 = vpop.f32.mrb[0].mxu0
    %v2202 = vpop.f32.mrb[0].mxu0
    %v2203 = vadd.f32 0.0, %v2202
    %v2204 = vpop.f32.mrb[0].mxu0
    %2205 = vmatprep.mubr.bf16.mxu0 0
    %2206 = vmatmul.mubr.bf16.gmra.mrb[0].mxu0 %v1759
    %v2207 = vpop.f32.mrb[0].mxu0
    %v2208 = vadd.f32 0.0, %v2207
    %v2209 = vpop.f32.mrb[0].mxu0
    %v2210 = vpop.f32.mrb[0].mxu0
    %v2211 = vadd.f32 0.0, %v2210
    %v2212 = vpop.f32.mrb[0].mxu0
    %2213 = vmatprep.mubr.bf16.mxu0 0
    %2214 = vmatmul.mubr.bf16.gmra.mrb[0].mxu0 %v1762
    %v2215 = vpop.f32.mrb[0].mxu0
    %v2216 = vadd.f32 0.0, %v2215
    %v2217 = vpop.f32.mrb[0].mxu0
    %v2218 = vpop.f32.mrb[0].mxu0
    %v2219 = vadd.f32 0.0, %v2218
    %v2220 = vpop.f32.mrb[0].mxu0
    %2221 = vmatprep.mubr.bf16.mxu0 0
    %2222 = vmatmul.mubr.bf16.gmra.mrb[0].mxu0 %v1765
    %v2223 = vpop.f32.mrb[0].mxu0
    %v2224 = vadd.f32 0.0, %v2223
    %v2225 = vpop.f32.mrb[0].mxu0
    %v2226 = vpop.f32.mrb[0].mxu0
    %v2227 = vadd.f32 0.0, %v2226
    %v2228 = vpop.f32.mrb[0].mxu0
    %2229 = vmatprep.mubr.bf16.mxu0 0
    %2230 = vmatmul.mubr.bf16.gmra.mrb[0].mxu0 %v1768
    %v2231 = vpop.f32.mrb[0].mxu0
    %v2232 = vadd.f32 0.0, %v2231
    %v2233 = vpop.f32.mrb[0].mxu0
    %v2234 = vpop.f32.mrb[0].mxu0
    %v2235 = vadd.f32 0.0, %v2234
    %v2236 = vpop.f32.mrb[0].mxu0
    %2237 = vmatprep.mubr.bf16.mxu0 0
    %2238 = vmatmul.mubr.bf16.gmra.mrb[0].mxu0 %v2029
    %v2239 = vpop.f32.mrb[0].mxu0
    %v2240 = vadd.f32 0.0, %v2239
    %v2241 = vpop.f32.mrb[0].mxu0
    %v2242 = vpop.f32.mrb[0].mxu0
    %v2243 = vadd.f32 0.0, %v2242
    %v2244 = vpop.f32.mrb[0].mxu0
    %2245 = vmatprep.mubr.bf16.mxu0 0
    %2246 = vmatmul.mubr.bf16.gmra.mrb[0].mxu0 %v2032
    %v2247 = vpop.f32.mrb[0].mxu0
    %v2248 = vadd.f32 0.0, %v2247
    %v2249 = vpop.f32.mrb[0].mxu0
    %v2250 = vpop.f32.mrb[0].mxu0
    %v2251 = vadd.f32 0.0, %v2250
    %v2252 = vpop.f32.mrb[0].mxu0
    %2253 = vmatprep.mubr.bf16.mxu0 0
    %2254 = vmatmul.mubr.bf16.gmra.mrb[0].mxu0 %v2035
    %v2255 = vpop.f32.mrb[0].mxu0
    %v2256 = vadd.f32 0.0, %v2255
    %v2257 = vpop.f32.mrb[0].mxu0
    %v2258 = vpop.f32.mrb[0].mxu0
    %v2259 = vadd.f32 0.0, %v2258
    %v2260 = vpop.f32.mrb[0].mxu0
    %2261 = vdwg.mxu0
    %v2262 = vadd.f32 %v1805, %v2072
    %v2263 = vadd.f32 %v1808, %v2075
    %v2264 = vadd.f32 %v1813, %v2080
    %v2265 = vadd.f32 %v1816, %v2083
    %v2266 = vadd.f32 %v1821, %v2088
    %v2267 = vadd.f32 %v1824, %v2091
    %v2268 = vadd.f32 %v1829, %v2096
    %v2269 = vadd.f32 %v1832, %v2099
    %v2270 = vadd.f32 %v1837, %v2104
    %v2271 = vadd.f32 %v1840, %v2107
    %v2272 = vadd.f32 %v1845, %v2112
    %v2273 = vadd.f32 %v1848, %v2115
    %v2274 = vadd.f32 %v1853, %v2120
    %v2275 = vadd.f32 %v1856, %v2123
    %v2276 = vadd.f32 %v1861, %v2128
    %v2277 = vadd.f32 %v1864, %v2131
    %v2278 = vadd.f32 %v1869, %v2136
    %v2279 = vadd.f32 %v1872, %v2139
    %v2280 = vadd.f32 %v1877, %v2144
    %v2281 = vadd.f32 %v1880, %v2147
    %v2282 = vadd.f32 %v1885, %v2152
    %v2283 = vadd.f32 %v1888, %v2155
    %v2284 = vadd.f32 %v1893, %v2160
    %v2285 = vadd.f32 %v1896, %v2163
    %v2286 = vadd.f32 %v1901, %v2168
    %v2287 = vadd.f32 %v1904, %v2171
    %v2288 = vadd.f32 %v1909, %v2176
    %v2289 = vadd.f32 %v1912, %v2179
    %v2290 = vadd.f32 %v1917, %v2184
    %v2291 = vadd.f32 %v1920, %v2187
    %v2292 = vadd.f32 %v1925, %v2192
    %v2293 = vadd.f32 %v1928, %v2195
    %v2294 = vadd.f32 %v1933, %v2200
    %v2295 = vadd.f32 %v1936, %v2203
    %v2296 = vadd.f32 %v1941, %v2208
    %v2297 = vadd.f32 %v1944, %v2211
    %v2298 = vadd.f32 %v1949, %v2216
    %v2299 = vadd.f32 %v1952, %v2219
    %v2300 = vadd.f32 %v1957, %v2224
    %v2301 = vadd.f32 %v1960, %v2227
    %v2302 = vadd.f32 %v1965, %v2232
    %v2303 = vadd.f32 %v1968, %v2235
    %v2304 = vadd.f32 %v1973, %v2240
    %v2305 = vadd.f32 %v1976, %v2243
    %v2306 = vadd.f32 %v1981, %v2248
    %v2307 = vadd.f32 %v1984, %v2251
    %v2308 = vadd.f32 %v1989, %v2256
    %v2309 = vadd.f32 %v1992, %v2259
    %s2310 = scalar_lea.vmem %s3, 96
    %v2311 = vld [vmem:[%s2310] sm:$0xf]
    %v2312 = vld [vmem:[%s2310 + $0x4] sm:$0xf]
    %v2313 = vld [vmem:[%s2310 + $0x8] sm:$0xf]
    %v2314 = vld [vmem:[%s2310 + $0xc] sm:$0xf]
    %v2315 = vld [vmem:[%s2310 + $0x10] sm:$0xf]
    %v2316 = vld [vmem:[%s2310 + $0x14] sm:$0xf]
    %v2317 = vld [vmem:[%s2310 + $0x18] sm:$0xf]
    %v2318 = vld [vmem:[%s2310 + $0x1c] sm:$0xf]
    %v2322 = vrot.slane %v1256, 4
    %v2323 = vsel %vm1302, %v1350, %v2322
    %v2324 = vrot.slane %v1257, 4
    %v2325 = vsel %vm1302, %v2322, %v2324
    %v2326 = vrot.slane %v1258, 4
    %v2327 = vsel %vm1302, %v2324, %v2326
    %v2336 = vunpack.c.l.b16 %v2311
    %v2337 = vunpack.c.l.b16 %v2312
    %v2338 = vunpack.c.l.b16 %v2313
    %v2339 = vunpack.c.l.b16 %v2314
    %v2340 = vunpack.c.l.b16 %v2315
    %v2341 = vunpack.c.l.b16 %v2316
    %v2342 = vunpack.c.l.b16 %v2317
    %v2343 = vunpack.c.l.b16 %v2318
    %v2344 = vpack.c.b16 %v2337, %v2336
    %v2345 = vpack.c.b16 %v2339, %v2338
    %v2346 = vpack.c.b16 %v2341, %v2340
    %v2347 = vpack.c.b16 %v2343, %v2342
    %v2353 = vsel %vm1376, %v2323, 0
    %v2356 = vsel %vm1376, %v2325, 0
    %v2359 = vsel %vm1376, %v2327, 0
    %2361 = vmatprep.subr.bf16.mxu0 0
    %2362 = vmatpush1.bf16.msra.mxu0 %v2344
    %2363 = vmatprep.subr.bf16.mxu0 0
    %2364 = vmatpush1.bf16.msra.mxu0 %v2345
    %2365 = vmatprep.subr.bf16.mxu0 0
    %2366 = vmatpush1.bf16.msra.mxu0 %v2346
    %2367 = vmatprep.subr.bf16.mxu0 0
    %2368 = vmatpush1.bf16.msra.mxu0 %v2347
    %2369 = vmatprep.subr.bf16.mxu0 0
    %2370 = vmatpush1.bf16.msra.mxu0 0
    %2371 = vmatprep.subr.bf16.mxu0 0
    %2372 = vmatpush1.bf16.msra.mxu0 0
    %2373 = vmatprep.subr.bf16.mxu0 0
    %2374 = vmatpush1.bf16.msra.mxu0 0
    %2375 = vmatprep.subr.bf16.mxu0 0
    %2376 = vmatpush1.bf16.msra.mxu0 0
    %2377 = vmatprep.subr.bf16.mxu0 0
    %2378 = vmatpush1.bf16.msra.mxu0 0
    %2379 = vmatprep.subr.bf16.mxu0 0
    %2380 = vmatpush1.bf16.msra.mxu0 0
    %2381 = vmatprep.subr.bf16.mxu0 0
    %2382 = vmatpush1.bf16.msra.mxu0 0
    %2383 = vmatprep.subr.bf16.mxu0 0
    %2384 = vmatpush1.bf16.msra.mxu0 0
    %2385 = vmatprep.subr.bf16.mxu0 0
    %2386 = vmatpush1.bf16.msra.mxu0 0
    %2387 = vmatprep.subr.bf16.mxu0 0
    %2388 = vmatpush1.bf16.msra.mxu0 0
    %2389 = vmatprep.subr.bf16.mxu0 0
    %2390 = vmatpush1.bf16.msra.mxu0 0
    %2391 = vmatprep.subr.bf16.mxu0 0
    %2392 = vmatpush1.bf16.msra.mxu0 0
    %2393 = vmatprep.mubr.bf16.mxu0 0
    %2394 = vmatmul.mubr.bf16.gmra.mrb[0].mxu0 %v1387
    %v2395 = vpop.f32.mrb[0].mxu0
    %v2396 = vadd.f32 0.0, %v2395
    %v2397 = vpop.f32.mrb[0].mxu0
    %v2398 = vpop.f32.mrb[0].mxu0
    %v2399 = vadd.f32 0.0, %v2398
    %v2400 = vpop.f32.mrb[0].mxu0
    %2401 = vmatprep.mubr.bf16.mxu0 0
    %2402 = vmatmul.mubr.bf16.gmra.mrb[0].mxu0 %v1390
    %v2403 = vpop.f32.mrb[0].mxu0
    %v2404 = vadd.f32 0.0, %v2403
    %v2405 = vpop.f32.mrb[0].mxu0
    %v2406 = vpop.f32.mrb[0].mxu0
    %v2407 = vadd.f32 0.0, %v2406
    %v2408 = vpop.f32.mrb[0].mxu0
    %2409 = vmatprep.mubr.bf16.mxu0 0
    %2410 = vmatmul.mubr.bf16.gmra.mrb[0].mxu0 %v1393
    %v2411 = vpop.f32.mrb[0].mxu0
    %v2412 = vadd.f32 0.0, %v2411
    %v2413 = vpop.f32.mrb[0].mxu0
    %v2414 = vpop.f32.mrb[0].mxu0
    %v2415 = vadd.f32 0.0, %v2414
    %v2416 = vpop.f32.mrb[0].mxu0
    %2417 = vmatprep.mubr.bf16.mxu0 0
    %2418 = vmatmul.mubr.bf16.gmra.mrb[0].mxu0 %v1396
    %v2419 = vpop.f32.mrb[0].mxu0
    %v2420 = vadd.f32 0.0, %v2419
    %v2421 = vpop.f32.mrb[0].mxu0
    %v2422 = vpop.f32.mrb[0].mxu0
    %v2423 = vadd.f32 0.0, %v2422
    %v2424 = vpop.f32.mrb[0].mxu0
    %2425 = vmatprep.mubr.bf16.mxu0 0
    %2426 = vmatmul.mubr.bf16.gmra.mrb[0].mxu0 %v1399
    %v2427 = vpop.f32.mrb[0].mxu0
    %v2428 = vadd.f32 0.0, %v2427
    %v2429 = vpop.f32.mrb[0].mxu0
    %v2430 = vpop.f32.mrb[0].mxu0
    %v2431 = vadd.f32 0.0, %v2430
    %v2432 = vpop.f32.mrb[0].mxu0
    %2433 = vmatprep.mubr.bf16.mxu0 0
    %2434 = vmatmul.mubr.bf16.gmra.mrb[0].mxu0 %v1402
    %v2435 = vpop.f32.mrb[0].mxu0
    %v2436 = vadd.f32 0.0, %v2435
    %v2437 = vpop.f32.mrb[0].mxu0
    %v2438 = vpop.f32.mrb[0].mxu0
    %v2439 = vadd.f32 0.0, %v2438
    %v2440 = vpop.f32.mrb[0].mxu0
    %2441 = vmatprep.mubr.bf16.mxu0 0
    %2442 = vmatmul.mubr.bf16.gmra.mrb[0].mxu0 %v1405
    %v2443 = vpop.f32.mrb[0].mxu0
    %v2444 = vadd.f32 0.0, %v2443
    %v2445 = vpop.f32.mrb[0].mxu0
    %v2446 = vpop.f32.mrb[0].mxu0
    %v2447 = vadd.f32 0.0, %v2446
    %v2448 = vpop.f32.mrb[0].mxu0
    %2449 = vmatprep.mubr.bf16.mxu0 0
    %2450 = vmatmul.mubr.bf16.gmra.mrb[0].mxu0 %v1408
    %v2451 = vpop.f32.mrb[0].mxu0
    %v2452 = vadd.f32 0.0, %v2451
    %v2453 = vpop.f32.mrb[0].mxu0
    %v2454 = vpop.f32.mrb[0].mxu0
    %v2455 = vadd.f32 0.0, %v2454
    %v2456 = vpop.f32.mrb[0].mxu0
    %2457 = vmatprep.mubr.bf16.mxu0 0
    %2458 = vmatmul.mubr.bf16.gmra.mrb[0].mxu0 %v1411
    %v2459 = vpop.f32.mrb[0].mxu0
    %v2460 = vadd.f32 0.0, %v2459
    %v2461 = vpop.f32.mrb[0].mxu0
    %v2462 = vpop.f32.mrb[0].mxu0
    %v2463 = vadd.f32 0.0, %v2462
    %v2464 = vpop.f32.mrb[0].mxu0
    %2465 = vmatprep.mubr.bf16.mxu0 0
    %2466 = vmatmul.mubr.bf16.gmra.mrb[0].mxu0 %v1414
    %v2467 = vpop.f32.mrb[0].mxu0
    %v2468 = vadd.f32 0.0, %v2467
    %v2469 = vpop.f32.mrb[0].mxu0
    %v2470 = vpop.f32.mrb[0].mxu0
    %v2471 = vadd.f32 0.0, %v2470
    %v2472 = vpop.f32.mrb[0].mxu0
    %2473 = vmatprep.mubr.bf16.mxu0 0
    %2474 = vmatmul.mubr.bf16.gmra.mrb[0].mxu0 %v1417
    %v2475 = vpop.f32.mrb[0].mxu0
    %v2476 = vadd.f32 0.0, %v2475
    %v2477 = vpop.f32.mrb[0].mxu0
    %v2478 = vpop.f32.mrb[0].mxu0
    %v2479 = vadd.f32 0.0, %v2478
    %v2480 = vpop.f32.mrb[0].mxu0
    %2481 = vmatprep.mubr.bf16.mxu0 0
    %2482 = vmatmul.mubr.bf16.gmra.mrb[0].mxu0 %v1420
    %v2483 = vpop.f32.mrb[0].mxu0
    %v2484 = vadd.f32 0.0, %v2483
    %v2485 = vpop.f32.mrb[0].mxu0
    %v2486 = vpop.f32.mrb[0].mxu0
    %v2487 = vadd.f32 0.0, %v2486
    %v2488 = vpop.f32.mrb[0].mxu0
    %2489 = vmatprep.mubr.bf16.mxu0 0
    %2490 = vmatmul.mubr.bf16.gmra.mrb[0].mxu0 %v1423
    %v2491 = vpop.f32.mrb[0].mxu0
    %v2492 = vadd.f32 0.0, %v2491
    %v2493 = vpop.f32.mrb[0].mxu0
    %v2494 = vpop.f32.mrb[0].mxu0
    %v2495 = vadd.f32 0.0, %v2494
    %v2496 = vpop.f32.mrb[0].mxu0
    %2497 = vmatprep.mubr.bf16.mxu0 0
    %2498 = vmatmul.mubr.bf16.gmra.mrb[0].mxu0 %v1426
    %v2499 = vpop.f32.mrb[0].mxu0
    %v2500 = vadd.f32 0.0, %v2499
    %v2501 = vpop.f32.mrb[0].mxu0
    %v2502 = vpop.f32.mrb[0].mxu0
    %v2503 = vadd.f32 0.0, %v2502
    %v2504 = vpop.f32.mrb[0].mxu0
    %2505 = vmatprep.mubr.bf16.mxu0 0
    %2506 = vmatmul.mubr.bf16.gmra.mrb[0].mxu0 %v1429
    %v2507 = vpop.f32.mrb[0].mxu0
    %v2508 = vadd.f32 0.0, %v2507
    %v2509 = vpop.f32.mrb[0].mxu0
    %v2510 = vpop.f32.mrb[0].mxu0
    %v2511 = vadd.f32 0.0, %v2510
    %v2512 = vpop.f32.mrb[0].mxu0
    %2513 = vmatprep.mubr.bf16.mxu0 0
    %2514 = vmatmul.mubr.bf16.gmra.mrb[0].mxu0 %v1432
    %v2515 = vpop.f32.mrb[0].mxu0
    %v2516 = vadd.f32 0.0, %v2515
    %v2517 = vpop.f32.mrb[0].mxu0
    %v2518 = vpop.f32.mrb[0].mxu0
    %v2519 = vadd.f32 0.0, %v2518
    %v2520 = vpop.f32.mrb[0].mxu0
    %2521 = vmatprep.mubr.bf16.mxu0 0
    %2522 = vmatmul.mubr.bf16.gmra.mrb[0].mxu0 %v1435
    %v2523 = vpop.f32.mrb[0].mxu0
    %v2524 = vadd.f32 0.0, %v2523
    %v2525 = vpop.f32.mrb[0].mxu0
    %v2526 = vpop.f32.mrb[0].mxu0
    %v2527 = vadd.f32 0.0, %v2526
    %v2528 = vpop.f32.mrb[0].mxu0
    %2529 = vmatprep.mubr.bf16.mxu0 0
    %2530 = vmatmul.mubr.bf16.gmra.mrb[0].mxu0 %v1438
    %v2531 = vpop.f32.mrb[0].mxu0
    %v2532 = vadd.f32 0.0, %v2531
    %v2533 = vpop.f32.mrb[0].mxu0
    %v2534 = vpop.f32.mrb[0].mxu0
    %v2535 = vadd.f32 0.0, %v2534
    %v2536 = vpop.f32.mrb[0].mxu0
    %2537 = vmatprep.mubr.bf16.mxu0 0
    %2538 = vmatmul.mubr.bf16.gmra.mrb[0].mxu0 %v1441
    %v2539 = vpop.f32.mrb[0].mxu0
    %v2540 = vadd.f32 0.0, %v2539
    %v2541 = vpop.f32.mrb[0].mxu0
    %v2542 = vpop.f32.mrb[0].mxu0
    %v2543 = vadd.f32 0.0, %v2542
    %v2544 = vpop.f32.mrb[0].mxu0
    %2545 = vmatprep.mubr.bf16.mxu0 0
    %2546 = vmatmul.mubr.bf16.gmra.mrb[0].mxu0 %v1444
    %v2547 = vpop.f32.mrb[0].mxu0
    %v2548 = vadd.f32 0.0, %v2547
    %v2549 = vpop.f32.mrb[0].mxu0
    %v2550 = vpop.f32.mrb[0].mxu0
    %v2551 = vadd.f32 0.0, %v2550
    %v2552 = vpop.f32.mrb[0].mxu0
    %2553 = vmatprep.mubr.bf16.mxu0 0
    %2554 = vmatmul.mubr.bf16.gmra.mrb[0].mxu0 %v1447
    %v2555 = vpop.f32.mrb[0].mxu0
    %v2556 = vadd.f32 0.0, %v2555
    %v2557 = vpop.f32.mrb[0].mxu0
    %v2558 = vpop.f32.mrb[0].mxu0
    %v2559 = vadd.f32 0.0, %v2558
    %v2560 = vpop.f32.mrb[0].mxu0
    %2561 = vmatprep.mubr.bf16.mxu0 0
    %2562 = vmatmul.mubr.bf16.gmra.mrb[0].mxu0 %v2353
    %v2563 = vpop.f32.mrb[0].mxu0
    %v2564 = vadd.f32 0.0, %v2563
    %v2565 = vpop.f32.mrb[0].mxu0
    %v2566 = vpop.f32.mrb[0].mxu0
    %v2567 = vadd.f32 0.0, %v2566
    %v2568 = vpop.f32.mrb[0].mxu0
    %2569 = vmatprep.mubr.bf16.mxu0 0
    %2570 = vmatmul.mubr.bf16.gmra.mrb[0].mxu0 %v2356
    %v2571 = vpop.f32.mrb[0].mxu0
    %v2572 = vadd.f32 0.0, %v2571
    %v2573 = vpop.f32.mrb[0].mxu0
    %v2574 = vpop.f32.mrb[0].mxu0
    %v2575 = vadd.f32 0.0, %v2574
    %v2576 = vpop.f32.mrb[0].mxu0
    %2577 = vmatprep.mubr.bf16.mxu0 0
    %2578 = vmatmul.mubr.bf16.gmra.mrb[0].mxu0 %v2359
    %v2579 = vpop.f32.mrb[0].mxu0
    %v2580 = vadd.f32 0.0, %v2579
    %v2581 = vpop.f32.mrb[0].mxu0
    %v2582 = vpop.f32.mrb[0].mxu0
    %v2583 = vadd.f32 0.0, %v2582
    %v2584 = vpop.f32.mrb[0].mxu0
    %2585 = vdwg.mxu0
    %v2586 = vadd.f32 %v2262, %v2396
    %v2587 = vadd.f32 %v2263, %v2399
    %v2588 = vadd.f32 %v2264, %v2404
    %v2589 = vadd.f32 %v2265, %v2407
    %v2590 = vadd.f32 %v2266, %v2412
    %v2591 = vadd.f32 %v2267, %v2415
    %v2592 = vadd.f32 %v2268, %v2420
    %v2593 = vadd.f32 %v2269, %v2423
    %v2594 = vadd.f32 %v2270, %v2428
    %v2595 = vadd.f32 %v2271, %v2431
    %v2596 = vadd.f32 %v2272, %v2436
    %v2597 = vadd.f32 %v2273, %v2439
    %v2598 = vadd.f32 %v2274, %v2444
    %v2599 = vadd.f32 %v2275, %v2447
    %v2600 = vadd.f32 %v2276, %v2452
    %v2601 = vadd.f32 %v2277, %v2455
    %v2602 = vadd.f32 %v2278, %v2460
    %v2603 = vadd.f32 %v2279, %v2463
    %v2604 = vadd.f32 %v2280, %v2468
    %v2605 = vadd.f32 %v2281, %v2471
    %v2606 = vadd.f32 %v2282, %v2476
    %v2607 = vadd.f32 %v2283, %v2479
    %v2608 = vadd.f32 %v2284, %v2484
    %v2609 = vadd.f32 %v2285, %v2487
    %v2610 = vadd.f32 %v2286, %v2492
    %v2611 = vadd.f32 %v2287, %v2495
    %v2612 = vadd.f32 %v2288, %v2500
    %v2613 = vadd.f32 %v2289, %v2503
    %v2614 = vadd.f32 %v2290, %v2508
    %v2615 = vadd.f32 %v2291, %v2511
    %v2616 = vadd.f32 %v2292, %v2516
    %v2617 = vadd.f32 %v2293, %v2519
    %v2618 = vadd.f32 %v2294, %v2524
    %v2619 = vadd.f32 %v2295, %v2527
    %v2620 = vadd.f32 %v2296, %v2532
    %v2621 = vadd.f32 %v2297, %v2535
    %v2622 = vadd.f32 %v2298, %v2540
    %v2623 = vadd.f32 %v2299, %v2543
    %v2624 = vadd.f32 %v2300, %v2548
    %v2625 = vadd.f32 %v2301, %v2551
    %v2626 = vadd.f32 %v2302, %v2556
    %v2627 = vadd.f32 %v2303, %v2559
    %v2628 = vadd.f32 %v2304, %v2564
    %v2629 = vadd.f32 %v2305, %v2567
    %v2630 = vadd.f32 %v2306, %v2572
    %v2631 = vadd.f32 %v2307, %v2575
    %v2632 = vadd.f32 %v2308, %v2580
    %v2633 = vadd.f32 %v2309, %v2583
    %s2634 = scalar_lea.vmem %s3, 128
    %v2635 = vld [vmem:[%s2634] sm:$0xf]
    %v2636 = vld [vmem:[%s2634 + $0x4] sm:$0xf]
    %v2637 = vld [vmem:[%s2634 + $0x8] sm:$0xf]
    %v2638 = vld [vmem:[%s2634 + $0xc] sm:$0xf]
    %v2639 = vld [vmem:[%s2634 + $0x10] sm:$0xf]
    %v2640 = vld [vmem:[%s2634 + $0x14] sm:$0xf]
    %v2641 = vld [vmem:[%s2634 + $0x18] sm:$0xf]
    %v2642 = vld [vmem:[%s2634 + $0x1c] sm:$0xf]
    %v2651 = vunpack.c.l.b16 %v2635
    %v2652 = vunpack.c.l.b16 %v2636
    %v2653 = vunpack.c.l.b16 %v2637
    %v2654 = vunpack.c.l.b16 %v2638
    %v2655 = vunpack.c.l.b16 %v2639
    %v2656 = vunpack.c.l.b16 %v2640
    %v2657 = vunpack.c.l.b16 %v2641
    %v2658 = vunpack.c.l.b16 %v2642
    %v2659 = vpack.c.b16 %v2652, %v2651
    %v2660 = vpack.c.b16 %v2654, %v2653
    %v2661 = vpack.c.b16 %v2656, %v2655
    %v2662 = vpack.c.b16 %v2658, %v2657
    %v2668 = vsel %vm1376, %v1257, 0
    %v2671 = vsel %vm1376, %v1258, 0
    %v2674 = vsel %vm1376, %v1259, 0
    %2676 = vmatprep.subr.bf16.mxu0 0
    %2677 = vmatpush1.bf16.msra.mxu0 %v2659
    %2678 = vmatprep.subr.bf16.mxu0 0
    %2679 = vmatpush1.bf16.msra.mxu0 %v2660
    %2680 = vmatprep.subr.bf16.mxu0 0
    %2681 = vmatpush1.bf16.msra.mxu0 %v2661
    %2682 = vmatprep.subr.bf16.mxu0 0
    %2683 = vmatpush1.bf16.msra.mxu0 %v2662
    %2684 = vmatprep.subr.bf16.mxu0 0
    %2685 = vmatpush1.bf16.msra.mxu0 0
    %2686 = vmatprep.subr.bf16.mxu0 0
    %2687 = vmatpush1.bf16.msra.mxu0 0
    %2688 = vmatprep.subr.bf16.mxu0 0
    %2689 = vmatpush1.bf16.msra.mxu0 0
    %2690 = vmatprep.subr.bf16.mxu0 0
    %2691 = vmatpush1.bf16.msra.mxu0 0
    %2692 = vmatprep.subr.bf16.mxu0 0
    %2693 = vmatpush1.bf16.msra.mxu0 0
    %2694 = vmatprep.subr.bf16.mxu0 0
    %2695 = vmatpush1.bf16.msra.mxu0 0
    %2696 = vmatprep.subr.bf16.mxu0 0
    %2697 = vmatpush1.bf16.msra.mxu0 0
    %2698 = vmatprep.subr.bf16.mxu0 0
    %2699 = vmatpush1.bf16.msra.mxu0 0
    %2700 = vmatprep.subr.bf16.mxu0 0
    %2701 = vmatpush1.bf16.msra.mxu0 0
    %2702 = vmatprep.subr.bf16.mxu0 0
    %2703 = vmatpush1.bf16.msra.mxu0 0
    %2704 = vmatprep.subr.bf16.mxu0 0
    %2705 = vmatpush1.bf16.msra.mxu0 0
    %2706 = vmatprep.subr.bf16.mxu0 0
    %2707 = vmatpush1.bf16.msra.mxu0 0
    %2708 = vmatprep.mubr.bf16.mxu0 0
    %2709 = vmatmul.mubr.bf16.gmra.mrb[0].mxu0 %v1717
    %v2710 = vpop.f32.mrb[0].mxu0
    %v2711 = vadd.f32 0.0, %v2710
    %v2712 = vpop.f32.mrb[0].mxu0
    %v2713 = vpop.f32.mrb[0].mxu0
    %v2714 = vadd.f32 0.0, %v2713
    %v2715 = vpop.f32.mrb[0].mxu0
    %2716 = vmatprep.mubr.bf16.mxu0 0
    %2717 = vmatmul.mubr.bf16.gmra.mrb[0].mxu0 %v1720
    %v2718 = vpop.f32.mrb[0].mxu0
    %v2719 = vadd.f32 0.0, %v2718
    %v2720 = vpop.f32.mrb[0].mxu0
    %v2721 = vpop.f32.mrb[0].mxu0
    %v2722 = vadd.f32 0.0, %v2721
    %v2723 = vpop.f32.mrb[0].mxu0
    %2724 = vmatprep.mubr.bf16.mxu0 0
    %2725 = vmatmul.mubr.bf16.gmra.mrb[0].mxu0 %v1723
    %v2726 = vpop.f32.mrb[0].mxu0
    %v2727 = vadd.f32 0.0, %v2726
    %v2728 = vpop.f32.mrb[0].mxu0
    %v2729 = vpop.f32.mrb[0].mxu0
    %v2730 = vadd.f32 0.0, %v2729
    %v2731 = vpop.f32.mrb[0].mxu0
    %2732 = vmatprep.mubr.bf16.mxu0 0
    %2733 = vmatmul.mubr.bf16.gmra.mrb[0].mxu0 %v1726
    %v2734 = vpop.f32.mrb[0].mxu0
    %v2735 = vadd.f32 0.0, %v2734
    %v2736 = vpop.f32.mrb[0].mxu0
    %v2737 = vpop.f32.mrb[0].mxu0
    %v2738 = vadd.f32 0.0, %v2737
    %v2739 = vpop.f32.mrb[0].mxu0
    %2740 = vmatprep.mubr.bf16.mxu0 0
    %2741 = vmatmul.mubr.bf16.gmra.mrb[0].mxu0 %v1729
    %v2742 = vpop.f32.mrb[0].mxu0
    %v2743 = vadd.f32 0.0, %v2742
    %v2744 = vpop.f32.mrb[0].mxu0
    %v2745 = vpop.f32.mrb[0].mxu0
    %v2746 = vadd.f32 0.0, %v2745
    %v2747 = vpop.f32.mrb[0].mxu0
    %2748 = vmatprep.mubr.bf16.mxu0 0
    %2749 = vmatmul.mubr.bf16.gmra.mrb[0].mxu0 %v1732
    %v2750 = vpop.f32.mrb[0].mxu0
    %v2751 = vadd.f32 0.0, %v2750
    %v2752 = vpop.f32.mrb[0].mxu0
    %v2753 = vpop.f32.mrb[0].mxu0
    %v2754 = vadd.f32 0.0, %v2753
    %v2755 = vpop.f32.mrb[0].mxu0
    %2756 = vmatprep.mubr.bf16.mxu0 0
    %2757 = vmatmul.mubr.bf16.gmra.mrb[0].mxu0 %v1735
    %v2758 = vpop.f32.mrb[0].mxu0
    %v2759 = vadd.f32 0.0, %v2758
    %v2760 = vpop.f32.mrb[0].mxu0
    %v2761 = vpop.f32.mrb[0].mxu0
    %v2762 = vadd.f32 0.0, %v2761
    %v2763 = vpop.f32.mrb[0].mxu0
    %2764 = vmatprep.mubr.bf16.mxu0 0
    %2765 = vmatmul.mubr.bf16.gmra.mrb[0].mxu0 %v1738
    %v2766 = vpop.f32.mrb[0].mxu0
    %v2767 = vadd.f32 0.0, %v2766
    %v2768 = vpop.f32.mrb[0].mxu0
    %v2769 = vpop.f32.mrb[0].mxu0
    %v2770 = vadd.f32 0.0, %v2769
    %v2771 = vpop.f32.mrb[0].mxu0
    %2772 = vmatprep.mubr.bf16.mxu0 0
    %2773 = vmatmul.mubr.bf16.gmra.mrb[0].mxu0 %v1741
    %v2774 = vpop.f32.mrb[0].mxu0
    %v2775 = vadd.f32 0.0, %v2774
    %v2776 = vpop.f32.mrb[0].mxu0
    %v2777 = vpop.f32.mrb[0].mxu0
    %v2778 = vadd.f32 0.0, %v2777
    %v2779 = vpop.f32.mrb[0].mxu0
    %2780 = vmatprep.mubr.bf16.mxu0 0
    %2781 = vmatmul.mubr.bf16.gmra.mrb[0].mxu0 %v1744
    %v2782 = vpop.f32.mrb[0].mxu0
    %v2783 = vadd.f32 0.0, %v2782
    %v2784 = vpop.f32.mrb[0].mxu0
    %v2785 = vpop.f32.mrb[0].mxu0
    %v2786 = vadd.f32 0.0, %v2785
    %v2787 = vpop.f32.mrb[0].mxu0
    %2788 = vmatprep.mubr.bf16.mxu0 0
    %2789 = vmatmul.mubr.bf16.gmra.mrb[0].mxu0 %v1747
    %v2790 = vpop.f32.mrb[0].mxu0
    %v2791 = vadd.f32 0.0, %v2790
    %v2792 = vpop.f32.mrb[0].mxu0
    %v2793 = vpop.f32.mrb[0].mxu0
    %v2794 = vadd.f32 0.0, %v2793
    %v2795 = vpop.f32.mrb[0].mxu0
    %2796 = vmatprep.mubr.bf16.mxu0 0
    %2797 = vmatmul.mubr.bf16.gmra.mrb[0].mxu0 %v1750
    %v2798 = vpop.f32.mrb[0].mxu0
    %v2799 = vadd.f32 0.0, %v2798
    %v2800 = vpop.f32.mrb[0].mxu0
    %v2801 = vpop.f32.mrb[0].mxu0
    %v2802 = vadd.f32 0.0, %v2801
    %v2803 = vpop.f32.mrb[0].mxu0
    %2804 = vmatprep.mubr.bf16.mxu0 0
    %2805 = vmatmul.mubr.bf16.gmra.mrb[0].mxu0 %v1753
    %v2806 = vpop.f32.mrb[0].mxu0
    %v2807 = vadd.f32 0.0, %v2806
    %v2808 = vpop.f32.mrb[0].mxu0
    %v2809 = vpop.f32.mrb[0].mxu0
    %v2810 = vadd.f32 0.0, %v2809
    %v2811 = vpop.f32.mrb[0].mxu0
    %2812 = vmatprep.mubr.bf16.mxu0 0
    %2813 = vmatmul.mubr.bf16.gmra.mrb[0].mxu0 %v1756
    %v2814 = vpop.f32.mrb[0].mxu0
    %v2815 = vadd.f32 0.0, %v2814
    %v2816 = vpop.f32.mrb[0].mxu0
    %v2817 = vpop.f32.mrb[0].mxu0
    %v2818 = vadd.f32 0.0, %v2817
    %v2819 = vpop.f32.mrb[0].mxu0
    %2820 = vmatprep.mubr.bf16.mxu0 0
    %2821 = vmatmul.mubr.bf16.gmra.mrb[0].mxu0 %v1759
    %v2822 = vpop.f32.mrb[0].mxu0
    %v2823 = vadd.f32 0.0, %v2822
    %v2824 = vpop.f32.mrb[0].mxu0
    %v2825 = vpop.f32.mrb[0].mxu0
    %v2826 = vadd.f32 0.0, %v2825
    %v2827 = vpop.f32.mrb[0].mxu0
    %2828 = vmatprep.mubr.bf16.mxu0 0
    %2829 = vmatmul.mubr.bf16.gmra.mrb[0].mxu0 %v1762
    %v2830 = vpop.f32.mrb[0].mxu0
    %v2831 = vadd.f32 0.0, %v2830
    %v2832 = vpop.f32.mrb[0].mxu0
    %v2833 = vpop.f32.mrb[0].mxu0
    %v2834 = vadd.f32 0.0, %v2833
    %v2835 = vpop.f32.mrb[0].mxu0
    %2836 = vmatprep.mubr.bf16.mxu0 0
    %2837 = vmatmul.mubr.bf16.gmra.mrb[0].mxu0 %v1765
    %v2838 = vpop.f32.mrb[0].mxu0
    %v2839 = vadd.f32 0.0, %v2838
    %v2840 = vpop.f32.mrb[0].mxu0
    %v2841 = vpop.f32.mrb[0].mxu0
    %v2842 = vadd.f32 0.0, %v2841
    %v2843 = vpop.f32.mrb[0].mxu0
    %2844 = vmatprep.mubr.bf16.mxu0 0
    %2845 = vmatmul.mubr.bf16.gmra.mrb[0].mxu0 %v1768
    %v2846 = vpop.f32.mrb[0].mxu0
    %v2847 = vadd.f32 0.0, %v2846
    %v2848 = vpop.f32.mrb[0].mxu0
    %v2849 = vpop.f32.mrb[0].mxu0
    %v2850 = vadd.f32 0.0, %v2849
    %v2851 = vpop.f32.mrb[0].mxu0
    %2852 = vmatprep.mubr.bf16.mxu0 0
    %2853 = vmatmul.mubr.bf16.gmra.mrb[0].mxu0 %v2029
    %v2854 = vpop.f32.mrb[0].mxu0
    %v2855 = vadd.f32 0.0, %v2854
    %v2856 = vpop.f32.mrb[0].mxu0
    %v2857 = vpop.f32.mrb[0].mxu0
    %v2858 = vadd.f32 0.0, %v2857
    %v2859 = vpop.f32.mrb[0].mxu0
    %2860 = vmatprep.mubr.bf16.mxu0 0
    %2861 = vmatmul.mubr.bf16.gmra.mrb[0].mxu0 %v2032
    %v2862 = vpop.f32.mrb[0].mxu0
    %v2863 = vadd.f32 0.0, %v2862
    %v2864 = vpop.f32.mrb[0].mxu0
    %v2865 = vpop.f32.mrb[0].mxu0
    %v2866 = vadd.f32 0.0, %v2865
    %v2867 = vpop.f32.mrb[0].mxu0
    %2868 = vmatprep.mubr.bf16.mxu0 0
    %2869 = vmatmul.mubr.bf16.gmra.mrb[0].mxu0 %v2035
    %v2870 = vpop.f32.mrb[0].mxu0
    %v2871 = vadd.f32 0.0, %v2870
    %v2872 = vpop.f32.mrb[0].mxu0
    %v2873 = vpop.f32.mrb[0].mxu0
    %v2874 = vadd.f32 0.0, %v2873
    %v2875 = vpop.f32.mrb[0].mxu0
    %2876 = vmatprep.mubr.bf16.mxu0 0
    %2877 = vmatmul.mubr.bf16.gmra.mrb[0].mxu0 %v2668
    %v2878 = vpop.f32.mrb[0].mxu0
    %v2879 = vadd.f32 0.0, %v2878
    %v2880 = vpop.f32.mrb[0].mxu0
    %v2881 = vpop.f32.mrb[0].mxu0
    %v2882 = vadd.f32 0.0, %v2881
    %v2883 = vpop.f32.mrb[0].mxu0
    %2884 = vmatprep.mubr.bf16.mxu0 0
    %2885 = vmatmul.mubr.bf16.gmra.mrb[0].mxu0 %v2671
    %v2886 = vpop.f32.mrb[0].mxu0
    %v2887 = vadd.f32 0.0, %v2886
    %v2888 = vpop.f32.mrb[0].mxu0
    %v2889 = vpop.f32.mrb[0].mxu0
    %v2890 = vadd.f32 0.0, %v2889
    %v2891 = vpop.f32.mrb[0].mxu0
    %2892 = vmatprep.mubr.bf16.mxu0 0
    %2893 = vmatmul.mubr.bf16.gmra.mrb[0].mxu0 %v2674
    %v2894 = vpop.f32.mrb[0].mxu0
    %v2895 = vadd.f32 0.0, %v2894
    %v2896 = vpop.f32.mrb[0].mxu0
    %v2897 = vpop.f32.mrb[0].mxu0
    %v2898 = vadd.f32 0.0, %v2897
    %v2899 = vpop.f32.mrb[0].mxu0
    %2900 = vdwg.mxu0
    %v2901 = vadd.f32 %v2586, %v2711
    %v2902 = vadd.f32 %v2587, %v2714
    %v2903 = vadd.f32 %v2588, %v2719
    %v2904 = vadd.f32 %v2589, %v2722
    %v2905 = vadd.f32 %v2590, %v2727
    %v2906 = vadd.f32 %v2591, %v2730
    %v2907 = vadd.f32 %v2592, %v2735
    %v2908 = vadd.f32 %v2593, %v2738
    %v2909 = vadd.f32 %v2594, %v2743
    %v2910 = vadd.f32 %v2595, %v2746
    %v2911 = vadd.f32 %v2596, %v2751
    %v2912 = vadd.f32 %v2597, %v2754
    %v2913 = vadd.f32 %v2598, %v2759
    %v2914 = vadd.f32 %v2599, %v2762
    %v2915 = vadd.f32 %v2600, %v2767
    %v2916 = vadd.f32 %v2601, %v2770
    %v2917 = vadd.f32 %v2602, %v2775
    %v2918 = vadd.f32 %v2603, %v2778
    %v2919 = vadd.f32 %v2604, %v2783
    %v2920 = vadd.f32 %v2605, %v2786
    %v2921 = vadd.f32 %v2606, %v2791
    %v2922 = vadd.f32 %v2607, %v2794
    %v2923 = vadd.f32 %v2608, %v2799
    %v2924 = vadd.f32 %v2609, %v2802
    %v2925 = vadd.f32 %v2610, %v2807
    %v2926 = vadd.f32 %v2611, %v2810
    %v2927 = vadd.f32 %v2612, %v2815
    %v2928 = vadd.f32 %v2613, %v2818
    %v2929 = vadd.f32 %v2614, %v2823
    %v2930 = vadd.f32 %v2615, %v2826
    %v2931 = vadd.f32 %v2616, %v2831
    %v2932 = vadd.f32 %v2617, %v2834
    %v2933 = vadd.f32 %v2618, %v2839
    %v2934 = vadd.f32 %v2619, %v2842
    %v2935 = vadd.f32 %v2620, %v2847
    %v2936 = vadd.f32 %v2621, %v2850
    %v2937 = vadd.f32 %v2622, %v2855
    %v2938 = vadd.f32 %v2623, %v2858
    %v2939 = vadd.f32 %v2624, %v2863
    %v2940 = vadd.f32 %v2625, %v2866
    %v2941 = vadd.f32 %v2626, %v2871
    %v2942 = vadd.f32 %v2627, %v2874
    %v2943 = vadd.f32 %v2628, %v2879
    %v2944 = vadd.f32 %v2629, %v2882
    %v2945 = vadd.f32 %v2630, %v2887
    %v2946 = vadd.f32 %v2631, %v2890
    %v2947 = vadd.f32 %v2632, %v2895
    %v2948 = vadd.f32 %v2633, %v2898
    %v2949 = vld [vmem:[%s4] sm:$0x1]
    %v2951 = vlaneseq
    %v2952 = vshrl.u32 %v2951, 7
    %v2953 = vsub.s32 0, %v2952
    %v2954 = vrot.slane %v2949, %v2953
    %v2956 = vadd.f32 %v2901, %v2954
    %v2957 = vadd.f32 %v2902, %v2954
    %v2958 = vadd.f32 %v2903, %v2954
    %v2959 = vadd.f32 %v2904, %v2954
    %v2960 = vadd.f32 %v2905, %v2954
    %v2961 = vadd.f32 %v2906, %v2954
    %v2962 = vadd.f32 %v2907, %v2954
    %v2963 = vadd.f32 %v2908, %v2954
    %v2964 = vadd.f32 %v2909, %v2954
    %v2965 = vadd.f32 %v2910, %v2954
    %v2966 = vadd.f32 %v2911, %v2954
    %v2967 = vadd.f32 %v2912, %v2954
    %v2968 = vadd.f32 %v2913, %v2954
    %v2969 = vadd.f32 %v2914, %v2954
    %v2970 = vadd.f32 %v2915, %v2954
    %v2971 = vadd.f32 %v2916, %v2954
    %v2972 = vadd.f32 %v2917, %v2954
    %v2973 = vadd.f32 %v2918, %v2954
    %v2974 = vadd.f32 %v2919, %v2954
    %v2975 = vadd.f32 %v2920, %v2954
    %v2976 = vadd.f32 %v2921, %v2954
    %v2977 = vadd.f32 %v2922, %v2954
    %v2978 = vadd.f32 %v2923, %v2954
    %v2979 = vadd.f32 %v2924, %v2954
    %v2980 = vadd.f32 %v2925, %v2954
    %v2981 = vadd.f32 %v2926, %v2954
    %v2982 = vadd.f32 %v2927, %v2954
    %v2983 = vadd.f32 %v2928, %v2954
    %v2984 = vadd.f32 %v2929, %v2954
    %v2985 = vadd.f32 %v2930, %v2954
    %v2986 = vadd.f32 %v2931, %v2954
    %v2987 = vadd.f32 %v2932, %v2954
    %v2988 = vadd.f32 %v2933, %v2954
    %v2989 = vadd.f32 %v2934, %v2954
    %v2990 = vadd.f32 %v2935, %v2954
    %v2991 = vadd.f32 %v2936, %v2954
    %v2992 = vadd.f32 %v2937, %v2954
    %v2993 = vadd.f32 %v2938, %v2954
    %v2994 = vadd.f32 %v2939, %v2954
    %v2995 = vadd.f32 %v2940, %v2954
    %v2996 = vadd.f32 %v2941, %v2954
    %v2997 = vadd.f32 %v2942, %v2954
    %v2998 = vadd.f32 %v2943, %v2954
    %v2999 = vadd.f32 %v2944, %v2954
    %v3000 = vadd.f32 %v2945, %v2954
    %v3001 = vadd.f32 %v2946, %v2954
    %v3002 = vadd.f32 %v2947, %v2954
    %v3003 = vadd.f32 %v2948, %v2954
    %v3004 = vmax.f32 %v2956, 0.0
    %v3005 = vmax.f32 %v2957, 0.0
    %v3006 = vmax.f32 %v2958, 0.0
    %v3007 = vmax.f32 %v2959, 0.0
    %v3008 = vmax.f32 %v2960, 0.0
    %v3009 = vmax.f32 %v2961, 0.0
    %v3010 = vmax.f32 %v2962, 0.0
    %v3011 = vmax.f32 %v2963, 0.0
    %v3012 = vmax.f32 %v2964, 0.0
    %v3013 = vmax.f32 %v2965, 0.0
    %v3014 = vmax.f32 %v2966, 0.0
    %v3015 = vmax.f32 %v2967, 0.0
    %v3016 = vmax.f32 %v2968, 0.0
    %v3017 = vmax.f32 %v2969, 0.0
    %v3018 = vmax.f32 %v2970, 0.0
    %v3019 = vmax.f32 %v2971, 0.0
    %v3020 = vmax.f32 %v2972, 0.0
    %v3021 = vmax.f32 %v2973, 0.0
    %v3022 = vmax.f32 %v2974, 0.0
    %v3023 = vmax.f32 %v2975, 0.0
    %v3024 = vmax.f32 %v2976, 0.0
    %v3025 = vmax.f32 %v2977, 0.0
    %v3026 = vmax.f32 %v2978, 0.0
    %v3027 = vmax.f32 %v2979, 0.0
    %v3028 = vmax.f32 %v2980, 0.0
    %v3029 = vmax.f32 %v2981, 0.0
    %v3030 = vmax.f32 %v2982, 0.0
    %v3031 = vmax.f32 %v2983, 0.0
    %v3032 = vmax.f32 %v2984, 0.0
    %v3033 = vmax.f32 %v2985, 0.0
    %v3034 = vmax.f32 %v2986, 0.0
    %v3035 = vmax.f32 %v2987, 0.0
    %v3036 = vmax.f32 %v2988, 0.0
    %v3037 = vmax.f32 %v2989, 0.0
    %v3038 = vmax.f32 %v2990, 0.0
    %v3039 = vmax.f32 %v2991, 0.0
    %v3040 = vmax.f32 %v2992, 0.0
    %v3041 = vmax.f32 %v2993, 0.0
    %v3042 = vmax.f32 %v2994, 0.0
    %v3043 = vmax.f32 %v2995, 0.0
    %v3044 = vmax.f32 %v2996, 0.0
    %v3045 = vmax.f32 %v2997, 0.0
    %v3046 = vmax.f32 %v2998, 0.0
    %v3047 = vmax.f32 %v2999, 0.0
    %v3048 = vmax.f32 %v3000, 0.0
    %v3049 = vmax.f32 %v3001, 0.0
    %v3050 = vmax.f32 %v3002, 0.0
    %v3051 = vmax.f32 %v3003, 0.0
    %v3052 = vpack.c.bf16 %v3005, %v3004
    %v3053 = vpack.c.bf16 %v3007, %v3006
    %v3054 = vpack.c.bf16 %v3009, %v3008
    %v3055 = vpack.c.bf16 %v3011, %v3010
    %v3056 = vpack.c.bf16 %v3013, %v3012
    %v3057 = vpack.c.bf16 %v3015, %v3014
    %v3058 = vpack.c.bf16 %v3017, %v3016
    %v3059 = vpack.c.bf16 %v3019, %v3018
    %v3060 = vpack.c.bf16 %v3021, %v3020
    %v3061 = vpack.c.bf16 %v3023, %v3022
    %v3062 = vpack.c.bf16 %v3025, %v3024
    %v3063 = vpack.c.bf16 %v3027, %v3026
    %v3064 = vpack.c.bf16 %v3029, %v3028
    %v3065 = vpack.c.bf16 %v3031, %v3030
    %v3066 = vpack.c.bf16 %v3033, %v3032
    %v3067 = vpack.c.bf16 %v3035, %v3034
    %v3068 = vpack.c.bf16 %v3037, %v3036
    %v3069 = vpack.c.bf16 %v3039, %v3038
    %v3070 = vpack.c.bf16 %v3041, %v3040
    %v3071 = vpack.c.bf16 %v3043, %v3042
    %v3072 = vpack.c.bf16 %v3045, %v3044
    %v3073 = vpack.c.bf16 %v3047, %v3046
    %v3074 = vpack.c.bf16 %v3049, %v3048
    %v3075 = vpack.c.bf16 %v3051, %v3050
    %v3076 = vld [vmem:[#allocation3] sm:$0xf]
    %v3077 = vld [vmem:[#allocation3 + $0x4] sm:$0xf]
    %v3078 = vld [vmem:[#allocation3 + $0x8] sm:$0xf]
    %v3079 = vld [vmem:[#allocation3 + $0xc] sm:$0xf]
    %v3080 = vld [vmem:[#allocation3 + $0x10] sm:$0xf]
    %v3081 = vld [vmem:[#allocation3 + $0x14] sm:$0xf]
    %v3082 = vld [vmem:[#allocation3 + $0x18] sm:$0xf]
    %v3083 = vld [vmem:[#allocation3 + $0x1c] sm:$0xf]
    %s3084 = scalar_lea.vmem [#allocation3], 32
    %v3085 = vld [vmem:[%s3084] sm:$0xf]
    %v3086 = vld [vmem:[%s3084 + $0x4] sm:$0xf]
    %v3087 = vld [vmem:[%s3084 + $0x8] sm:$0xf]
    %v3088 = vld [vmem:[%s3084 + $0xc] sm:$0xf]
    %v3089 = vld [vmem:[%s3084 + $0x10] sm:$0xf]
    %v3090 = vld [vmem:[%s3084 + $0x14] sm:$0xf]
    %v3091 = vld [vmem:[%s3084 + $0x18] sm:$0xf]
    %v3092 = vld [vmem:[%s3084 + $0x1c] sm:$0xf]
    %v3112 = vrot.slane %v3053, 4
    %v3113 = vrot.slane %v3054, 4
    %v3114 = vsel %vm1302, %v3112, %v3113
    %v3115 = vrot.slane %v3055, 4
    %v3116 = vsel %vm1302, %v3113, %v3115
    %v3117 = vrot.slane %v3056, 4
    %v3118 = vsel %vm1302, %v3115, %v3117
    %v3119 = vrot.slane %v3057, 4
    %v3120 = vsel %vm1302, %v3117, %v3119
    %v3121 = vrot.slane %v3058, 4
    %v3122 = vsel %vm1302, %v3119, %v3121
    %v3123 = vrot.slane %v3059, 4
    %v3124 = vsel %vm1302, %v3121, %v3123
    %v3125 = vrot.slane %v3060, 4
    %v3126 = vsel %vm1302, %v3123, %v3125
    %v3127 = vrot.slane %v3061, 4
    %v3128 = vsel %vm1302, %v3125, %v3127
    %v3129 = vrot.slane %v3062, 4
    %v3130 = vsel %vm1302, %v3127, %v3129
    %v3131 = vrot.slane %v3063, 4
    %v3132 = vsel %vm1302, %v3129, %v3131
    %v3133 = vrot.slane %v3064, 4
    %v3134 = vsel %vm1302, %v3131, %v3133
    %v3135 = vrot.slane %v3065, 4
    %v3136 = vsel %vm1302, %v3133, %v3135
    %v3137 = vrot.slane %v3066, 4
    %v3138 = vsel %vm1302, %v3135, %v3137
    %v3139 = vrot.slane %v3067, 4
    %v3140 = vsel %vm1302, %v3137, %v3139
    %v3141 = vrot.slane %v3068, 4
    %v3142 = vsel %vm1302, %v3139, %v3141
    %v3143 = vrot.slane %v3069, 4
    %v3144 = vsel %vm1302, %v3141, %v3143
    %v3145 = vrot.slane %v3070, 4
    %v3146 = vsel %vm1302, %v3143, %v3145
    %v3147 = vrot.slane %v3071, 4
    %v3148 = vsel %vm1302, %v3145, %v3147
    %v3157 = vunpack.c.l.b16 %v3085
    %v3158 = vunpack.c.l.b16 %v3086
    %v3159 = vunpack.c.l.b16 %v3087
    %v3160 = vunpack.c.l.b16 %v3088
    %v3161 = vunpack.c.l.b16 %v3089
    %v3162 = vunpack.c.l.b16 %v3090
    %v3163 = vunpack.c.l.b16 %v3091
    %v3164 = vunpack.c.l.b16 %v3092
    %v3165 = vpack.c.b16 %v3158, %v3157
    %v3166 = vpack.c.b16 %v3160, %v3159
    %v3167 = vpack.c.b16 %v3162, %v3161
    %v3168 = vpack.c.b16 %v3164, %v3163
    %v3174 = vsel %vm1376, %v3114, 0
    %v3177 = vsel %vm1376, %v3116, 0
    %v3180 = vsel %vm1376, %v3118, 0
    %v3183 = vsel %vm1376, %v3120, 0
    %v3186 = vsel %vm1376, %v3122, 0
    %v3189 = vsel %vm1376, %v3124, 0
    %v3192 = vsel %vm1376, %v3126, 0
    %v3195 = vsel %vm1376, %v3128, 0
    %v3198 = vsel %vm1376, %v3130, 0
    %v3201 = vsel %vm1376, %v3132, 0
    %v3204 = vsel %vm1376, %v3134, 0
    %v3207 = vsel %vm1376, %v3136, 0
    %v3210 = vsel %vm1376, %v3138, 0
    %v3213 = vsel %vm1376, %v3140, 0
    %v3216 = vsel %vm1376, %v3142, 0
    %v3219 = vsel %vm1376, %v3144, 0
    %v3222 = vsel %vm1376, %v3146, 0
    %v3225 = vsel %vm1376, %v3148, 0
    %3227 = vmatprep.subr.bf16.mxu0 0
    %3228 = vmatpush1.bf16.msra.mxu0 %v3165
    %3229 = vmatprep.subr.bf16.mxu0 0
    %3230 = vmatpush1.bf16.msra.mxu0 %v3166
    %3231 = vmatprep.subr.bf16.mxu0 0
    %3232 = vmatpush1.bf16.msra.mxu0 %v3167
    %3233 = vmatprep.subr.bf16.mxu0 0
    %3234 = vmatpush1.bf16.msra.mxu0 %v3168
    %3235 = vmatprep.subr.bf16.mxu0 0
    %3236 = vmatpush1.bf16.msra.mxu0 0
    %3237 = vmatprep.subr.bf16.mxu0 0
    %3238 = vmatpush1.bf16.msra.mxu0 0
    %3239 = vmatprep.subr.bf16.mxu0 0
    %3240 = vmatpush1.bf16.msra.mxu0 0
    %3241 = vmatprep.subr.bf16.mxu0 0
    %3242 = vmatpush1.bf16.msra.mxu0 0
    %3243 = vmatprep.subr.bf16.mxu0 0
    %3244 = vmatpush1.bf16.msra.mxu0 0
    %3245 = vmatprep.subr.bf16.mxu0 0
    %3246 = vmatpush1.bf16.msra.mxu0 0
    %3247 = vmatprep.subr.bf16.mxu0 0
    %3248 = vmatpush1.bf16.msra.mxu0 0
    %3249 = vmatprep.subr.bf16.mxu0 0
    %3250 = vmatpush1.bf16.msra.mxu0 0
    %3251 = vmatprep.subr.bf16.mxu0 0
    %3252 = vmatpush1.bf16.msra.mxu0 0
    %3253 = vmatprep.subr.bf16.mxu0 0
    %3254 = vmatpush1.bf16.msra.mxu0 0
    %3255 = vmatprep.subr.bf16.mxu0 0
    %3256 = vmatpush1.bf16.msra.mxu0 0
    %3257 = vmatprep.subr.bf16.mxu0 0
    %3258 = vmatpush1.bf16.msra.mxu0 0
    %3259 = vmatprep.mubr.bf16.mxu0 0
    %3260 = vmatmul.mubr.bf16.gmra.mrb[0].mxu0 %v3174
    %v3261 = vpop.f32.mrb[0].mxu0
    %v3262 = vadd.f32 0.0, %v3261
    %v3263 = vpop.f32.mrb[0].mxu0
    %v3264 = vpop.f32.mrb[0].mxu0
    %v3265 = vadd.f32 0.0, %v3264
    %v3266 = vpop.f32.mrb[0].mxu0
    %3267 = vmatprep.mubr.bf16.mxu0 0
    %3268 = vmatmul.mubr.bf16.gmra.mrb[0].mxu0 %v3177
    %v3269 = vpop.f32.mrb[0].mxu0
    %v3270 = vadd.f32 0.0, %v3269
    %v3271 = vpop.f32.mrb[0].mxu0
    %v3272 = vpop.f32.mrb[0].mxu0
    %v3273 = vadd.f32 0.0, %v3272
    %v3274 = vpop.f32.mrb[0].mxu0
    %3275 = vmatprep.mubr.bf16.mxu0 0
    %3276 = vmatmul.mubr.bf16.gmra.mrb[0].mxu0 %v3180
    %v3277 = vpop.f32.mrb[0].mxu0
    %v3278 = vadd.f32 0.0, %v3277
    %v3279 = vpop.f32.mrb[0].mxu0
    %v3280 = vpop.f32.mrb[0].mxu0
    %v3281 = vadd.f32 0.0, %v3280
    %v3282 = vpop.f32.mrb[0].mxu0
    %3283 = vmatprep.mubr.bf16.mxu0 0
    %3284 = vmatmul.mubr.bf16.gmra.mrb[0].mxu0 %v3183
    %v3285 = vpop.f32.mrb[0].mxu0
    %v3286 = vadd.f32 0.0, %v3285
    %v3287 = vpop.f32.mrb[0].mxu0
    %v3288 = vpop.f32.mrb[0].mxu0
    %v3289 = vadd.f32 0.0, %v3288
    %v3290 = vpop.f32.mrb[0].mxu0
    %3291 = vmatprep.mubr.bf16.mxu0 0
    %3292 = vmatmul.mubr.bf16.gmra.mrb[0].mxu0 %v3186
    %v3293 = vpop.f32.mrb[0].mxu0
    %v3294 = vadd.f32 0.0, %v3293
    %v3295 = vpop.f32.mrb[0].mxu0
    %v3296 = vpop.f32.mrb[0].mxu0
    %v3297 = vadd.f32 0.0, %v3296
    %v3298 = vpop.f32.mrb[0].mxu0
    %3299 = vmatprep.mubr.bf16.mxu0 0
    %3300 = vmatmul.mubr.bf16.gmra.mrb[0].mxu0 %v3189
    %v3301 = vpop.f32.mrb[0].mxu0
    %v3302 = vadd.f32 0.0, %v3301
    %v3303 = vpop.f32.mrb[0].mxu0
    %v3304 = vpop.f32.mrb[0].mxu0
    %v3305 = vadd.f32 0.0, %v3304
    %v3306 = vpop.f32.mrb[0].mxu0
    %3307 = vmatprep.mubr.bf16.mxu0 0
    %3308 = vmatmul.mubr.bf16.gmra.mrb[0].mxu0 %v3192
    %v3309 = vpop.f32.mrb[0].mxu0
    %v3310 = vadd.f32 0.0, %v3309
    %v3311 = vpop.f32.mrb[0].mxu0
    %v3312 = vpop.f32.mrb[0].mxu0
    %v3313 = vadd.f32 0.0, %v3312
    %v3314 = vpop.f32.mrb[0].mxu0
    %3315 = vmatprep.mubr.bf16.mxu0 0
    %3316 = vmatmul.mubr.bf16.gmra.mrb[0].mxu0 %v3195
    %v3317 = vpop.f32.mrb[0].mxu0
    %v3318 = vadd.f32 0.0, %v3317
    %v3319 = vpop.f32.mrb[0].mxu0
    %v3320 = vpop.f32.mrb[0].mxu0
    %v3321 = vadd.f32 0.0, %v3320
    %v3322 = vpop.f32.mrb[0].mxu0
    %3323 = vmatprep.mubr.bf16.mxu0 0
    %3324 = vmatmul.mubr.bf16.gmra.mrb[0].mxu0 %v3198
    %v3325 = vpop.f32.mrb[0].mxu0
    %v3326 = vadd.f32 0.0, %v3325
    %v3327 = vpop.f32.mrb[0].mxu0
    %v3328 = vpop.f32.mrb[0].mxu0
    %v3329 = vadd.f32 0.0, %v3328
    %v3330 = vpop.f32.mrb[0].mxu0
    %3331 = vmatprep.mubr.bf16.mxu0 0
    %3332 = vmatmul.mubr.bf16.gmra.mrb[0].mxu0 %v3201
    %v3333 = vpop.f32.mrb[0].mxu0
    %v3334 = vadd.f32 0.0, %v3333
    %v3335 = vpop.f32.mrb[0].mxu0
    %v3336 = vpop.f32.mrb[0].mxu0
    %v3337 = vadd.f32 0.0, %v3336
    %v3338 = vpop.f32.mrb[0].mxu0
    %3339 = vmatprep.mubr.bf16.mxu0 0
    %3340 = vmatmul.mubr.bf16.gmra.mrb[0].mxu0 %v3204
    %v3341 = vpop.f32.mrb[0].mxu0
    %v3342 = vadd.f32 0.0, %v3341
    %v3343 = vpop.f32.mrb[0].mxu0
    %v3344 = vpop.f32.mrb[0].mxu0
    %v3345 = vadd.f32 0.0, %v3344
    %v3346 = vpop.f32.mrb[0].mxu0
    %3347 = vmatprep.mubr.bf16.mxu0 0
    %3348 = vmatmul.mubr.bf16.gmra.mrb[0].mxu0 %v3207
    %v3349 = vpop.f32.mrb[0].mxu0
    %v3350 = vadd.f32 0.0, %v3349
    %v3351 = vpop.f32.mrb[0].mxu0
    %v3352 = vpop.f32.mrb[0].mxu0
    %v3353 = vadd.f32 0.0, %v3352
    %v3354 = vpop.f32.mrb[0].mxu0
    %3355 = vmatprep.mubr.bf16.mxu0 0
    %3356 = vmatmul.mubr.bf16.gmra.mrb[0].mxu0 %v3210
    %v3357 = vpop.f32.mrb[0].mxu0
    %v3358 = vadd.f32 0.0, %v3357
    %v3359 = vpop.f32.mrb[0].mxu0
    %v3360 = vpop.f32.mrb[0].mxu0
    %v3361 = vadd.f32 0.0, %v3360
    %v3362 = vpop.f32.mrb[0].mxu0
    %3363 = vmatprep.mubr.bf16.mxu0 0
    %3364 = vmatmul.mubr.bf16.gmra.mrb[0].mxu0 %v3213
    %v3365 = vpop.f32.mrb[0].mxu0
    %v3366 = vadd.f32 0.0, %v3365
    %v3367 = vpop.f32.mrb[0].mxu0
    %v3368 = vpop.f32.mrb[0].mxu0
    %v3369 = vadd.f32 0.0, %v3368
    %v3370 = vpop.f32.mrb[0].mxu0
    %3371 = vmatprep.mubr.bf16.mxu0 0
    %3372 = vmatmul.mubr.bf16.gmra.mrb[0].mxu0 %v3216
    %v3373 = vpop.f32.mrb[0].mxu0
    %v3374 = vadd.f32 0.0, %v3373
    %v3375 = vpop.f32.mrb[0].mxu0
    %v3376 = vpop.f32.mrb[0].mxu0
    %v3377 = vadd.f32 0.0, %v3376
    %v3378 = vpop.f32.mrb[0].mxu0
    %3379 = vmatprep.mubr.bf16.mxu0 0
    %3380 = vmatmul.mubr.bf16.gmra.mrb[0].mxu0 %v3219
    %v3381 = vpop.f32.mrb[0].mxu0
    %v3382 = vadd.f32 0.0, %v3381
    %v3383 = vpop.f32.mrb[0].mxu0
    %v3384 = vpop.f32.mrb[0].mxu0
    %v3385 = vadd.f32 0.0, %v3384
    %v3386 = vpop.f32.mrb[0].mxu0
    %3387 = vmatprep.mubr.bf16.mxu0 0
    %3388 = vmatmul.mubr.bf16.gmra.mrb[0].mxu0 %v3222
    %v3389 = vpop.f32.mrb[0].mxu0
    %v3390 = vadd.f32 0.0, %v3389
    %v3391 = vpop.f32.mrb[0].mxu0
    %v3392 = vpop.f32.mrb[0].mxu0
    %v3393 = vadd.f32 0.0, %v3392
    %v3394 = vpop.f32.mrb[0].mxu0
    %3395 = vmatprep.mubr.bf16.mxu0 0
    %3396 = vmatmul.mubr.bf16.gmra.mrb[0].mxu0 %v3225
    %v3397 = vpop.f32.mrb[0].mxu0
    %v3398 = vadd.f32 0.0, %v3397
    %v3399 = vpop.f32.mrb[0].mxu0
    %v3400 = vpop.f32.mrb[0].mxu0
    %v3401 = vadd.f32 0.0, %v3400
    %v3402 = vpop.f32.mrb[0].mxu0
    %3403 = vdwg.mxu0
    %v3412 = vunpack.c.l.b16 %v3076
    %v3413 = vunpack.c.l.b16 %v3077
    %v3414 = vunpack.c.l.b16 %v3078
    %v3415 = vunpack.c.l.b16 %v3079
    %v3416 = vunpack.c.l.b16 %v3080
    %v3417 = vunpack.c.l.b16 %v3081
    %v3418 = vunpack.c.l.b16 %v3082
    %v3419 = vunpack.c.l.b16 %v3083
    %v3420 = vpack.c.b16 %v3413, %v3412
    %v3421 = vpack.c.b16 %v3415, %v3414
    %v3422 = vpack.c.b16 %v3417, %v3416
    %v3423 = vpack.c.b16 %v3419, %v3418
    %v3429 = vsel %vm1376, %v3052, 0
    %v3432 = vsel %vm1376, %v3053, 0
    %v3435 = vsel %vm1376, %v3054, 0
    %v3438 = vsel %vm1376, %v3055, 0
    %v3441 = vsel %vm1376, %v3056, 0
    %v3444 = vsel %vm1376, %v3057, 0
    %v3447 = vsel %vm1376, %v3058, 0
    %v3450 = vsel %vm1376, %v3059, 0
    %v3453 = vsel %vm1376, %v3060, 0
    %v3456 = vsel %vm1376, %v3061, 0
    %v3459 = vsel %vm1376, %v3062, 0
    %v3462 = vsel %vm1376, %v3063, 0
    %v3465 = vsel %vm1376, %v3064, 0
    %v3468 = vsel %vm1376, %v3065, 0
    %v3471 = vsel %vm1376, %v3066, 0
    %v3474 = vsel %vm1376, %v3067, 0
    %v3477 = vsel %vm1376, %v3068, 0
    %v3480 = vsel %vm1376, %v3069, 0
    %3482 = vmatprep.subr.bf16.mxu0 0
    %3483 = vmatpush1.bf16.msra.mxu0 %v3420
    %3484 = vmatprep.subr.bf16.mxu0 0
    %3485 = vmatpush1.bf16.msra.mxu0 %v3421
    %3486 = vmatprep.subr.bf16.mxu0 0
    %3487 = vmatpush1.bf16.msra.mxu0 %v3422
    %3488 = vmatprep.subr.bf16.mxu0 0
    %3489 = vmatpush1.bf16.msra.mxu0 %v3423
    %3490 = vmatprep.subr.bf16.mxu0 0
    %3491 = vmatpush1.bf16.msra.mxu0 0
    %3492 = vmatprep.subr.bf16.mxu0 0
    %3493 = vmatpush1.bf16.msra.mxu0 0
    %3494 = vmatprep.subr.bf16.mxu0 0
    %3495 = vmatpush1.bf16.msra.mxu0 0
    %3496 = vmatprep.subr.bf16.mxu0 0
    %3497 = vmatpush1.bf16.msra.mxu0 0
    %3498 = vmatprep.subr.bf16.mxu0 0
    %3499 = vmatpush1.bf16.msra.mxu0 0
    %3500 = vmatprep.subr.bf16.mxu0 0
    %3501 = vmatpush1.bf16.msra.mxu0 0
    %3502 = vmatprep.subr.bf16.mxu0 0
    %3503 = vmatpush1.bf16.msra.mxu0 0
    %3504 = vmatprep.subr.bf16.mxu0 0
    %3505 = vmatpush1.bf16.msra.mxu0 0
    %3506 = vmatprep.subr.bf16.mxu0 0
    %3507 = vmatpush1.bf16.msra.mxu0 0
    %3508 = vmatprep.subr.bf16.mxu0 0
    %3509 = vmatpush1.bf16.msra.mxu0 0
    %3510 = vmatprep.subr.bf16.mxu0 0
    %3511 = vmatpush1.bf16.msra.mxu0 0
    %3512 = vmatprep.subr.bf16.mxu0 0
    %3513 = vmatpush1.bf16.msra.mxu0 0
    %3514 = vmatprep.mubr.bf16.mxu0 0
    %3515 = vmatmul.mubr.bf16.gmra.mrb[0].mxu0 %v3429
    %v3516 = vpop.f32.mrb[0].mxu0
    %v3517 = vadd.f32 %v3262, %v3516
    %v3518 = vpop.f32.mrb[0].mxu0
    %v3519 = vpop.f32.mrb[0].mxu0
    %v3520 = vadd.f32 %v3265, %v3519
    %v3521 = vpop.f32.mrb[0].mxu0
    %3522 = vmatprep.mubr.bf16.mxu0 0
    %3523 = vmatmul.mubr.bf16.gmra.mrb[0].mxu0 %v3432
    %v3524 = vpop.f32.mrb[0].mxu0
    %v3525 = vadd.f32 %v3270, %v3524
    %v3526 = vpop.f32.mrb[0].mxu0
    %v3527 = vpop.f32.mrb[0].mxu0
    %v3528 = vadd.f32 %v3273, %v3527
    %v3529 = vpop.f32.mrb[0].mxu0
    %3530 = vmatprep.mubr.bf16.mxu0 0
    %3531 = vmatmul.mubr.bf16.gmra.mrb[0].mxu0 %v3435
    %v3532 = vpop.f32.mrb[0].mxu0
    %v3533 = vadd.f32 %v3278, %v3532
    %v3534 = vpop.f32.mrb[0].mxu0
    %v3535 = vpop.f32.mrb[0].mxu0
    %v3536 = vadd.f32 %v3281, %v3535
    %v3537 = vpop.f32.mrb[0].mxu0
    %3538 = vmatprep.mubr.bf16.mxu0 0
    %3539 = vmatmul.mubr.bf16.gmra.mrb[0].mxu0 %v3438
    %v3540 = vpop.f32.mrb[0].mxu0
    %v3541 = vadd.f32 %v3286, %v3540
    %v3542 = vpop.f32.mrb[0].mxu0
    %v3543 = vpop.f32.mrb[0].mxu0
    %v3544 = vadd.f32 %v3289, %v3543
    %v3545 = vpop.f32.mrb[0].mxu0
    %3546 = vmatprep.mubr.bf16.mxu0 0
    %3547 = vmatmul.mubr.bf16.gmra.mrb[0].mxu0 %v3441
    %v3548 = vpop.f32.mrb[0].mxu0
    %v3549 = vadd.f32 %v3294, %v3548
    %v3550 = vpop.f32.mrb[0].mxu0
    %v3551 = vpop.f32.mrb[0].mxu0
    %v3552 = vadd.f32 %v3297, %v3551
    %v3553 = vpop.f32.mrb[0].mxu0
    %3554 = vmatprep.mubr.bf16.mxu0 0
    %3555 = vmatmul.mubr.bf16.gmra.mrb[0].mxu0 %v3444
    %v3556 = vpop.f32.mrb[0].mxu0
    %v3557 = vadd.f32 %v3302, %v3556
    %v3558 = vpop.f32.mrb[0].mxu0
    %v3559 = vpop.f32.mrb[0].mxu0
    %v3560 = vadd.f32 %v3305, %v3559
    %v3561 = vpop.f32.mrb[0].mxu0
    %3562 = vmatprep.mubr.bf16.mxu0 0
    %3563 = vmatmul.mubr.bf16.gmra.mrb[0].mxu0 %v3447
    %v3564 = vpop.f32.mrb[0].mxu0
    %v3565 = vadd.f32 %v3310, %v3564
    %v3566 = vpop.f32.mrb[0].mxu0
    %v3567 = vpop.f32.mrb[0].mxu0
    %v3568 = vadd.f32 %v3313, %v3567
    %v3569 = vpop.f32.mrb[0].mxu0
    %3570 = vmatprep.mubr.bf16.mxu0 0
    %3571 = vmatmul.mubr.bf16.gmra.mrb[0].mxu0 %v3450
    %v3572 = vpop.f32.mrb[0].mxu0
    %v3573 = vadd.f32 %v3318, %v3572
    %v3574 = vpop.f32.mrb[0].mxu0
    %v3575 = vpop.f32.mrb[0].mxu0
    %v3576 = vadd.f32 %v3321, %v3575
    %v3577 = vpop.f32.mrb[0].mxu0
    %3578 = vmatprep.mubr.bf16.mxu0 0
    %3579 = vmatmul.mubr.bf16.gmra.mrb[0].mxu0 %v3453
    %v3580 = vpop.f32.mrb[0].mxu0
    %v3581 = vadd.f32 %v3326, %v3580
    %v3582 = vpop.f32.mrb[0].mxu0
    %v3583 = vpop.f32.mrb[0].mxu0
    %v3584 = vadd.f32 %v3329, %v3583
    %v3585 = vpop.f32.mrb[0].mxu0
    %3586 = vmatprep.mubr.bf16.mxu0 0
    %3587 = vmatmul.mubr.bf16.gmra.mrb[0].mxu0 %v3456
    %v3588 = vpop.f32.mrb[0].mxu0
    %v3589 = vadd.f32 %v3334, %v3588
    %v3590 = vpop.f32.mrb[0].mxu0
    %v3591 = vpop.f32.mrb[0].mxu0
    %v3592 = vadd.f32 %v3337, %v3591
    %v3593 = vpop.f32.mrb[0].mxu0
    %3594 = vmatprep.mubr.bf16.mxu0 0
    %3595 = vmatmul.mubr.bf16.gmra.mrb[0].mxu0 %v3459
    %v3596 = vpop.f32.mrb[0].mxu0
    %v3597 = vadd.f32 %v3342, %v3596
    %v3598 = vpop.f32.mrb[0].mxu0
    %v3599 = vpop.f32.mrb[0].mxu0
    %v3600 = vadd.f32 %v3345, %v3599
    %v3601 = vpop.f32.mrb[0].mxu0
    %3602 = vmatprep.mubr.bf16.mxu0 0
    %3603 = vmatmul.mubr.bf16.gmra.mrb[0].mxu0 %v3462
    %v3604 = vpop.f32.mrb[0].mxu0
    %v3605 = vadd.f32 %v3350, %v3604
    %v3606 = vpop.f32.mrb[0].mxu0
    %v3607 = vpop.f32.mrb[0].mxu0
    %v3608 = vadd.f32 %v3353, %v3607
    %v3609 = vpop.f32.mrb[0].mxu0
    %3610 = vmatprep.mubr.bf16.mxu0 0
    %3611 = vmatmul.mubr.bf16.gmra.mrb[0].mxu0 %v3465
    %v3612 = vpop.f32.mrb[0].mxu0
    %v3613 = vadd.f32 %v3358, %v3612
    %v3614 = vpop.f32.mrb[0].mxu0
    %v3615 = vpop.f32.mrb[0].mxu0
    %v3616 = vadd.f32 %v3361, %v3615
    %v3617 = vpop.f32.mrb[0].mxu0
    %3618 = vmatprep.mubr.bf16.mxu0 0
    %3619 = vmatmul.mubr.bf16.gmra.mrb[0].mxu0 %v3468
    %v3620 = vpop.f32.mrb[0].mxu0
    %v3621 = vadd.f32 %v3366, %v3620
    %v3622 = vpop.f32.mrb[0].mxu0
    %v3623 = vpop.f32.mrb[0].mxu0
    %v3624 = vadd.f32 %v3369, %v3623
    %v3625 = vpop.f32.mrb[0].mxu0
    %3626 = vmatprep.mubr.bf16.mxu0 0
    %3627 = vmatmul.mubr.bf16.gmra.mrb[0].mxu0 %v3471
    %v3628 = vpop.f32.mrb[0].mxu0
    %v3629 = vadd.f32 %v3374, %v3628
    %v3630 = vpop.f32.mrb[0].mxu0
    %v3631 = vpop.f32.mrb[0].mxu0
    %v3632 = vadd.f32 %v3377, %v3631
    %v3633 = vpop.f32.mrb[0].mxu0
    %3634 = vmatprep.mubr.bf16.mxu0 0
    %3635 = vmatmul.mubr.bf16.gmra.mrb[0].mxu0 %v3474
    %v3636 = vpop.f32.mrb[0].mxu0
    %v3637 = vadd.f32 %v3382, %v3636
    %v3638 = vpop.f32.mrb[0].mxu0
    %v3639 = vpop.f32.mrb[0].mxu0
    %v3640 = vadd.f32 %v3385, %v3639
    %v3641 = vpop.f32.mrb[0].mxu0
    %3642 = vmatprep.mubr.bf16.mxu0 0
    %3643 = vmatmul.mubr.bf16.gmra.mrb[0].mxu0 %v3477
    %v3644 = vpop.f32.mrb[0].mxu0
    %v3645 = vadd.f32 %v3390, %v3644
    %v3646 = vpop.f32.mrb[0].mxu0
    %v3647 = vpop.f32.mrb[0].mxu0
    %v3648 = vadd.f32 %v3393, %v3647
    %v3649 = vpop.f32.mrb[0].mxu0
    %3650 = vmatprep.mubr.bf16.mxu0 0
    %3651 = vmatmul.mubr.bf16.gmra.mrb[0].mxu0 %v3480
    %v3652 = vpop.f32.mrb[0].mxu0
    %v3653 = vadd.f32 %v3398, %v3652
    %v3654 = vpop.f32.mrb[0].mxu0
    %v3655 = vpop.f32.mrb[0].mxu0
    %v3656 = vadd.f32 %v3401, %v3655
    %v3657 = vpop.f32.mrb[0].mxu0
    %3658 = vdwg.mxu0
    %s3659 = scalar_lea.vmem [#allocation3], 64
    %v3660 = vld [vmem:[%s3659] sm:$0xf]
    %v3661 = vld [vmem:[%s3659 + $0x4] sm:$0xf]
    %v3662 = vld [vmem:[%s3659 + $0x8] sm:$0xf]
    %v3663 = vld [vmem:[%s3659 + $0xc] sm:$0xf]
    %v3664 = vld [vmem:[%s3659 + $0x10] sm:$0xf]
    %v3665 = vld [vmem:[%s3659 + $0x14] sm:$0xf]
    %v3666 = vld [vmem:[%s3659 + $0x18] sm:$0xf]
    %v3667 = vld [vmem:[%s3659 + $0x1c] sm:$0xf]
    %v3676 = vunpack.c.l.b16 %v3660
    %v3677 = vunpack.c.l.b16 %v3661
    %v3678 = vunpack.c.l.b16 %v3662
    %v3679 = vunpack.c.l.b16 %v3663
    %v3680 = vunpack.c.l.b16 %v3664
    %v3681 = vunpack.c.l.b16 %v3665
    %v3682 = vunpack.c.l.b16 %v3666
    %v3683 = vunpack.c.l.b16 %v3667
    %v3684 = vpack.c.b16 %v3677, %v3676
    %v3685 = vpack.c.b16 %v3679, %v3678
    %v3686 = vpack.c.b16 %v3681, %v3680
    %v3687 = vpack.c.b16 %v3683, %v3682
    %v3693 = vsel %vm1376, %v3070, 0
    %v3696 = vsel %vm1376, %v3071, 0
    %v3699 = vsel %vm1376, %v3072, 0
    %3701 = vmatprep.subr.bf16.mxu0 0
    %3702 = vmatpush1.bf16.msra.mxu0 %v3684
    %3703 = vmatprep.subr.bf16.mxu0 0
    %3704 = vmatpush1.bf16.msra.mxu0 %v3685
    %3705 = vmatprep.subr.bf16.mxu0 0
    %3706 = vmatpush1.bf16.msra.mxu0 %v3686
    %3707 = vmatprep.subr.bf16.mxu0 0
    %3708 = vmatpush1.bf16.msra.mxu0 %v3687
    %3709 = vmatprep.subr.bf16.mxu0 0
    %3710 = vmatpush1.bf16.msra.mxu0 0
    %3711 = vmatprep.subr.bf16.mxu0 0
    %3712 = vmatpush1.bf16.msra.mxu0 0
    %3713 = vmatprep.subr.bf16.mxu0 0
    %3714 = vmatpush1.bf16.msra.mxu0 0
    %3715 = vmatprep.subr.bf16.mxu0 0
    %3716 = vmatpush1.bf16.msra.mxu0 0
    %3717 = vmatprep.subr.bf16.mxu0 0
    %3718 = vmatpush1.bf16.msra.mxu0 0
    %3719 = vmatprep.subr.bf16.mxu0 0
    %3720 = vmatpush1.bf16.msra.mxu0 0
    %3721 = vmatprep.subr.bf16.mxu0 0
    %3722 = vmatpush1.bf16.msra.mxu0 0
    %3723 = vmatprep.subr.bf16.mxu0 0
    %3724 = vmatpush1.bf16.msra.mxu0 0
    %3725 = vmatprep.subr.bf16.mxu0 0
    %3726 = vmatpush1.bf16.msra.mxu0 0
    %3727 = vmatprep.subr.bf16.mxu0 0
    %3728 = vmatpush1.bf16.msra.mxu0 0
    %3729 = vmatprep.subr.bf16.mxu0 0
    %3730 = vmatpush1.bf16.msra.mxu0 0
    %3731 = vmatprep.subr.bf16.mxu0 0
    %3732 = vmatpush1.bf16.msra.mxu0 0
    %3733 = vmatprep.mubr.bf16.mxu0 0
    %3734 = vmatmul.mubr.bf16.gmra.mrb[0].mxu0 %v3438
    %v3735 = vpop.f32.mrb[0].mxu0
    %v3736 = vadd.f32 0.0, %v3735
    %v3737 = vpop.f32.mrb[0].mxu0
    %v3738 = vpop.f32.mrb[0].mxu0
    %v3739 = vadd.f32 0.0, %v3738
    %v3740 = vpop.f32.mrb[0].mxu0
    %3741 = vmatprep.mubr.bf16.mxu0 0
    %3742 = vmatmul.mubr.bf16.gmra.mrb[0].mxu0 %v3441
    %v3743 = vpop.f32.mrb[0].mxu0
    %v3744 = vadd.f32 0.0, %v3743
    %v3745 = vpop.f32.mrb[0].mxu0
    %v3746 = vpop.f32.mrb[0].mxu0
    %v3747 = vadd.f32 0.0, %v3746
    %v3748 = vpop.f32.mrb[0].mxu0
    %3749 = vmatprep.mubr.bf16.mxu0 0
    %3750 = vmatmul.mubr.bf16.gmra.mrb[0].mxu0 %v3444
    %v3751 = vpop.f32.mrb[0].mxu0
    %v3752 = vadd.f32 0.0, %v3751
    %v3753 = vpop.f32.mrb[0].mxu0
    %v3754 = vpop.f32.mrb[0].mxu0
    %v3755 = vadd.f32 0.0, %v3754
    %v3756 = vpop.f32.mrb[0].mxu0
    %3757 = vmatprep.mubr.bf16.mxu0 0
    %3758 = vmatmul.mubr.bf16.gmra.mrb[0].mxu0 %v3447
    %v3759 = vpop.f32.mrb[0].mxu0
    %v3760 = vadd.f32 0.0, %v3759
    %v3761 = vpop.f32.mrb[0].mxu0
    %v3762 = vpop.f32.mrb[0].mxu0
    %v3763 = vadd.f32 0.0, %v3762
    %v3764 = vpop.f32.mrb[0].mxu0
    %3765 = vmatprep.mubr.bf16.mxu0 0
    %3766 = vmatmul.mubr.bf16.gmra.mrb[0].mxu0 %v3450
    %v3767 = vpop.f32.mrb[0].mxu0
    %v3768 = vadd.f32 0.0, %v3767
    %v3769 = vpop.f32.mrb[0].mxu0
    %v3770 = vpop.f32.mrb[0].mxu0
    %v3771 = vadd.f32 0.0, %v3770
    %v3772 = vpop.f32.mrb[0].mxu0
    %3773 = vmatprep.mubr.bf16.mxu0 0
    %3774 = vmatmul.mubr.bf16.gmra.mrb[0].mxu0 %v3453
    %v3775 = vpop.f32.mrb[0].mxu0
    %v3776 = vadd.f32 0.0, %v3775
    %v3777 = vpop.f32.mrb[0].mxu0
    %v3778 = vpop.f32.mrb[0].mxu0
    %v3779 = vadd.f32 0.0, %v3778
    %v3780 = vpop.f32.mrb[0].mxu0
    %3781 = vmatprep.mubr.bf16.mxu0 0
    %3782 = vmatmul.mubr.bf16.gmra.mrb[0].mxu0 %v3456
    %v3783 = vpop.f32.mrb[0].mxu0
    %v3784 = vadd.f32 0.0, %v3783
    %v3785 = vpop.f32.mrb[0].mxu0
    %v3786 = vpop.f32.mrb[0].mxu0
    %v3787 = vadd.f32 0.0, %v3786
    %v3788 = vpop.f32.mrb[0].mxu0
    %3789 = vmatprep.mubr.bf16.mxu0 0
    %3790 = vmatmul.mubr.bf16.gmra.mrb[0].mxu0 %v3459
    %v3791 = vpop.f32.mrb[0].mxu0
    %v3792 = vadd.f32 0.0, %v3791
    %v3793 = vpop.f32.mrb[0].mxu0
    %v3794 = vpop.f32.mrb[0].mxu0
    %v3795 = vadd.f32 0.0, %v3794
    %v3796 = vpop.f32.mrb[0].mxu0
    %3797 = vmatprep.mubr.bf16.mxu0 0
    %3798 = vmatmul.mubr.bf16.gmra.mrb[0].mxu0 %v3462
    %v3799 = vpop.f32.mrb[0].mxu0
    %v3800 = vadd.f32 0.0, %v3799
    %v3801 = vpop.f32.mrb[0].mxu0
    %v3802 = vpop.f32.mrb[0].mxu0
    %v3803 = vadd.f32 0.0, %v3802
    %v3804 = vpop.f32.mrb[0].mxu0
    %3805 = vmatprep.mubr.bf16.mxu0 0
    %3806 = vmatmul.mubr.bf16.gmra.mrb[0].mxu0 %v3465
    %v3807 = vpop.f32.mrb[0].mxu0
    %v3808 = vadd.f32 0.0, %v3807
    %v3809 = vpop.f32.mrb[0].mxu0
    %v3810 = vpop.f32.mrb[0].mxu0
    %v3811 = vadd.f32 0.0, %v3810
    %v3812 = vpop.f32.mrb[0].mxu0
    %3813 = vmatprep.mubr.bf16.mxu0 0
    %3814 = vmatmul.mubr.bf16.gmra.mrb[0].mxu0 %v3468
    %v3815 = vpop.f32.mrb[0].mxu0
    %v3816 = vadd.f32 0.0, %v3815
    %v3817 = vpop.f32.mrb[0].mxu0
    %v3818 = vpop.f32.mrb[0].mxu0
    %v3819 = vadd.f32 0.0, %v3818
    %v3820 = vpop.f32.mrb[0].mxu0
    %3821 = vmatprep.mubr.bf16.mxu0 0
    %3822 = vmatmul.mubr.bf16.gmra.mrb[0].mxu0 %v3471
    %v3823 = vpop.f32.mrb[0].mxu0
    %v3824 = vadd.f32 0.0, %v3823
    %v3825 = vpop.f32.mrb[0].mxu0
    %v3826 = vpop.f32.mrb[0].mxu0
    %v3827 = vadd.f32 0.0, %v3826
    %v3828 = vpop.f32.mrb[0].mxu0
    %3829 = vmatprep.mubr.bf16.mxu0 0
    %3830 = vmatmul.mubr.bf16.gmra.mrb[0].mxu0 %v3474
    %v3831 = vpop.f32.mrb[0].mxu0
    %v3832 = vadd.f32 0.0, %v3831
    %v3833 = vpop.f32.mrb[0].mxu0
    %v3834 = vpop.f32.mrb[0].mxu0
    %v3835 = vadd.f32 0.0, %v3834
    %v3836 = vpop.f32.mrb[0].mxu0
    %3837 = vmatprep.mubr.bf16.mxu0 0
    %3838 = vmatmul.mubr.bf16.gmra.mrb[0].mxu0 %v3477
    %v3839 = vpop.f32.mrb[0].mxu0
    %v3840 = vadd.f32 0.0, %v3839
    %v3841 = vpop.f32.mrb[0].mxu0
    %v3842 = vpop.f32.mrb[0].mxu0
    %v3843 = vadd.f32 0.0, %v3842
    %v3844 = vpop.f32.mrb[0].mxu0
    %3845 = vmatprep.mubr.bf16.mxu0 0
    %3846 = vmatmul.mubr.bf16.gmra.mrb[0].mxu0 %v3480
    %v3847 = vpop.f32.mrb[0].mxu0
    %v3848 = vadd.f32 0.0, %v3847
    %v3849 = vpop.f32.mrb[0].mxu0
    %v3850 = vpop.f32.mrb[0].mxu0
    %v3851 = vadd.f32 0.0, %v3850
    %v3852 = vpop.f32.mrb[0].mxu0
    %3853 = vmatprep.mubr.bf16.mxu0 0
    %3854 = vmatmul.mubr.bf16.gmra.mrb[0].mxu0 %v3693
    %v3855 = vpop.f32.mrb[0].mxu0
    %v3856 = vadd.f32 0.0, %v3855
    %v3857 = vpop.f32.mrb[0].mxu0
    %v3858 = vpop.f32.mrb[0].mxu0
    %v3859 = vadd.f32 0.0, %v3858
    %v3860 = vpop.f32.mrb[0].mxu0
    %3861 = vmatprep.mubr.bf16.mxu0 0
    %3862 = vmatmul.mubr.bf16.gmra.mrb[0].mxu0 %v3696
    %v3863 = vpop.f32.mrb[0].mxu0
    %v3864 = vadd.f32 0.0, %v3863
    %v3865 = vpop.f32.mrb[0].mxu0
    %v3866 = vpop.f32.mrb[0].mxu0
    %v3867 = vadd.f32 0.0, %v3866
    %v3868 = vpop.f32.mrb[0].mxu0
    %3869 = vmatprep.mubr.bf16.mxu0 0
    %3870 = vmatmul.mubr.bf16.gmra.mrb[0].mxu0 %v3699
    %v3871 = vpop.f32.mrb[0].mxu0
    %v3872 = vadd.f32 0.0, %v3871
    %v3873 = vpop.f32.mrb[0].mxu0
    %v3874 = vpop.f32.mrb[0].mxu0
    %v3875 = vadd.f32 0.0, %v3874
    %v3876 = vpop.f32.mrb[0].mxu0
    %3877 = vdwg.mxu0
    %v3878 = vadd.f32 %v3517, %v3736
    %v3879 = vadd.f32 %v3520, %v3739
    %v3880 = vadd.f32 %v3525, %v3744
    %v3881 = vadd.f32 %v3528, %v3747
    %v3882 = vadd.f32 %v3533, %v3752
    %v3883 = vadd.f32 %v3536, %v3755
    %v3884 = vadd.f32 %v3541, %v3760
    %v3885 = vadd.f32 %v3544, %v3763
    %v3886 = vadd.f32 %v3549, %v3768
    %v3887 = vadd.f32 %v3552, %v3771
    %v3888 = vadd.f32 %v3557, %v3776
    %v3889 = vadd.f32 %v3560, %v3779
    %v3890 = vadd.f32 %v3565, %v3784
    %v3891 = vadd.f32 %v3568, %v3787
    %v3892 = vadd.f32 %v3573, %v3792
    %v3893 = vadd.f32 %v3576, %v3795
    %v3894 = vadd.f32 %v3581, %v3800
    %v3895 = vadd.f32 %v3584, %v3803
    %v3896 = vadd.f32 %v3589, %v3808
    %v3897 = vadd.f32 %v3592, %v3811
    %v3898 = vadd.f32 %v3597, %v3816
    %v3899 = vadd.f32 %v3600, %v3819
    %v3900 = vadd.f32 %v3605, %v3824
    %v3901 = vadd.f32 %v3608, %v3827
    %v3902 = vadd.f32 %v3613, %v3832
    %v3903 = vadd.f32 %v3616, %v3835
    %v3904 = vadd.f32 %v3621, %v3840
    %v3905 = vadd.f32 %v3624, %v3843
    %v3906 = vadd.f32 %v3629, %v3848
    %v3907 = vadd.f32 %v3632, %v3851
    %v3908 = vadd.f32 %v3637, %v3856
    %v3909 = vadd.f32 %v3640, %v3859
    %v3910 = vadd.f32 %v3645, %v3864
    %v3911 = vadd.f32 %v3648, %v3867
    %v3912 = vadd.f32 %v3653, %v3872
    %v3913 = vadd.f32 %v3656, %v3875
    %s3914 = scalar_lea.vmem [#allocation3], 96
    %v3915 = vld [vmem:[%s3914] sm:$0xf]
    %v3916 = vld [vmem:[%s3914 + $0x4] sm:$0xf]
    %v3917 = vld [vmem:[%s3914 + $0x8] sm:$0xf]
    %v3918 = vld [vmem:[%s3914 + $0xc] sm:$0xf]
    %v3919 = vld [vmem:[%s3914 + $0x10] sm:$0xf]
    %v3920 = vld [vmem:[%s3914 + $0x14] sm:$0xf]
    %v3921 = vld [vmem:[%s3914 + $0x18] sm:$0xf]
    %v3922 = vld [vmem:[%s3914 + $0x1c] sm:$0xf]
    %v3926 = vrot.slane %v3072, 4
    %v3927 = vsel %vm1302, %v3147, %v3926
    %v3928 = vrot.slane %v3073, 4
    %v3929 = vsel %vm1302, %v3926, %v3928
    %v3930 = vrot.slane %v3074, 4
    %v3931 = vsel %vm1302, %v3928, %v3930
    %v3940 = vunpack.c.l.b16 %v3915
    %v3941 = vunpack.c.l.b16 %v3916
    %v3942 = vunpack.c.l.b16 %v3917
    %v3943 = vunpack.c.l.b16 %v3918
    %v3944 = vunpack.c.l.b16 %v3919
    %v3945 = vunpack.c.l.b16 %v3920
    %v3946 = vunpack.c.l.b16 %v3921
    %v3947 = vunpack.c.l.b16 %v3922
    %v3948 = vpack.c.b16 %v3941, %v3940
    %v3949 = vpack.c.b16 %v3943, %v3942
    %v3950 = vpack.c.b16 %v3945, %v3944
    %v3951 = vpack.c.b16 %v3947, %v3946
    %v3957 = vsel %vm1376, %v3927, 0
    %v3960 = vsel %vm1376, %v3929, 0
    %v3963 = vsel %vm1376, %v3931, 0
    %3965 = vmatprep.subr.bf16.mxu0 0
    %3966 = vmatpush1.bf16.msra.mxu0 %v3948
    %3967 = vmatprep.subr.bf16.mxu0 0
    %3968 = vmatpush1.bf16.msra.mxu0 %v3949
    %3969 = vmatprep.subr.bf16.mxu0 0
    %3970 = vmatpush1.bf16.msra.mxu0 %v3950
    %3971 = vmatprep.subr.bf16.mxu0 0
    %3972 = vmatpush1.bf16.msra.mxu0 %v3951
    %3973 = vmatprep.subr.bf16.mxu0 0
    %3974 = vmatpush1.bf16.msra.mxu0 0
    %3975 = vmatprep.subr.bf16.mxu0 0
    %3976 = vmatpush1.bf16.msra.mxu0 0
    %3977 = vmatprep.subr.bf16.mxu0 0
    %3978 = vmatpush1.bf16.msra.mxu0 0
    %3979 = vmatprep.subr.bf16.mxu0 0
    %3980 = vmatpush1.bf16.msra.mxu0 0
    %3981 = vmatprep.subr.bf16.mxu0 0
    %3982 = vmatpush1.bf16.msra.mxu0 0
    %3983 = vmatprep.subr.bf16.mxu0 0
    %3984 = vmatpush1.bf16.msra.mxu0 0
    %3985 = vmatprep.subr.bf16.mxu0 0
    %3986 = vmatpush1.bf16.msra.mxu0 0
    %3987 = vmatprep.subr.bf16.mxu0 0
    %3988 = vmatpush1.bf16.msra.mxu0 0
    %3989 = vmatprep.subr.bf16.mxu0 0
    %3990 = vmatpush1.bf16.msra.mxu0 0
    %3991 = vmatprep.subr.bf16.mxu0 0
    %3992 = vmatpush1.bf16.msra.mxu0 0
    %3993 = vmatprep.subr.bf16.mxu0 0
    %3994 = vmatpush1.bf16.msra.mxu0 0
    %3995 = vmatprep.subr.bf16.mxu0 0
    %3996 = vmatpush1.bf16.msra.mxu0 0
    %3997 = vmatprep.mubr.bf16.mxu0 0
    %3998 = vmatmul.mubr.bf16.gmra.mrb[0].mxu0 %v3183
    %v3999 = vpop.f32.mrb[0].mxu0
    %v4000 = vadd.f32 0.0, %v3999
    %v4001 = vpop.f32.mrb[0].mxu0
    %v4002 = vpop.f32.mrb[0].mxu0
    %v4003 = vadd.f32 0.0, %v4002
    %v4004 = vpop.f32.mrb[0].mxu0
    %4005 = vmatprep.mubr.bf16.mxu0 0
    %4006 = vmatmul.mubr.bf16.gmra.mrb[0].mxu0 %v3186
    %v4007 = vpop.f32.mrb[0].mxu0
    %v4008 = vadd.f32 0.0, %v4007
    %v4009 = vpop.f32.mrb[0].mxu0
    %v4010 = vpop.f32.mrb[0].mxu0
    %v4011 = vadd.f32 0.0, %v4010
    %v4012 = vpop.f32.mrb[0].mxu0
    %4013 = vmatprep.mubr.bf16.mxu0 0
    %4014 = vmatmul.mubr.bf16.gmra.mrb[0].mxu0 %v3189
    %v4015 = vpop.f32.mrb[0].mxu0
    %v4016 = vadd.f32 0.0, %v4015
    %v4017 = vpop.f32.mrb[0].mxu0
    %v4018 = vpop.f32.mrb[0].mxu0
    %v4019 = vadd.f32 0.0, %v4018
    %v4020 = vpop.f32.mrb[0].mxu0
    %4021 = vmatprep.mubr.bf16.mxu0 0
    %4022 = vmatmul.mubr.bf16.gmra.mrb[0].mxu0 %v3192
    %v4023 = vpop.f32.mrb[0].mxu0
    %v4024 = vadd.f32 0.0, %v4023
    %v4025 = vpop.f32.mrb[0].mxu0
    %v4026 = vpop.f32.mrb[0].mxu0
    %v4027 = vadd.f32 0.0, %v4026
    %v4028 = vpop.f32.mrb[0].mxu0
    %4029 = vmatprep.mubr.bf16.mxu0 0
    %4030 = vmatmul.mubr.bf16.gmra.mrb[0].mxu0 %v3195
    %v4031 = vpop.f32.mrb[0].mxu0
    %v4032 = vadd.f32 0.0, %v4031
    %v4033 = vpop.f32.mrb[0].mxu0
    %v4034 = vpop.f32.mrb[0].mxu0
    %v4035 = vadd.f32 0.0, %v4034
    %v4036 = vpop.f32.mrb[0].mxu0
    %4037 = vmatprep.mubr.bf16.mxu0 0
    %4038 = vmatmul.mubr.bf16.gmra.mrb[0].mxu0 %v3198
    %v4039 = vpop.f32.mrb[0].mxu0
    %v4040 = vadd.f32 0.0, %v4039
    %v4041 = vpop.f32.mrb[0].mxu0
    %v4042 = vpop.f32.mrb[0].mxu0
    %v4043 = vadd.f32 0.0, %v4042
    %v4044 = vpop.f32.mrb[0].mxu0
    %4045 = vmatprep.mubr.bf16.mxu0 0
    %4046 = vmatmul.mubr.bf16.gmra.mrb[0].mxu0 %v3201
    %v4047 = vpop.f32.mrb[0].mxu0
    %v4048 = vadd.f32 0.0, %v4047
    %v4049 = vpop.f32.mrb[0].mxu0
    %v4050 = vpop.f32.mrb[0].mxu0
    %v4051 = vadd.f32 0.0, %v4050
    %v4052 = vpop.f32.mrb[0].mxu0
    %4053 = vmatprep.mubr.bf16.mxu0 0
    %4054 = vmatmul.mubr.bf16.gmra.mrb[0].mxu0 %v3204
    %v4055 = vpop.f32.mrb[0].mxu0
    %v4056 = vadd.f32 0.0, %v4055
    %v4057 = vpop.f32.mrb[0].mxu0
    %v4058 = vpop.f32.mrb[0].mxu0
    %v4059 = vadd.f32 0.0, %v4058
    %v4060 = vpop.f32.mrb[0].mxu0
    %4061 = vmatprep.mubr.bf16.mxu0 0
    %4062 = vmatmul.mubr.bf16.gmra.mrb[0].mxu0 %v3207
    %v4063 = vpop.f32.mrb[0].mxu0
    %v4064 = vadd.f32 0.0, %v4063
    %v4065 = vpop.f32.mrb[0].mxu0
    %v4066 = vpop.f32.mrb[0].mxu0
    %v4067 = vadd.f32 0.0, %v4066
    %v4068 = vpop.f32.mrb[0].mxu0
    %4069 = vmatprep.mubr.bf16.mxu0 0
    %4070 = vmatmul.mubr.bf16.gmra.mrb[0].mxu0 %v3210
    %v4071 = vpop.f32.mrb[0].mxu0
    %v4072 = vadd.f32 0.0, %v4071
    %v4073 = vpop.f32.mrb[0].mxu0
    %v4074 = vpop.f32.mrb[0].mxu0
    %v4075 = vadd.f32 0.0, %v4074
    %v4076 = vpop.f32.mrb[0].mxu0
    %4077 = vmatprep.mubr.bf16.mxu0 0
    %4078 = vmatmul.mubr.bf16.gmra.mrb[0].mxu0 %v3213
    %v4079 = vpop.f32.mrb[0].mxu0
    %v4080 = vadd.f32 0.0, %v4079
    %v4081 = vpop.f32.mrb[0].mxu0
    %v4082 = vpop.f32.mrb[0].mxu0
    %v4083 = vadd.f32 0.0, %v4082
    %v4084 = vpop.f32.mrb[0].mxu0
    %4085 = vmatprep.mubr.bf16.mxu0 0
    %4086 = vmatmul.mubr.bf16.gmra.mrb[0].mxu0 %v3216
    %v4087 = vpop.f32.mrb[0].mxu0
    %v4088 = vadd.f32 0.0, %v4087
    %v4089 = vpop.f32.mrb[0].mxu0
    %v4090 = vpop.f32.mrb[0].mxu0
    %v4091 = vadd.f32 0.0, %v4090
    %v4092 = vpop.f32.mrb[0].mxu0
    %4093 = vmatprep.mubr.bf16.mxu0 0
    %4094 = vmatmul.mubr.bf16.gmra.mrb[0].mxu0 %v3219
    %v4095 = vpop.f32.mrb[0].mxu0
    %v4096 = vadd.f32 0.0, %v4095
    %v4097 = vpop.f32.mrb[0].mxu0
    %v4098 = vpop.f32.mrb[0].mxu0
    %v4099 = vadd.f32 0.0, %v4098
    %v4100 = vpop.f32.mrb[0].mxu0
    %4101 = vmatprep.mubr.bf16.mxu0 0
    %4102 = vmatmul.mubr.bf16.gmra.mrb[0].mxu0 %v3222
    %v4103 = vpop.f32.mrb[0].mxu0
    %v4104 = vadd.f32 0.0, %v4103
    %v4105 = vpop.f32.mrb[0].mxu0
    %v4106 = vpop.f32.mrb[0].mxu0
    %v4107 = vadd.f32 0.0, %v4106
    %v4108 = vpop.f32.mrb[0].mxu0
    %4109 = vmatprep.mubr.bf16.mxu0 0
    %4110 = vmatmul.mubr.bf16.gmra.mrb[0].mxu0 %v3225
    %v4111 = vpop.f32.mrb[0].mxu0
    %v4112 = vadd.f32 0.0, %v4111
    %v4113 = vpop.f32.mrb[0].mxu0
    %v4114 = vpop.f32.mrb[0].mxu0
    %v4115 = vadd.f32 0.0, %v4114
    %v4116 = vpop.f32.mrb[0].mxu0
    %4117 = vmatprep.mubr.bf16.mxu0 0
    %4118 = vmatmul.mubr.bf16.gmra.mrb[0].mxu0 %v3957
    %v4119 = vpop.f32.mrb[0].mxu0
    %v4120 = vadd.f32 0.0, %v4119
    %v4121 = vpop.f32.mrb[0].mxu0
    %v4122 = vpop.f32.mrb[0].mxu0
    %v4123 = vadd.f32 0.0, %v4122
    %v4124 = vpop.f32.mrb[0].mxu0
    %4125 = vmatprep.mubr.bf16.mxu0 0
    %4126 = vmatmul.mubr.bf16.gmra.mrb[0].mxu0 %v3960
    %v4127 = vpop.f32.mrb[0].mxu0
    %v4128 = vadd.f32 0.0, %v4127
    %v4129 = vpop.f32.mrb[0].mxu0
    %v4130 = vpop.f32.mrb[0].mxu0
    %v4131 = vadd.f32 0.0, %v4130
    %v4132 = vpop.f32.mrb[0].mxu0
    %4133 = vmatprep.mubr.bf16.mxu0 0
    %4134 = vmatmul.mubr.bf16.gmra.mrb[0].mxu0 %v3963
    %v4135 = vpop.f32.mrb[0].mxu0
    %v4136 = vadd.f32 0.0, %v4135
    %v4137 = vpop.f32.mrb[0].mxu0
    %v4138 = vpop.f32.mrb[0].mxu0
    %v4139 = vadd.f32 0.0, %v4138
    %v4140 = vpop.f32.mrb[0].mxu0
    %4141 = vdwg.mxu0
    %v4142 = vadd.f32 %v3878, %v4000
    %v4143 = vadd.f32 %v3879, %v4003
    %v4144 = vadd.f32 %v3880, %v4008
    %v4145 = vadd.f32 %v3881, %v4011
    %v4146 = vadd.f32 %v3882, %v4016
    %v4147 = vadd.f32 %v3883, %v4019
    %v4148 = vadd.f32 %v3884, %v4024
    %v4149 = vadd.f32 %v3885, %v4027
    %v4150 = vadd.f32 %v3886, %v4032
    %v4151 = vadd.f32 %v3887, %v4035
    %v4152 = vadd.f32 %v3888, %v4040
    %v4153 = vadd.f32 %v3889, %v4043
    %v4154 = vadd.f32 %v3890, %v4048
    %v4155 = vadd.f32 %v3891, %v4051
    %v4156 = vadd.f32 %v3892, %v4056
    %v4157 = vadd.f32 %v3893, %v4059
    %v4158 = vadd.f32 %v3894, %v4064
    %v4159 = vadd.f32 %v3895, %v4067
    %v4160 = vadd.f32 %v3896, %v4072
    %v4161 = vadd.f32 %v3897, %v4075
    %v4162 = vadd.f32 %v3898, %v4080
    %v4163 = vadd.f32 %v3899, %v4083
    %v4164 = vadd.f32 %v3900, %v4088
    %v4165 = vadd.f32 %v3901, %v4091
    %v4166 = vadd.f32 %v3902, %v4096
    %v4167 = vadd.f32 %v3903, %v4099
    %v4168 = vadd.f32 %v3904, %v4104
    %v4169 = vadd.f32 %v3905, %v4107
    %v4170 = vadd.f32 %v3906, %v4112
    %v4171 = vadd.f32 %v3907, %v4115
    %v4172 = vadd.f32 %v3908, %v4120
    %v4173 = vadd.f32 %v3909, %v4123
    %v4174 = vadd.f32 %v3910, %v4128
    %v4175 = vadd.f32 %v3911, %v4131
    %v4176 = vadd.f32 %v3912, %v4136
    %v4177 = vadd.f32 %v3913, %v4139
    %s4178 = scalar_lea.vmem [#allocation3], 128
    %v4179 = vld [vmem:[%s4178] sm:$0xf]
    %v4180 = vld [vmem:[%s4178 + $0x4] sm:$0xf]
    %v4181 = vld [vmem:[%s4178 + $0x8] sm:$0xf]
    %v4182 = vld [vmem:[%s4178 + $0xc] sm:$0xf]
    %v4183 = vld [vmem:[%s4178 + $0x10] sm:$0xf]
    %v4184 = vld [vmem:[%s4178 + $0x14] sm:$0xf]
    %v4185 = vld [vmem:[%s4178 + $0x18] sm:$0xf]
    %v4186 = vld [vmem:[%s4178 + $0x1c] sm:$0xf]
    %v4195 = vunpack.c.l.b16 %v4179
    %v4196 = vunpack.c.l.b16 %v4180
    %v4197 = vunpack.c.l.b16 %v4181
    %v4198 = vunpack.c.l.b16 %v4182
    %v4199 = vunpack.c.l.b16 %v4183
    %v4200 = vunpack.c.l.b16 %v4184
    %v4201 = vunpack.c.l.b16 %v4185
    %v4202 = vunpack.c.l.b16 %v4186
    %v4203 = vpack.c.b16 %v4196, %v4195
    %v4204 = vpack.c.b16 %v4198, %v4197
    %v4205 = vpack.c.b16 %v4200, %v4199
    %v4206 = vpack.c.b16 %v4202, %v4201
    %v4212 = vsel %vm1376, %v3073, 0
    %v4215 = vsel %vm1376, %v3074, 0
    %v4218 = vsel %vm1376, %v3075, 0
    %4220 = vmatprep.subr.bf16.mxu0 0
    %4221 = vmatpush1.bf16.msra.mxu0 %v4203
    %4222 = vmatprep.subr.bf16.mxu0 0
    %4223 = vmatpush1.bf16.msra.mxu0 %v4204
    %4224 = vmatprep.subr.bf16.mxu0 0
    %4225 = vmatpush1.bf16.msra.mxu0 %v4205
    %4226 = vmatprep.subr.bf16.mxu0 0
    %4227 = vmatpush1.bf16.msra.mxu0 %v4206
    %4228 = vmatprep.subr.bf16.mxu0 0
    %4229 = vmatpush1.bf16.msra.mxu0 0
    %4230 = vmatprep.subr.bf16.mxu0 0
    %4231 = vmatpush1.bf16.msra.mxu0 0
    %4232 = vmatprep.subr.bf16.mxu0 0
    %4233 = vmatpush1.bf16.msra.mxu0 0
    %4234 = vmatprep.subr.bf16.mxu0 0
    %4235 = vmatpush1.bf16.msra.mxu0 0
    %4236 = vmatprep.subr.bf16.mxu0 0
    %4237 = vmatpush1.bf16.msra.mxu0 0
    %4238 = vmatprep.subr.bf16.mxu0 0
    %4239 = vmatpush1.bf16.msra.mxu0 0
    %4240 = vmatprep.subr.bf16.mxu0 0
    %4241 = vmatpush1.bf16.msra.mxu0 0
    %4242 = vmatprep.subr.bf16.mxu0 0
    %4243 = vmatpush1.bf16.msra.mxu0 0
    %4244 = vmatprep.subr.bf16.mxu0 0
    %4245 = vmatpush1.bf16.msra.mxu0 0
    %4246 = vmatprep.subr.bf16.mxu0 0
    %4247 = vmatpush1.bf16.msra.mxu0 0
    %4248 = vmatprep.subr.bf16.mxu0 0
    %4249 = vmatpush1.bf16.msra.mxu0 0
    %4250 = vmatprep.subr.bf16.mxu0 0
    %4251 = vmatpush1.bf16.msra.mxu0 0
    %4252 = vmatprep.mubr.bf16.mxu0 0
    %4253 = vmatmul.mubr.bf16.gmra.mrb[0].mxu0 %v3447
    %v4254 = vpop.f32.mrb[0].mxu0
    %v4255 = vadd.f32 0.0, %v4254
    %v4256 = vpop.f32.mrb[0].mxu0
    %v4257 = vpop.f32.mrb[0].mxu0
    %v4258 = vadd.f32 0.0, %v4257
    %v4259 = vpop.f32.mrb[0].mxu0
    %4260 = vmatprep.mubr.bf16.mxu0 0
    %4261 = vmatmul.mubr.bf16.gmra.mrb[0].mxu0 %v3450
    %v4262 = vpop.f32.mrb[0].mxu0
    %v4263 = vadd.f32 0.0, %v4262
    %v4264 = vpop.f32.mrb[0].mxu0
    %v4265 = vpop.f32.mrb[0].mxu0
    %v4266 = vadd.f32 0.0, %v4265
    %v4267 = vpop.f32.mrb[0].mxu0
    %4268 = vmatprep.mubr.bf16.mxu0 0
    %4269 = vmatmul.mubr.bf16.gmra.mrb[0].mxu0 %v3453
    %v4270 = vpop.f32.mrb[0].mxu0
    %v4271 = vadd.f32 0.0, %v4270
    %v4272 = vpop.f32.mrb[0].mxu0
    %v4273 = vpop.f32.mrb[0].mxu0
    %v4274 = vadd.f32 0.0, %v4273
    %v4275 = vpop.f32.mrb[0].mxu0
    %4276 = vmatprep.mubr.bf16.mxu0 0
    %4277 = vmatmul.mubr.bf16.gmra.mrb[0].mxu0 %v3456
    %v4278 = vpop.f32.mrb[0].mxu0
    %v4279 = vadd.f32 0.0, %v4278
    %v4280 = vpop.f32.mrb[0].mxu0
    %v4281 = vpop.f32.mrb[0].mxu0
    %v4282 = vadd.f32 0.0, %v4281
    %v4283 = vpop.f32.mrb[0].mxu0
    %4284 = vmatprep.mubr.bf16.mxu0 0
    %4285 = vmatmul.mubr.bf16.gmra.mrb[0].mxu0 %v3459
    %v4286 = vpop.f32.mrb[0].mxu0
    %v4287 = vadd.f32 0.0, %v4286
    %v4288 = vpop.f32.mrb[0].mxu0
    %v4289 = vpop.f32.mrb[0].mxu0
    %v4290 = vadd.f32 0.0, %v4289
    %v4291 = vpop.f32.mrb[0].mxu0
    %4292 = vmatprep.mubr.bf16.mxu0 0
    %4293 = vmatmul.mubr.bf16.gmra.mrb[0].mxu0 %v3462
    %v4294 = vpop.f32.mrb[0].mxu0
    %v4295 = vadd.f32 0.0, %v4294
    %v4296 = vpop.f32.mrb[0].mxu0
    %v4297 = vpop.f32.mrb[0].mxu0
    %v4298 = vadd.f32 0.0, %v4297
    %v4299 = vpop.f32.mrb[0].mxu0
    %4300 = vmatprep.mubr.bf16.mxu0 0
    %4301 = vmatmul.mubr.bf16.gmra.mrb[0].mxu0 %v3465
    %v4302 = vpop.f32.mrb[0].mxu0
    %v4303 = vadd.f32 0.0, %v4302
    %v4304 = vpop.f32.mrb[0].mxu0
    %v4305 = vpop.f32.mrb[0].mxu0
    %v4306 = vadd.f32 0.0, %v4305
    %v4307 = vpop.f32.mrb[0].mxu0
    %4308 = vmatprep.mubr.bf16.mxu0 0
    %4309 = vmatmul.mubr.bf16.gmra.mrb[0].mxu0 %v3468
    %v4310 = vpop.f32.mrb[0].mxu0
    %v4311 = vadd.f32 0.0, %v4310
    %v4312 = vpop.f32.mrb[0].mxu0
    %v4313 = vpop.f32.mrb[0].mxu0
    %v4314 = vadd.f32 0.0, %v4313
    %v4315 = vpop.f32.mrb[0].mxu0
    %4316 = vmatprep.mubr.bf16.mxu0 0
    %4317 = vmatmul.mubr.bf16.gmra.mrb[0].mxu0 %v3471
    %v4318 = vpop.f32.mrb[0].mxu0
    %v4319 = vadd.f32 0.0, %v4318
    %v4320 = vpop.f32.mrb[0].mxu0
    %v4321 = vpop.f32.mrb[0].mxu0
    %v4322 = vadd.f32 0.0, %v4321
    %v4323 = vpop.f32.mrb[0].mxu0
    %4324 = vmatprep.mubr.bf16.mxu0 0
    %4325 = vmatmul.mubr.bf16.gmra.mrb[0].mxu0 %v3474
    %v4326 = vpop.f32.mrb[0].mxu0
    %v4327 = vadd.f32 0.0, %v4326
    %v4328 = vpop.f32.mrb[0].mxu0
    %v4329 = vpop.f32.mrb[0].mxu0
    %v4330 = vadd.f32 0.0, %v4329
    %v4331 = vpop.f32.mrb[0].mxu0
    %4332 = vmatprep.mubr.bf16.mxu0 0
    %4333 = vmatmul.mubr.bf16.gmra.mrb[0].mxu0 %v3477
    %v4334 = vpop.f32.mrb[0].mxu0
    %v4335 = vadd.f32 0.0, %v4334
    %v4336 = vpop.f32.mrb[0].mxu0
    %v4337 = vpop.f32.mrb[0].mxu0
    %v4338 = vadd.f32 0.0, %v4337
    %v4339 = vpop.f32.mrb[0].mxu0
    %4340 = vmatprep.mubr.bf16.mxu0 0
    %4341 = vmatmul.mubr.bf16.gmra.mrb[0].mxu0 %v3480
    %v4342 = vpop.f32.mrb[0].mxu0
    %v4343 = vadd.f32 0.0, %v4342
    %v4344 = vpop.f32.mrb[0].mxu0
    %v4345 = vpop.f32.mrb[0].mxu0
    %v4346 = vadd.f32 0.0, %v4345
    %v4347 = vpop.f32.mrb[0].mxu0
    %4348 = vmatprep.mubr.bf16.mxu0 0
    %4349 = vmatmul.mubr.bf16.gmra.mrb[0].mxu0 %v3693
    %v4350 = vpop.f32.mrb[0].mxu0
    %v4351 = vadd.f32 0.0, %v4350
    %v4352 = vpop.f32.mrb[0].mxu0
    %v4353 = vpop.f32.mrb[0].mxu0
    %v4354 = vadd.f32 0.0, %v4353
    %v4355 = vpop.f32.mrb[0].mxu0
    %4356 = vmatprep.mubr.bf16.mxu0 0
    %4357 = vmatmul.mubr.bf16.gmra.mrb[0].mxu0 %v3696
    %v4358 = vpop.f32.mrb[0].mxu0
    %v4359 = vadd.f32 0.0, %v4358
    %v4360 = vpop.f32.mrb[0].mxu0
    %v4361 = vpop.f32.mrb[0].mxu0
    %v4362 = vadd.f32 0.0, %v4361
    %v4363 = vpop.f32.mrb[0].mxu0
    %4364 = vmatprep.mubr.bf16.mxu0 0
    %4365 = vmatmul.mubr.bf16.gmra.mrb[0].mxu0 %v3699
    %v4366 = vpop.f32.mrb[0].mxu0
    %v4367 = vadd.f32 0.0, %v4366
    %v4368 = vpop.f32.mrb[0].mxu0
    %v4369 = vpop.f32.mrb[0].mxu0
    %v4370 = vadd.f32 0.0, %v4369
    %v4371 = vpop.f32.mrb[0].mxu0
    %4372 = vmatprep.mubr.bf16.mxu0 0
    %4373 = vmatmul.mubr.bf16.gmra.mrb[0].mxu0 %v4212
    %v4374 = vpop.f32.mrb[0].mxu0
    %v4375 = vadd.f32 0.0, %v4374
    %v4376 = vpop.f32.mrb[0].mxu0
    %v4377 = vpop.f32.mrb[0].mxu0
    %v4378 = vadd.f32 0.0, %v4377
    %v4379 = vpop.f32.mrb[0].mxu0
    %4380 = vmatprep.mubr.bf16.mxu0 0
    %4381 = vmatmul.mubr.bf16.gmra.mrb[0].mxu0 %v4215
    %v4382 = vpop.f32.mrb[0].mxu0
    %v4383 = vadd.f32 0.0, %v4382
    %v4384 = vpop.f32.mrb[0].mxu0
    %v4385 = vpop.f32.mrb[0].mxu0
    %v4386 = vadd.f32 0.0, %v4385
    %v4387 = vpop.f32.mrb[0].mxu0
    %4388 = vmatprep.mubr.bf16.mxu0 0
    %4389 = vmatmul.mubr.bf16.gmra.mrb[0].mxu0 %v4218
    %v4390 = vpop.f32.mrb[0].mxu0
    %v4391 = vadd.f32 0.0, %v4390
    %v4392 = vpop.f32.mrb[0].mxu0
    %v4393 = vpop.f32.mrb[0].mxu0
    %v4394 = vadd.f32 0.0, %v4393
    %v4395 = vpop.f32.mrb[0].mxu0
    %4396 = vdwg.mxu0
    %v4397 = vadd.f32 %v4142, %v4255
    %v4398 = vadd.f32 %v4143, %v4258
    %v4399 = vadd.f32 %v4144, %v4263
    %v4400 = vadd.f32 %v4145, %v4266
    %v4401 = vadd.f32 %v4146, %v4271
    %v4402 = vadd.f32 %v4147, %v4274
    %v4403 = vadd.f32 %v4148, %v4279
    %v4404 = vadd.f32 %v4149, %v4282
    %v4405 = vadd.f32 %v4150, %v4287
    %v4406 = vadd.f32 %v4151, %v4290
    %v4407 = vadd.f32 %v4152, %v4295
    %v4408 = vadd.f32 %v4153, %v4298
    %v4409 = vadd.f32 %v4154, %v4303
    %v4410 = vadd.f32 %v4155, %v4306
    %v4411 = vadd.f32 %v4156, %v4311
    %v4412 = vadd.f32 %v4157, %v4314
    %v4413 = vadd.f32 %v4158, %v4319
    %v4414 = vadd.f32 %v4159, %v4322
    %v4415 = vadd.f32 %v4160, %v4327
    %v4416 = vadd.f32 %v4161, %v4330
    %v4417 = vadd.f32 %v4162, %v4335
    %v4418 = vadd.f32 %v4163, %v4338
    %v4419 = vadd.f32 %v4164, %v4343
    %v4420 = vadd.f32 %v4165, %v4346
    %v4421 = vadd.f32 %v4166, %v4351
    %v4422 = vadd.f32 %v4167, %v4354
    %v4423 = vadd.f32 %v4168, %v4359
    %v4424 = vadd.f32 %v4169, %v4362
    %v4425 = vadd.f32 %v4170, %v4367
    %v4426 = vadd.f32 %v4171, %v4370
    %v4427 = vadd.f32 %v4172, %v4375
    %v4428 = vadd.f32 %v4173, %v4378
    %v4429 = vadd.f32 %v4174, %v4383
    %v4430 = vadd.f32 %v4175, %v4386
    %v4431 = vadd.f32 %v4176, %v4391
    %v4432 = vadd.f32 %v4177, %v4394
    %v4433 = vld [vmem:[%s6] sm:$0x1]
    %v4435 = vlaneseq
    %v4436 = vshrl.u32 %v4435, 7
    %v4437 = vsub.s32 0, %v4436
    %v4438 = vrot.slane %v4433, %v4437
    %v4440 = vadd.f32 %v4397, %v4438
    %v4441 = vadd.f32 %v4398, %v4438
    %v4442 = vadd.f32 %v4399, %v4438
    %v4443 = vadd.f32 %v4400, %v4438
    %v4444 = vadd.f32 %v4401, %v4438
    %v4445 = vadd.f32 %v4402, %v4438
    %v4446 = vadd.f32 %v4403, %v4438
    %v4447 = vadd.f32 %v4404, %v4438
    %v4448 = vadd.f32 %v4405, %v4438
    %v4449 = vadd.f32 %v4406, %v4438
    %v4450 = vadd.f32 %v4407, %v4438
    %v4451 = vadd.f32 %v4408, %v4438
    %v4452 = vadd.f32 %v4409, %v4438
    %v4453 = vadd.f32 %v4410, %v4438
    %v4454 = vadd.f32 %v4411, %v4438
    %v4455 = vadd.f32 %v4412, %v4438
    %v4456 = vadd.f32 %v4413, %v4438
    %v4457 = vadd.f32 %v4414, %v4438
    %v4458 = vadd.f32 %v4415, %v4438
    %v4459 = vadd.f32 %v4416, %v4438
    %v4460 = vadd.f32 %v4417, %v4438
    %v4461 = vadd.f32 %v4418, %v4438
    %v4462 = vadd.f32 %v4419, %v4438
    %v4463 = vadd.f32 %v4420, %v4438
    %v4464 = vadd.f32 %v4421, %v4438
    %v4465 = vadd.f32 %v4422, %v4438
    %v4466 = vadd.f32 %v4423, %v4438
    %v4467 = vadd.f32 %v4424, %v4438
    %v4468 = vadd.f32 %v4425, %v4438
    %v4469 = vadd.f32 %v4426, %v4438
    %v4470 = vadd.f32 %v4427, %v4438
    %v4471 = vadd.f32 %v4428, %v4438
    %v4472 = vadd.f32 %v4429, %v4438
    %v4473 = vadd.f32 %v4430, %v4438
    %v4474 = vadd.f32 %v4431, %v4438
    %v4475 = vadd.f32 %v4432, %v4438
    %v4476 = vmax.f32 %v4440, 0.0
    %v4477 = vmax.f32 %v4441, 0.0
    %v4478 = vmax.f32 %v4442, 0.0
    %v4479 = vmax.f32 %v4443, 0.0
    %v4480 = vmax.f32 %v4444, 0.0
    %v4481 = vmax.f32 %v4445, 0.0
    %v4482 = vmax.f32 %v4446, 0.0
    %v4483 = vmax.f32 %v4447, 0.0
    %v4484 = vmax.f32 %v4448, 0.0
    %v4485 = vmax.f32 %v4449, 0.0
    %v4486 = vmax.f32 %v4450, 0.0
    %v4487 = vmax.f32 %v4451, 0.0
    %v4488 = vmax.f32 %v4452, 0.0
    %v4489 = vmax.f32 %v4453, 0.0
    %v4490 = vmax.f32 %v4454, 0.0
    %v4491 = vmax.f32 %v4455, 0.0
    %v4492 = vmax.f32 %v4456, 0.0
    %v4493 = vmax.f32 %v4457, 0.0
    %v4494 = vmax.f32 %v4458, 0.0
    %v4495 = vmax.f32 %v4459, 0.0
    %v4496 = vmax.f32 %v4460, 0.0
    %v4497 = vmax.f32 %v4461, 0.0
    %v4498 = vmax.f32 %v4462, 0.0
    %v4499 = vmax.f32 %v4463, 0.0
    %v4500 = vmax.f32 %v4464, 0.0
    %v4501 = vmax.f32 %v4465, 0.0
    %v4502 = vmax.f32 %v4466, 0.0
    %v4503 = vmax.f32 %v4467, 0.0
    %v4504 = vmax.f32 %v4468, 0.0
    %v4505 = vmax.f32 %v4469, 0.0
    %v4506 = vmax.f32 %v4470, 0.0
    %v4507 = vmax.f32 %v4471, 0.0
    %v4508 = vmax.f32 %v4472, 0.0
    %v4509 = vmax.f32 %v4473, 0.0
    %v4510 = vmax.f32 %v4474, 0.0
    %v4511 = vmax.f32 %v4475, 0.0
    %v4512 = vpack.c.bf16 %v4477, %v4476
    %v4513 = vpack.c.bf16 %v4479, %v4478
    %v4514 = vpack.c.bf16 %v4481, %v4480
    %v4515 = vpack.c.bf16 %v4483, %v4482
    %v4516 = vpack.c.bf16 %v4485, %v4484
    %v4517 = vpack.c.bf16 %v4487, %v4486
    %v4518 = vpack.c.bf16 %v4489, %v4488
    %v4519 = vpack.c.bf16 %v4491, %v4490
    %v4520 = vpack.c.bf16 %v4493, %v4492
    %v4521 = vpack.c.bf16 %v4495, %v4494
    %v4522 = vpack.c.bf16 %v4497, %v4496
    %v4523 = vpack.c.bf16 %v4499, %v4498
    %v4524 = vpack.c.bf16 %v4501, %v4500
    %v4525 = vpack.c.bf16 %v4503, %v4502
    %v4526 = vpack.c.bf16 %v4505, %v4504
    %v4527 = vpack.c.bf16 %v4507, %v4506
    %v4528 = vpack.c.bf16 %v4509, %v4508
    %v4529 = vpack.c.bf16 %v4511, %v4510
    %v4530 = vld [vmem:[#allocation5] sm:$0xf]
    %v4531 = vld [vmem:[#allocation5 + $0x4] sm:$0xf]
    %v4532 = vld [vmem:[#allocation5 + $0x8] sm:$0xf]
    %v4533 = vld [vmem:[#allocation5 + $0xc] sm:$0xf]
    %v4534 = vld [vmem:[#allocation5 + $0x10] sm:$0xf]
    %v4535 = vld [vmem:[#allocation5 + $0x14] sm:$0xf]
    %v4536 = vld [vmem:[#allocation5 + $0x18] sm:$0xf]
    %v4537 = vld [vmem:[#allocation5 + $0x1c] sm:$0xf]
    %s4538 = scalar_lea.vmem [#allocation5], 32
    %v4539 = vld [vmem:[%s4538] sm:$0xf]
    %v4540 = vld [vmem:[%s4538 + $0x4] sm:$0xf]
    %v4541 = vld [vmem:[%s4538 + $0x8] sm:$0xf]
    %v4542 = vld [vmem:[%s4538 + $0xc] sm:$0xf]
    %v4543 = vld [vmem:[%s4538 + $0x10] sm:$0xf]
    %v4544 = vld [vmem:[%s4538 + $0x14] sm:$0xf]
    %v4545 = vld [vmem:[%s4538 + $0x18] sm:$0xf]
    %v4546 = vld [vmem:[%s4538 + $0x1c] sm:$0xf]
    %v4560 = vrot.slane %v4513, 4
    %v4561 = vrot.slane %v4514, 4
    %v4562 = vsel %vm1302, %v4560, %v4561
    %v4563 = vrot.slane %v4515, 4
    %v4564 = vsel %vm1302, %v4561, %v4563
    %v4565 = vrot.slane %v4516, 4
    %v4566 = vsel %vm1302, %v4563, %v4565
    %v4567 = vrot.slane %v4517, 4
    %v4568 = vsel %vm1302, %v4565, %v4567
    %v4569 = vrot.slane %v4518, 4
    %v4570 = vsel %vm1302, %v4567, %v4569
    %v4571 = vrot.slane %v4519, 4
    %v4572 = vsel %vm1302, %v4569, %v4571
    %v4573 = vrot.slane %v4520, 4
    %v4574 = vsel %vm1302, %v4571, %v4573
    %v4575 = vrot.slane %v4521, 4
    %v4576 = vsel %vm1302, %v4573, %v4575
    %v4577 = vrot.slane %v4522, 4
    %v4578 = vsel %vm1302, %v4575, %v4577
    %v4579 = vrot.slane %v4523, 4
    %v4580 = vsel %vm1302, %v4577, %v4579
    %v4581 = vrot.slane %v4524, 4
    %v4582 = vsel %vm1302, %v4579, %v4581
    %v4583 = vrot.slane %v4525, 4
    %v4584 = vsel %vm1302, %v4581, %v4583
    %v4593 = vunpack.c.l.b16 %v4539
    %v4594 = vunpack.c.l.b16 %v4540
    %v4595 = vunpack.c.l.b16 %v4541
    %v4596 = vunpack.c.l.b16 %v4542
    %v4597 = vunpack.c.l.b16 %v4543
    %v4598 = vunpack.c.l.b16 %v4544
    %v4599 = vunpack.c.l.b16 %v4545
    %v4600 = vunpack.c.l.b16 %v4546
    %v4601 = vpack.c.b16 %v4594, %v4593
    %v4602 = vpack.c.b16 %v4596, %v4595
    %v4603 = vpack.c.b16 %v4598, %v4597
    %v4604 = vpack.c.b16 %v4600, %v4599
    %v4610 = vsel %vm1376, %v4562, 0
    %v4613 = vsel %vm1376, %v4564, 0
    %v4616 = vsel %vm1376, %v4566, 0
    %v4619 = vsel %vm1376, %v4568, 0
    %v4622 = vsel %vm1376, %v4570, 0
    %v4625 = vsel %vm1376, %v4572, 0
    %v4628 = vsel %vm1376, %v4574, 0
    %v4631 = vsel %vm1376, %v4576, 0
    %v4634 = vsel %vm1376, %v4578, 0
    %v4637 = vsel %vm1376, %v4580, 0
    %v4640 = vsel %vm1376, %v4582, 0
    %v4643 = vsel %vm1376, %v4584, 0
    %4645 = vmatprep.subr.bf16.mxu0 0
    %4646 = vmatpush1.bf16.msra.mxu0 %v4601
    %4647 = vmatprep.subr.bf16.mxu0 0
    %4648 = vmatpush1.bf16.msra.mxu0 %v4602
    %4649 = vmatprep.subr.bf16.mxu0 0
    %4650 = vmatpush1.bf16.msra.mxu0 %v4603
    %4651 = vmatprep.subr.bf16.mxu0 0
    %4652 = vmatpush1.bf16.msra.mxu0 %v4604
    %4653 = vmatprep.subr.bf16.mxu0 0
    %4654 = vmatpush1.bf16.msra.mxu0 0
    %4655 = vmatprep.subr.bf16.mxu0 0
    %4656 = vmatpush1.bf16.msra.mxu0 0
    %4657 = vmatprep.subr.bf16.mxu0 0
    %4658 = vmatpush1.bf16.msra.mxu0 0
    %4659 = vmatprep.subr.bf16.mxu0 0
    %4660 = vmatpush1.bf16.msra.mxu0 0
    %4661 = vmatprep.subr.bf16.mxu0 0
    %4662 = vmatpush1.bf16.msra.mxu0 0
    %4663 = vmatprep.subr.bf16.mxu0 0
    %4664 = vmatpush1.bf16.msra.mxu0 0
    %4665 = vmatprep.subr.bf16.mxu0 0
    %4666 = vmatpush1.bf16.msra.mxu0 0
    %4667 = vmatprep.subr.bf16.mxu0 0
    %4668 = vmatpush1.bf16.msra.mxu0 0
    %4669 = vmatprep.subr.bf16.mxu0 0
    %4670 = vmatpush1.bf16.msra.mxu0 0
    %4671 = vmatprep.subr.bf16.mxu0 0
    %4672 = vmatpush1.bf16.msra.mxu0 0
    %4673 = vmatprep.subr.bf16.mxu0 0
    %4674 = vmatpush1.bf16.msra.mxu0 0
    %4675 = vmatprep.subr.bf16.mxu0 0
    %4676 = vmatpush1.bf16.msra.mxu0 0
    %4677 = vmatprep.mubr.bf16.mxu0 0
    %4678 = vmatmul.mubr.bf16.gmra.mrb[0].mxu0 %v4610
    %v4679 = vpop.f32.mrb[0].mxu0
    %v4680 = vadd.f32 0.0, %v4679
    %v4681 = vpop.f32.mrb[0].mxu0
    %v4682 = vpop.f32.mrb[0].mxu0
    %v4683 = vadd.f32 0.0, %v4682
    %v4684 = vpop.f32.mrb[0].mxu0
    %4685 = vmatprep.mubr.bf16.mxu0 0
    %4686 = vmatmul.mubr.bf16.gmra.mrb[0].mxu0 %v4613
    %v4687 = vpop.f32.mrb[0].mxu0
    %v4688 = vadd.f32 0.0, %v4687
    %v4689 = vpop.f32.mrb[0].mxu0
    %v4690 = vpop.f32.mrb[0].mxu0
    %v4691 = vadd.f32 0.0, %v4690
    %v4692 = vpop.f32.mrb[0].mxu0
    %4693 = vmatprep.mubr.bf16.mxu0 0
    %4694 = vmatmul.mubr.bf16.gmra.mrb[0].mxu0 %v4616
    %v4695 = vpop.f32.mrb[0].mxu0
    %v4696 = vadd.f32 0.0, %v4695
    %v4697 = vpop.f32.mrb[0].mxu0
    %v4698 = vpop.f32.mrb[0].mxu0
    %v4699 = vadd.f32 0.0, %v4698
    %v4700 = vpop.f32.mrb[0].mxu0
    %4701 = vmatprep.mubr.bf16.mxu0 0
    %4702 = vmatmul.mubr.bf16.gmra.mrb[0].mxu0 %v4619
    %v4703 = vpop.f32.mrb[0].mxu0
    %v4704 = vadd.f32 0.0, %v4703
    %v4705 = vpop.f32.mrb[0].mxu0
    %v4706 = vpop.f32.mrb[0].mxu0
    %v4707 = vadd.f32 0.0, %v4706
    %v4708 = vpop.f32.mrb[0].mxu0
    %4709 = vmatprep.mubr.bf16.mxu0 0
    %4710 = vmatmul.mubr.bf16.gmra.mrb[0].mxu0 %v4622
    %v4711 = vpop.f32.mrb[0].mxu0
    %v4712 = vadd.f32 0.0, %v4711
    %v4713 = vpop.f32.mrb[0].mxu0
    %v4714 = vpop.f32.mrb[0].mxu0
    %v4715 = vadd.f32 0.0, %v4714
    %v4716 = vpop.f32.mrb[0].mxu0
    %4717 = vmatprep.mubr.bf16.mxu0 0
    %4718 = vmatmul.mubr.bf16.gmra.mrb[0].mxu0 %v4625
    %v4719 = vpop.f32.mrb[0].mxu0
    %v4720 = vadd.f32 0.0, %v4719
    %v4721 = vpop.f32.mrb[0].mxu0
    %v4722 = vpop.f32.mrb[0].mxu0
    %v4723 = vadd.f32 0.0, %v4722
    %v4724 = vpop.f32.mrb[0].mxu0
    %4725 = vmatprep.mubr.bf16.mxu0 0
    %4726 = vmatmul.mubr.bf16.gmra.mrb[0].mxu0 %v4628
    %v4727 = vpop.f32.mrb[0].mxu0
    %v4728 = vadd.f32 0.0, %v4727
    %v4729 = vpop.f32.mrb[0].mxu0
    %v4730 = vpop.f32.mrb[0].mxu0
    %v4731 = vadd.f32 0.0, %v4730
    %v4732 = vpop.f32.mrb[0].mxu0
    %4733 = vmatprep.mubr.bf16.mxu0 0
    %4734 = vmatmul.mubr.bf16.gmra.mrb[0].mxu0 %v4631
    %v4735 = vpop.f32.mrb[0].mxu0
    %v4736 = vadd.f32 0.0, %v4735
    %v4737 = vpop.f32.mrb[0].mxu0
    %v4738 = vpop.f32.mrb[0].mxu0
    %v4739 = vadd.f32 0.0, %v4738
    %v4740 = vpop.f32.mrb[0].mxu0
    %4741 = vmatprep.mubr.bf16.mxu0 0
    %4742 = vmatmul.mubr.bf16.gmra.mrb[0].mxu0 %v4634
    %v4743 = vpop.f32.mrb[0].mxu0
    %v4744 = vadd.f32 0.0, %v4743
    %v4745 = vpop.f32.mrb[0].mxu0
    %v4746 = vpop.f32.mrb[0].mxu0
    %v4747 = vadd.f32 0.0, %v4746
    %v4748 = vpop.f32.mrb[0].mxu0
    %4749 = vmatprep.mubr.bf16.mxu0 0
    %4750 = vmatmul.mubr.bf16.gmra.mrb[0].mxu0 %v4637
    %v4751 = vpop.f32.mrb[0].mxu0
    %v4752 = vadd.f32 0.0, %v4751
    %v4753 = vpop.f32.mrb[0].mxu0
    %v4754 = vpop.f32.mrb[0].mxu0
    %v4755 = vadd.f32 0.0, %v4754
    %v4756 = vpop.f32.mrb[0].mxu0
    %4757 = vmatprep.mubr.bf16.mxu0 0
    %4758 = vmatmul.mubr.bf16.gmra.mrb[0].mxu0 %v4640
    %v4759 = vpop.f32.mrb[0].mxu0
    %v4760 = vadd.f32 0.0, %v4759
    %v4761 = vpop.f32.mrb[0].mxu0
    %v4762 = vpop.f32.mrb[0].mxu0
    %v4763 = vadd.f32 0.0, %v4762
    %v4764 = vpop.f32.mrb[0].mxu0
    %4765 = vmatprep.mubr.bf16.mxu0 0
    %4766 = vmatmul.mubr.bf16.gmra.mrb[0].mxu0 %v4643
    %v4767 = vpop.f32.mrb[0].mxu0
    %v4768 = vadd.f32 0.0, %v4767
    %v4769 = vpop.f32.mrb[0].mxu0
    %v4770 = vpop.f32.mrb[0].mxu0
    %v4771 = vadd.f32 0.0, %v4770
    %v4772 = vpop.f32.mrb[0].mxu0
    %4773 = vdwg.mxu0
    %v4782 = vunpack.c.l.b16 %v4530
    %v4783 = vunpack.c.l.b16 %v4531
    %v4784 = vunpack.c.l.b16 %v4532
    %v4785 = vunpack.c.l.b16 %v4533
    %v4786 = vunpack.c.l.b16 %v4534
    %v4787 = vunpack.c.l.b16 %v4535
    %v4788 = vunpack.c.l.b16 %v4536
    %v4789 = vunpack.c.l.b16 %v4537
    %v4790 = vpack.c.b16 %v4783, %v4782
    %v4791 = vpack.c.b16 %v4785, %v4784
    %v4792 = vpack.c.b16 %v4787, %v4786
    %v4793 = vpack.c.b16 %v4789, %v4788
    %v4799 = vsel %vm1376, %v4512, 0
    %v4802 = vsel %vm1376, %v4513, 0
    %v4805 = vsel %vm1376, %v4514, 0
    %v4808 = vsel %vm1376, %v4515, 0
    %v4811 = vsel %vm1376, %v4516, 0
    %v4814 = vsel %vm1376, %v4517, 0
    %v4817 = vsel %vm1376, %v4518, 0
    %v4820 = vsel %vm1376, %v4519, 0
    %v4823 = vsel %vm1376, %v4520, 0
    %v4826 = vsel %vm1376, %v4521, 0
    %v4829 = vsel %vm1376, %v4522, 0
    %v4832 = vsel %vm1376, %v4523, 0
    %4834 = vmatprep.subr.bf16.mxu0 0
    %4835 = vmatpush1.bf16.msra.mxu0 %v4790
    %4836 = vmatprep.subr.bf16.mxu0 0
    %4837 = vmatpush1.bf16.msra.mxu0 %v4791
    %4838 = vmatprep.subr.bf16.mxu0 0
    %4839 = vmatpush1.bf16.msra.mxu0 %v4792
    %4840 = vmatprep.subr.bf16.mxu0 0
    %4841 = vmatpush1.bf16.msra.mxu0 %v4793
    %4842 = vmatprep.subr.bf16.mxu0 0
    %4843 = vmatpush1.bf16.msra.mxu0 0
    %4844 = vmatprep.subr.bf16.mxu0 0
    %4845 = vmatpush1.bf16.msra.mxu0 0
    %4846 = vmatprep.subr.bf16.mxu0 0
    %4847 = vmatpush1.bf16.msra.mxu0 0
    %4848 = vmatprep.subr.bf16.mxu0 0
    %4849 = vmatpush1.bf16.msra.mxu0 0
    %4850 = vmatprep.subr.bf16.mxu0 0
    %4851 = vmatpush1.bf16.msra.mxu0 0
    %4852 = vmatprep.subr.bf16.mxu0 0
    %4853 = vmatpush1.bf16.msra.mxu0 0
    %4854 = vmatprep.subr.bf16.mxu0 0
    %4855 = vmatpush1.bf16.msra.mxu0 0
    %4856 = vmatprep.subr.bf16.mxu0 0
    %4857 = vmatpush1.bf16.msra.mxu0 0
    %4858 = vmatprep.subr.bf16.mxu0 0
    %4859 = vmatpush1.bf16.msra.mxu0 0
    %4860 = vmatprep.subr.bf16.mxu0 0
    %4861 = vmatpush1.bf16.msra.mxu0 0
    %4862 = vmatprep.subr.bf16.mxu0 0
    %4863 = vmatpush1.bf16.msra.mxu0 0
    %4864 = vmatprep.subr.bf16.mxu0 0
    %4865 = vmatpush1.bf16.msra.mxu0 0
    %4866 = vmatprep.mubr.bf16.mxu0 0
    %4867 = vmatmul.mubr.bf16.gmra.mrb[0].mxu0 %v4799
    %v4868 = vpop.f32.mrb[0].mxu0
    %v4869 = vadd.f32 %v4680, %v4868
    %v4870 = vpop.f32.mrb[0].mxu0
    %v4871 = vpop.f32.mrb[0].mxu0
    %v4872 = vadd.f32 %v4683, %v4871
    %v4873 = vpop.f32.mrb[0].mxu0
    %4874 = vmatprep.mubr.bf16.mxu0 0
    %4875 = vmatmul.mubr.bf16.gmra.mrb[0].mxu0 %v4802
    %v4876 = vpop.f32.mrb[0].mxu0
    %v4877 = vadd.f32 %v4688, %v4876
    %v4878 = vpop.f32.mrb[0].mxu0
    %v4879 = vpop.f32.mrb[0].mxu0
    %v4880 = vadd.f32 %v4691, %v4879
    %v4881 = vpop.f32.mrb[0].mxu0
    %4882 = vmatprep.mubr.bf16.mxu0 0
    %4883 = vmatmul.mubr.bf16.gmra.mrb[0].mxu0 %v4805
    %v4884 = vpop.f32.mrb[0].mxu0
    %v4885 = vadd.f32 %v4696, %v4884
    %v4886 = vpop.f32.mrb[0].mxu0
    %v4887 = vpop.f32.mrb[0].mxu0
    %v4888 = vadd.f32 %v4699, %v4887
    %v4889 = vpop.f32.mrb[0].mxu0
    %4890 = vmatprep.mubr.bf16.mxu0 0
    %4891 = vmatmul.mubr.bf16.gmra.mrb[0].mxu0 %v4808
    %v4892 = vpop.f32.mrb[0].mxu0
    %v4893 = vadd.f32 %v4704, %v4892
    %v4894 = vpop.f32.mrb[0].mxu0
    %v4895 = vpop.f32.mrb[0].mxu0
    %v4896 = vadd.f32 %v4707, %v4895
    %v4897 = vpop.f32.mrb[0].mxu0
    %4898 = vmatprep.mubr.bf16.mxu0 0
    %4899 = vmatmul.mubr.bf16.gmra.mrb[0].mxu0 %v4811
    %v4900 = vpop.f32.mrb[0].mxu0
    %v4901 = vadd.f32 %v4712, %v4900
    %v4902 = vpop.f32.mrb[0].mxu0
    %v4903 = vpop.f32.mrb[0].mxu0
    %v4904 = vadd.f32 %v4715, %v4903
    %v4905 = vpop.f32.mrb[0].mxu0
    %4906 = vmatprep.mubr.bf16.mxu0 0
    %4907 = vmatmul.mubr.bf16.gmra.mrb[0].mxu0 %v4814
    %v4908 = vpop.f32.mrb[0].mxu0
    %v4909 = vadd.f32 %v4720, %v4908
    %v4910 = vpop.f32.mrb[0].mxu0
    %v4911 = vpop.f32.mrb[0].mxu0
    %v4912 = vadd.f32 %v4723, %v4911
    %v4913 = vpop.f32.mrb[0].mxu0
    %4914 = vmatprep.mubr.bf16.mxu0 0
    %4915 = vmatmul.mubr.bf16.gmra.mrb[0].mxu0 %v4817
    %v4916 = vpop.f32.mrb[0].mxu0
    %v4917 = vadd.f32 %v4728, %v4916
    %v4918 = vpop.f32.mrb[0].mxu0
    %v4919 = vpop.f32.mrb[0].mxu0
    %v4920 = vadd.f32 %v4731, %v4919
    %v4921 = vpop.f32.mrb[0].mxu0
    %4922 = vmatprep.mubr.bf16.mxu0 0
    %4923 = vmatmul.mubr.bf16.gmra.mrb[0].mxu0 %v4820
    %v4924 = vpop.f32.mrb[0].mxu0
    %v4925 = vadd.f32 %v4736, %v4924
    %v4926 = vpop.f32.mrb[0].mxu0
    %v4927 = vpop.f32.mrb[0].mxu0
    %v4928 = vadd.f32 %v4739, %v4927
    %v4929 = vpop.f32.mrb[0].mxu0
    %4930 = vmatprep.mubr.bf16.mxu0 0
    %4931 = vmatmul.mubr.bf16.gmra.mrb[0].mxu0 %v4823
    %v4932 = vpop.f32.mrb[0].mxu0
    %v4933 = vadd.f32 %v4744, %v4932
    %v4934 = vpop.f32.mrb[0].mxu0
    %v4935 = vpop.f32.mrb[0].mxu0
    %v4936 = vadd.f32 %v4747, %v4935
    %v4937 = vpop.f32.mrb[0].mxu0
    %4938 = vmatprep.mubr.bf16.mxu0 0
    %4939 = vmatmul.mubr.bf16.gmra.mrb[0].mxu0 %v4826
    %v4940 = vpop.f32.mrb[0].mxu0
    %v4941 = vadd.f32 %v4752, %v4940
    %v4942 = vpop.f32.mrb[0].mxu0
    %v4943 = vpop.f32.mrb[0].mxu0
    %v4944 = vadd.f32 %v4755, %v4943
    %v4945 = vpop.f32.mrb[0].mxu0
    %4946 = vmatprep.mubr.bf16.mxu0 0
    %4947 = vmatmul.mubr.bf16.gmra.mrb[0].mxu0 %v4829
    %v4948 = vpop.f32.mrb[0].mxu0
    %v4949 = vadd.f32 %v4760, %v4948
    %v4950 = vpop.f32.mrb[0].mxu0
    %v4951 = vpop.f32.mrb[0].mxu0
    %v4952 = vadd.f32 %v4763, %v4951
    %v4953 = vpop.f32.mrb[0].mxu0
    %4954 = vmatprep.mubr.bf16.mxu0 0
    %4955 = vmatmul.mubr.bf16.gmra.mrb[0].mxu0 %v4832
    %v4956 = vpop.f32.mrb[0].mxu0
    %v4957 = vadd.f32 %v4768, %v4956
    %v4958 = vpop.f32.mrb[0].mxu0
    %v4959 = vpop.f32.mrb[0].mxu0
    %v4960 = vadd.f32 %v4771, %v4959
    %v4961 = vpop.f32.mrb[0].mxu0
    %4962 = vdwg.mxu0
    %s4963 = scalar_lea.vmem [#allocation5], 64
    %v4964 = vld [vmem:[%s4963] sm:$0xf]
    %v4965 = vld [vmem:[%s4963 + $0x4] sm:$0xf]
    %v4966 = vld [vmem:[%s4963 + $0x8] sm:$0xf]
    %v4967 = vld [vmem:[%s4963 + $0xc] sm:$0xf]
    %v4968 = vld [vmem:[%s4963 + $0x10] sm:$0xf]
    %v4969 = vld [vmem:[%s4963 + $0x14] sm:$0xf]
    %v4970 = vld [vmem:[%s4963 + $0x18] sm:$0xf]
    %v4971 = vld [vmem:[%s4963 + $0x1c] sm:$0xf]
    %v4980 = vunpack.c.l.b16 %v4964
    %v4981 = vunpack.c.l.b16 %v4965
    %v4982 = vunpack.c.l.b16 %v4966
    %v4983 = vunpack.c.l.b16 %v4967
    %v4984 = vunpack.c.l.b16 %v4968
    %v4985 = vunpack.c.l.b16 %v4969
    %v4986 = vunpack.c.l.b16 %v4970
    %v4987 = vunpack.c.l.b16 %v4971
    %v4988 = vpack.c.b16 %v4981, %v4980
    %v4989 = vpack.c.b16 %v4983, %v4982
    %v4990 = vpack.c.b16 %v4985, %v4984
    %v4991 = vpack.c.b16 %v4987, %v4986
    %v4997 = vsel %vm1376, %v4524, 0
    %v5000 = vsel %vm1376, %v4525, 0
    %v5003 = vsel %vm1376, %v4526, 0
    %5005 = vmatprep.subr.bf16.mxu0 0
    %5006 = vmatpush1.bf16.msra.mxu0 %v4988
    %5007 = vmatprep.subr.bf16.mxu0 0
    %5008 = vmatpush1.bf16.msra.mxu0 %v4989
    %5009 = vmatprep.subr.bf16.mxu0 0
    %5010 = vmatpush1.bf16.msra.mxu0 %v4990
    %5011 = vmatprep.subr.bf16.mxu0 0
    %5012 = vmatpush1.bf16.msra.mxu0 %v4991
    %5013 = vmatprep.subr.bf16.mxu0 0
    %5014 = vmatpush1.bf16.msra.mxu0 0
    %5015 = vmatprep.subr.bf16.mxu0 0
    %5016 = vmatpush1.bf16.msra.mxu0 0
    %5017 = vmatprep.subr.bf16.mxu0 0
    %5018 = vmatpush1.bf16.msra.mxu0 0
    %5019 = vmatprep.subr.bf16.mxu0 0
    %5020 = vmatpush1.bf16.msra.mxu0 0
    %5021 = vmatprep.subr.bf16.mxu0 0
    %5022 = vmatpush1.bf16.msra.mxu0 0
    %5023 = vmatprep.subr.bf16.mxu0 0
    %5024 = vmatpush1.bf16.msra.mxu0 0
    %5025 = vmatprep.subr.bf16.mxu0 0
    %5026 = vmatpush1.bf16.msra.mxu0 0
    %5027 = vmatprep.subr.bf16.mxu0 0
    %5028 = vmatpush1.bf16.msra.mxu0 0
    %5029 = vmatprep.subr.bf16.mxu0 0
    %5030 = vmatpush1.bf16.msra.mxu0 0
    %5031 = vmatprep.subr.bf16.mxu0 0
    %5032 = vmatpush1.bf16.msra.mxu0 0
    %5033 = vmatprep.subr.bf16.mxu0 0
    %5034 = vmatpush1.bf16.msra.mxu0 0
    %5035 = vmatprep.subr.bf16.mxu0 0
    %5036 = vmatpush1.bf16.msra.mxu0 0
    %5037 = vmatprep.mubr.bf16.mxu0 0
    %5038 = vmatmul.mubr.bf16.gmra.mrb[0].mxu0 %v4808
    %v5039 = vpop.f32.mrb[0].mxu0
    %v5040 = vadd.f32 0.0, %v5039
    %v5041 = vpop.f32.mrb[0].mxu0
    %v5042 = vpop.f32.mrb[0].mxu0
    %v5043 = vadd.f32 0.0, %v5042
    %v5044 = vpop.f32.mrb[0].mxu0
    %5045 = vmatprep.mubr.bf16.mxu0 0
    %5046 = vmatmul.mubr.bf16.gmra.mrb[0].mxu0 %v4811
    %v5047 = vpop.f32.mrb[0].mxu0
    %v5048 = vadd.f32 0.0, %v5047
    %v5049 = vpop.f32.mrb[0].mxu0
    %v5050 = vpop.f32.mrb[0].mxu0
    %v5051 = vadd.f32 0.0, %v5050
    %v5052 = vpop.f32.mrb[0].mxu0
    %5053 = vmatprep.mubr.bf16.mxu0 0
    %5054 = vmatmul.mubr.bf16.gmra.mrb[0].mxu0 %v4814
    %v5055 = vpop.f32.mrb[0].mxu0
    %v5056 = vadd.f32 0.0, %v5055
    %v5057 = vpop.f32.mrb[0].mxu0
    %v5058 = vpop.f32.mrb[0].mxu0
    %v5059 = vadd.f32 0.0, %v5058
    %v5060 = vpop.f32.mrb[0].mxu0
    %5061 = vmatprep.mubr.bf16.mxu0 0
    %5062 = vmatmul.mubr.bf16.gmra.mrb[0].mxu0 %v4817
    %v5063 = vpop.f32.mrb[0].mxu0
    %v5064 = vadd.f32 0.0, %v5063
    %v5065 = vpop.f32.mrb[0].mxu0
    %v5066 = vpop.f32.mrb[0].mxu0
    %v5067 = vadd.f32 0.0, %v5066
    %v5068 = vpop.f32.mrb[0].mxu0
    %5069 = vmatprep.mubr.bf16.mxu0 0
    %5070 = vmatmul.mubr.bf16.gmra.mrb[0].mxu0 %v4820
    %v5071 = vpop.f32.mrb[0].mxu0
    %v5072 = vadd.f32 0.0, %v5071
    %v5073 = vpop.f32.mrb[0].mxu0
    %v5074 = vpop.f32.mrb[0].mxu0
    %v5075 = vadd.f32 0.0, %v5074
    %v5076 = vpop.f32.mrb[0].mxu0
    %5077 = vmatprep.mubr.bf16.mxu0 0
    %5078 = vmatmul.mubr.bf16.gmra.mrb[0].mxu0 %v4823
    %v5079 = vpop.f32.mrb[0].mxu0
    %v5080 = vadd.f32 0.0, %v5079
    %v5081 = vpop.f32.mrb[0].mxu0
    %v5082 = vpop.f32.mrb[0].mxu0
    %v5083 = vadd.f32 0.0, %v5082
    %v5084 = vpop.f32.mrb[0].mxu0
    %5085 = vmatprep.mubr.bf16.mxu0 0
    %5086 = vmatmul.mubr.bf16.gmra.mrb[0].mxu0 %v4826
    %v5087 = vpop.f32.mrb[0].mxu0
    %v5088 = vadd.f32 0.0, %v5087
    %v5089 = vpop.f32.mrb[0].mxu0
    %v5090 = vpop.f32.mrb[0].mxu0
    %v5091 = vadd.f32 0.0, %v5090
    %v5092 = vpop.f32.mrb[0].mxu0
    %5093 = vmatprep.mubr.bf16.mxu0 0
    %5094 = vmatmul.mubr.bf16.gmra.mrb[0].mxu0 %v4829
    %v5095 = vpop.f32.mrb[0].mxu0
    %v5096 = vadd.f32 0.0, %v5095
    %v5097 = vpop.f32.mrb[0].mxu0
    %v5098 = vpop.f32.mrb[0].mxu0
    %v5099 = vadd.f32 0.0, %v5098
    %v5100 = vpop.f32.mrb[0].mxu0
    %5101 = vmatprep.mubr.bf16.mxu0 0
    %5102 = vmatmul.mubr.bf16.gmra.mrb[0].mxu0 %v4832
    %v5103 = vpop.f32.mrb[0].mxu0
    %v5104 = vadd.f32 0.0, %v5103
    %v5105 = vpop.f32.mrb[0].mxu0
    %v5106 = vpop.f32.mrb[0].mxu0
    %v5107 = vadd.f32 0.0, %v5106
    %v5108 = vpop.f32.mrb[0].mxu0
    %5109 = vmatprep.mubr.bf16.mxu0 0
    %5110 = vmatmul.mubr.bf16.gmra.mrb[0].mxu0 %v4997
    %v5111 = vpop.f32.mrb[0].mxu0
    %v5112 = vadd.f32 0.0, %v5111
    %v5113 = vpop.f32.mrb[0].mxu0
    %v5114 = vpop.f32.mrb[0].mxu0
    %v5115 = vadd.f32 0.0, %v5114
    %v5116 = vpop.f32.mrb[0].mxu0
    %5117 = vmatprep.mubr.bf16.mxu0 0
    %5118 = vmatmul.mubr.bf16.gmra.mrb[0].mxu0 %v5000
    %v5119 = vpop.f32.mrb[0].mxu0
    %v5120 = vadd.f32 0.0, %v5119
    %v5121 = vpop.f32.mrb[0].mxu0
    %v5122 = vpop.f32.mrb[0].mxu0
    %v5123 = vadd.f32 0.0, %v5122
    %v5124 = vpop.f32.mrb[0].mxu0
    %5125 = vmatprep.mubr.bf16.mxu0 0
    %5126 = vmatmul.mubr.bf16.gmra.mrb[0].mxu0 %v5003
    %v5127 = vpop.f32.mrb[0].mxu0
    %v5128 = vadd.f32 0.0, %v5127
    %v5129 = vpop.f32.mrb[0].mxu0
    %v5130 = vpop.f32.mrb[0].mxu0
    %v5131 = vadd.f32 0.0, %v5130
    %v5132 = vpop.f32.mrb[0].mxu0
    %5133 = vdwg.mxu0
    %v5134 = vadd.f32 %v4869, %v5040
    %v5135 = vadd.f32 %v4872, %v5043
    %v5136 = vadd.f32 %v4877, %v5048
    %v5137 = vadd.f32 %v4880, %v5051
    %v5138 = vadd.f32 %v4885, %v5056
    %v5139 = vadd.f32 %v4888, %v5059
    %v5140 = vadd.f32 %v4893, %v5064
    %v5141 = vadd.f32 %v4896, %v5067
    %v5142 = vadd.f32 %v4901, %v5072
    %v5143 = vadd.f32 %v4904, %v5075
    %v5144 = vadd.f32 %v4909, %v5080
    %v5145 = vadd.f32 %v4912, %v5083
    %v5146 = vadd.f32 %v4917, %v5088
    %v5147 = vadd.f32 %v4920, %v5091
    %v5148 = vadd.f32 %v4925, %v5096
    %v5149 = vadd.f32 %v4928, %v5099
    %v5150 = vadd.f32 %v4933, %v5104
    %v5151 = vadd.f32 %v4936, %v5107
    %v5152 = vadd.f32 %v4941, %v5112
    %v5153 = vadd.f32 %v4944, %v5115
    %v5154 = vadd.f32 %v4949, %v5120
    %v5155 = vadd.f32 %v4952, %v5123
    %v5156 = vadd.f32 %v4957, %v5128
    %v5157 = vadd.f32 %v4960, %v5131
    %s5158 = scalar_lea.vmem [#allocation5], 96
    %v5159 = vld [vmem:[%s5158] sm:$0xf]
    %v5160 = vld [vmem:[%s5158 + $0x4] sm:$0xf]
    %v5161 = vld [vmem:[%s5158 + $0x8] sm:$0xf]
    %v5162 = vld [vmem:[%s5158 + $0xc] sm:$0xf]
    %v5163 = vld [vmem:[%s5158 + $0x10] sm:$0xf]
    %v5164 = vld [vmem:[%s5158 + $0x14] sm:$0xf]
    %v5165 = vld [vmem:[%s5158 + $0x18] sm:$0xf]
    %v5166 = vld [vmem:[%s5158 + $0x1c] sm:$0xf]
    %v5170 = vrot.slane %v4526, 4
    %v5171 = vsel %vm1302, %v4583, %v5170
    %v5172 = vrot.slane %v4527, 4
    %v5173 = vsel %vm1302, %v5170, %v5172
    %v5174 = vrot.slane %v4528, 4
    %v5175 = vsel %vm1302, %v5172, %v5174
    %v5184 = vunpack.c.l.b16 %v5159
    %v5185 = vunpack.c.l.b16 %v5160
    %v5186 = vunpack.c.l.b16 %v5161
    %v5187 = vunpack.c.l.b16 %v5162
    %v5188 = vunpack.c.l.b16 %v5163
    %v5189 = vunpack.c.l.b16 %v5164
    %v5190 = vunpack.c.l.b16 %v5165
    %v5191 = vunpack.c.l.b16 %v5166
    %v5192 = vpack.c.b16 %v5185, %v5184
    %v5193 = vpack.c.b16 %v5187, %v5186
    %v5194 = vpack.c.b16 %v5189, %v5188
    %v5195 = vpack.c.b16 %v5191, %v5190
    %v5201 = vsel %vm1376, %v5171, 0
    %v5204 = vsel %vm1376, %v5173, 0
    %v5207 = vsel %vm1376, %v5175, 0
    %5209 = vmatprep.subr.bf16.mxu0 0
    %5210 = vmatpush1.bf16.msra.mxu0 %v5192
    %5211 = vmatprep.subr.bf16.mxu0 0
    %5212 = vmatpush1.bf16.msra.mxu0 %v5193
    %5213 = vmatprep.subr.bf16.mxu0 0
    %5214 = vmatpush1.bf16.msra.mxu0 %v5194
    %5215 = vmatprep.subr.bf16.mxu0 0
    %5216 = vmatpush1.bf16.msra.mxu0 %v5195
    %5217 = vmatprep.subr.bf16.mxu0 0
    %5218 = vmatpush1.bf16.msra.mxu0 0
    %5219 = vmatprep.subr.bf16.mxu0 0
    %5220 = vmatpush1.bf16.msra.mxu0 0
    %5221 = vmatprep.subr.bf16.mxu0 0
    %5222 = vmatpush1.bf16.msra.mxu0 0
    %5223 = vmatprep.subr.bf16.mxu0 0
    %5224 = vmatpush1.bf16.msra.mxu0 0
    %5225 = vmatprep.subr.bf16.mxu0 0
    %5226 = vmatpush1.bf16.msra.mxu0 0
    %5227 = vmatprep.subr.bf16.mxu0 0
    %5228 = vmatpush1.bf16.msra.mxu0 0
    %5229 = vmatprep.subr.bf16.mxu0 0
    %5230 = vmatpush1.bf16.msra.mxu0 0
    %5231 = vmatprep.subr.bf16.mxu0 0
    %5232 = vmatpush1.bf16.msra.mxu0 0
    %5233 = vmatprep.subr.bf16.mxu0 0
    %5234 = vmatpush1.bf16.msra.mxu0 0
    %5235 = vmatprep.subr.bf16.mxu0 0
    %5236 = vmatpush1.bf16.msra.mxu0 0
    %5237 = vmatprep.subr.bf16.mxu0 0
    %5238 = vmatpush1.bf16.msra.mxu0 0
    %5239 = vmatprep.subr.bf16.mxu0 0
    %5240 = vmatpush1.bf16.msra.mxu0 0
    %5241 = vmatprep.mubr.bf16.mxu0 0
    %5242 = vmatmul.mubr.bf16.gmra.mrb[0].mxu0 %v4619
    %v5243 = vpop.f32.mrb[0].mxu0
    %v5244 = vadd.f32 0.0, %v5243
    %v5245 = vpop.f32.mrb[0].mxu0
    %v5246 = vpop.f32.mrb[0].mxu0
    %v5247 = vadd.f32 0.0, %v5246
    %v5248 = vpop.f32.mrb[0].mxu0
    %5249 = vmatprep.mubr.bf16.mxu0 0
    %5250 = vmatmul.mubr.bf16.gmra.mrb[0].mxu0 %v4622
    %v5251 = vpop.f32.mrb[0].mxu0
    %v5252 = vadd.f32 0.0, %v5251
    %v5253 = vpop.f32.mrb[0].mxu0
    %v5254 = vpop.f32.mrb[0].mxu0
    %v5255 = vadd.f32 0.0, %v5254
    %v5256 = vpop.f32.mrb[0].mxu0
    %5257 = vmatprep.mubr.bf16.mxu0 0
    %5258 = vmatmul.mubr.bf16.gmra.mrb[0].mxu0 %v4625
    %v5259 = vpop.f32.mrb[0].mxu0
    %v5260 = vadd.f32 0.0, %v5259
    %v5261 = vpop.f32.mrb[0].mxu0
    %v5262 = vpop.f32.mrb[0].mxu0
    %v5263 = vadd.f32 0.0, %v5262
    %v5264 = vpop.f32.mrb[0].mxu0
    %5265 = vmatprep.mubr.bf16.mxu0 0
    %5266 = vmatmul.mubr.bf16.gmra.mrb[0].mxu0 %v4628
    %v5267 = vpop.f32.mrb[0].mxu0
    %v5268 = vadd.f32 0.0, %v5267
    %v5269 = vpop.f32.mrb[0].mxu0
    %v5270 = vpop.f32.mrb[0].mxu0
    %v5271 = vadd.f32 0.0, %v5270
    %v5272 = vpop.f32.mrb[0].mxu0
    %5273 = vmatprep.mubr.bf16.mxu0 0
    %5274 = vmatmul.mubr.bf16.gmra.mrb[0].mxu0 %v4631
    %v5275 = vpop.f32.mrb[0].mxu0
    %v5276 = vadd.f32 0.0, %v5275
    %v5277 = vpop.f32.mrb[0].mxu0
    %v5278 = vpop.f32.mrb[0].mxu0
    %v5279 = vadd.f32 0.0, %v5278
    %v5280 = vpop.f32.mrb[0].mxu0
    %5281 = vmatprep.mubr.bf16.mxu0 0
    %5282 = vmatmul.mubr.bf16.gmra.mrb[0].mxu0 %v4634
    %v5283 = vpop.f32.mrb[0].mxu0
    %v5284 = vadd.f32 0.0, %v5283
    %v5285 = vpop.f32.mrb[0].mxu0
    %v5286 = vpop.f32.mrb[0].mxu0
    %v5287 = vadd.f32 0.0, %v5286
    %v5288 = vpop.f32.mrb[0].mxu0
    %5289 = vmatprep.mubr.bf16.mxu0 0
    %5290 = vmatmul.mubr.bf16.gmra.mrb[0].mxu0 %v4637
    %v5291 = vpop.f32.mrb[0].mxu0
    %v5292 = vadd.f32 0.0, %v5291
    %v5293 = vpop.f32.mrb[0].mxu0
    %v5294 = vpop.f32.mrb[0].mxu0
    %v5295 = vadd.f32 0.0, %v5294
    %v5296 = vpop.f32.mrb[0].mxu0
    %5297 = vmatprep.mubr.bf16.mxu0 0
    %5298 = vmatmul.mubr.bf16.gmra.mrb[0].mxu0 %v4640
    %v5299 = vpop.f32.mrb[0].mxu0
    %v5300 = vadd.f32 0.0, %v5299
    %v5301 = vpop.f32.mrb[0].mxu0
    %v5302 = vpop.f32.mrb[0].mxu0
    %v5303 = vadd.f32 0.0, %v5302
    %v5304 = vpop.f32.mrb[0].mxu0
    %5305 = vmatprep.mubr.bf16.mxu0 0
    %5306 = vmatmul.mubr.bf16.gmra.mrb[0].mxu0 %v4643
    %v5307 = vpop.f32.mrb[0].mxu0
    %v5308 = vadd.f32 0.0, %v5307
    %v5309 = vpop.f32.mrb[0].mxu0
    %v5310 = vpop.f32.mrb[0].mxu0
    %v5311 = vadd.f32 0.0, %v5310
    %v5312 = vpop.f32.mrb[0].mxu0
    %5313 = vmatprep.mubr.bf16.mxu0 0
    %5314 = vmatmul.mubr.bf16.gmra.mrb[0].mxu0 %v5201
    %v5315 = vpop.f32.mrb[0].mxu0
    %v5316 = vadd.f32 0.0, %v5315
    %v5317 = vpop.f32.mrb[0].mxu0
    %v5318 = vpop.f32.mrb[0].mxu0
    %v5319 = vadd.f32 0.0, %v5318
    %v5320 = vpop.f32.mrb[0].mxu0
    %5321 = vmatprep.mubr.bf16.mxu0 0
    %5322 = vmatmul.mubr.bf16.gmra.mrb[0].mxu0 %v5204
    %v5323 = vpop.f32.mrb[0].mxu0
    %v5324 = vadd.f32 0.0, %v5323
    %v5325 = vpop.f32.mrb[0].mxu0
    %v5326 = vpop.f32.mrb[0].mxu0
    %v5327 = vadd.f32 0.0, %v5326
    %v5328 = vpop.f32.mrb[0].mxu0
    %5329 = vmatprep.mubr.bf16.mxu0 0
    %5330 = vmatmul.mubr.bf16.gmra.mrb[0].mxu0 %v5207
    %v5331 = vpop.f32.mrb[0].mxu0
    %v5332 = vadd.f32 0.0, %v5331
    %v5333 = vpop.f32.mrb[0].mxu0
    %v5334 = vpop.f32.mrb[0].mxu0
    %v5335 = vadd.f32 0.0, %v5334
    %v5336 = vpop.f32.mrb[0].mxu0
    %5337 = vdwg.mxu0
    %v5338 = vadd.f32 %v5134, %v5244
    %v5339 = vadd.f32 %v5135, %v5247
    %v5340 = vadd.f32 %v5136, %v5252
    %v5341 = vadd.f32 %v5137, %v5255
    %v5342 = vadd.f32 %v5138, %v5260
    %v5343 = vadd.f32 %v5139, %v5263
    %v5344 = vadd.f32 %v5140, %v5268
    %v5345 = vadd.f32 %v5141, %v5271
    %v5346 = vadd.f32 %v5142, %v5276
    %v5347 = vadd.f32 %v5143, %v5279
    %v5348 = vadd.f32 %v5144, %v5284
    %v5349 = vadd.f32 %v5145, %v5287
    %v5350 = vadd.f32 %v5146, %v5292
    %v5351 = vadd.f32 %v5147, %v5295
    %v5352 = vadd.f32 %v5148, %v5300
    %v5353 = vadd.f32 %v5149, %v5303
    %v5354 = vadd.f32 %v5150, %v5308
    %v5355 = vadd.f32 %v5151, %v5311
    %v5356 = vadd.f32 %v5152, %v5316
    %v5357 = vadd.f32 %v5153, %v5319
    %v5358 = vadd.f32 %v5154, %v5324
    %v5359 = vadd.f32 %v5155, %v5327
    %v5360 = vadd.f32 %v5156, %v5332
    %v5361 = vadd.f32 %v5157, %v5335
    %s5362 = scalar_lea.vmem [#allocation5], 128
    %v5363 = vld [vmem:[%s5362] sm:$0xf]
    %v5364 = vld [vmem:[%s5362 + $0x4] sm:$0xf]
    %v5365 = vld [vmem:[%s5362 + $0x8] sm:$0xf]
    %v5366 = vld [vmem:[%s5362 + $0xc] sm:$0xf]
    %v5367 = vld [vmem:[%s5362 + $0x10] sm:$0xf]
    %v5368 = vld [vmem:[%s5362 + $0x14] sm:$0xf]
    %v5369 = vld [vmem:[%s5362 + $0x18] sm:$0xf]
    %v5370 = vld [vmem:[%s5362 + $0x1c] sm:$0xf]
    %v5379 = vunpack.c.l.b16 %v5363
    %v5380 = vunpack.c.l.b16 %v5364
    %v5381 = vunpack.c.l.b16 %v5365
    %v5382 = vunpack.c.l.b16 %v5366
    %v5383 = vunpack.c.l.b16 %v5367
    %v5384 = vunpack.c.l.b16 %v5368
    %v5385 = vunpack.c.l.b16 %v5369
    %v5386 = vunpack.c.l.b16 %v5370
    %v5387 = vpack.c.b16 %v5380, %v5379
    %v5388 = vpack.c.b16 %v5382, %v5381
    %v5389 = vpack.c.b16 %v5384, %v5383
    %v5390 = vpack.c.b16 %v5386, %v5385
    %v5396 = vsel %vm1376, %v4527, 0
    %v5399 = vsel %vm1376, %v4528, 0
    %v5402 = vsel %vm1376, %v4529, 0
    %5404 = vmatprep.subr.bf16.mxu0 0
    %5405 = vmatpush1.bf16.msra.mxu0 %v5387
    %5406 = vmatprep.subr.bf16.mxu0 0
    %5407 = vmatpush1.bf16.msra.mxu0 %v5388
    %5408 = vmatprep.subr.bf16.mxu0 0
    %5409 = vmatpush1.bf16.msra.mxu0 %v5389
    %5410 = vmatprep.subr.bf16.mxu0 0
    %5411 = vmatpush1.bf16.msra.mxu0 %v5390
    %5412 = vmatprep.subr.bf16.mxu0 0
    %5413 = vmatpush1.bf16.msra.mxu0 0
    %5414 = vmatprep.subr.bf16.mxu0 0
    %5415 = vmatpush1.bf16.msra.mxu0 0
    %5416 = vmatprep.subr.bf16.mxu0 0
    %5417 = vmatpush1.bf16.msra.mxu0 0
    %5418 = vmatprep.subr.bf16.mxu0 0
    %5419 = vmatpush1.bf16.msra.mxu0 0
    %5420 = vmatprep.subr.bf16.mxu0 0
    %5421 = vmatpush1.bf16.msra.mxu0 0
    %5422 = vmatprep.subr.bf16.mxu0 0
    %5423 = vmatpush1.bf16.msra.mxu0 0
    %5424 = vmatprep.subr.bf16.mxu0 0
    %5425 = vmatpush1.bf16.msra.mxu0 0
    %5426 = vmatprep.subr.bf16.mxu0 0
    %5427 = vmatpush1.bf16.msra.mxu0 0
    %5428 = vmatprep.subr.bf16.mxu0 0
    %5429 = vmatpush1.bf16.msra.mxu0 0
    %5430 = vmatprep.subr.bf16.mxu0 0
    %5431 = vmatpush1.bf16.msra.mxu0 0
    %5432 = vmatprep.subr.bf16.mxu0 0
    %5433 = vmatpush1.bf16.msra.mxu0 0
    %5434 = vmatprep.subr.bf16.mxu0 0
    %5435 = vmatpush1.bf16.msra.mxu0 0
    %5436 = vmatprep.mubr.bf16.mxu0 0
    %5437 = vmatmul.mubr.bf16.gmra.mrb[0].mxu0 %v4817
    %v5438 = vpop.f32.mrb[0].mxu0
    %v5439 = vadd.f32 0.0, %v5438
    %v5440 = vpop.f32.mrb[0].mxu0
    %v5441 = vpop.f32.mrb[0].mxu0
    %v5442 = vadd.f32 0.0, %v5441
    %v5443 = vpop.f32.mrb[0].mxu0
    %5444 = vmatprep.mubr.bf16.mxu0 0
    %5445 = vmatmul.mubr.bf16.gmra.mrb[0].mxu0 %v4820
    %v5446 = vpop.f32.mrb[0].mxu0
    %v5447 = vadd.f32 0.0, %v5446
    %v5448 = vpop.f32.mrb[0].mxu0
    %v5449 = vpop.f32.mrb[0].mxu0
    %v5450 = vadd.f32 0.0, %v5449
    %v5451 = vpop.f32.mrb[0].mxu0
    %5452 = vmatprep.mubr.bf16.mxu0 0
    %5453 = vmatmul.mubr.bf16.gmra.mrb[0].mxu0 %v4823
    %v5454 = vpop.f32.mrb[0].mxu0
    %v5455 = vadd.f32 0.0, %v5454
    %v5456 = vpop.f32.mrb[0].mxu0
    %v5457 = vpop.f32.mrb[0].mxu0
    %v5458 = vadd.f32 0.0, %v5457
    %v5459 = vpop.f32.mrb[0].mxu0
    %5460 = vmatprep.mubr.bf16.mxu0 0
    %5461 = vmatmul.mubr.bf16.gmra.mrb[0].mxu0 %v4826
    %v5462 = vpop.f32.mrb[0].mxu0
    %v5463 = vadd.f32 0.0, %v5462
    %v5464 = vpop.f32.mrb[0].mxu0
    %v5465 = vpop.f32.mrb[0].mxu0
    %v5466 = vadd.f32 0.0, %v5465
    %v5467 = vpop.f32.mrb[0].mxu0
    %5468 = vmatprep.mubr.bf16.mxu0 0
    %5469 = vmatmul.mubr.bf16.gmra.mrb[0].mxu0 %v4829
    %v5470 = vpop.f32.mrb[0].mxu0
    %v5471 = vadd.f32 0.0, %v5470
    %v5472 = vpop.f32.mrb[0].mxu0
    %v5473 = vpop.f32.mrb[0].mxu0
    %v5474 = vadd.f32 0.0, %v5473
    %v5475 = vpop.f32.mrb[0].mxu0
    %5476 = vmatprep.mubr.bf16.mxu0 0
    %5477 = vmatmul.mubr.bf16.gmra.mrb[0].mxu0 %v4832
    %v5478 = vpop.f32.mrb[0].mxu0
    %v5479 = vadd.f32 0.0, %v5478
    %v5480 = vpop.f32.mrb[0].mxu0
    %v5481 = vpop.f32.mrb[0].mxu0
    %v5482 = vadd.f32 0.0, %v5481
    %v5483 = vpop.f32.mrb[0].mxu0
    %5484 = vmatprep.mubr.bf16.mxu0 0
    %5485 = vmatmul.mubr.bf16.gmra.mrb[0].mxu0 %v4997
    %v5486 = vpop.f32.mrb[0].mxu0
    %v5487 = vadd.f32 0.0, %v5486
    %v5488 = vpop.f32.mrb[0].mxu0
    %v5489 = vpop.f32.mrb[0].mxu0
    %v5490 = vadd.f32 0.0, %v5489
    %v5491 = vpop.f32.mrb[0].mxu0
    %5492 = vmatprep.mubr.bf16.mxu0 0
    %5493 = vmatmul.mubr.bf16.gmra.mrb[0].mxu0 %v5000
    %v5494 = vpop.f32.mrb[0].mxu0
    %v5495 = vadd.f32 0.0, %v5494
    %v5496 = vpop.f32.mrb[0].mxu0
    %v5497 = vpop.f32.mrb[0].mxu0
    %v5498 = vadd.f32 0.0, %v5497
    %v5499 = vpop.f32.mrb[0].mxu0
    %5500 = vmatprep.mubr.bf16.mxu0 0
    %5501 = vmatmul.mubr.bf16.gmra.mrb[0].mxu0 %v5003
    %v5502 = vpop.f32.mrb[0].mxu0
    %v5503 = vadd.f32 0.0, %v5502
    %v5504 = vpop.f32.mrb[0].mxu0
    %v5505 = vpop.f32.mrb[0].mxu0
    %v5506 = vadd.f32 0.0, %v5505
    %v5507 = vpop.f32.mrb[0].mxu0
    %5508 = vmatprep.mubr.bf16.mxu0 0
    %5509 = vmatmul.mubr.bf16.gmra.mrb[0].mxu0 %v5396
    %v5510 = vpop.f32.mrb[0].mxu0
    %v5511 = vadd.f32 0.0, %v5510
    %v5512 = vpop.f32.mrb[0].mxu0
    %v5513 = vpop.f32.mrb[0].mxu0
    %v5514 = vadd.f32 0.0, %v5513
    %v5515 = vpop.f32.mrb[0].mxu0
    %5516 = vmatprep.mubr.bf16.mxu0 0
    %5517 = vmatmul.mubr.bf16.gmra.mrb[0].mxu0 %v5399
    %v5518 = vpop.f32.mrb[0].mxu0
    %v5519 = vadd.f32 0.0, %v5518
    %v5520 = vpop.f32.mrb[0].mxu0
    %v5521 = vpop.f32.mrb[0].mxu0
    %v5522 = vadd.f32 0.0, %v5521
    %v5523 = vpop.f32.mrb[0].mxu0
    %5524 = vmatprep.mubr.bf16.mxu0 0
    %5525 = vmatmul.mubr.bf16.gmra.mrb[0].mxu0 %v5402
    %v5526 = vpop.f32.mrb[0].mxu0
    %v5527 = vadd.f32 0.0, %v5526
    %v5528 = vpop.f32.mrb[0].mxu0
    %v5529 = vpop.f32.mrb[0].mxu0
    %v5530 = vadd.f32 0.0, %v5529
    %v5531 = vpop.f32.mrb[0].mxu0
    %5532 = vdwg.mxu0
    %v5533 = vadd.f32 %v5338, %v5439
    %v5534 = vadd.f32 %v5339, %v5442
    %v5535 = vadd.f32 %v5340, %v5447
    %v5536 = vadd.f32 %v5341, %v5450
    %v5537 = vadd.f32 %v5342, %v5455
    %v5538 = vadd.f32 %v5343, %v5458
    %v5539 = vadd.f32 %v5344, %v5463
    %v5540 = vadd.f32 %v5345, %v5466
    %v5541 = vadd.f32 %v5346, %v5471
    %v5542 = vadd.f32 %v5347, %v5474
    %v5543 = vadd.f32 %v5348, %v5479
    %v5544 = vadd.f32 %v5349, %v5482
    %v5545 = vadd.f32 %v5350, %v5487
    %v5546 = vadd.f32 %v5351, %v5490
    %v5547 = vadd.f32 %v5352, %v5495
    %v5548 = vadd.f32 %v5353, %v5498
    %v5549 = vadd.f32 %v5354, %v5503
    %v5550 = vadd.f32 %v5355, %v5506
    %v5551 = vadd.f32 %v5356, %v5511
    %v5552 = vadd.f32 %v5357, %v5514
    %v5553 = vadd.f32 %v5358, %v5519
    %v5554 = vadd.f32 %v5359, %v5522
    %v5555 = vadd.f32 %v5360, %v5527
    %v5556 = vadd.f32 %v5361, %v5530
    %v5557 = vld [vmem:[%s8] sm:$0x1]
    %v5559 = vlaneseq
    %v5560 = vshrl.u32 %v5559, 7
    %v5561 = vsub.s32 0, %v5560
    %v5562 = vrot.slane %v5557, %v5561
    %v5564 = vadd.f32 %v5533, %v5562
    %v5565 = vadd.f32 %v5534, %v5562
    %v5566 = vadd.f32 %v5535, %v5562
    %v5567 = vadd.f32 %v5536, %v5562
    %v5568 = vadd.f32 %v5537, %v5562
    %v5569 = vadd.f32 %v5538, %v5562
    %v5570 = vadd.f32 %v5539, %v5562
    %v5571 = vadd.f32 %v5540, %v5562
    %v5572 = vadd.f32 %v5541, %v5562
    %v5573 = vadd.f32 %v5542, %v5562
    %v5574 = vadd.f32 %v5543, %v5562
    %v5575 = vadd.f32 %v5544, %v5562
    %v5576 = vadd.f32 %v5545, %v5562
    %v5577 = vadd.f32 %v5546, %v5562
    %v5578 = vadd.f32 %v5547, %v5562
    %v5579 = vadd.f32 %v5548, %v5562
    %v5580 = vadd.f32 %v5549, %v5562
    %v5581 = vadd.f32 %v5550, %v5562
    %v5582 = vadd.f32 %v5551, %v5562
    %v5583 = vadd.f32 %v5552, %v5562
    %v5584 = vadd.f32 %v5553, %v5562
    %v5585 = vadd.f32 %v5554, %v5562
    %v5586 = vadd.f32 %v5555, %v5562
    %v5587 = vadd.f32 %v5556, %v5562
    %v5588 = vmax.f32 %v5564, 0.0
    %v5589 = vmax.f32 %v5565, 0.0
    %v5590 = vmax.f32 %v5566, 0.0
    %v5591 = vmax.f32 %v5567, 0.0
    %v5592 = vmax.f32 %v5568, 0.0
    %v5593 = vmax.f32 %v5569, 0.0
    %v5594 = vmax.f32 %v5570, 0.0
    %v5595 = vmax.f32 %v5571, 0.0
    %v5596 = vmax.f32 %v5572, 0.0
    %v5597 = vmax.f32 %v5573, 0.0
    %v5598 = vmax.f32 %v5574, 0.0
    %v5599 = vmax.f32 %v5575, 0.0
    %v5600 = vmax.f32 %v5576, 0.0
    %v5601 = vmax.f32 %v5577, 0.0
    %v5602 = vmax.f32 %v5578, 0.0
    %v5603 = vmax.f32 %v5579, 0.0
    %v5604 = vmax.f32 %v5580, 0.0
    %v5605 = vmax.f32 %v5581, 0.0
    %v5606 = vmax.f32 %v5582, 0.0
    %v5607 = vmax.f32 %v5583, 0.0
    %v5608 = vmax.f32 %v5584, 0.0
    %v5609 = vmax.f32 %v5585, 0.0
    %v5610 = vmax.f32 %v5586, 0.0
    %v5611 = vmax.f32 %v5587, 0.0
    %v5612 = vpack.c.bf16 %v5589, %v5588
    %v5613 = vpack.c.bf16 %v5590, %v5590
    %v5614 = vpack.c.bf16 %v5592, %v5591
    %v5615 = vpack.c.bf16 %v5593, %v5593
    %v5616 = vpack.c.bf16 %v5595, %v5594
    %v5617 = vpack.c.bf16 %v5596, %v5596
    %v5618 = vpack.c.bf16 %v5598, %v5597
    %v5619 = vpack.c.bf16 %v5599, %v5599
    %v5620 = vpack.c.bf16 %v5601, %v5600
    %v5621 = vpack.c.bf16 %v5602, %v5602
    %v5622 = vpack.c.bf16 %v5604, %v5603
    %v5623 = vpack.c.bf16 %v5605, %v5605
    %v5624 = vpack.c.bf16 %v5607, %v5606
    %v5625 = vpack.c.bf16 %v5608, %v5608
    %v5626 = vpack.c.bf16 %v5610, %v5609
    %v5627 = vpack.c.bf16 %v5611, %v5611
    %v5628 = vld [vmem:[%s9] sm:$0xff]
    %v5629 = vld [vmem:[%s9 + $0x8] sm:$0xff]
    %v5630 = vld [vmem:[%s9 + $0x10] sm:$0xff]
    %v5631 = vld [vmem:[%s9 + $0x18] sm:$0xff]
    %v5632 = vld [vmem:[%s9 + $0x20] sm:$0xff]
    %v5633 = vld [vmem:[%s9 + $0x28] sm:$0xff]
    %v5634 = vld [vmem:[%s9 + $0x30] sm:$0xff]
    %v5635 = vld [vmem:[%s9 + $0x38] sm:$0xff]
    %v5636 = vld [vmem:[%s9 + $0x40] sm:$0xff]
    %v5637 = vld [vmem:[%s9 + $0x48] sm:$0xff]
    %v5638 = vld [vmem:[%s9 + $0x50] sm:$0xff]
    %v5639 = vld [vmem:[%s9 + $0x58] sm:$0xff]
    %v5640 = vld [vmem:[%s9 + $0x60] sm:$0xff]
    %v5641 = vld [vmem:[%s9 + $0x68] sm:$0xff]
    %v5642 = vld [vmem:[%s9 + $0x70] sm:$0xff]
    %v5643 = vld [vmem:[%s9 + $0x78] sm:$0xff]
    %v5652 = vunpack.c.h.b16 %v5612
    %v5653 = vunpack.c.h.b16 %v5614
    %v5654 = vunpack.c.h.b16 %v5616
    %v5655 = vunpack.c.h.b16 %v5618
    %v5656 = vunpack.c.h.b16 %v5620
    %v5657 = vunpack.c.h.b16 %v5622
    %v5658 = vunpack.c.h.b16 %v5624
    %v5659 = vunpack.c.h.b16 %v5626
    %s5660 = scalar_lea.vmem %s9, 128
    %v5661 = vld [vmem:[%s5660] sm:$0xff]
    %v5662 = vld [vmem:[%s5660 + $0x8] sm:$0xff]
    %v5663 = vld [vmem:[%s5660 + $0x10] sm:$0xff]
    %v5664 = vld [vmem:[%s5660 + $0x18] sm:$0xff]
    %v5665 = vld [vmem:[%s5660 + $0x20] sm:$0xff]
    %v5666 = vld [vmem:[%s5660 + $0x28] sm:$0xff]
    %v5667 = vld [vmem:[%s5660 + $0x30] sm:$0xff]
    %v5668 = vld [vmem:[%s5660 + $0x38] sm:$0xff]
    %v5669 = vld [vmem:[%s5660 + $0x40] sm:$0xff]
    %v5670 = vld [vmem:[%s5660 + $0x48] sm:$0xff]
    %v5671 = vld [vmem:[%s5660 + $0x50] sm:$0xff]
    %v5672 = vld [vmem:[%s5660 + $0x58] sm:$0xff]
    %v5673 = vld [vmem:[%s5660 + $0x60] sm:$0xff]
    %v5674 = vld [vmem:[%s5660 + $0x68] sm:$0xff]
    %v5675 = vld [vmem:[%s5660 + $0x70] sm:$0xff]
    %v5676 = vld [vmem:[%s5660 + $0x78] sm:$0xff]
    %v5677 = vpack.c.b16 %v5653, %v5652
    %v5678 = vpack.c.b16 %v5655, %v5654
    %v5679 = vpack.c.b16 %v5657, %v5656
    %v5680 = vpack.c.b16 %v5659, %v5658
    %v5697 = vunpack.c.l.b16 %v5661
    %v5698 = vunpack.c.h.b16 %v5661
    %v5699 = vunpack.c.l.b16 %v5662
    %v5700 = vunpack.c.h.b16 %v5662
    %v5701 = vunpack.c.l.b16 %v5663
    %v5702 = vunpack.c.h.b16 %v5663
    %v5703 = vunpack.c.l.b16 %v5664
    %v5704 = vunpack.c.h.b16 %v5664
    %v5705 = vunpack.c.l.b16 %v5665
    %v5706 = vunpack.c.h.b16 %v5665
    %v5707 = vunpack.c.l.b16 %v5666
    %v5708 = vunpack.c.h.b16 %v5666
    %v5709 = vunpack.c.l.b16 %v5667
    %v5710 = vunpack.c.h.b16 %v5667
    %v5711 = vunpack.c.l.b16 %v5668
    %v5712 = vunpack.c.h.b16 %v5668
    %v5713 = vunpack.c.l.b16 %v5669
    %v5714 = vunpack.c.h.b16 %v5669
    %v5715 = vunpack.c.l.b16 %v5670
    %v5716 = vunpack.c.h.b16 %v5670
    %v5717 = vunpack.c.l.b16 %v5671
    %v5718 = vunpack.c.h.b16 %v5671
    %v5719 = vunpack.c.l.b16 %v5672
    %v5720 = vunpack.c.h.b16 %v5672
    %v5721 = vunpack.c.l.b16 %v5673
    %v5722 = vunpack.c.h.b16 %v5673
    %v5723 = vunpack.c.l.b16 %v5674
    %v5724 = vunpack.c.h.b16 %v5674
    %v5725 = vunpack.c.l.b16 %v5675
    %v5726 = vunpack.c.h.b16 %v5675
    %v5727 = vunpack.c.l.b16 %v5676
    %v5728 = vunpack.c.h.b16 %v5676
    %v5729 = vpack.c.b16 %v5701, %v5697
    %v5730 = vpack.c.b16 %v5702, %v5698
    %v5731 = vpack.c.b16 %v5703, %v5699
    %v5732 = vpack.c.b16 %v5704, %v5700
    %v5733 = vpack.c.b16 %v5709, %v5705
    %v5734 = vpack.c.b16 %v5710, %v5706
    %v5735 = vpack.c.b16 %v5711, %v5707
    %v5736 = vpack.c.b16 %v5712, %v5708
    %v5737 = vpack.c.b16 %v5717, %v5713
    %v5738 = vpack.c.b16 %v5718, %v5714
    %v5739 = vpack.c.b16 %v5719, %v5715
    %v5740 = vpack.c.b16 %v5720, %v5716
    %v5741 = vpack.c.b16 %v5725, %v5721
    %v5742 = vpack.c.b16 %v5726, %v5722
    %v5743 = vpack.c.b16 %v5727, %v5723
    %v5744 = vpack.c.b16 %v5728, %v5724
    %v5762 = vsel %vm1376, %v5677, 0
    %v5765 = vsel %vm1376, %v5678, 0
    %v5768 = vsel %vm1376, %v5679, 0
    %v5771 = vsel %vm1376, %v5680, 0
    %5773 = vmatprep.subr.bf16.mxu0 %v5730
    %5774 = vmatpush1.bf16.msra.mxu0 %v5729
    %5775 = vmatprep.subr.bf16.mxu0 %v5734
    %5776 = vmatpush1.bf16.msra.mxu0 %v5733
    %5777 = vmatprep.subr.bf16.mxu0 %v5738
    %5778 = vmatpush1.bf16.msra.mxu0 %v5737
    %5779 = vmatprep.subr.bf16.mxu0 %v5742
    %5780 = vmatpush1.bf16.msra.mxu0 %v5741
    %5781 = vmatprep.subr.bf16.mxu0 0
    %5782 = vmatpush1.bf16.msra.mxu0 0
    %5783 = vmatprep.subr.bf16.mxu0 0
    %5784 = vmatpush1.bf16.msra.mxu0 0
    %5785 = vmatprep.subr.bf16.mxu0 0
    %5786 = vmatpush1.bf16.msra.mxu0 0
    %5787 = vmatprep.subr.bf16.mxu0 0
    %5788 = vmatpush1.bf16.msra.mxu0 0
    %5789 = vmatprep.subr.bf16.mxu0 0
    %5790 = vmatpush1.bf16.msra.mxu0 0
    %5791 = vmatprep.subr.bf16.mxu0 0
    %5792 = vmatpush1.bf16.msra.mxu0 0
    %5793 = vmatprep.subr.bf16.mxu0 0
    %5794 = vmatpush1.bf16.msra.mxu0 0
    %5795 = vmatprep.subr.bf16.mxu0 0
    %5796 = vmatpush1.bf16.msra.mxu0 0
    %5797 = vmatprep.subr.bf16.mxu0 0
    %5798 = vmatpush1.bf16.msra.mxu0 0
    %5799 = vmatprep.subr.bf16.mxu0 0
    %5800 = vmatpush1.bf16.msra.mxu0 0
    %5801 = vmatprep.subr.bf16.mxu0 0
    %5802 = vmatpush1.bf16.msra.mxu0 0
    %5803 = vmatprep.subr.bf16.mxu0 0
    %5804 = vmatpush1.bf16.msra.mxu0 0
    %5805 = vmatprep.mubr.bf16.mxu0 0
    %5806 = vmatmul.mubr.bf16.gmra.mrb[0].mxu0 %v5762
    %v5807 = vpop.f32.mrb[0].mxu0
    %v5808 = vadd.f32 0.0, %v5807
    %v5809 = vpop.f32.mrb[0].mxu0
    %v5810 = vadd.f32 0.0, %v5809
    %v5811 = vpop.f32.mrb[0].mxu0
    %v5812 = vadd.f32 0.0, %v5811
    %v5813 = vpop.f32.mrb[0].mxu0
    %v5814 = vadd.f32 0.0, %v5813
    %5815 = vmatprep.mubr.bf16.mxu0 0
    %5816 = vmatmul.mubr.bf16.gmra.mrb[0].mxu0 %v5765
    %v5817 = vpop.f32.mrb[0].mxu0
    %v5818 = vadd.f32 0.0, %v5817
    %v5819 = vpop.f32.mrb[0].mxu0
    %v5820 = vadd.f32 0.0, %v5819
    %v5821 = vpop.f32.mrb[0].mxu0
    %v5822 = vadd.f32 0.0, %v5821
    %v5823 = vpop.f32.mrb[0].mxu0
    %v5824 = vadd.f32 0.0, %v5823
    %5825 = vmatprep.mubr.bf16.mxu0 0
    %5826 = vmatmul.mubr.bf16.gmra.mrb[0].mxu0 %v5768
    %v5827 = vpop.f32.mrb[0].mxu0
    %v5828 = vadd.f32 0.0, %v5827
    %v5829 = vpop.f32.mrb[0].mxu0
    %v5830 = vadd.f32 0.0, %v5829
    %v5831 = vpop.f32.mrb[0].mxu0
    %v5832 = vadd.f32 0.0, %v5831
    %v5833 = vpop.f32.mrb[0].mxu0
    %v5834 = vadd.f32 0.0, %v5833
    %5835 = vmatprep.mubr.bf16.mxu0 0
    %5836 = vmatmul.mubr.bf16.gmra.mrb[0].mxu0 %v5771
    %v5837 = vpop.f32.mrb[0].mxu0
    %v5838 = vadd.f32 0.0, %v5837
    %v5839 = vpop.f32.mrb[0].mxu0
    %v5840 = vadd.f32 0.0, %v5839
    %v5841 = vpop.f32.mrb[0].mxu0
    %v5842 = vadd.f32 0.0, %v5841
    %v5843 = vpop.f32.mrb[0].mxu0
    %v5844 = vadd.f32 0.0, %v5843
    %5845 = vdwg.mxu0
    %5846 = vmatprep.subr.bf16.mxu0 %v5732
    %5847 = vmatpush1.bf16.msra.mxu0 %v5731
    %5848 = vmatprep.subr.bf16.mxu0 %v5736
    %5849 = vmatpush1.bf16.msra.mxu0 %v5735
    %5850 = vmatprep.subr.bf16.mxu0 %v5740
    %5851 = vmatpush1.bf16.msra.mxu0 %v5739
    %5852 = vmatprep.subr.bf16.mxu0 %v5744
    %5853 = vmatpush1.bf16.msra.mxu0 %v5743
    %5854 = vmatprep.subr.bf16.mxu0 0
    %5855 = vmatpush1.bf16.msra.mxu0 0
    %5856 = vmatprep.subr.bf16.mxu0 0
    %5857 = vmatpush1.bf16.msra.mxu0 0
    %5858 = vmatprep.subr.bf16.mxu0 0
    %5859 = vmatpush1.bf16.msra.mxu0 0
    %5860 = vmatprep.subr.bf16.mxu0 0
    %5861 = vmatpush1.bf16.msra.mxu0 0
    %5862 = vmatprep.subr.bf16.mxu0 0
    %5863 = vmatpush1.bf16.msra.mxu0 0
    %5864 = vmatprep.subr.bf16.mxu0 0
    %5865 = vmatpush1.bf16.msra.mxu0 0
    %5866 = vmatprep.subr.bf16.mxu0 0
    %5867 = vmatpush1.bf16.msra.mxu0 0
    %5868 = vmatprep.subr.bf16.mxu0 0
    %5869 = vmatpush1.bf16.msra.mxu0 0
    %5870 = vmatprep.subr.bf16.mxu0 0
    %5871 = vmatpush1.bf16.msra.mxu0 0
    %5872 = vmatprep.subr.bf16.mxu0 0
    %5873 = vmatpush1.bf16.msra.mxu0 0
    %5874 = vmatprep.subr.bf16.mxu0 0
    %5875 = vmatpush1.bf16.msra.mxu0 0
    %5876 = vmatprep.subr.bf16.mxu0 0
    %5877 = vmatpush1.bf16.msra.mxu0 0
    %5878 = vmatprep.mubr.bf16.mxu0 0
    %5879 = vmatmul.mubr.bf16.gmra.mrb[0].mxu0 %v5762
    %v5880 = vpop.f32.mrb[0].mxu0
    %v5881 = vadd.f32 0.0, %v5880
    %v5882 = vpop.f32.mrb[0].mxu0
    %v5883 = vadd.f32 0.0, %v5882
    %v5884 = vpop.f32.mrb[0].mxu0
    %v5885 = vadd.f32 0.0, %v5884
    %v5886 = vpop.f32.mrb[0].mxu0
    %v5887 = vadd.f32 0.0, %v5886
    %5888 = vmatprep.mubr.bf16.mxu0 0
    %5889 = vmatmul.mubr.bf16.gmra.mrb[0].mxu0 %v5765
    %v5890 = vpop.f32.mrb[0].mxu0
    %v5891 = vadd.f32 0.0, %v5890
    %v5892 = vpop.f32.mrb[0].mxu0
    %v5893 = vadd.f32 0.0, %v5892
    %v5894 = vpop.f32.mrb[0].mxu0
    %v5895 = vadd.f32 0.0, %v5894
    %v5896 = vpop.f32.mrb[0].mxu0
    %v5897 = vadd.f32 0.0, %v5896
    %5898 = vmatprep.mubr.bf16.mxu0 0
    %5899 = vmatmul.mubr.bf16.gmra.mrb[0].mxu0 %v5768
    %v5900 = vpop.f32.mrb[0].mxu0
    %v5901 = vadd.f32 0.0, %v5900
    %v5902 = vpop.f32.mrb[0].mxu0
    %v5903 = vadd.f32 0.0, %v5902
    %v5904 = vpop.f32.mrb[0].mxu0
    %v5905 = vadd.f32 0.0, %v5904
    %v5906 = vpop.f32.mrb[0].mxu0
    %v5907 = vadd.f32 0.0, %v5906
    %5908 = vmatprep.mubr.bf16.mxu0 0
    %5909 = vmatmul.mubr.bf16.gmra.mrb[0].mxu0 %v5771
    %v5910 = vpop.f32.mrb[0].mxu0
    %v5911 = vadd.f32 0.0, %v5910
    %v5912 = vpop.f32.mrb[0].mxu0
    %v5913 = vadd.f32 0.0, %v5912
    %v5914 = vpop.f32.mrb[0].mxu0
    %v5915 = vadd.f32 0.0, %v5914
    %v5916 = vpop.f32.mrb[0].mxu0
    %v5917 = vadd.f32 0.0, %v5916
    %5918 = vdwg.mxu0
    %v5919 = vunpack.c.l.b16 %v5612
    %v5920 = vunpack.c.l.b16 %v5614
    %v5921 = vunpack.c.l.b16 %v5616
    %v5922 = vunpack.c.l.b16 %v5618
    %v5923 = vunpack.c.l.b16 %v5620
    %v5924 = vunpack.c.l.b16 %v5622
    %v5925 = vunpack.c.l.b16 %v5624
    %v5926 = vunpack.c.l.b16 %v5626
    %v5927 = vpack.c.b16 %v5920, %v5919
    %v5928 = vpack.c.b16 %v5922, %v5921
    %v5929 = vpack.c.b16 %v5924, %v5923
    %v5930 = vpack.c.b16 %v5926, %v5925
    %v5947 = vunpack.c.l.b16 %v5628
    %v5948 = vunpack.c.h.b16 %v5628
    %v5949 = vunpack.c.l.b16 %v5629
    %v5950 = vunpack.c.h.b16 %v5629
    %v5951 = vunpack.c.l.b16 %v5630
    %v5952 = vunpack.c.h.b16 %v5630
    %v5953 = vunpack.c.l.b16 %v5631
    %v5954 = vunpack.c.h.b16 %v5631
    %v5955 = vunpack.c.l.b16 %v5632
    %v5956 = vunpack.c.h.b16 %v5632
    %v5957 = vunpack.c.l.b16 %v5633
    %v5958 = vunpack.c.h.b16 %v5633
    %v5959 = vunpack.c.l.b16 %v5634
    %v5960 = vunpack.c.h.b16 %v5634
    %v5961 = vunpack.c.l.b16 %v5635
    %v5962 = vunpack.c.h.b16 %v5635
    %v5963 = vunpack.c.l.b16 %v5636
    %v5964 = vunpack.c.h.b16 %v5636
    %v5965 = vunpack.c.l.b16 %v5637
    %v5966 = vunpack.c.h.b16 %v5637
    %v5967 = vunpack.c.l.b16 %v5638
    %v5968 = vunpack.c.h.b16 %v5638
    %v5969 = vunpack.c.l.b16 %v5639
    %v5970 = vunpack.c.h.b16 %v5639
    %v5971 = vunpack.c.l.b16 %v5640
    %v5972 = vunpack.c.h.b16 %v5640
    %v5973 = vunpack.c.l.b16 %v5641
    %v5974 = vunpack.c.h.b16 %v5641
    %v5975 = vunpack.c.l.b16 %v5642
    %v5976 = vunpack.c.h.b16 %v5642
    %v5977 = vunpack.c.l.b16 %v5643
    %v5978 = vunpack.c.h.b16 %v5643
    %v5979 = vpack.c.b16 %v5951, %v5947
    %v5980 = vpack.c.b16 %v5952, %v5948
    %v5981 = vpack.c.b16 %v5953, %v5949
    %v5982 = vpack.c.b16 %v5954, %v5950
    %v5983 = vpack.c.b16 %v5959, %v5955
    %v5984 = vpack.c.b16 %v5960, %v5956
    %v5985 = vpack.c.b16 %v5961, %v5957
    %v5986 = vpack.c.b16 %v5962, %v5958
    %v5987 = vpack.c.b16 %v5967, %v5963
    %v5988 = vpack.c.b16 %v5968, %v5964
    %v5989 = vpack.c.b16 %v5969, %v5965
    %v5990 = vpack.c.b16 %v5970, %v5966
    %v5991 = vpack.c.b16 %v5975, %v5971
    %v5992 = vpack.c.b16 %v5976, %v5972
    %v5993 = vpack.c.b16 %v5977, %v5973
    %v5994 = vpack.c.b16 %v5978, %v5974
    %v6012 = vsel %vm1376, %v5927, 0
    %v6015 = vsel %vm1376, %v5928, 0
    %v6018 = vsel %vm1376, %v5929, 0
    %v6021 = vsel %vm1376, %v5930, 0
    %6023 = vmatprep.subr.bf16.mxu0 %v5980
    %6024 = vmatpush1.bf16.msra.mxu0 %v5979
    %6025 = vmatprep.subr.bf16.mxu0 %v5984
    %6026 = vmatpush1.bf16.msra.mxu0 %v5983
    %6027 = vmatprep.subr.bf16.mxu0 %v5988
    %6028 = vmatpush1.bf16.msra.mxu0 %v5987
    %6029 = vmatprep.subr.bf16.mxu0 %v5992
    %6030 = vmatpush1.bf16.msra.mxu0 %v5991
    %6031 = vmatprep.subr.bf16.mxu0 0
    %6032 = vmatpush1.bf16.msra.mxu0 0
    %6033 = vmatprep.subr.bf16.mxu0 0
    %6034 = vmatpush1.bf16.msra.mxu0 0
    %6035 = vmatprep.subr.bf16.mxu0 0
    %6036 = vmatpush1.bf16.msra.mxu0 0
    %6037 = vmatprep.subr.bf16.mxu0 0
    %6038 = vmatpush1.bf16.msra.mxu0 0
    %6039 = vmatprep.subr.bf16.mxu0 0
    %6040 = vmatpush1.bf16.msra.mxu0 0
    %6041 = vmatprep.subr.bf16.mxu0 0
    %6042 = vmatpush1.bf16.msra.mxu0 0
    %6043 = vmatprep.subr.bf16.mxu0 0
    %6044 = vmatpush1.bf16.msra.mxu0 0
    %6045 = vmatprep.subr.bf16.mxu0 0
    %6046 = vmatpush1.bf16.msra.mxu0 0
    %6047 = vmatprep.subr.bf16.mxu0 0
    %6048 = vmatpush1.bf16.msra.mxu0 0
    %6049 = vmatprep.subr.bf16.mxu0 0
    %6050 = vmatpush1.bf16.msra.mxu0 0
    %6051 = vmatprep.subr.bf16.mxu0 0
    %6052 = vmatpush1.bf16.msra.mxu0 0
    %6053 = vmatprep.subr.bf16.mxu0 0
    %6054 = vmatpush1.bf16.msra.mxu0 0
    %6055 = vmatprep.mubr.bf16.mxu0 0
    %6056 = vmatmul.mubr.bf16.gmra.mrb[0].mxu0 %v6012
    %v6057 = vpop.f32.mrb[0].mxu0
    %v6058 = vadd.f32 %v5808, %v6057
    %v6059 = vpop.f32.mrb[0].mxu0
    %v6060 = vadd.f32 %v5810, %v6059
    %v6061 = vpop.f32.mrb[0].mxu0
    %v6062 = vadd.f32 %v5812, %v6061
    %v6063 = vpop.f32.mrb[0].mxu0
    %v6064 = vadd.f32 %v5814, %v6063
    %6065 = vmatprep.mubr.bf16.mxu0 0
    %6066 = vmatmul.mubr.bf16.gmra.mrb[0].mxu0 %v6015
    %v6067 = vpop.f32.mrb[0].mxu0
    %v6068 = vadd.f32 %v5818, %v6067
    %v6069 = vpop.f32.mrb[0].mxu0
    %v6070 = vadd.f32 %v5820, %v6069
    %v6071 = vpop.f32.mrb[0].mxu0
    %v6072 = vadd.f32 %v5822, %v6071
    %v6073 = vpop.f32.mrb[0].mxu0
    %v6074 = vadd.f32 %v5824, %v6073
    %6075 = vmatprep.mubr.bf16.mxu0 0
    %6076 = vmatmul.mubr.bf16.gmra.mrb[0].mxu0 %v6018
    %v6077 = vpop.f32.mrb[0].mxu0
    %v6078 = vadd.f32 %v5828, %v6077
    %v6079 = vpop.f32.mrb[0].mxu0
    %v6080 = vadd.f32 %v5830, %v6079
    %v6081 = vpop.f32.mrb[0].mxu0
    %v6082 = vadd.f32 %v5832, %v6081
    %v6083 = vpop.f32.mrb[0].mxu0
    %v6084 = vadd.f32 %v5834, %v6083
    %6085 = vmatprep.mubr.bf16.mxu0 0
    %6086 = vmatmul.mubr.bf16.gmra.mrb[0].mxu0 %v6021
    %v6087 = vpop.f32.mrb[0].mxu0
    %v6088 = vadd.f32 %v5838, %v6087
    %v6089 = vpop.f32.mrb[0].mxu0
    %v6090 = vadd.f32 %v5840, %v6089
    %v6091 = vpop.f32.mrb[0].mxu0
    %v6092 = vadd.f32 %v5842, %v6091
    %v6093 = vpop.f32.mrb[0].mxu0
    %v6094 = vadd.f32 %v5844, %v6093
    %6095 = vdwg.mxu0
    %6096 = vmatprep.subr.bf16.mxu0 %v5982
    %6097 = vmatpush1.bf16.msra.mxu0 %v5981
    %6098 = vmatprep.subr.bf16.mxu0 %v5986
    %6099 = vmatpush1.bf16.msra.mxu0 %v5985
    %6100 = vmatprep.subr.bf16.mxu0 %v5990
    %6101 = vmatpush1.bf16.msra.mxu0 %v5989
    %6102 = vmatprep.subr.bf16.mxu0 %v5994
    %6103 = vmatpush1.bf16.msra.mxu0 %v5993
    %6104 = vmatprep.subr.bf16.mxu0 0
    %6105 = vmatpush1.bf16.msra.mxu0 0
    %6106 = vmatprep.subr.bf16.mxu0 0
    %6107 = vmatpush1.bf16.msra.mxu0 0
    %6108 = vmatprep.subr.bf16.mxu0 0
    %6109 = vmatpush1.bf16.msra.mxu0 0
    %6110 = vmatprep.subr.bf16.mxu0 0
    %6111 = vmatpush1.bf16.msra.mxu0 0
    %6112 = vmatprep.subr.bf16.mxu0 0
    %6113 = vmatpush1.bf16.msra.mxu0 0
    %6114 = vmatprep.subr.bf16.mxu0 0
    %6115 = vmatpush1.bf16.msra.mxu0 0
    %6116 = vmatprep.subr.bf16.mxu0 0
    %6117 = vmatpush1.bf16.msra.mxu0 0
    %6118 = vmatprep.subr.bf16.mxu0 0
    %6119 = vmatpush1.bf16.msra.mxu0 0
    %6120 = vmatprep.subr.bf16.mxu0 0
    %6121 = vmatpush1.bf16.msra.mxu0 0
    %6122 = vmatprep.subr.bf16.mxu0 0
    %6123 = vmatpush1.bf16.msra.mxu0 0
    %6124 = vmatprep.subr.bf16.mxu0 0
    %6125 = vmatpush1.bf16.msra.mxu0 0
    %6126 = vmatprep.subr.bf16.mxu0 0
    %6127 = vmatpush1.bf16.msra.mxu0 0
    %6128 = vmatprep.mubr.bf16.mxu0 0
    %6129 = vmatmul.mubr.bf16.gmra.mrb[0].mxu0 %v6012
    %v6130 = vpop.f32.mrb[0].mxu0
    %v6131 = vadd.f32 %v5881, %v6130
    %v6132 = vpop.f32.mrb[0].mxu0
    %v6133 = vadd.f32 %v5883, %v6132
    %v6134 = vpop.f32.mrb[0].mxu0
    %v6135 = vadd.f32 %v5885, %v6134
    %v6136 = vpop.f32.mrb[0].mxu0
    %v6137 = vadd.f32 %v5887, %v6136
    %6138 = vmatprep.mubr.bf16.mxu0 0
    %6139 = vmatmul.mubr.bf16.gmra.mrb[0].mxu0 %v6015
    %v6140 = vpop.f32.mrb[0].mxu0
    %v6141 = vadd.f32 %v5891, %v6140
    %v6142 = vpop.f32.mrb[0].mxu0
    %v6143 = vadd.f32 %v5893, %v6142
    %v6144 = vpop.f32.mrb[0].mxu0
    %v6145 = vadd.f32 %v5895, %v6144
    %v6146 = vpop.f32.mrb[0].mxu0
    %v6147 = vadd.f32 %v5897, %v6146
    %6148 = vmatprep.mubr.bf16.mxu0 0
    %6149 = vmatmul.mubr.bf16.gmra.mrb[0].mxu0 %v6018
    %v6150 = vpop.f32.mrb[0].mxu0
    %v6151 = vadd.f32 %v5901, %v6150
    %v6152 = vpop.f32.mrb[0].mxu0
    %v6153 = vadd.f32 %v5903, %v6152
    %v6154 = vpop.f32.mrb[0].mxu0
    %v6155 = vadd.f32 %v5905, %v6154
    %v6156 = vpop.f32.mrb[0].mxu0
    %v6157 = vadd.f32 %v5907, %v6156
    %6158 = vmatprep.mubr.bf16.mxu0 0
    %6159 = vmatmul.mubr.bf16.gmra.mrb[0].mxu0 %v6021
    %v6160 = vpop.f32.mrb[0].mxu0
    %v6161 = vadd.f32 %v5911, %v6160
    %v6162 = vpop.f32.mrb[0].mxu0
    %v6163 = vadd.f32 %v5913, %v6162
    %v6164 = vpop.f32.mrb[0].mxu0
    %v6165 = vadd.f32 %v5915, %v6164
    %v6166 = vpop.f32.mrb[0].mxu0
    %v6167 = vadd.f32 %v5917, %v6166
    %6168 = vdwg.mxu0
    %s6169 = scalar_lea.vmem %s9, 256
    %v6170 = vld [vmem:[%s6169] sm:$0xff]
    %v6171 = vld [vmem:[%s6169 + $0x8] sm:$0xff]
    %v6172 = vld [vmem:[%s6169 + $0x10] sm:$0xff]
    %v6173 = vld [vmem:[%s6169 + $0x18] sm:$0xff]
    %v6174 = vld [vmem:[%s6169 + $0x20] sm:$0xff]
    %v6175 = vld [vmem:[%s6169 + $0x28] sm:$0xff]
    %v6176 = vld [vmem:[%s6169 + $0x30] sm:$0xff]
    %v6177 = vld [vmem:[%s6169 + $0x38] sm:$0xff]
    %v6178 = vld [vmem:[%s6169 + $0x40] sm:$0xff]
    %v6179 = vld [vmem:[%s6169 + $0x48] sm:$0xff]
    %v6180 = vld [vmem:[%s6169 + $0x50] sm:$0xff]
    %v6181 = vld [vmem:[%s6169 + $0x58] sm:$0xff]
    %v6182 = vld [vmem:[%s6169 + $0x60] sm:$0xff]
    %v6183 = vld [vmem:[%s6169 + $0x68] sm:$0xff]
    %v6184 = vld [vmem:[%s6169 + $0x70] sm:$0xff]
    %v6185 = vld [vmem:[%s6169 + $0x78] sm:$0xff]
    %v6194 = vunpack.c.l.b16 %v5613
    %v6195 = vunpack.c.l.b16 %v5615
    %v6196 = vunpack.c.l.b16 %v5617
    %v6197 = vunpack.c.l.b16 %v5619
    %v6198 = vunpack.c.l.b16 %v5621
    %v6199 = vunpack.c.l.b16 %v5623
    %v6200 = vunpack.c.l.b16 %v5625
    %v6201 = vunpack.c.l.b16 %v5627
    %v6202 = vpack.c.b16 %v6195, %v6194
    %v6203 = vpack.c.b16 %v6197, %v6196
    %v6204 = vpack.c.b16 %v6199, %v6198
    %v6205 = vpack.c.b16 %v6201, %v6200
    %v6222 = vunpack.c.l.b16 %v6170
    %v6223 = vunpack.c.h.b16 %v6170
    %v6224 = vunpack.c.l.b16 %v6171
    %v6225 = vunpack.c.h.b16 %v6171
    %v6226 = vunpack.c.l.b16 %v6172
    %v6227 = vunpack.c.h.b16 %v6172
    %v6228 = vunpack.c.l.b16 %v6173
    %v6229 = vunpack.c.h.b16 %v6173
    %v6230 = vunpack.c.l.b16 %v6174
    %v6231 = vunpack.c.h.b16 %v6174
    %v6232 = vunpack.c.l.b16 %v6175
    %v6233 = vunpack.c.h.b16 %v6175
    %v6234 = vunpack.c.l.b16 %v6176
    %v6235 = vunpack.c.h.b16 %v6176
    %v6236 = vunpack.c.l.b16 %v6177
    %v6237 = vunpack.c.h.b16 %v6177
    %v6238 = vunpack.c.l.b16 %v6178
    %v6239 = vunpack.c.h.b16 %v6178
    %v6240 = vunpack.c.l.b16 %v6179
    %v6241 = vunpack.c.h.b16 %v6179
    %v6242 = vunpack.c.l.b16 %v6180
    %v6243 = vunpack.c.h.b16 %v6180
    %v6244 = vunpack.c.l.b16 %v6181
    %v6245 = vunpack.c.h.b16 %v6181
    %v6246 = vunpack.c.l.b16 %v6182
    %v6247 = vunpack.c.h.b16 %v6182
    %v6248 = vunpack.c.l.b16 %v6183
    %v6249 = vunpack.c.h.b16 %v6183
    %v6250 = vunpack.c.l.b16 %v6184
    %v6251 = vunpack.c.h.b16 %v6184
    %v6252 = vunpack.c.l.b16 %v6185
    %v6253 = vunpack.c.h.b16 %v6185
    %v6254 = vpack.c.b16 %v6226, %v6222
    %v6255 = vpack.c.b16 %v6227, %v6223
    %v6256 = vpack.c.b16 %v6228, %v6224
    %v6257 = vpack.c.b16 %v6229, %v6225
    %v6258 = vpack.c.b16 %v6234, %v6230
    %v6259 = vpack.c.b16 %v6235, %v6231
    %v6260 = vpack.c.b16 %v6236, %v6232
    %v6261 = vpack.c.b16 %v6237, %v6233
    %v6262 = vpack.c.b16 %v6242, %v6238
    %v6263 = vpack.c.b16 %v6243, %v6239
    %v6264 = vpack.c.b16 %v6244, %v6240
    %v6265 = vpack.c.b16 %v6245, %v6241
    %v6266 = vpack.c.b16 %v6250, %v6246
    %v6267 = vpack.c.b16 %v6251, %v6247
    %v6268 = vpack.c.b16 %v6252, %v6248
    %v6269 = vpack.c.b16 %v6253, %v6249
    %v6287 = vsel %vm1376, %v6202, 0
    %v6290 = vsel %vm1376, %v6203, 0
    %v6293 = vsel %vm1376, %v6204, 0
    %v6296 = vsel %vm1376, %v6205, 0
    %6298 = vmatprep.subr.bf16.mxu0 %v6255
    %6299 = vmatpush1.bf16.msra.mxu0 %v6254
    %6300 = vmatprep.subr.bf16.mxu0 %v6259
    %6301 = vmatpush1.bf16.msra.mxu0 %v6258
    %6302 = vmatprep.subr.bf16.mxu0 %v6263
    %6303 = vmatpush1.bf16.msra.mxu0 %v6262
    %6304 = vmatprep.subr.bf16.mxu0 %v6267
    %6305 = vmatpush1.bf16.msra.mxu0 %v6266
    %6306 = vmatprep.subr.bf16.mxu0 0
    %6307 = vmatpush1.bf16.msra.mxu0 0
    %6308 = vmatprep.subr.bf16.mxu0 0
    %6309 = vmatpush1.bf16.msra.mxu0 0
    %6310 = vmatprep.subr.bf16.mxu0 0
    %6311 = vmatpush1.bf16.msra.mxu0 0
    %6312 = vmatprep.subr.bf16.mxu0 0
    %6313 = vmatpush1.bf16.msra.mxu0 0
    %6314 = vmatprep.subr.bf16.mxu0 0
    %6315 = vmatpush1.bf16.msra.mxu0 0
    %6316 = vmatprep.subr.bf16.mxu0 0
    %6317 = vmatpush1.bf16.msra.mxu0 0
    %6318 = vmatprep.subr.bf16.mxu0 0
    %6319 = vmatpush1.bf16.msra.mxu0 0
    %6320 = vmatprep.subr.bf16.mxu0 0
    %6321 = vmatpush1.bf16.msra.mxu0 0
    %6322 = vmatprep.subr.bf16.mxu0 0
    %6323 = vmatpush1.bf16.msra.mxu0 0
    %6324 = vmatprep.subr.bf16.mxu0 0
    %6325 = vmatpush1.bf16.msra.mxu0 0
    %6326 = vmatprep.subr.bf16.mxu0 0
    %6327 = vmatpush1.bf16.msra.mxu0 0
    %6328 = vmatprep.subr.bf16.mxu0 0
    %6329 = vmatpush1.bf16.msra.mxu0 0
    %6330 = vmatprep.mubr.bf16.mxu0 0
    %6331 = vmatmul.mubr.bf16.gmra.mrb[0].mxu0 %v6287
    %v6332 = vpop.f32.mrb[0].mxu0
    %v6333 = vadd.f32 0.0, %v6332
    %v6334 = vpop.f32.mrb[0].mxu0
    %v6335 = vadd.f32 0.0, %v6334
    %v6336 = vpop.f32.mrb[0].mxu0
    %v6337 = vadd.f32 0.0, %v6336
    %v6338 = vpop.f32.mrb[0].mxu0
    %v6339 = vadd.f32 0.0, %v6338
    %6340 = vmatprep.mubr.bf16.mxu0 0
    %6341 = vmatmul.mubr.bf16.gmra.mrb[0].mxu0 %v6290
    %v6342 = vpop.f32.mrb[0].mxu0
    %v6343 = vadd.f32 0.0, %v6342
    %v6344 = vpop.f32.mrb[0].mxu0
    %v6345 = vadd.f32 0.0, %v6344
    %v6346 = vpop.f32.mrb[0].mxu0
    %v6347 = vadd.f32 0.0, %v6346
    %v6348 = vpop.f32.mrb[0].mxu0
    %v6349 = vadd.f32 0.0, %v6348
    %6350 = vmatprep.mubr.bf16.mxu0 0
    %6351 = vmatmul.mubr.bf16.gmra.mrb[0].mxu0 %v6293
    %v6352 = vpop.f32.mrb[0].mxu0
    %v6353 = vadd.f32 0.0, %v6352
    %v6354 = vpop.f32.mrb[0].mxu0
    %v6355 = vadd.f32 0.0, %v6354
    %v6356 = vpop.f32.mrb[0].mxu0
    %v6357 = vadd.f32 0.0, %v6356
    %v6358 = vpop.f32.mrb[0].mxu0
    %v6359 = vadd.f32 0.0, %v6358
    %6360 = vmatprep.mubr.bf16.mxu0 0
    %6361 = vmatmul.mubr.bf16.gmra.mrb[0].mxu0 %v6296
    %v6362 = vpop.f32.mrb[0].mxu0
    %v6363 = vadd.f32 0.0, %v6362
    %v6364 = vpop.f32.mrb[0].mxu0
    %v6365 = vadd.f32 0.0, %v6364
    %v6366 = vpop.f32.mrb[0].mxu0
    %v6367 = vadd.f32 0.0, %v6366
    %v6368 = vpop.f32.mrb[0].mxu0
    %v6369 = vadd.f32 0.0, %v6368
    %6370 = vdwg.mxu0
    %6371 = vmatprep.subr.bf16.mxu0 %v6257
    %6372 = vmatpush1.bf16.msra.mxu0 %v6256
    %6373 = vmatprep.subr.bf16.mxu0 %v6261
    %6374 = vmatpush1.bf16.msra.mxu0 %v6260
    %6375 = vmatprep.subr.bf16.mxu0 %v6265
    %6376 = vmatpush1.bf16.msra.mxu0 %v6264
    %6377 = vmatprep.subr.bf16.mxu0 %v6269
    %6378 = vmatpush1.bf16.msra.mxu0 %v6268
    %6379 = vmatprep.subr.bf16.mxu0 0
    %6380 = vmatpush1.bf16.msra.mxu0 0
    %6381 = vmatprep.subr.bf16.mxu0 0
    %6382 = vmatpush1.bf16.msra.mxu0 0
    %6383 = vmatprep.subr.bf16.mxu0 0
    %6384 = vmatpush1.bf16.msra.mxu0 0
    %6385 = vmatprep.subr.bf16.mxu0 0
    %6386 = vmatpush1.bf16.msra.mxu0 0
    %6387 = vmatprep.subr.bf16.mxu0 0
    %6388 = vmatpush1.bf16.msra.mxu0 0
    %6389 = vmatprep.subr.bf16.mxu0 0
    %6390 = vmatpush1.bf16.msra.mxu0 0
    %6391 = vmatprep.subr.bf16.mxu0 0
    %6392 = vmatpush1.bf16.msra.mxu0 0
    %6393 = vmatprep.subr.bf16.mxu0 0
    %6394 = vmatpush1.bf16.msra.mxu0 0
    %6395 = vmatprep.subr.bf16.mxu0 0
    %6396 = vmatpush1.bf16.msra.mxu0 0
    %6397 = vmatprep.subr.bf16.mxu0 0
    %6398 = vmatpush1.bf16.msra.mxu0 0
    %6399 = vmatprep.subr.bf16.mxu0 0
    %6400 = vmatpush1.bf16.msra.mxu0 0
    %6401 = vmatprep.subr.bf16.mxu0 0
    %6402 = vmatpush1.bf16.msra.mxu0 0
    %6403 = vmatprep.mubr.bf16.mxu0 0
    %6404 = vmatmul.mubr.bf16.gmra.mrb[0].mxu0 %v6287
    %v6405 = vpop.f32.mrb[0].mxu0
    %v6406 = vadd.f32 0.0, %v6405
    %v6407 = vpop.f32.mrb[0].mxu0
    %v6408 = vadd.f32 0.0, %v6407
    %v6409 = vpop.f32.mrb[0].mxu0
    %v6410 = vadd.f32 0.0, %v6409
    %v6411 = vpop.f32.mrb[0].mxu0
    %v6412 = vadd.f32 0.0, %v6411
    %6413 = vmatprep.mubr.bf16.mxu0 0
    %6414 = vmatmul.mubr.bf16.gmra.mrb[0].mxu0 %v6290
    %v6415 = vpop.f32.mrb[0].mxu0
    %v6416 = vadd.f32 0.0, %v6415
    %v6417 = vpop.f32.mrb[0].mxu0
    %v6418 = vadd.f32 0.0, %v6417
    %v6419 = vpop.f32.mrb[0].mxu0
    %v6420 = vadd.f32 0.0, %v6419
    %v6421 = vpop.f32.mrb[0].mxu0
    %v6422 = vadd.f32 0.0, %v6421
    %6423 = vmatprep.mubr.bf16.mxu0 0
    %6424 = vmatmul.mubr.bf16.gmra.mrb[0].mxu0 %v6293
    %v6425 = vpop.f32.mrb[0].mxu0
    %v6426 = vadd.f32 0.0, %v6425
    %v6427 = vpop.f32.mrb[0].mxu0
    %v6428 = vadd.f32 0.0, %v6427
    %v6429 = vpop.f32.mrb[0].mxu0
    %v6430 = vadd.f32 0.0, %v6429
    %v6431 = vpop.f32.mrb[0].mxu0
    %v6432 = vadd.f32 0.0, %v6431
    %6433 = vmatprep.mubr.bf16.mxu0 0
    %6434 = vmatmul.mubr.bf16.gmra.mrb[0].mxu0 %v6296
    %v6435 = vpop.f32.mrb[0].mxu0
    %v6436 = vadd.f32 0.0, %v6435
    %v6437 = vpop.f32.mrb[0].mxu0
    %v6438 = vadd.f32 0.0, %v6437
    %v6439 = vpop.f32.mrb[0].mxu0
    %v6440 = vadd.f32 0.0, %v6439
    %v6441 = vpop.f32.mrb[0].mxu0
    %v6442 = vadd.f32 0.0, %v6441
    %6443 = vdwg.mxu0
    %v6444 = vadd.f32 %v6058, %v6333
    %v6445 = vadd.f32 %v6060, %v6335
    %v6446 = vadd.f32 %v6131, %v6406
    %v6447 = vadd.f32 %v6133, %v6408
    %v6448 = vadd.f32 %v6062, %v6337
    %v6449 = vadd.f32 %v6064, %v6339
    %v6450 = vadd.f32 %v6135, %v6410
    %v6451 = vadd.f32 %v6137, %v6412
    %v6452 = vadd.f32 %v6068, %v6343
    %v6453 = vadd.f32 %v6070, %v6345
    %v6454 = vadd.f32 %v6141, %v6416
    %v6455 = vadd.f32 %v6143, %v6418
    %v6456 = vadd.f32 %v6072, %v6347
    %v6457 = vadd.f32 %v6074, %v6349
    %v6458 = vadd.f32 %v6145, %v6420
    %v6459 = vadd.f32 %v6147, %v6422
    %v6460 = vadd.f32 %v6078, %v6353
    %v6461 = vadd.f32 %v6080, %v6355
    %v6462 = vadd.f32 %v6151, %v6426
    %v6463 = vadd.f32 %v6153, %v6428
    %v6464 = vadd.f32 %v6082, %v6357
    %v6465 = vadd.f32 %v6084, %v6359
    %v6466 = vadd.f32 %v6155, %v6430
    %v6467 = vadd.f32 %v6157, %v6432
    %v6468 = vadd.f32 %v6088, %v6363
    %v6469 = vadd.f32 %v6090, %v6365
    %v6470 = vadd.f32 %v6161, %v6436
    %v6471 = vadd.f32 %v6163, %v6438
    %v6472 = vadd.f32 %v6092, %v6367
    %v6473 = vadd.f32 %v6094, %v6369
    %v6474 = vadd.f32 %v6165, %v6440
    %v6475 = vadd.f32 %v6167, %v6442
    %v6476 = vld [vmem:[%s11] sm:$0xf]
    %v6478 = vlaneseq
    %v6479 = vshrl.u32 %v6478, 7
    %v6480 = vsub.s32 0, %v6479
    %v6481 = vrot.slane %v6476, %v6480
    %v6482 = vlaneseq
    %v6483 = vshrl.u32 %v6482, 7
    %v6484 = vsub.s32 1, %v6483
    %v6485 = vrot.slane %v6476, %v6484
    %v6486 = vlaneseq
    %v6487 = vshrl.u32 %v6486, 7
    %v6488 = vsub.s32 2, %v6487
    %v6489 = vrot.slane %v6476, %v6488
    %v6490 = vlaneseq
    %v6491 = vshrl.u32 %v6490, 7
    %v6492 = vsub.s32 3, %v6491
    %v6493 = vrot.slane %v6476, %v6492
    %v6498 = vadd.f32 %v6444, %v6481
    %v6499 = vadd.f32 %v6445, %v6485
    %v6500 = vadd.f32 %v6446, %v6489
    %v6501 = vadd.f32 %v6447, %v6493
    %v6502 = vadd.f32 %v6448, %v6481
    %v6503 = vadd.f32 %v6449, %v6485
    %v6504 = vadd.f32 %v6450, %v6489
    %v6505 = vadd.f32 %v6451, %v6493
    %v6506 = vadd.f32 %v6452, %v6481
    %v6507 = vadd.f32 %v6453, %v6485
    %v6508 = vadd.f32 %v6454, %v6489
    %v6509 = vadd.f32 %v6455, %v6493
    %v6510 = vadd.f32 %v6456, %v6481
    %v6511 = vadd.f32 %v6457, %v6485
    %v6512 = vadd.f32 %v6458, %v6489
    %v6513 = vadd.f32 %v6459, %v6493
    %v6514 = vadd.f32 %v6460, %v6481
    %v6515 = vadd.f32 %v6461, %v6485
    %v6516 = vadd.f32 %v6462, %v6489
    %v6517 = vadd.f32 %v6463, %v6493
    %v6518 = vadd.f32 %v6464, %v6481
    %v6519 = vadd.f32 %v6465, %v6485
    %v6520 = vadd.f32 %v6466, %v6489
    %v6521 = vadd.f32 %v6467, %v6493
    %v6522 = vadd.f32 %v6468, %v6481
    %v6523 = vadd.f32 %v6469, %v6485
    %v6524 = vadd.f32 %v6470, %v6489
    %v6525 = vadd.f32 %v6471, %v6493
    %v6526 = vadd.f32 %v6472, %v6481
    %v6527 = vadd.f32 %v6473, %v6485
    %v6528 = vadd.f32 %v6474, %v6489
    %v6529 = vadd.f32 %v6475, %v6493
    %v6530 = vld [vmem:[%s10] sm:$0xff]
    %v6531 = vld [vmem:[%s10 + $0x8] sm:$0xff]
    %v6532 = vld [vmem:[%s10 + $0x10] sm:$0xff]
    %v6533 = vld [vmem:[%s10 + $0x18] sm:$0xff]
    %v6534 = vld [vmem:[%s10 + $0x20] sm:$0xff]
    %v6535 = vld [vmem:[%s10 + $0x28] sm:$0xff]
    %v6536 = vld [vmem:[%s10 + $0x30] sm:$0xff]
    %v6537 = vld [vmem:[%s10 + $0x38] sm:$0xff]
    %v6538 = vld [vmem:[%s10 + $0x40] sm:$0xff]
    %v6539 = vld [vmem:[%s10 + $0x48] sm:$0xff]
    %v6540 = vld [vmem:[%s10 + $0x50] sm:$0xff]
    %v6541 = vld [vmem:[%s10 + $0x58] sm:$0xff]
    %v6542 = vld [vmem:[%s10 + $0x60] sm:$0xff]
    %v6543 = vld [vmem:[%s10 + $0x68] sm:$0xff]
    %v6544 = vld [vmem:[%s10 + $0x70] sm:$0xff]
    %v6545 = vld [vmem:[%s10 + $0x78] sm:$0xff]
    %v6546 = vld [vmem:[%s10 + $0x80] sm:$0xff]
    %v6547 = vld [vmem:[%s10 + $0x88] sm:$0xff]
    %v6548 = vld [vmem:[%s10 + $0x90] sm:$0xff]
    %v6549 = vld [vmem:[%s10 + $0x98] sm:$0xff]
    %v6550 = vld [vmem:[%s10 + $0xa0] sm:$0xff]
    %v6551 = vld [vmem:[%s10 + $0xa8] sm:$0xff]
    %v6552 = vld [vmem:[%s10 + $0xb0] sm:$0xff]
    %v6553 = vld [vmem:[%s10 + $0xb8] sm:$0xff]
    %v6554 = vld [vmem:[%s10 + $0xc0] sm:$0xff]
    %v6555 = vld [vmem:[%s10 + $0xc8] sm:$0xff]
    %v6556 = vld [vmem:[%s10 + $0xd0] sm:$0xff]
    %v6557 = vld [vmem:[%s10 + $0xd8] sm:$0xff]
    %v6558 = vld [vmem:[%s10 + $0xe0] sm:$0xff]
    %v6559 = vld [vmem:[%s10 + $0xe8] sm:$0xff]
    %v6560 = vld [vmem:[%s10 + $0xf0] sm:$0xff]
    %v6561 = vld [vmem:[%s10 + $0xf8] sm:$0xff]
    %v6594 = vunpack.c.l.b16 %v6530
    %v6595 = vunpack.c.h.b16 %v6530
    %v6596 = vunpack.c.l.b16 %v6531
    %v6597 = vunpack.c.h.b16 %v6531
    %v6598 = vunpack.c.l.b16 %v6532
    %v6599 = vunpack.c.h.b16 %v6532
    %v6600 = vunpack.c.l.b16 %v6533
    %v6601 = vunpack.c.h.b16 %v6533
    %v6602 = vunpack.c.l.b16 %v6534
    %v6603 = vunpack.c.h.b16 %v6534
    %v6604 = vunpack.c.l.b16 %v6535
    %v6605 = vunpack.c.h.b16 %v6535
    %v6606 = vunpack.c.l.b16 %v6536
    %v6607 = vunpack.c.h.b16 %v6536
    %v6608 = vunpack.c.l.b16 %v6537
    %v6609 = vunpack.c.h.b16 %v6537
    %v6610 = vunpack.c.l.b16 %v6538
    %v6611 = vunpack.c.h.b16 %v6538
    %v6612 = vunpack.c.l.b16 %v6539
    %v6613 = vunpack.c.h.b16 %v6539
    %v6614 = vunpack.c.l.b16 %v6540
    %v6615 = vunpack.c.h.b16 %v6540
    %v6616 = vunpack.c.l.b16 %v6541
    %v6617 = vunpack.c.h.b16 %v6541
    %v6618 = vunpack.c.l.b16 %v6542
    %v6619 = vunpack.c.h.b16 %v6542
    %v6620 = vunpack.c.l.b16 %v6543
    %v6621 = vunpack.c.h.b16 %v6543
    %v6622 = vunpack.c.l.b16 %v6544
    %v6623 = vunpack.c.h.b16 %v6544
    %v6624 = vunpack.c.l.b16 %v6545
    %v6625 = vunpack.c.h.b16 %v6545
    %v6626 = vunpack.c.l.b16 %v6546
    %v6627 = vunpack.c.h.b16 %v6546
    %v6628 = vunpack.c.l.b16 %v6547
    %v6629 = vunpack.c.h.b16 %v6547
    %v6630 = vunpack.c.l.b16 %v6548
    %v6631 = vunpack.c.h.b16 %v6548
    %v6632 = vunpack.c.l.b16 %v6549
    %v6633 = vunpack.c.h.b16 %v6549
    %v6634 = vunpack.c.l.b16 %v6550
    %v6635 = vunpack.c.h.b16 %v6550
    %v6636 = vunpack.c.l.b16 %v6551
    %v6637 = vunpack.c.h.b16 %v6551
    %v6638 = vunpack.c.l.b16 %v6552
    %v6639 = vunpack.c.h.b16 %v6552
    %v6640 = vunpack.c.l.b16 %v6553
    %v6641 = vunpack.c.h.b16 %v6553
    %v6642 = vunpack.c.l.b16 %v6554
    %v6643 = vunpack.c.h.b16 %v6554
    %v6644 = vunpack.c.l.b16 %v6555
    %v6645 = vunpack.c.h.b16 %v6555
    %v6646 = vunpack.c.l.b16 %v6556
    %v6647 = vunpack.c.h.b16 %v6556
    %v6648 = vunpack.c.l.b16 %v6557
    %v6649 = vunpack.c.h.b16 %v6557
    %v6650 = vunpack.c.l.b16 %v6558
    %v6651 = vunpack.c.h.b16 %v6558
    %v6652 = vunpack.c.l.b16 %v6559
    %v6653 = vunpack.c.h.b16 %v6559
    %v6654 = vunpack.c.l.b16 %v6560
    %v6655 = vunpack.c.h.b16 %v6560
    %v6656 = vunpack.c.l.b16 %v6561
    %v6657 = vunpack.c.h.b16 %v6561
    %v6658 = vpack.c.b16 %v6598, %v6594
    %v6659 = vpack.c.b16 %v6599, %v6595
    %v6660 = vpack.c.b16 %v6600, %v6596
    %v6661 = vpack.c.b16 %v6601, %v6597
    %v6662 = vpack.c.b16 %v6606, %v6602
    %v6663 = vpack.c.b16 %v6607, %v6603
    %v6664 = vpack.c.b16 %v6608, %v6604
    %v6665 = vpack.c.b16 %v6609, %v6605
    %v6666 = vpack.c.b16 %v6614, %v6610
    %v6667 = vpack.c.b16 %v6615, %v6611
    %v6668 = vpack.c.b16 %v6616, %v6612
    %v6669 = vpack.c.b16 %v6617, %v6613
    %v6670 = vpack.c.b16 %v6622, %v6618
    %v6671 = vpack.c.b16 %v6623, %v6619
    %v6672 = vpack.c.b16 %v6624, %v6620
    %v6673 = vpack.c.b16 %v6625, %v6621
    %v6674 = vpack.c.b16 %v6630, %v6626
    %v6675 = vpack.c.b16 %v6631, %v6627
    %v6676 = vpack.c.b16 %v6632, %v6628
    %v6677 = vpack.c.b16 %v6633, %v6629
    %v6678 = vpack.c.b16 %v6638, %v6634
    %v6679 = vpack.c.b16 %v6639, %v6635
    %v6680 = vpack.c.b16 %v6640, %v6636
    %v6681 = vpack.c.b16 %v6641, %v6637
    %v6682 = vpack.c.b16 %v6646, %v6642
    %v6683 = vpack.c.b16 %v6647, %v6643
    %v6684 = vpack.c.b16 %v6648, %v6644
    %v6685 = vpack.c.b16 %v6649, %v6645
    %v6686 = vpack.c.b16 %v6654, %v6650
    %v6687 = vpack.c.b16 %v6655, %v6651
    %v6688 = vpack.c.b16 %v6656, %v6652
    %v6689 = vpack.c.b16 %v6657, %v6653
    %6722 = vmatprep.subr.bf16.mxu0 %v6659
    %6723 = vmatpush1.bf16.msra.mxu0 %v6658
    %6724 = vmatprep.subr.bf16.mxu0 %v6663
    %6725 = vmatpush1.bf16.msra.mxu0 %v6662
    %6726 = vmatprep.subr.bf16.mxu0 %v6667
    %6727 = vmatpush1.bf16.msra.mxu0 %v6666
    %6728 = vmatprep.subr.bf16.mxu0 %v6671
    %6729 = vmatpush1.bf16.msra.mxu0 %v6670
    %6730 = vmatprep.subr.bf16.mxu0 %v6675
    %6731 = vmatpush1.bf16.msra.mxu0 %v6674
    %6732 = vmatprep.subr.bf16.mxu0 %v6679
    %6733 = vmatpush1.bf16.msra.mxu0 %v6678
    %6734 = vmatprep.subr.bf16.mxu0 %v6683
    %6735 = vmatpush1.bf16.msra.mxu0 %v6682
    %6736 = vmatprep.subr.bf16.mxu0 %v6687
    %6737 = vmatpush1.bf16.msra.mxu0 %v6686
    %6738 = vmatprep.subr.bf16.mxu0 0
    %6739 = vmatpush1.bf16.msra.mxu0 0
    %6740 = vmatprep.subr.bf16.mxu0 0
    %6741 = vmatpush1.bf16.msra.mxu0 0
    %6742 = vmatprep.subr.bf16.mxu0 0
    %6743 = vmatpush1.bf16.msra.mxu0 0
    %6744 = vmatprep.subr.bf16.mxu0 0
    %6745 = vmatpush1.bf16.msra.mxu0 0
    %6746 = vmatprep.subr.bf16.mxu0 0
    %6747 = vmatpush1.bf16.msra.mxu0 0
    %6748 = vmatprep.subr.bf16.mxu0 0
    %6749 = vmatpush1.bf16.msra.mxu0 0
    %6750 = vmatprep.subr.bf16.mxu0 0
    %6751 = vmatpush1.bf16.msra.mxu0 0
    %6752 = vmatprep.subr.bf16.mxu0 0
    %6753 = vmatpush1.bf16.msra.mxu0 0
    %6754 = vmatprep.mubr.bf16.mxu0 0
    %6755 = vmatmul.mubr.bf16.gmra.mrb[0].mxu0 0
    %v6756 = vpop.f32.mrb[0].mxu0
    %v6757 = vadd.f32 0.0, %v6756
    %v6758 = vpop.f32.mrb[0].mxu0
    %v6759 = vadd.f32 0.0, %v6758
    %v6760 = vpop.f32.mrb[0].mxu0
    %v6761 = vpop.f32.mrb[0].mxu0
    %6762 = vdwg.mxu0
    %6763 = vmatprep.subr.bf16.mxu0 %v6661
    %6764 = vmatpush1.bf16.msra.mxu0 %v6660
    %6765 = vmatprep.subr.bf16.mxu0 %v6665
    %6766 = vmatpush1.bf16.msra.mxu0 %v6664
    %6767 = vmatprep.subr.bf16.mxu0 %v6669
    %6768 = vmatpush1.bf16.msra.mxu0 %v6668
    %6769 = vmatprep.subr.bf16.mxu0 %v6673
    %6770 = vmatpush1.bf16.msra.mxu0 %v6672
    %6771 = vmatprep.subr.bf16.mxu0 %v6677
    %6772 = vmatpush1.bf16.msra.mxu0 %v6676
    %6773 = vmatprep.subr.bf16.mxu0 %v6681
    %6774 = vmatpush1.bf16.msra.mxu0 %v6680
    %6775 = vmatprep.subr.bf16.mxu0 %v6685
    %6776 = vmatpush1.bf16.msra.mxu0 %v6684
    %6777 = vmatprep.subr.bf16.mxu0 %v6689
    %6778 = vmatpush1.bf16.msra.mxu0 %v6688
    %6779 = vmatprep.subr.bf16.mxu0 0
    %6780 = vmatpush1.bf16.msra.mxu0 0
    %6781 = vmatprep.subr.bf16.mxu0 0
    %6782 = vmatpush1.bf16.msra.mxu0 0
    %6783 = vmatprep.subr.bf16.mxu0 0
    %6784 = vmatpush1.bf16.msra.mxu0 0
    %6785 = vmatprep.subr.bf16.mxu0 0
    %6786 = vmatpush1.bf16.msra.mxu0 0
    %6787 = vmatprep.subr.bf16.mxu0 0
    %6788 = vmatpush1.bf16.msra.mxu0 0
    %6789 = vmatprep.subr.bf16.mxu0 0
    %6790 = vmatpush1.bf16.msra.mxu0 0
    %6791 = vmatprep.subr.bf16.mxu0 0
    %6792 = vmatpush1.bf16.msra.mxu0 0
    %6793 = vmatprep.subr.bf16.mxu0 0
    %6794 = vmatpush1.bf16.msra.mxu0 0
    %6795 = vmatprep.mubr.bf16.mxu0 0
    %6796 = vmatmul.mubr.bf16.gmra.mrb[0].mxu0 0
    %v6797 = vpop.f32.mrb[0].mxu0
    %v6798 = vadd.f32 0.0, %v6797
    %v6799 = vpop.f32.mrb[0].mxu0
    %v6800 = vadd.f32 0.0, %v6799
    %v6801 = vpop.f32.mrb[0].mxu0
    %v6802 = vpop.f32.mrb[0].mxu0
    %6803 = vdwg.mxu0
    %v6804 = vadd.f32 %v6498, %v6757
    %v6805 = vadd.f32 %v6499, %v6759
    %v6806 = vadd.f32 %v6500, %v6798
    %v6807 = vadd.f32 %v6501, %v6800
    %v6808 = vxor.u32 %v6804, 2147483648
    %v6809 = vmul.f32 %v6808, 1.442695
    %v6810 = vpow.pop %v6809
    %v6811 = vadd.f32 %v6810, 1.0
    %v6812 = vrcp.pop %v6811
    %v6813 = vmul.f32 1.0, %v6812
    %v6814 = vxor.u32 %v6805, 2147483648
    %v6815 = vmul.f32 %v6814, 1.442695
    %v6816 = vpow.pop %v6815
    %v6817 = vadd.f32 %v6816, 1.0
    %v6818 = vrcp.pop %v6817
    %v6819 = vmul.f32 1.0, %v6818
    %v6820 = vtanh.pop %v6806
    %v6821 = vxor.u32 %v6807, 2147483648
    %v6822 = vmul.f32 %v6821, 1.442695
    %v6823 = vpow.pop %v6822
    %v6824 = vadd.f32 %v6823, 1.0
    %v6825 = vrcp.pop %v6824
    %v6826 = vmul.f32 1.0, %v6825
    %v6827 = vmul.f32 %v6819, 0.0
    %v6828 = vmul.f32 %v6813, %v6820
    %v6829 = vadd.f32 %v6827, %v6828
    %v6830 = vtanh.pop %v6829
    %v6831 = vmul.f32 %v6826, %v6830
    %6832 = vst [vmem:[#allocation2] sm:$0xff] %v6831
    %v6833 = vpack.c.bf16 %v6831, %v6831
    %6834 = vmatprep.subr.bf16.mxu0 %v6659
    %6835 = vmatpush1.bf16.msra.mxu0 %v6658
    %6836 = vmatprep.subr.bf16.mxu0 %v6663
    %6837 = vmatpush1.bf16.msra.mxu0 %v6662
    %6838 = vmatprep.subr.bf16.mxu0 %v6667
    %6839 = vmatpush1.bf16.msra.mxu0 %v6666
    %6840 = vmatprep.subr.bf16.mxu0 %v6671
    %6841 = vmatpush1.bf16.msra.mxu0 %v6670
    %6842 = vmatprep.subr.bf16.mxu0 %v6675
    %6843 = vmatpush1.bf16.msra.mxu0 %v6674
    %6844 = vmatprep.subr.bf16.mxu0 %v6679
    %6845 = vmatpush1.bf16.msra.mxu0 %v6678
    %6846 = vmatprep.subr.bf16.mxu0 %v6683
    %6847 = vmatpush1.bf16.msra.mxu0 %v6682
    %6848 = vmatprep.subr.bf16.mxu0 %v6687
    %6849 = vmatpush1.bf16.msra.mxu0 %v6686
    %6850 = vmatprep.subr.bf16.mxu0 0
    %6851 = vmatpush1.bf16.msra.mxu0 0
    %6852 = vmatprep.subr.bf16.mxu0 0
    %6853 = vmatpush1.bf16.msra.mxu0 0
    %6854 = vmatprep.subr.bf16.mxu0 0
    %6855 = vmatpush1.bf16.msra.mxu0 0
    %6856 = vmatprep.subr.bf16.mxu0 0
    %6857 = vmatpush1.bf16.msra.mxu0 0
    %6858 = vmatprep.subr.bf16.mxu0 0
    %6859 = vmatpush1.bf16.msra.mxu0 0
    %6860 = vmatprep.subr.bf16.mxu0 0
    %6861 = vmatpush1.bf16.msra.mxu0 0
    %6862 = vmatprep.subr.bf16.mxu0 0
    %6863 = vmatpush1.bf16.msra.mxu0 0
    %6864 = vmatprep.subr.bf16.mxu0 0
    %6865 = vmatpush1.bf16.msra.mxu0 0
    %6866 = vmatprep.mubr.bf16.mxu0 0
    %6867 = vmatmul.mubr.bf16.gmra.mrb[0].mxu0 %v6833
    %v6868 = vpop.f32.mrb[0].mxu0
    %v6869 = vadd.f32 0.0, %v6868
    %v6870 = vpop.f32.mrb[0].mxu0
    %v6871 = vadd.f32 0.0, %v6870
    %v6872 = vpop.f32.mrb[0].mxu0
    %v6873 = vpop.f32.mrb[0].mxu0
    %6874 = vdwg.mxu0
    %6875 = vmatprep.subr.bf16.mxu0 %v6661
    %6876 = vmatpush1.bf16.msra.mxu0 %v6660
    %6877 = vmatprep.subr.bf16.mxu0 %v6665
    %6878 = vmatpush1.bf16.msra.mxu0 %v6664
    %6879 = vmatprep.subr.bf16.mxu0 %v6669
    %6880 = vmatpush1.bf16.msra.mxu0 %v6668
    %6881 = vmatprep.subr.bf16.mxu0 %v6673
    %6882 = vmatpush1.bf16.msra.mxu0 %v6672
    %6883 = vmatprep.subr.bf16.mxu0 %v6677
    %6884 = vmatpush1.bf16.msra.mxu0 %v6676
    %6885 = vmatprep.subr.bf16.mxu0 %v6681
    %6886 = vmatpush1.bf16.msra.mxu0 %v6680
    %6887 = vmatprep.subr.bf16.mxu0 %v6685
    %6888 = vmatpush1.bf16.msra.mxu0 %v6684
    %6889 = vmatprep.subr.bf16.mxu0 %v6689
    %6890 = vmatpush1.bf16.msra.mxu0 %v6688
    %6891 = vmatprep.subr.bf16.mxu0 0
    %6892 = vmatpush1.bf16.msra.mxu0 0
    %6893 = vmatprep.subr.bf16.mxu0 0
    %6894 = vmatpush1.bf16.msra.mxu0 0
    %6895 = vmatprep.subr.bf16.mxu0 0
    %6896 = vmatpush1.bf16.msra.mxu0 0
    %6897 = vmatprep.subr.bf16.mxu0 0
    %6898 = vmatpush1.bf16.msra.mxu0 0
    %6899 = vmatprep.subr.bf16.mxu0 0
    %6900 = vmatpush1.bf16.msra.mxu0 0
    %6901 = vmatprep.subr.bf16.mxu0 0
    %6902 = vmatpush1.bf16.msra.mxu0 0
    %6903 = vmatprep.subr.bf16.mxu0 0
    %6904 = vmatpush1.bf16.msra.mxu0 0
    %6905 = vmatprep.subr.bf16.mxu0 0
    %6906 = vmatpush1.bf16.msra.mxu0 0
    %6907 = vmatprep.mubr.bf16.mxu0 0
    %6908 = vmatmul.mubr.bf16.gmra.mrb[0].mxu0 %v6833
    %v6909 = vpop.f32.mrb[0].mxu0
    %v6910 = vadd.f32 0.0, %v6909
    %v6911 = vpop.f32.mrb[0].mxu0
    %v6912 = vadd.f32 0.0, %v6911
    %v6913 = vpop.f32.mrb[0].mxu0
    %v6914 = vpop.f32.mrb[0].mxu0
    %6915 = vdwg.mxu0
    %v6916 = vadd.f32 %v6502, %v6869
    %v6917 = vadd.f32 %v6503, %v6871
    %v6918 = vadd.f32 %v6504, %v6910
    %v6919 = vadd.f32 %v6505, %v6912
    %v6920 = vxor.u32 %v6916, 2147483648
    %v6921 = vmul.f32 %v6920, 1.442695
    %v6922 = vpow.pop %v6921
    %v6923 = vadd.f32 %v6922, 1.0
    %v6924 = vrcp.pop %v6923
    %v6925 = vmul.f32 1.0, %v6924
    %v6926 = vxor.u32 %v6917, 2147483648
    %v6927 = vmul.f32 %v6926, 1.442695
    %v6928 = vpow.pop %v6927
    %v6929 = vadd.f32 %v6928, 1.0
    %v6930 = vrcp.pop %v6929
    %v6931 = vmul.f32 1.0, %v6930
    %v6932 = vtanh.pop %v6918
    %v6933 = vxor.u32 %v6919, 2147483648
    %v6934 = vmul.f32 %v6933, 1.442695
    %v6935 = vpow.pop %v6934
    %v6936 = vadd.f32 %v6935, 1.0
    %v6937 = vrcp.pop %v6936
    %v6938 = vmul.f32 1.0, %v6937
    %v6939 = vmul.f32 %v6931, %v6829
    %v6940 = vmul.f32 %v6925, %v6932
    %v6941 = vadd.f32 %v6939, %v6940
    %v6942 = vtanh.pop %v6941
    %v6943 = vmul.f32 %v6938, %v6942
    %6944 = vst [vmem:[#allocation2 + $0x8] sm:$0xff] %v6943
    %v6945 = vpack.c.bf16 %v6943, %v6943
    %6946 = vmatprep.subr.bf16.mxu0 %v6659
    %6947 = vmatpush1.bf16.msra.mxu0 %v6658
    %6948 = vmatprep.subr.bf16.mxu0 %v6663
    %6949 = vmatpush1.bf16.msra.mxu0 %v6662
    %6950 = vmatprep.subr.bf16.mxu0 %v6667
    %6951 = vmatpush1.bf16.msra.mxu0 %v6666
    %6952 = vmatprep.subr.bf16.mxu0 %v6671
    %6953 = vmatpush1.bf16.msra.mxu0 %v6670
    %6954 = vmatprep.subr.bf16.mxu0 %v6675
    %6955 = vmatpush1.bf16.msra.mxu0 %v6674
    %6956 = vmatprep.subr.bf16.mxu0 %v6679
    %6957 = vmatpush1.bf16.msra.mxu0 %v6678
    %6958 = vmatprep.subr.bf16.mxu0 %v6683
    %6959 = vmatpush1.bf16.msra.mxu0 %v6682
    %6960 = vmatprep.subr.bf16.mxu0 %v6687
    %6961 = vmatpush1.bf16.msra.mxu0 %v6686
    %6962 = vmatprep.subr.bf16.mxu0 0
    %6963 = vmatpush1.bf16.msra.mxu0 0
    %6964 = vmatprep.subr.bf16.mxu0 0
    %6965 = vmatpush1.bf16.msra.mxu0 0
    %6966 = vmatprep.subr.bf16.mxu0 0
    %6967 = vmatpush1.bf16.msra.mxu0 0
    %6968 = vmatprep.subr.bf16.mxu0 0
    %6969 = vmatpush1.bf16.msra.mxu0 0
    %6970 = vmatprep.subr.bf16.mxu0 0
    %6971 = vmatpush1.bf16.msra.mxu0 0
    %6972 = vmatprep.subr.bf16.mxu0 0
    %6973 = vmatpush1.bf16.msra.mxu0 0
    %6974 = vmatprep.subr.bf16.mxu0 0
    %6975 = vmatpush1.bf16.msra.mxu0 0
    %6976 = vmatprep.subr.bf16.mxu0 0
    %6977 = vmatpush1.bf16.msra.mxu0 0
    %6978 = vmatprep.mubr.bf16.mxu0 0
    %6979 = vmatmul.mubr.bf16.gmra.mrb[0].mxu0 %v6945
    %v6980 = vpop.f32.mrb[0].mxu0
    %v6981 = vadd.f32 0.0, %v6980
    %v6982 = vpop.f32.mrb[0].mxu0
    %v6983 = vadd.f32 0.0, %v6982
    %v6984 = vpop.f32.mrb[0].mxu0
    %v6985 = vpop.f32.mrb[0].mxu0
    %6986 = vdwg.mxu0
    %6987 = vmatprep.subr.bf16.mxu0 %v6661
    %6988 = vmatpush1.bf16.msra.mxu0 %v6660
    %6989 = vmatprep.subr.bf16.mxu0 %v6665
    %6990 = vmatpush1.bf16.msra.mxu0 %v6664
    %6991 = vmatprep.subr.bf16.mxu0 %v6669
    %6992 = vmatpush1.bf16.msra.mxu0 %v6668
    %6993 = vmatprep.subr.bf16.mxu0 %v6673
    %6994 = vmatpush1.bf16.msra.mxu0 %v6672
    %6995 = vmatprep.subr.bf16.mxu0 %v6677
    %6996 = vmatpush1.bf16.msra.mxu0 %v6676
    %6997 = vmatprep.subr.bf16.mxu0 %v6681
    %6998 = vmatpush1.bf16.msra.mxu0 %v6680
    %6999 = vmatprep.subr.bf16.mxu0 %v6685
    %7000 = vmatpush1.bf16.msra.mxu0 %v6684
    %7001 = vmatprep.subr.bf16.mxu0 %v6689
    %7002 = vmatpush1.bf16.msra.mxu0 %v6688
    %7003 = vmatprep.subr.bf16.mxu0 0
    %7004 = vmatpush1.bf16.msra.mxu0 0
    %7005 = vmatprep.subr.bf16.mxu0 0
    %7006 = vmatpush1.bf16.msra.mxu0 0
    %7007 = vmatprep.subr.bf16.mxu0 0
    %7008 = vmatpush1.bf16.msra.mxu0 0
    %7009 = vmatprep.subr.bf16.mxu0 0
    %7010 = vmatpush1.bf16.msra.mxu0 0
    %7011 = vmatprep.subr.bf16.mxu0 0
    %7012 = vmatpush1.bf16.msra.mxu0 0
    %7013 = vmatprep.subr.bf16.mxu0 0
    %7014 = vmatpush1.bf16.msra.mxu0 0
    %7015 = vmatprep.subr.bf16.mxu0 0
    %7016 = vmatpush1.bf16.msra.mxu0 0
    %7017 = vmatprep.subr.bf16.mxu0 0
    %7018 = vmatpush1.bf16.msra.mxu0 0
    %7019 = vmatprep.mubr.bf16.mxu0 0
    %7020 = vmatmul.mubr.bf16.gmra.mrb[0].mxu0 %v6945
    %v7021 = vpop.f32.mrb[0].mxu0
    %v7022 = vadd.f32 0.0, %v7021
    %v7023 = vpop.f32.mrb[0].mxu0
    %v7024 = vadd.f32 0.0, %v7023
    %v7025 = vpop.f32.mrb[0].mxu0
    %v7026 = vpop.f32.mrb[0].mxu0
    %7027 = vdwg.mxu0
    %v7028 = vadd.f32 %v6506, %v6981
    %v7029 = vadd.f32 %v6507, %v6983
    %v7030 = vadd.f32 %v6508, %v7022
    %v7031 = vadd.f32 %v6509, %v7024
    %v7032 = vxor.u32 %v7028, 2147483648
    %v7033 = vmul.f32 %v7032, 1.442695
    %v7034 = vpow.pop %v7033
    %v7035 = vadd.f32 %v7034, 1.0
    %v7036 = vrcp.pop %v7035
    %v7037 = vmul.f32 1.0, %v7036
    %v7038 = vxor.u32 %v7029, 2147483648
    %v7039 = vmul.f32 %v7038, 1.442695
    %v7040 = vpow.pop %v7039
    %v7041 = vadd.f32 %v7040, 1.0
    %v7042 = vrcp.pop %v7041
    %v7043 = vmul.f32 1.0, %v7042
    %v7044 = vtanh.pop %v7030
    %v7045 = vxor.u32 %v7031, 2147483648
    %v7046 = vmul.f32 %v7045, 1.442695
    %v7047 = vpow.pop %v7046
    %v7048 = vadd.f32 %v7047, 1.0
    %v7049 = vrcp.pop %v7048
    %v7050 = vmul.f32 1.0, %v7049
    %v7051 = vmul.f32 %v7043, %v6941
    %v7052 = vmul.f32 %v7037, %v7044
    %v7053 = vadd.f32 %v7051, %v7052
    %v7054 = vtanh.pop %v7053
    %v7055 = vmul.f32 %v7050, %v7054
    %7056 = vst [vmem:[#allocation2 + $0x10] sm:$0xff] %v7055
    %v7057 = vpack.c.bf16 %v7055, %v7055
    %7058 = vmatprep.subr.bf16.mxu0 %v6659
    %7059 = vmatpush1.bf16.msra.mxu0 %v6658
    %7060 = vmatprep.subr.bf16.mxu0 %v6663
    %7061 = vmatpush1.bf16.msra.mxu0 %v6662
    %7062 = vmatprep.subr.bf16.mxu0 %v6667
    %7063 = vmatpush1.bf16.msra.mxu0 %v6666
    %7064 = vmatprep.subr.bf16.mxu0 %v6671
    %7065 = vmatpush1.bf16.msra.mxu0 %v6670
    %7066 = vmatprep.subr.bf16.mxu0 %v6675
    %7067 = vmatpush1.bf16.msra.mxu0 %v6674
    %7068 = vmatprep.subr.bf16.mxu0 %v6679
    %7069 = vmatpush1.bf16.msra.mxu0 %v6678
    %7070 = vmatprep.subr.bf16.mxu0 %v6683
    %7071 = vmatpush1.bf16.msra.mxu0 %v6682
    %7072 = vmatprep.subr.bf16.mxu0 %v6687
    %7073 = vmatpush1.bf16.msra.mxu0 %v6686
    %7074 = vmatprep.subr.bf16.mxu0 0
    %7075 = vmatpush1.bf16.msra.mxu0 0
    %7076 = vmatprep.subr.bf16.mxu0 0
    %7077 = vmatpush1.bf16.msra.mxu0 0
    %7078 = vmatprep.subr.bf16.mxu0 0
    %7079 = vmatpush1.bf16.msra.mxu0 0
    %7080 = vmatprep.subr.bf16.mxu0 0
    %7081 = vmatpush1.bf16.msra.mxu0 0
    %7082 = vmatprep.subr.bf16.mxu0 0
    %7083 = vmatpush1.bf16.msra.mxu0 0
    %7084 = vmatprep.subr.bf16.mxu0 0
    %7085 = vmatpush1.bf16.msra.mxu0 0
    %7086 = vmatprep.subr.bf16.mxu0 0
    %7087 = vmatpush1.bf16.msra.mxu0 0
    %7088 = vmatprep.subr.bf16.mxu0 0
    %7089 = vmatpush1.bf16.msra.mxu0 0
    %7090 = vmatprep.mubr.bf16.mxu0 0
    %7091 = vmatmul.mubr.bf16.gmra.mrb[0].mxu0 %v7057
    %v7092 = vpop.f32.mrb[0].mxu0
    %v7093 = vadd.f32 0.0, %v7092
    %v7094 = vpop.f32.mrb[0].mxu0
    %v7095 = vadd.f32 0.0, %v7094
    %v7096 = vpop.f32.mrb[0].mxu0
    %v7097 = vpop.f32.mrb[0].mxu0
    %7098 = vdwg.mxu0
    %7099 = vmatprep.subr.bf16.mxu0 %v6661
    %7100 = vmatpush1.bf16.msra.mxu0 %v6660
    %7101 = vmatprep.subr.bf16.mxu0 %v6665
    %7102 = vmatpush1.bf16.msra.mxu0 %v6664
    %7103 = vmatprep.subr.bf16.mxu0 %v6669
    %7104 = vmatpush1.bf16.msra.mxu0 %v6668
    %7105 = vmatprep.subr.bf16.mxu0 %v6673
    %7106 = vmatpush1.bf16.msra.mxu0 %v6672
    %7107 = vmatprep.subr.bf16.mxu0 %v6677
    %7108 = vmatpush1.bf16.msra.mxu0 %v6676
    %7109 = vmatprep.subr.bf16.mxu0 %v6681
    %7110 = vmatpush1.bf16.msra.mxu0 %v6680
    %7111 = vmatprep.subr.bf16.mxu0 %v6685
    %7112 = vmatpush1.bf16.msra.mxu0 %v6684
    %7113 = vmatprep.subr.bf16.mxu0 %v6689
    %7114 = vmatpush1.bf16.msra.mxu0 %v6688
    %7115 = vmatprep.subr.bf16.mxu0 0
    %7116 = vmatpush1.bf16.msra.mxu0 0
    %7117 = vmatprep.subr.bf16.mxu0 0
    %7118 = vmatpush1.bf16.msra.mxu0 0
    %7119 = vmatprep.subr.bf16.mxu0 0
    %7120 = vmatpush1.bf16.msra.mxu0 0
    %7121 = vmatprep.subr.bf16.mxu0 0
    %7122 = vmatpush1.bf16.msra.mxu0 0
    %7123 = vmatprep.subr.bf16.mxu0 0
    %7124 = vmatpush1.bf16.msra.mxu0 0
    %7125 = vmatprep.subr.bf16.mxu0 0
    %7126 = vmatpush1.bf16.msra.mxu0 0
    %7127 = vmatprep.subr.bf16.mxu0 0
    %7128 = vmatpush1.bf16.msra.mxu0 0
    %7129 = vmatprep.subr.bf16.mxu0 0
    %7130 = vmatpush1.bf16.msra.mxu0 0
    %7131 = vmatprep.mubr.bf16.mxu0 0
    %7132 = vmatmul.mubr.bf16.gmra.mrb[0].mxu0 %v7057
    %v7133 = vpop.f32.mrb[0].mxu0
    %v7134 = vadd.f32 0.0, %v7133
    %v7135 = vpop.f32.mrb[0].mxu0
    %v7136 = vadd.f32 0.0, %v7135
    %v7137 = vpop.f32.mrb[0].mxu0
    %v7138 = vpop.f32.mrb[0].mxu0
    %7139 = vdwg.mxu0
    %v7140 = vadd.f32 %v6510, %v7093
    %v7141 = vadd.f32 %v6511, %v7095
    %v7142 = vadd.f32 %v6512, %v7134
    %v7143 = vadd.f32 %v6513, %v7136
    %v7144 = vxor.u32 %v7140, 2147483648
    %v7145 = vmul.f32 %v7144, 1.442695
    %v7146 = vpow.pop %v7145
    %v7147 = vadd.f32 %v7146, 1.0
    %v7148 = vrcp.pop %v7147
    %v7149 = vmul.f32 1.0, %v7148
    %v7150 = vxor.u32 %v7141, 2147483648
    %v7151 = vmul.f32 %v7150, 1.442695
    %v7152 = vpow.pop %v7151
    %v7153 = vadd.f32 %v7152, 1.0
    %v7154 = vrcp.pop %v7153
    %v7155 = vmul.f32 1.0, %v7154
    %v7156 = vtanh.pop %v7142
    %v7157 = vxor.u32 %v7143, 2147483648
    %v7158 = vmul.f32 %v7157, 1.442695
    %v7159 = vpow.pop %v7158
    %v7160 = vadd.f32 %v7159, 1.0
    %v7161 = vrcp.pop %v7160
    %v7162 = vmul.f32 1.0, %v7161
    %v7163 = vmul.f32 %v7155, %v7053
    %v7164 = vmul.f32 %v7149, %v7156
    %v7165 = vadd.f32 %v7163, %v7164
    %v7166 = vtanh.pop %v7165
    %v7167 = vmul.f32 %v7162, %v7166
    %7168 = vst [vmem:[#allocation2 + $0x18] sm:$0xff] %v7167
    %v7169 = vpack.c.bf16 %v7167, %v7167
    %7170 = vmatprep.subr.bf16.mxu0 %v6659
    %7171 = vmatpush1.bf16.msra.mxu0 %v6658
    %7172 = vmatprep.subr.bf16.mxu0 %v6663
    %7173 = vmatpush1.bf16.msra.mxu0 %v6662
    %7174 = vmatprep.subr.bf16.mxu0 %v6667
    %7175 = vmatpush1.bf16.msra.mxu0 %v6666
    %7176 = vmatprep.subr.bf16.mxu0 %v6671
    %7177 = vmatpush1.bf16.msra.mxu0 %v6670
    %7178 = vmatprep.subr.bf16.mxu0 %v6675
    %7179 = vmatpush1.bf16.msra.mxu0 %v6674
    %7180 = vmatprep.subr.bf16.mxu0 %v6679
    %7181 = vmatpush1.bf16.msra.mxu0 %v6678
    %7182 = vmatprep.subr.bf16.mxu0 %v6683
    %7183 = vmatpush1.bf16.msra.mxu0 %v6682
    %7184 = vmatprep.subr.bf16.mxu0 %v6687
    %7185 = vmatpush1.bf16.msra.mxu0 %v6686
    %7186 = vmatprep.subr.bf16.mxu0 0
    %7187 = vmatpush1.bf16.msra.mxu0 0
    %7188 = vmatprep.subr.bf16.mxu0 0
    %7189 = vmatpush1.bf16.msra.mxu0 0
    %7190 = vmatprep.subr.bf16.mxu0 0
    %7191 = vmatpush1.bf16.msra.mxu0 0
    %7192 = vmatprep.subr.bf16.mxu0 0
    %7193 = vmatpush1.bf16.msra.mxu0 0
    %7194 = vmatprep.subr.bf16.mxu0 0
    %7195 = vmatpush1.bf16.msra.mxu0 0
    %7196 = vmatprep.subr.bf16.mxu0 0
    %7197 = vmatpush1.bf16.msra.mxu0 0
    %7198 = vmatprep.subr.bf16.mxu0 0
    %7199 = vmatpush1.bf16.msra.mxu0 0
    %7200 = vmatprep.subr.bf16.mxu0 0
    %7201 = vmatpush1.bf16.msra.mxu0 0
    %7202 = vmatprep.mubr.bf16.mxu0 0
    %7203 = vmatmul.mubr.bf16.gmra.mrb[0].mxu0 %v7169
    %v7204 = vpop.f32.mrb[0].mxu0
    %v7205 = vadd.f32 0.0, %v7204
    %v7206 = vpop.f32.mrb[0].mxu0
    %v7207 = vadd.f32 0.0, %v7206
    %v7208 = vpop.f32.mrb[0].mxu0
    %v7209 = vpop.f32.mrb[0].mxu0
    %7210 = vdwg.mxu0
    %7211 = vmatprep.subr.bf16.mxu0 %v6661
    %7212 = vmatpush1.bf16.msra.mxu0 %v6660
    %7213 = vmatprep.subr.bf16.mxu0 %v6665
    %7214 = vmatpush1.bf16.msra.mxu0 %v6664
    %7215 = vmatprep.subr.bf16.mxu0 %v6669
    %7216 = vmatpush1.bf16.msra.mxu0 %v6668
    %7217 = vmatprep.subr.bf16.mxu0 %v6673
    %7218 = vmatpush1.bf16.msra.mxu0 %v6672
    %7219 = vmatprep.subr.bf16.mxu0 %v6677
    %7220 = vmatpush1.bf16.msra.mxu0 %v6676
    %7221 = vmatprep.subr.bf16.mxu0 %v6681
    %7222 = vmatpush1.bf16.msra.mxu0 %v6680
    %7223 = vmatprep.subr.bf16.mxu0 %v6685
    %7224 = vmatpush1.bf16.msra.mxu0 %v6684
    %7225 = vmatprep.subr.bf16.mxu0 %v6689
    %7226 = vmatpush1.bf16.msra.mxu0 %v6688
    %7227 = vmatprep.subr.bf16.mxu0 0
    %7228 = vmatpush1.bf16.msra.mxu0 0
    %7229 = vmatprep.subr.bf16.mxu0 0
    %7230 = vmatpush1.bf16.msra.mxu0 0
    %7231 = vmatprep.subr.bf16.mxu0 0
    %7232 = vmatpush1.bf16.msra.mxu0 0
    %7233 = vmatprep.subr.bf16.mxu0 0
    %7234 = vmatpush1.bf16.msra.mxu0 0
    %7235 = vmatprep.subr.bf16.mxu0 0
    %7236 = vmatpush1.bf16.msra.mxu0 0
    %7237 = vmatprep.subr.bf16.mxu0 0
    %7238 = vmatpush1.bf16.msra.mxu0 0
    %7239 = vmatprep.subr.bf16.mxu0 0
    %7240 = vmatpush1.bf16.msra.mxu0 0
    %7241 = vmatprep.subr.bf16.mxu0 0
    %7242 = vmatpush1.bf16.msra.mxu0 0
    %7243 = vmatprep.mubr.bf16.mxu0 0
    %7244 = vmatmul.mubr.bf16.gmra.mrb[0].mxu0 %v7169
    %v7245 = vpop.f32.mrb[0].mxu0
    %v7246 = vadd.f32 0.0, %v7245
    %v7247 = vpop.f32.mrb[0].mxu0
    %v7248 = vadd.f32 0.0, %v7247
    %v7249 = vpop.f32.mrb[0].mxu0
    %v7250 = vpop.f32.mrb[0].mxu0
    %7251 = vdwg.mxu0
    %v7252 = vadd.f32 %v6514, %v7205
    %v7253 = vadd.f32 %v6515, %v7207
    %v7254 = vadd.f32 %v6516, %v7246
    %v7255 = vadd.f32 %v6517, %v7248
    %v7256 = vxor.u32 %v7252, 2147483648
    %v7257 = vmul.f32 %v7256, 1.442695
    %v7258 = vpow.pop %v7257
    %v7259 = vadd.f32 %v7258, 1.0
    %v7260 = vrcp.pop %v7259
    %v7261 = vmul.f32 1.0, %v7260
    %v7262 = vxor.u32 %v7253, 2147483648
    %v7263 = vmul.f32 %v7262, 1.442695
    %v7264 = vpow.pop %v7263
    %v7265 = vadd.f32 %v7264, 1.0
    %v7266 = vrcp.pop %v7265
    %v7267 = vmul.f32 1.0, %v7266
    %v7268 = vtanh.pop %v7254
    %v7269 = vxor.u32 %v7255, 2147483648
    %v7270 = vmul.f32 %v7269, 1.442695
    %v7271 = vpow.pop %v7270
    %v7272 = vadd.f32 %v7271, 1.0
    %v7273 = vrcp.pop %v7272
    %v7274 = vmul.f32 1.0, %v7273
    %v7275 = vmul.f32 %v7267, %v7165
    %v7276 = vmul.f32 %v7261, %v7268
    %v7277 = vadd.f32 %v7275, %v7276
    %v7278 = vtanh.pop %v7277
    %v7279 = vmul.f32 %v7274, %v7278
    %7280 = vst [vmem:[#allocation2 + $0x20] sm:$0xff] %v7279
    %v7281 = vpack.c.bf16 %v7279, %v7279
    %7282 = vmatprep.subr.bf16.mxu0 %v6659
    %7283 = vmatpush1.bf16.msra.mxu0 %v6658
    %7284 = vmatprep.subr.bf16.mxu0 %v6663
    %7285 = vmatpush1.bf16.msra.mxu0 %v6662
    %7286 = vmatprep.subr.bf16.mxu0 %v6667
    %7287 = vmatpush1.bf16.msra.mxu0 %v6666
    %7288 = vmatprep.subr.bf16.mxu0 %v6671
    %7289 = vmatpush1.bf16.msra.mxu0 %v6670
    %7290 = vmatprep.subr.bf16.mxu0 %v6675
    %7291 = vmatpush1.bf16.msra.mxu0 %v6674
    %7292 = vmatprep.subr.bf16.mxu0 %v6679
    %7293 = vmatpush1.bf16.msra.mxu0 %v6678
    %7294 = vmatprep.subr.bf16.mxu0 %v6683
    %7295 = vmatpush1.bf16.msra.mxu0 %v6682
    %7296 = vmatprep.subr.bf16.mxu0 %v6687
    %7297 = vmatpush1.bf16.msra.mxu0 %v6686
    %7298 = vmatprep.subr.bf16.mxu0 0
    %7299 = vmatpush1.bf16.msra.mxu0 0
    %7300 = vmatprep.subr.bf16.mxu0 0
    %7301 = vmatpush1.bf16.msra.mxu0 0
    %7302 = vmatprep.subr.bf16.mxu0 0
    %7303 = vmatpush1.bf16.msra.mxu0 0
    %7304 = vmatprep.subr.bf16.mxu0 0
    %7305 = vmatpush1.bf16.msra.mxu0 0
    %7306 = vmatprep.subr.bf16.mxu0 0
    %7307 = vmatpush1.bf16.msra.mxu0 0
    %7308 = vmatprep.subr.bf16.mxu0 0
    %7309 = vmatpush1.bf16.msra.mxu0 0
    %7310 = vmatprep.subr.bf16.mxu0 0
    %7311 = vmatpush1.bf16.msra.mxu0 0
    %7312 = vmatprep.subr.bf16.mxu0 0
    %7313 = vmatpush1.bf16.msra.mxu0 0
    %7314 = vmatprep.mubr.bf16.mxu0 0
    %7315 = vmatmul.mubr.bf16.gmra.mrb[0].mxu0 %v7281
    %v7316 = vpop.f32.mrb[0].mxu0
    %v7317 = vadd.f32 0.0, %v7316
    %v7318 = vpop.f32.mrb[0].mxu0
    %v7319 = vadd.f32 0.0, %v7318
    %v7320 = vpop.f32.mrb[0].mxu0
    %v7321 = vpop.f32.mrb[0].mxu0
    %7322 = vdwg.mxu0
    %7323 = vmatprep.subr.bf16.mxu0 %v6661
    %7324 = vmatpush1.bf16.msra.mxu0 %v6660
    %7325 = vmatprep.subr.bf16.mxu0 %v6665
    %7326 = vmatpush1.bf16.msra.mxu0 %v6664
    %7327 = vmatprep.subr.bf16.mxu0 %v6669
    %7328 = vmatpush1.bf16.msra.mxu0 %v6668
    %7329 = vmatprep.subr.bf16.mxu0 %v6673
    %7330 = vmatpush1.bf16.msra.mxu0 %v6672
    %7331 = vmatprep.subr.bf16.mxu0 %v6677
    %7332 = vmatpush1.bf16.msra.mxu0 %v6676
    %7333 = vmatprep.subr.bf16.mxu0 %v6681
    %7334 = vmatpush1.bf16.msra.mxu0 %v6680
    %7335 = vmatprep.subr.bf16.mxu0 %v6685
    %7336 = vmatpush1.bf16.msra.mxu0 %v6684
    %7337 = vmatprep.subr.bf16.mxu0 %v6689
    %7338 = vmatpush1.bf16.msra.mxu0 %v6688
    %7339 = vmatprep.subr.bf16.mxu0 0
    %7340 = vmatpush1.bf16.msra.mxu0 0
    %7341 = vmatprep.subr.bf16.mxu0 0
    %7342 = vmatpush1.bf16.msra.mxu0 0
    %7343 = vmatprep.subr.bf16.mxu0 0
    %7344 = vmatpush1.bf16.msra.mxu0 0
    %7345 = vmatprep.subr.bf16.mxu0 0
    %7346 = vmatpush1.bf16.msra.mxu0 0
    %7347 = vmatprep.subr.bf16.mxu0 0
    %7348 = vmatpush1.bf16.msra.mxu0 0
    %7349 = vmatprep.subr.bf16.mxu0 0
    %7350 = vmatpush1.bf16.msra.mxu0 0
    %7351 = vmatprep.subr.bf16.mxu0 0
    %7352 = vmatpush1.bf16.msra.mxu0 0
    %7353 = vmatprep.subr.bf16.mxu0 0
    %7354 = vmatpush1.bf16.msra.mxu0 0
    %7355 = vmatprep.mubr.bf16.mxu0 0
    %7356 = vmatmul.mubr.bf16.gmra.mrb[0].mxu0 %v7281
    %v7357 = vpop.f32.mrb[0].mxu0
    %v7358 = vadd.f32 0.0, %v7357
    %v7359 = vpop.f32.mrb[0].mxu0
    %v7360 = vadd.f32 0.0, %v7359
    %v7361 = vpop.f32.mrb[0].mxu0
    %v7362 = vpop.f32.mrb[0].mxu0
    %7363 = vdwg.mxu0
    %v7364 = vadd.f32 %v6518, %v7317
    %v7365 = vadd.f32 %v6519, %v7319
    %v7366 = vadd.f32 %v6520, %v7358
    %v7367 = vadd.f32 %v6521, %v7360
    %v7368 = vxor.u32 %v7364, 2147483648
    %v7369 = vmul.f32 %v7368, 1.442695
    %v7370 = vpow.pop %v7369
    %v7371 = vadd.f32 %v7370, 1.0
    %v7372 = vrcp.pop %v7371
    %v7373 = vmul.f32 1.0, %v7372
    %v7374 = vxor.u32 %v7365, 2147483648
    %v7375 = vmul.f32 %v7374, 1.442695
    %v7376 = vpow.pop %v7375
    %v7377 = vadd.f32 %v7376, 1.0
    %v7378 = vrcp.pop %v7377
    %v7379 = vmul.f32 1.0, %v7378
    %v7380 = vtanh.pop %v7366
    %v7381 = vxor.u32 %v7367, 2147483648
    %v7382 = vmul.f32 %v7381, 1.442695
    %v7383 = vpow.pop %v7382
    %v7384 = vadd.f32 %v7383, 1.0
    %v7385 = vrcp.pop %v7384
    %v7386 = vmul.f32 1.0, %v7385
    %v7387 = vmul.f32 %v7379, %v7277
    %v7388 = vmul.f32 %v7373, %v7380
    %v7389 = vadd.f32 %v7387, %v7388
    %v7390 = vtanh.pop %v7389
    %v7391 = vmul.f32 %v7386, %v7390
    %7392 = vst [vmem:[#allocation2 + $0x28] sm:$0xff] %v7391
    %v7393 = vpack.c.bf16 %v7391, %v7391
    %7394 = vmatprep.subr.bf16.mxu0 %v6659
    %7395 = vmatpush1.bf16.msra.mxu0 %v6658
    %7396 = vmatprep.subr.bf16.mxu0 %v6663
    %7397 = vmatpush1.bf16.msra.mxu0 %v6662
    %7398 = vmatprep.subr.bf16.mxu0 %v6667
    %7399 = vmatpush1.bf16.msra.mxu0 %v6666
    %7400 = vmatprep.subr.bf16.mxu0 %v6671
    %7401 = vmatpush1.bf16.msra.mxu0 %v6670
    %7402 = vmatprep.subr.bf16.mxu0 %v6675
    %7403 = vmatpush1.bf16.msra.mxu0 %v6674
    %7404 = vmatprep.subr.bf16.mxu0 %v6679
    %7405 = vmatpush1.bf16.msra.mxu0 %v6678
    %7406 = vmatprep.subr.bf16.mxu0 %v6683
    %7407 = vmatpush1.bf16.msra.mxu0 %v6682
    %7408 = vmatprep.subr.bf16.mxu0 %v6687
    %7409 = vmatpush1.bf16.msra.mxu0 %v6686
    %7410 = vmatprep.subr.bf16.mxu0 0
    %7411 = vmatpush1.bf16.msra.mxu0 0
    %7412 = vmatprep.subr.bf16.mxu0 0
    %7413 = vmatpush1.bf16.msra.mxu0 0
    %7414 = vmatprep.subr.bf16.mxu0 0
    %7415 = vmatpush1.bf16.msra.mxu0 0
    %7416 = vmatprep.subr.bf16.mxu0 0
    %7417 = vmatpush1.bf16.msra.mxu0 0
    %7418 = vmatprep.subr.bf16.mxu0 0
    %7419 = vmatpush1.bf16.msra.mxu0 0
    %7420 = vmatprep.subr.bf16.mxu0 0
    %7421 = vmatpush1.bf16.msra.mxu0 0
    %7422 = vmatprep.subr.bf16.mxu0 0
    %7423 = vmatpush1.bf16.msra.mxu0 0
    %7424 = vmatprep.subr.bf16.mxu0 0
    %7425 = vmatpush1.bf16.msra.mxu0 0
    %7426 = vmatprep.mubr.bf16.mxu0 0
    %7427 = vmatmul.mubr.bf16.gmra.mrb[0].mxu0 %v7393
    %v7428 = vpop.f32.mrb[0].mxu0
    %v7429 = vadd.f32 0.0, %v7428
    %v7430 = vpop.f32.mrb[0].mxu0
    %v7431 = vadd.f32 0.0, %v7430
    %v7432 = vpop.f32.mrb[0].mxu0
    %v7433 = vpop.f32.mrb[0].mxu0
    %7434 = vdwg.mxu0
    %7435 = vmatprep.subr.bf16.mxu0 %v6661
    %7436 = vmatpush1.bf16.msra.mxu0 %v6660
    %7437 = vmatprep.subr.bf16.mxu0 %v6665
    %7438 = vmatpush1.bf16.msra.mxu0 %v6664
    %7439 = vmatprep.subr.bf16.mxu0 %v6669
    %7440 = vmatpush1.bf16.msra.mxu0 %v6668
    %7441 = vmatprep.subr.bf16.mxu0 %v6673
    %7442 = vmatpush1.bf16.msra.mxu0 %v6672
    %7443 = vmatprep.subr.bf16.mxu0 %v6677
    %7444 = vmatpush1.bf16.msra.mxu0 %v6676
    %7445 = vmatprep.subr.bf16.mxu0 %v6681
    %7446 = vmatpush1.bf16.msra.mxu0 %v6680
    %7447 = vmatprep.subr.bf16.mxu0 %v6685
    %7448 = vmatpush1.bf16.msra.mxu0 %v6684
    %7449 = vmatprep.subr.bf16.mxu0 %v6689
    %7450 = vmatpush1.bf16.msra.mxu0 %v6688
    %7451 = vmatprep.subr.bf16.mxu0 0
    %7452 = vmatpush1.bf16.msra.mxu0 0
    %7453 = vmatprep.subr.bf16.mxu0 0
    %7454 = vmatpush1.bf16.msra.mxu0 0
    %7455 = vmatprep.subr.bf16.mxu0 0
    %7456 = vmatpush1.bf16.msra.mxu0 0
    %7457 = vmatprep.subr.bf16.mxu0 0
    %7458 = vmatpush1.bf16.msra.mxu0 0
    %7459 = vmatprep.subr.bf16.mxu0 0
    %7460 = vmatpush1.bf16.msra.mxu0 0
    %7461 = vmatprep.subr.bf16.mxu0 0
    %7462 = vmatpush1.bf16.msra.mxu0 0
    %7463 = vmatprep.subr.bf16.mxu0 0
    %7464 = vmatpush1.bf16.msra.mxu0 0
    %7465 = vmatprep.subr.bf16.mxu0 0
    %7466 = vmatpush1.bf16.msra.mxu0 0
    %7467 = vmatprep.mubr.bf16.mxu0 0
    %7468 = vmatmul.mubr.bf16.gmra.mrb[0].mxu0 %v7393
    %v7469 = vpop.f32.mrb[0].mxu0
    %v7470 = vadd.f32 0.0, %v7469
    %v7471 = vpop.f32.mrb[0].mxu0
    %v7472 = vadd.f32 0.0, %v7471
    %v7473 = vpop.f32.mrb[0].mxu0
    %v7474 = vpop.f32.mrb[0].mxu0
    %7475 = vdwg.mxu0
    %v7476 = vadd.f32 %v6522, %v7429
    %v7477 = vadd.f32 %v6523, %v7431
    %v7478 = vadd.f32 %v6524, %v7470
    %v7479 = vadd.f32 %v6525, %v7472
    %v7480 = vxor.u32 %v7476, 2147483648
    %v7481 = vmul.f32 %v7480, 1.442695
    %v7482 = vpow.pop %v7481
    %v7483 = vadd.f32 %v7482, 1.0
    %v7484 = vrcp.pop %v7483
    %v7485 = vmul.f32 1.0, %v7484
    %v7486 = vxor.u32 %v7477, 2147483648
    %v7487 = vmul.f32 %v7486, 1.442695
    %v7488 = vpow.pop %v7487
    %v7489 = vadd.f32 %v7488, 1.0
    %v7490 = vrcp.pop %v7489
    %v7491 = vmul.f32 1.0, %v7490
    %v7492 = vtanh.pop %v7478
    %v7493 = vxor.u32 %v7479, 2147483648
    %v7494 = vmul.f32 %v7493, 1.442695
    %v7495 = vpow.pop %v7494
    %v7496 = vadd.f32 %v7495, 1.0
    %v7497 = vrcp.pop %v7496
    %v7498 = vmul.f32 1.0, %v7497
    %v7499 = vmul.f32 %v7491, %v7389
    %v7500 = vmul.f32 %v7485, %v7492
    %v7501 = vadd.f32 %v7499, %v7500
    %v7502 = vtanh.pop %v7501
    %v7503 = vmul.f32 %v7498, %v7502
    %7504 = vst [vmem:[#allocation2 + $0x30] sm:$0xff] %v7503
    %v7505 = vpack.c.bf16 %v7503, %v7503
    %7506 = vmatprep.subr.bf16.mxu0 %v6659
    %7507 = vmatpush1.bf16.msra.mxu0 %v6658
    %7508 = vmatprep.subr.bf16.mxu0 %v6663
    %7509 = vmatpush1.bf16.msra.mxu0 %v6662
    %7510 = vmatprep.subr.bf16.mxu0 %v6667
    %7511 = vmatpush1.bf16.msra.mxu0 %v6666
    %7512 = vmatprep.subr.bf16.mxu0 %v6671
    %7513 = vmatpush1.bf16.msra.mxu0 %v6670
    %7514 = vmatprep.subr.bf16.mxu0 %v6675
    %7515 = vmatpush1.bf16.msra.mxu0 %v6674
    %7516 = vmatprep.subr.bf16.mxu0 %v6679
    %7517 = vmatpush1.bf16.msra.mxu0 %v6678
    %7518 = vmatprep.subr.bf16.mxu0 %v6683
    %7519 = vmatpush1.bf16.msra.mxu0 %v6682
    %7520 = vmatprep.subr.bf16.mxu0 %v6687
    %7521 = vmatpush1.bf16.msra.mxu0 %v6686
    %7522 = vmatprep.subr.bf16.mxu0 0
    %7523 = vmatpush1.bf16.msra.mxu0 0
    %7524 = vmatprep.subr.bf16.mxu0 0
    %7525 = vmatpush1.bf16.msra.mxu0 0
    %7526 = vmatprep.subr.bf16.mxu0 0
    %7527 = vmatpush1.bf16.msra.mxu0 0
    %7528 = vmatprep.subr.bf16.mxu0 0
    %7529 = vmatpush1.bf16.msra.mxu0 0
    %7530 = vmatprep.subr.bf16.mxu0 0
    %7531 = vmatpush1.bf16.msra.mxu0 0
    %7532 = vmatprep.subr.bf16.mxu0 0
    %7533 = vmatpush1.bf16.msra.mxu0 0
    %7534 = vmatprep.subr.bf16.mxu0 0
    %7535 = vmatpush1.bf16.msra.mxu0 0
    %7536 = vmatprep.subr.bf16.mxu0 0
    %7537 = vmatpush1.bf16.msra.mxu0 0
    %7538 = vmatprep.mubr.bf16.mxu0 0
    %7539 = vmatmul.mubr.bf16.gmra.mrb[0].mxu0 %v7505
    %v7540 = vpop.f32.mrb[0].mxu0
    %v7541 = vadd.f32 0.0, %v7540
    %v7542 = vpop.f32.mrb[0].mxu0
    %v7543 = vadd.f32 0.0, %v7542
    %v7544 = vpop.f32.mrb[0].mxu0
    %v7545 = vpop.f32.mrb[0].mxu0
    %7546 = vdwg.mxu0
    %7547 = vmatprep.subr.bf16.mxu0 %v6661
    %7548 = vmatpush1.bf16.msra.mxu0 %v6660
    %7549 = vmatprep.subr.bf16.mxu0 %v6665
    %7550 = vmatpush1.bf16.msra.mxu0 %v6664
    %7551 = vmatprep.subr.bf16.mxu0 %v6669
    %7552 = vmatpush1.bf16.msra.mxu0 %v6668
    %7553 = vmatprep.subr.bf16.mxu0 %v6673
    %7554 = vmatpush1.bf16.msra.mxu0 %v6672
    %7555 = vmatprep.subr.bf16.mxu0 %v6677
    %7556 = vmatpush1.bf16.msra.mxu0 %v6676
    %7557 = vmatprep.subr.bf16.mxu0 %v6681
    %7558 = vmatpush1.bf16.msra.mxu0 %v6680
    %7559 = vmatprep.subr.bf16.mxu0 %v6685
    %7560 = vmatpush1.bf16.msra.mxu0 %v6684
    %7561 = vmatprep.subr.bf16.mxu0 %v6689
    %7562 = vmatpush1.bf16.msra.mxu0 %v6688
    %7563 = vmatprep.subr.bf16.mxu0 0
    %7564 = vmatpush1.bf16.msra.mxu0 0
    %7565 = vmatprep.subr.bf16.mxu0 0
    %7566 = vmatpush1.bf16.msra.mxu0 0
    %7567 = vmatprep.subr.bf16.mxu0 0
    %7568 = vmatpush1.bf16.msra.mxu0 0
    %7569 = vmatprep.subr.bf16.mxu0 0
    %7570 = vmatpush1.bf16.msra.mxu0 0
    %7571 = vmatprep.subr.bf16.mxu0 0
    %7572 = vmatpush1.bf16.msra.mxu0 0
    %7573 = vmatprep.subr.bf16.mxu0 0
    %7574 = vmatpush1.bf16.msra.mxu0 0
    %7575 = vmatprep.subr.bf16.mxu0 0
    %7576 = vmatpush1.bf16.msra.mxu0 0
    %7577 = vmatprep.subr.bf16.mxu0 0
    %7578 = vmatpush1.bf16.msra.mxu0 0
    %7579 = vmatprep.mubr.bf16.mxu0 0
    %7580 = vmatmul.mubr.bf16.gmra.mrb[0].mxu0 %v7505
    %v7581 = vpop.f32.mrb[0].mxu0
    %v7582 = vadd.f32 0.0, %v7581
    %v7583 = vpop.f32.mrb[0].mxu0
    %v7584 = vadd.f32 0.0, %v7583
    %v7585 = vpop.f32.mrb[0].mxu0
    %v7586 = vpop.f32.mrb[0].mxu0
    %7587 = vdwg.mxu0
    %v7588 = vadd.f32 %v6526, %v7541
    %v7589 = vadd.f32 %v6527, %v7543
    %v7590 = vadd.f32 %v6528, %v7582
    %v7591 = vadd.f32 %v6529, %v7584
    %v7592 = vxor.u32 %v7588, 2147483648
    %v7593 = vmul.f32 %v7592, 1.442695
    %v7594 = vpow.pop %v7593
    %v7595 = vadd.f32 %v7594, 1.0
    %v7596 = vrcp.pop %v7595
    %v7597 = vmul.f32 1.0, %v7596
    %v7598 = vxor.u32 %v7589, 2147483648
    %v7599 = vmul.f32 %v7598, 1.442695
    %v7600 = vpow.pop %v7599
    %v7601 = vadd.f32 %v7600, 1.0
    %v7602 = vrcp.pop %v7601
    %v7603 = vmul.f32 1.0, %v7602
    %v7604 = vtanh.pop %v7590
    %v7605 = vxor.u32 %v7591, 2147483648
    %v7606 = vmul.f32 %v7605, 1.442695
    %v7607 = vpow.pop %v7606
    %v7608 = vadd.f32 %v7607, 1.0
    %v7609 = vrcp.pop %v7608
    %v7610 = vmul.f32 1.0, %v7609
    %v7611 = vmul.f32 %v7603, %v7501
    %v7612 = vmul.f32 %v7597, %v7604
    %v7613 = vadd.f32 %v7611, %v7612
    %v7614 = vtanh.pop %v7613
    %v7615 = vmul.f32 %v7610, %v7614
    %7616 = vst [vmem:[#allocation2 + $0x38] sm:$0xff] %v7615
    %v7617 = vld [vmem:[#allocation2] sm:$0xff]
    %v7618 = vld [vmem:[#allocation2 + $0x8] sm:$0xff]
    %v7619 = vld [vmem:[#allocation2 + $0x10] sm:$0xff]
    %v7620 = vld [vmem:[#allocation2 + $0x18] sm:$0xff]
    %v7621 = vld [vmem:[#allocation2 + $0x20] sm:$0xff]
    %v7622 = vld [vmem:[#allocation2 + $0x28] sm:$0xff]
    %v7623 = vld [vmem:[#allocation2 + $0x30] sm:$0xff]
    %v7624 = vld [vmem:[#allocation2 + $0x38] sm:$0xff]
    %v7625 = vpack.c.bf16 %v7618, %v7617
    %v7626 = vpack.c.bf16 %v7620, %v7619
    %v7627 = vpack.c.bf16 %v7622, %v7621
    %v7628 = vpack.c.bf16 %v7624, %v7623
    %v7629 = vld [vmem:[#allocation7] sm:$0xff]
    %v7630 = vld [vmem:[#allocation7 + $0x8] sm:$0xff]
    %v7631 = vld [vmem:[#allocation7 + $0x10] sm:$0xff]
    %v7632 = vld [vmem:[#allocation7 + $0x18] sm:$0xff]
    %v7633 = vld [vmem:[#allocation7 + $0x20] sm:$0xff]
    %v7634 = vld [vmem:[#allocation7 + $0x28] sm:$0xff]
    %v7635 = vld [vmem:[#allocation7 + $0x30] sm:$0xff]
    %v7636 = vld [vmem:[#allocation7 + $0x38] sm:$0xff]
    %v7637 = vld [vmem:[#allocation7 + $0x40] sm:$0xff]
    %v7638 = vld [vmem:[#allocation7 + $0x48] sm:$0xff]
    %v7639 = vld [vmem:[#allocation7 + $0x50] sm:$0xff]
    %v7640 = vld [vmem:[#allocation7 + $0x58] sm:$0xff]
    %v7641 = vld [vmem:[#allocation7 + $0x60] sm:$0xff]
    %v7642 = vld [vmem:[#allocation7 + $0x68] sm:$0xff]
    %v7643 = vld [vmem:[#allocation7 + $0x70] sm:$0xff]
    %v7644 = vld [vmem:[#allocation7 + $0x78] sm:$0xff]
    %v7645 = vld [vmem:[#allocation7 + $0x80] sm:$0xff]
    %v7646 = vld [vmem:[#allocation7 + $0x88] sm:$0xff]
    %v7647 = vld [vmem:[#allocation7 + $0x90] sm:$0xff]
    %v7648 = vld [vmem:[#allocation7 + $0x98] sm:$0xff]
    %v7649 = vld [vmem:[#allocation7 + $0xa0] sm:$0xff]
    %v7650 = vld [vmem:[#allocation7 + $0xa8] sm:$0xff]
    %v7651 = vld [vmem:[#allocation7 + $0xb0] sm:$0xff]
    %v7652 = vld [vmem:[#allocation7 + $0xb8] sm:$0xff]
    %v7653 = vld [vmem:[#allocation7 + $0xc0] sm:$0xff]
    %v7654 = vld [vmem:[#allocation7 + $0xc8] sm:$0xff]
    %v7655 = vld [vmem:[#allocation7 + $0xd0] sm:$0xff]
    %v7656 = vld [vmem:[#allocation7 + $0xd8] sm:$0xff]
    %v7657 = vld [vmem:[#allocation7 + $0xe0] sm:$0xff]
    %v7658 = vld [vmem:[#allocation7 + $0xe8] sm:$0xff]
    %v7659 = vld [vmem:[#allocation7 + $0xf0] sm:$0xff]
    %v7660 = vld [vmem:[#allocation7 + $0xf8] sm:$0xff]
    %v7661 = vld [vmem:[%s14] sm:$0xf]
    %v7663 = vlaneseq
    %v7664 = vshrl.u32 %v7663, 7
    %v7665 = vsub.s32 0, %v7664
    %v7666 = vrot.slane %v7661, %v7665
    %v7667 = vlaneseq
    %v7668 = vshrl.u32 %v7667, 7
    %v7669 = vsub.s32 1, %v7668
    %v7670 = vrot.slane %v7661, %v7669
    %v7671 = vlaneseq
    %v7672 = vshrl.u32 %v7671, 7
    %v7673 = vsub.s32 2, %v7672
    %v7674 = vrot.slane %v7661, %v7673
    %v7675 = vlaneseq
    %v7676 = vshrl.u32 %v7675, 7
    %v7677 = vsub.s32 3, %v7676
    %v7678 = vrot.slane %v7661, %v7677
    %v7715 = vunpack.c.l.b16 %v7629
    %v7716 = vunpack.c.h.b16 %v7629
    %v7717 = vunpack.c.l.b16 %v7630
    %v7718 = vunpack.c.h.b16 %v7630
    %v7719 = vunpack.c.l.b16 %v7631
    %v7720 = vunpack.c.h.b16 %v7631
    %v7721 = vunpack.c.l.b16 %v7632
    %v7722 = vunpack.c.h.b16 %v7632
    %v7723 = vunpack.c.l.b16 %v7633
    %v7724 = vunpack.c.h.b16 %v7633
    %v7725 = vunpack.c.l.b16 %v7634
    %v7726 = vunpack.c.h.b16 %v7634
    %v7727 = vunpack.c.l.b16 %v7635
    %v7728 = vunpack.c.h.b16 %v7635
    %v7729 = vunpack.c.l.b16 %v7636
    %v7730 = vunpack.c.h.b16 %v7636
    %v7731 = vunpack.c.l.b16 %v7637
    %v7732 = vunpack.c.h.b16 %v7637
    %v7733 = vunpack.c.l.b16 %v7638
    %v7734 = vunpack.c.h.b16 %v7638
    %v7735 = vunpack.c.l.b16 %v7639
    %v7736 = vunpack.c.h.b16 %v7639
    %v7737 = vunpack.c.l.b16 %v7640
    %v7738 = vunpack.c.h.b16 %v7640
    %v7739 = vunpack.c.l.b16 %v7641
    %v7740 = vunpack.c.h.b16 %v7641
    %v7741 = vunpack.c.l.b16 %v7642
    %v7742 = vunpack.c.h.b16 %v7642
    %v7743 = vunpack.c.l.b16 %v7643
    %v7744 = vunpack.c.h.b16 %v7643
    %v7745 = vunpack.c.l.b16 %v7644
    %v7746 = vunpack.c.h.b16 %v7644
    %v7747 = vunpack.c.l.b16 %v7645
    %v7748 = vunpack.c.h.b16 %v7645
    %v7749 = vunpack.c.l.b16 %v7646
    %v7750 = vunpack.c.h.b16 %v7646
    %v7751 = vunpack.c.l.b16 %v7647
    %v7752 = vunpack.c.h.b16 %v7647
    %v7753 = vunpack.c.l.b16 %v7648
    %v7754 = vunpack.c.h.b16 %v7648
    %v7755 = vunpack.c.l.b16 %v7649
    %v7756 = vunpack.c.h.b16 %v7649
    %v7757 = vunpack.c.l.b16 %v7650
    %v7758 = vunpack.c.h.b16 %v7650
    %v7759 = vunpack.c.l.b16 %v7651
    %v7760 = vunpack.c.h.b16 %v7651
    %v7761 = vunpack.c.l.b16 %v7652
    %v7762 = vunpack.c.h.b16 %v7652
    %v7763 = vunpack.c.l.b16 %v7653
    %v7764 = vunpack.c.h.b16 %v7653
    %v7765 = vunpack.c.l.b16 %v7654
    %v7766 = vunpack.c.h.b16 %v7654
    %v7767 = vunpack.c.l.b16 %v7655
    %v7768 = vunpack.c.h.b16 %v7655
    %v7769 = vunpack.c.l.b16 %v7656
    %v7770 = vunpack.c.h.b16 %v7656
    %v7771 = vunpack.c.l.b16 %v7657
    %v7772 = vunpack.c.h.b16 %v7657
    %v7773 = vunpack.c.l.b16 %v7658
    %v7774 = vunpack.c.h.b16 %v7658
    %v7775 = vunpack.c.l.b16 %v7659
    %v7776 = vunpack.c.h.b16 %v7659
    %v7777 = vunpack.c.l.b16 %v7660
    %v7778 = vunpack.c.h.b16 %v7660
    %v7779 = vpack.c.b16 %v7719, %v7715
    %v7780 = vpack.c.b16 %v7720, %v7716
    %v7781 = vpack.c.b16 %v7721, %v7717
    %v7782 = vpack.c.b16 %v7722, %v7718
    %v7783 = vpack.c.b16 %v7727, %v7723
    %v7784 = vpack.c.b16 %v7728, %v7724
    %v7785 = vpack.c.b16 %v7729, %v7725
    %v7786 = vpack.c.b16 %v7730, %v7726
    %v7787 = vpack.c.b16 %v7735, %v7731
    %v7788 = vpack.c.b16 %v7736, %v7732
    %v7789 = vpack.c.b16 %v7737, %v7733
    %v7790 = vpack.c.b16 %v7738, %v7734
    %v7791 = vpack.c.b16 %v7743, %v7739
    %v7792 = vpack.c.b16 %v7744, %v7740
    %v7793 = vpack.c.b16 %v7745, %v7741
    %v7794 = vpack.c.b16 %v7746, %v7742
    %v7795 = vpack.c.b16 %v7751, %v7747
    %v7796 = vpack.c.b16 %v7752, %v7748
    %v7797 = vpack.c.b16 %v7753, %v7749
    %v7798 = vpack.c.b16 %v7754, %v7750
    %v7799 = vpack.c.b16 %v7759, %v7755
    %v7800 = vpack.c.b16 %v7760, %v7756
    %v7801 = vpack.c.b16 %v7761, %v7757
    %v7802 = vpack.c.b16 %v7762, %v7758
    %v7803 = vpack.c.b16 %v7767, %v7763
    %v7804 = vpack.c.b16 %v7768, %v7764
    %v7805 = vpack.c.b16 %v7769, %v7765
    %v7806 = vpack.c.b16 %v7770, %v7766
    %v7807 = vpack.c.b16 %v7775, %v7771
    %v7808 = vpack.c.b16 %v7776, %v7772
    %v7809 = vpack.c.b16 %v7777, %v7773
    %v7810 = vpack.c.b16 %v7778, %v7774
    %7843 = vmatprep.subr.bf16.mxu0 %v7780
    %7844 = vmatpush1.bf16.msra.mxu0 %v7779
    %7845 = vmatprep.subr.bf16.mxu0 %v7784
    %7846 = vmatpush1.bf16.msra.mxu0 %v7783
    %7847 = vmatprep.subr.bf16.mxu0 %v7788
    %7848 = vmatpush1.bf16.msra.mxu0 %v7787
    %7849 = vmatprep.subr.bf16.mxu0 %v7792
    %7850 = vmatpush1.bf16.msra.mxu0 %v7791
    %7851 = vmatprep.subr.bf16.mxu0 %v7796
    %7852 = vmatpush1.bf16.msra.mxu0 %v7795
    %7853 = vmatprep.subr.bf16.mxu0 %v7800
    %7854 = vmatpush1.bf16.msra.mxu0 %v7799
    %7855 = vmatprep.subr.bf16.mxu0 %v7804
    %7856 = vmatpush1.bf16.msra.mxu0 %v7803
    %7857 = vmatprep.subr.bf16.mxu0 %v7808
    %7858 = vmatpush1.bf16.msra.mxu0 %v7807
    %7859 = vmatprep.subr.bf16.mxu0 0
    %7860 = vmatpush1.bf16.msra.mxu0 0
    %7861 = vmatprep.subr.bf16.mxu0 0
    %7862 = vmatpush1.bf16.msra.mxu0 0
    %7863 = vmatprep.subr.bf16.mxu0 0
    %7864 = vmatpush1.bf16.msra.mxu0 0
    %7865 = vmatprep.subr.bf16.mxu0 0
    %7866 = vmatpush1.bf16.msra.mxu0 0
    %7867 = vmatprep.subr.bf16.mxu0 0
    %7868 = vmatpush1.bf16.msra.mxu0 0
    %7869 = vmatprep.subr.bf16.mxu0 0
    %7870 = vmatpush1.bf16.msra.mxu0 0
    %7871 = vmatprep.subr.bf16.mxu0 0
    %7872 = vmatpush1.bf16.msra.mxu0 0
    %7873 = vmatprep.subr.bf16.mxu0 0
    %7874 = vmatpush1.bf16.msra.mxu0 0
    %7875 = vmatprep.mubr.bf16.mxu0 0
    %7876 = vmatmul.mubr.bf16.gmra.mrb[0].mxu0 %v7625
    %v7877 = vpop.f32.mrb[0].mxu0
    %v7878 = vadd.f32 %v7666, %v7877
    %v7879 = vpop.f32.mrb[0].mxu0
    %v7880 = vadd.f32 %v7670, %v7879
    %v7881 = vpop.f32.mrb[0].mxu0
    %v7882 = vadd.f32 %v7666, %v7881
    %v7883 = vpop.f32.mrb[0].mxu0
    %v7884 = vadd.f32 %v7670, %v7883
    %7885 = vmatprep.mubr.bf16.mxu0 0
    %7886 = vmatmul.mubr.bf16.gmra.mrb[0].mxu0 %v7626
    %v7887 = vpop.f32.mrb[0].mxu0
    %v7888 = vadd.f32 %v7666, %v7887
    %v7889 = vpop.f32.mrb[0].mxu0
    %v7890 = vadd.f32 %v7670, %v7889
    %v7891 = vpop.f32.mrb[0].mxu0
    %v7892 = vadd.f32 %v7666, %v7891
    %v7893 = vpop.f32.mrb[0].mxu0
    %v7894 = vadd.f32 %v7670, %v7893
    %7895 = vmatprep.mubr.bf16.mxu0 0
    %7896 = vmatmul.mubr.bf16.gmra.mrb[0].mxu0 %v7627
    %v7897 = vpop.f32.mrb[0].mxu0
    %v7898 = vadd.f32 %v7666, %v7897
    %v7899 = vpop.f32.mrb[0].mxu0
    %v7900 = vadd.f32 %v7670, %v7899
    %v7901 = vpop.f32.mrb[0].mxu0
    %v7902 = vadd.f32 %v7666, %v7901
    %v7903 = vpop.f32.mrb[0].mxu0
    %v7904 = vadd.f32 %v7670, %v7903
    %7905 = vmatprep.mubr.bf16.mxu0 0
    %7906 = vmatmul.mubr.bf16.gmra.mrb[0].mxu0 %v7628
    %v7907 = vpop.f32.mrb[0].mxu0
    %v7908 = vadd.f32 %v7666, %v7907
    %v7909 = vpop.f32.mrb[0].mxu0
    %v7910 = vadd.f32 %v7670, %v7909
    %v7911 = vpop.f32.mrb[0].mxu0
    %v7912 = vadd.f32 %v7666, %v7911
    %v7913 = vpop.f32.mrb[0].mxu0
    %v7914 = vadd.f32 %v7670, %v7913
    %7915 = vdwg.mxu0
    %7916 = vmatprep.subr.bf16.mxu0 %v7782
    %7917 = vmatpush1.bf16.msra.mxu0 %v7781
    %7918 = vmatprep.subr.bf16.mxu0 %v7786
    %7919 = vmatpush1.bf16.msra.mxu0 %v7785
    %7920 = vmatprep.subr.bf16.mxu0 %v7790
    %7921 = vmatpush1.bf16.msra.mxu0 %v7789
    %7922 = vmatprep.subr.bf16.mxu0 %v7794
    %7923 = vmatpush1.bf16.msra.mxu0 %v7793
    %7924 = vmatprep.subr.bf16.mxu0 %v7798
    %7925 = vmatpush1.bf16.msra.mxu0 %v7797
    %7926 = vmatprep.subr.bf16.mxu0 %v7802
    %7927 = vmatpush1.bf16.msra.mxu0 %v7801
    %7928 = vmatprep.subr.bf16.mxu0 %v7806
    %7929 = vmatpush1.bf16.msra.mxu0 %v7805
    %7930 = vmatprep.subr.bf16.mxu0 %v7810
    %7931 = vmatpush1.bf16.msra.mxu0 %v7809
    %7932 = vmatprep.subr.bf16.mxu0 0
    %7933 = vmatpush1.bf16.msra.mxu0 0
    %7934 = vmatprep.subr.bf16.mxu0 0
    %7935 = vmatpush1.bf16.msra.mxu0 0
    %7936 = vmatprep.subr.bf16.mxu0 0
    %7937 = vmatpush1.bf16.msra.mxu0 0
    %7938 = vmatprep.subr.bf16.mxu0 0
    %7939 = vmatpush1.bf16.msra.mxu0 0
    %7940 = vmatprep.subr.bf16.mxu0 0
    %7941 = vmatpush1.bf16.msra.mxu0 0
    %7942 = vmatprep.subr.bf16.mxu0 0
    %7943 = vmatpush1.bf16.msra.mxu0 0
    %7944 = vmatprep.subr.bf16.mxu0 0
    %7945 = vmatpush1.bf16.msra.mxu0 0
    %7946 = vmatprep.subr.bf16.mxu0 0
    %7947 = vmatpush1.bf16.msra.mxu0 0
    %7948 = vmatprep.mubr.bf16.mxu0 0
    %7949 = vmatmul.mubr.bf16.gmra.mrb[0].mxu0 %v7625
    %v7950 = vpop.f32.mrb[0].mxu0
    %v7951 = vadd.f32 %v7674, %v7950
    %v7952 = vpop.f32.mrb[0].mxu0
    %v7953 = vadd.f32 %v7678, %v7952
    %v7954 = vpop.f32.mrb[0].mxu0
    %v7955 = vadd.f32 %v7674, %v7954
    %v7956 = vpop.f32.mrb[0].mxu0
    %v7957 = vadd.f32 %v7678, %v7956
    %7958 = vmatprep.mubr.bf16.mxu0 0
    %7959 = vmatmul.mubr.bf16.gmra.mrb[0].mxu0 %v7626
    %v7960 = vpop.f32.mrb[0].mxu0
    %v7961 = vadd.f32 %v7674, %v7960
    %v7962 = vpop.f32.mrb[0].mxu0
    %v7963 = vadd.f32 %v7678, %v7962
    %v7964 = vpop.f32.mrb[0].mxu0
    %v7965 = vadd.f32 %v7674, %v7964
    %v7966 = vpop.f32.mrb[0].mxu0
    %v7967 = vadd.f32 %v7678, %v7966
    %7968 = vmatprep.mubr.bf16.mxu0 0
    %7969 = vmatmul.mubr.bf16.gmra.mrb[0].mxu0 %v7627
    %v7970 = vpop.f32.mrb[0].mxu0
    %v7971 = vadd.f32 %v7674, %v7970
    %v7972 = vpop.f32.mrb[0].mxu0
    %v7973 = vadd.f32 %v7678, %v7972
    %v7974 = vpop.f32.mrb[0].mxu0
    %v7975 = vadd.f32 %v7674, %v7974
    %v7976 = vpop.f32.mrb[0].mxu0
    %v7977 = vadd.f32 %v7678, %v7976
    %7978 = vmatprep.mubr.bf16.mxu0 0
    %7979 = vmatmul.mubr.bf16.gmra.mrb[0].mxu0 %v7628
    %v7980 = vpop.f32.mrb[0].mxu0
    %v7981 = vadd.f32 %v7674, %v7980
    %v7982 = vpop.f32.mrb[0].mxu0
    %v7983 = vadd.f32 %v7678, %v7982
    %v7984 = vpop.f32.mrb[0].mxu0
    %v7985 = vadd.f32 %v7674, %v7984
    %v7986 = vpop.f32.mrb[0].mxu0
    %v7987 = vadd.f32 %v7678, %v7986
    %7988 = vdwg.mxu0
    %v7989 = vld [vmem:[#allocation8] sm:$0xff]
    %v7990 = vld [vmem:[#allocation8 + $0x8] sm:$0xff]
    %v7991 = vld [vmem:[#allocation8 + $0x10] sm:$0xff]
    %v7992 = vld [vmem:[#allocation8 + $0x18] sm:$0xff]
    %v7993 = vld [vmem:[#allocation8 + $0x20] sm:$0xff]
    %v7994 = vld [vmem:[#allocation8 + $0x28] sm:$0xff]
    %v7995 = vld [vmem:[#allocation8 + $0x30] sm:$0xff]
    %v7996 = vld [vmem:[#allocation8 + $0x38] sm:$0xff]
    %v7997 = vld [vmem:[#allocation8 + $0x40] sm:$0xff]
    %v7998 = vld [vmem:[#allocation8 + $0x48] sm:$0xff]
    %v7999 = vld [vmem:[#allocation8 + $0x50] sm:$0xff]
    %v8000 = vld [vmem:[#allocation8 + $0x58] sm:$0xff]
    %v8001 = vld [vmem:[#allocation8 + $0x60] sm:$0xff]
    %v8002 = vld [vmem:[#allocation8 + $0x68] sm:$0xff]
    %v8003 = vld [vmem:[#allocation8 + $0x70] sm:$0xff]
    %v8004 = vld [vmem:[#allocation8 + $0x78] sm:$0xff]
    %v8005 = vld [vmem:[#allocation8 + $0x80] sm:$0xff]
    %v8006 = vld [vmem:[#allocation8 + $0x88] sm:$0xff]
    %v8007 = vld [vmem:[#allocation8 + $0x90] sm:$0xff]
    %v8008 = vld [vmem:[#allocation8 + $0x98] sm:$0xff]
    %v8009 = vld [vmem:[#allocation8 + $0xa0] sm:$0xff]
    %v8010 = vld [vmem:[#allocation8 + $0xa8] sm:$0xff]
    %v8011 = vld [vmem:[#allocation8 + $0xb0] sm:$0xff]
    %v8012 = vld [vmem:[#allocation8 + $0xb8] sm:$0xff]
    %v8013 = vld [vmem:[#allocation8 + $0xc0] sm:$0xff]
    %v8014 = vld [vmem:[#allocation8 + $0xc8] sm:$0xff]
    %v8015 = vld [vmem:[#allocation8 + $0xd0] sm:$0xff]
    %v8016 = vld [vmem:[#allocation8 + $0xd8] sm:$0xff]
    %v8017 = vld [vmem:[#allocation8 + $0xe0] sm:$0xff]
    %v8018 = vld [vmem:[#allocation8 + $0xe8] sm:$0xff]
    %v8019 = vld [vmem:[#allocation8 + $0xf0] sm:$0xff]
    %v8020 = vld [vmem:[#allocation8 + $0xf8] sm:$0xff]
    %v8053 = vunpack.c.l.b16 %v7989
    %v8054 = vunpack.c.h.b16 %v7989
    %v8055 = vunpack.c.l.b16 %v7990
    %v8056 = vunpack.c.h.b16 %v7990
    %v8057 = vunpack.c.l.b16 %v7991
    %v8058 = vunpack.c.h.b16 %v7991
    %v8059 = vunpack.c.l.b16 %v7992
    %v8060 = vunpack.c.h.b16 %v7992
    %v8061 = vunpack.c.l.b16 %v7993
    %v8062 = vunpack.c.h.b16 %v7993
    %v8063 = vunpack.c.l.b16 %v7994
    %v8064 = vunpack.c.h.b16 %v7994
    %v8065 = vunpack.c.l.b16 %v7995
    %v8066 = vunpack.c.h.b16 %v7995
    %v8067 = vunpack.c.l.b16 %v7996
    %v8068 = vunpack.c.h.b16 %v7996
    %v8069 = vunpack.c.l.b16 %v7997
    %v8070 = vunpack.c.h.b16 %v7997
    %v8071 = vunpack.c.l.b16 %v7998
    %v8072 = vunpack.c.h.b16 %v7998
    %v8073 = vunpack.c.l.b16 %v7999
    %v8074 = vunpack.c.h.b16 %v7999
    %v8075 = vunpack.c.l.b16 %v8000
    %v8076 = vunpack.c.h.b16 %v8000
    %v8077 = vunpack.c.l.b16 %v8001
    %v8078 = vunpack.c.h.b16 %v8001
    %v8079 = vunpack.c.l.b16 %v8002
    %v8080 = vunpack.c.h.b16 %v8002
    %v8081 = vunpack.c.l.b16 %v8003
    %v8082 = vunpack.c.h.b16 %v8003
    %v8083 = vunpack.c.l.b16 %v8004
    %v8084 = vunpack.c.h.b16 %v8004
    %v8085 = vunpack.c.l.b16 %v8005
    %v8086 = vunpack.c.h.b16 %v8005
    %v8087 = vunpack.c.l.b16 %v8006
    %v8088 = vunpack.c.h.b16 %v8006
    %v8089 = vunpack.c.l.b16 %v8007
    %v8090 = vunpack.c.h.b16 %v8007
    %v8091 = vunpack.c.l.b16 %v8008
    %v8092 = vunpack.c.h.b16 %v8008
    %v8093 = vunpack.c.l.b16 %v8009
    %v8094 = vunpack.c.h.b16 %v8009
    %v8095 = vunpack.c.l.b16 %v8010
    %v8096 = vunpack.c.h.b16 %v8010
    %v8097 = vunpack.c.l.b16 %v8011
    %v8098 = vunpack.c.h.b16 %v8011
    %v8099 = vunpack.c.l.b16 %v8012
    %v8100 = vunpack.c.h.b16 %v8012
    %v8101 = vunpack.c.l.b16 %v8013
    %v8102 = vunpack.c.h.b16 %v8013
    %v8103 = vunpack.c.l.b16 %v8014
    %v8104 = vunpack.c.h.b16 %v8014
    %v8105 = vunpack.c.l.b16 %v8015
    %v8106 = vunpack.c.h.b16 %v8015
    %v8107 = vunpack.c.l.b16 %v8016
    %v8108 = vunpack.c.h.b16 %v8016
    %v8109 = vunpack.c.l.b16 %v8017
    %v8110 = vunpack.c.h.b16 %v8017
    %v8111 = vunpack.c.l.b16 %v8018
    %v8112 = vunpack.c.h.b16 %v8018
    %v8113 = vunpack.c.l.b16 %v8019
    %v8114 = vunpack.c.h.b16 %v8019
    %v8115 = vunpack.c.l.b16 %v8020
    %v8116 = vunpack.c.h.b16 %v8020
    %v8117 = vpack.c.b16 %v8057, %v8053
    %v8118 = vpack.c.b16 %v8058, %v8054
    %v8119 = vpack.c.b16 %v8059, %v8055
    %v8120 = vpack.c.b16 %v8060, %v8056
    %v8121 = vpack.c.b16 %v8065, %v8061
    %v8122 = vpack.c.b16 %v8066, %v8062
    %v8123 = vpack.c.b16 %v8067, %v8063
    %v8124 = vpack.c.b16 %v8068, %v8064
    %v8125 = vpack.c.b16 %v8073, %v8069
    %v8126 = vpack.c.b16 %v8074, %v8070
    %v8127 = vpack.c.b16 %v8075, %v8071
    %v8128 = vpack.c.b16 %v8076, %v8072
    %v8129 = vpack.c.b16 %v8081, %v8077
    %v8130 = vpack.c.b16 %v8082, %v8078
    %v8131 = vpack.c.b16 %v8083, %v8079
    %v8132 = vpack.c.b16 %v8084, %v8080
    %v8133 = vpack.c.b16 %v8089, %v8085
    %v8134 = vpack.c.b16 %v8090, %v8086
    %v8135 = vpack.c.b16 %v8091, %v8087
    %v8136 = vpack.c.b16 %v8092, %v8088
    %v8137 = vpack.c.b16 %v8097, %v8093
    %v8138 = vpack.c.b16 %v8098, %v8094
    %v8139 = vpack.c.b16 %v8099, %v8095
    %v8140 = vpack.c.b16 %v8100, %v8096
    %v8141 = vpack.c.b16 %v8105, %v8101
    %v8142 = vpack.c.b16 %v8106, %v8102
    %v8143 = vpack.c.b16 %v8107, %v8103
    %v8144 = vpack.c.b16 %v8108, %v8104
    %v8145 = vpack.c.b16 %v8113, %v8109
    %v8146 = vpack.c.b16 %v8114, %v8110
    %v8147 = vpack.c.b16 %v8115, %v8111
    %v8148 = vpack.c.b16 %v8116, %v8112
    %8181 = vmatprep.subr.bf16.mxu0 %v8118
    %8182 = vmatpush1.bf16.msra.mxu0 %v8117
    %8183 = vmatprep.subr.bf16.mxu0 %v8122
    %8184 = vmatpush1.bf16.msra.mxu0 %v8121
    %8185 = vmatprep.subr.bf16.mxu0 %v8126
    %8186 = vmatpush1.bf16.msra.mxu0 %v8125
    %8187 = vmatprep.subr.bf16.mxu0 %v8130
    %8188 = vmatpush1.bf16.msra.mxu0 %v8129
    %8189 = vmatprep.subr.bf16.mxu0 %v8134
    %8190 = vmatpush1.bf16.msra.mxu0 %v8133
    %8191 = vmatprep.subr.bf16.mxu0 %v8138
    %8192 = vmatpush1.bf16.msra.mxu0 %v8137
    %8193 = vmatprep.subr.bf16.mxu0 %v8142
    %8194 = vmatpush1.bf16.msra.mxu0 %v8141
    %8195 = vmatprep.subr.bf16.mxu0 %v8146
    %8196 = vmatpush1.bf16.msra.mxu0 %v8145
    %8197 = vmatprep.subr.bf16.mxu0 0
    %8198 = vmatpush1.bf16.msra.mxu0 0
    %8199 = vmatprep.subr.bf16.mxu0 0
    %8200 = vmatpush1.bf16.msra.mxu0 0
    %8201 = vmatprep.subr.bf16.mxu0 0
    %8202 = vmatpush1.bf16.msra.mxu0 0
    %8203 = vmatprep.subr.bf16.mxu0 0
    %8204 = vmatpush1.bf16.msra.mxu0 0
    %8205 = vmatprep.subr.bf16.mxu0 0
    %8206 = vmatpush1.bf16.msra.mxu0 0
    %8207 = vmatprep.subr.bf16.mxu0 0
    %8208 = vmatpush1.bf16.msra.mxu0 0
    %8209 = vmatprep.subr.bf16.mxu0 0
    %8210 = vmatpush1.bf16.msra.mxu0 0
    %8211 = vmatprep.subr.bf16.mxu0 0
    %8212 = vmatpush1.bf16.msra.mxu0 0
    %8213 = vmatprep.mubr.bf16.mxu0 0
    %8214 = vmatmul.mubr.bf16.gmra.mrb[0].mxu0 0
    %v8215 = vpop.f32.mrb[0].mxu0
    %v8216 = vadd.f32 0.0, %v8215
    %v8217 = vpop.f32.mrb[0].mxu0
    %v8218 = vadd.f32 0.0, %v8217
    %v8219 = vpop.f32.mrb[0].mxu0
    %v8220 = vpop.f32.mrb[0].mxu0
    %8221 = vdwg.mxu0
    %8222 = vmatprep.subr.bf16.mxu0 %v8120
    %8223 = vmatpush1.bf16.msra.mxu0 %v8119
    %8224 = vmatprep.subr.bf16.mxu0 %v8124
    %8225 = vmatpush1.bf16.msra.mxu0 %v8123
    %8226 = vmatprep.subr.bf16.mxu0 %v8128
    %8227 = vmatpush1.bf16.msra.mxu0 %v8127
    %8228 = vmatprep.subr.bf16.mxu0 %v8132
    %8229 = vmatpush1.bf16.msra.mxu0 %v8131
    %8230 = vmatprep.subr.bf16.mxu0 %v8136
    %8231 = vmatpush1.bf16.msra.mxu0 %v8135
    %8232 = vmatprep.subr.bf16.mxu0 %v8140
    %8233 = vmatpush1.bf16.msra.mxu0 %v8139
    %8234 = vmatprep.subr.bf16.mxu0 %v8144
    %8235 = vmatpush1.bf16.msra.mxu0 %v8143
    %8236 = vmatprep.subr.bf16.mxu0 %v8148
    %8237 = vmatpush1.bf16.msra.mxu0 %v8147
    %8238 = vmatprep.subr.bf16.mxu0 0
    %8239 = vmatpush1.bf16.msra.mxu0 0
    %8240 = vmatprep.subr.bf16.mxu0 0
    %8241 = vmatpush1.bf16.msra.mxu0 0
    %8242 = vmatprep.subr.bf16.mxu0 0
    %8243 = vmatpush1.bf16.msra.mxu0 0
    %8244 = vmatprep.subr.bf16.mxu0 0
    %8245 = vmatpush1.bf16.msra.mxu0 0
    %8246 = vmatprep.subr.bf16.mxu0 0
    %8247 = vmatpush1.bf16.msra.mxu0 0
    %8248 = vmatprep.subr.bf16.mxu0 0
    %8249 = vmatpush1.bf16.msra.mxu0 0
    %8250 = vmatprep.subr.bf16.mxu0 0
    %8251 = vmatpush1.bf16.msra.mxu0 0
    %8252 = vmatprep.subr.bf16.mxu0 0
    %8253 = vmatpush1.bf16.msra.mxu0 0
    %8254 = vmatprep.mubr.bf16.mxu0 0
    %8255 = vmatmul.mubr.bf16.gmra.mrb[0].mxu0 0
    %v8256 = vpop.f32.mrb[0].mxu0
    %v8257 = vadd.f32 0.0, %v8256
    %v8258 = vpop.f32.mrb[0].mxu0
    %v8259 = vadd.f32 0.0, %v8258
    %v8260 = vpop.f32.mrb[0].mxu0
    %v8261 = vpop.f32.mrb[0].mxu0
    %8262 = vdwg.mxu0
    %v8263 = vadd.f32 %v7878, %v8216
    %v8264 = vadd.f32 %v7880, %v8218
    %v8265 = vadd.f32 %v7951, %v8257
    %v8266 = vadd.f32 %v7953, %v8259
    %v8267 = vxor.u32 %v8263, 2147483648
    %v8268 = vmul.f32 %v8267, 1.442695
    %v8269 = vpow.pop %v8268
    %v8270 = vadd.f32 %v8269, 1.0
    %v8271 = vrcp.pop %v8270
    %v8272 = vmul.f32 1.0, %v8271
    %v8273 = vxor.u32 %v8264, 2147483648
    %v8274 = vmul.f32 %v8273, 1.442695
    %v8275 = vpow.pop %v8274
    %v8276 = vadd.f32 %v8275, 1.0
    %v8277 = vrcp.pop %v8276
    %v8278 = vmul.f32 1.0, %v8277
    %v8279 = vtanh.pop %v8265
    %v8280 = vxor.u32 %v8266, 2147483648
    %v8281 = vmul.f32 %v8280, 1.442695
    %v8282 = vpow.pop %v8281
    %v8283 = vadd.f32 %v8282, 1.0
    %v8284 = vrcp.pop %v8283
    %v8285 = vmul.f32 1.0, %v8284
    %v8286 = vmul.f32 %v8278, 0.0
    %v8287 = vmul.f32 %v8272, %v8279
    %v8288 = vadd.f32 %v8286, %v8287
    %v8289 = vtanh.pop %v8288
    %v8290 = vmul.f32 %v8285, %v8289
    %8291 = vst [vmem:[%s15] sm:$0xff] %v8290
    %v8292 = vpack.c.bf16 %v8290, %v8290
    %8293 = vmatprep.subr.bf16.mxu0 %v8118
    %8294 = vmatpush1.bf16.msra.mxu0 %v8117
    %8295 = vmatprep.subr.bf16.mxu0 %v8122
    %8296 = vmatpush1.bf16.msra.mxu0 %v8121
    %8297 = vmatprep.subr.bf16.mxu0 %v8126
    %8298 = vmatpush1.bf16.msra.mxu0 %v8125
    %8299 = vmatprep.subr.bf16.mxu0 %v8130
    %8300 = vmatpush1.bf16.msra.mxu0 %v8129
    %8301 = vmatprep.subr.bf16.mxu0 %v8134
    %8302 = vmatpush1.bf16.msra.mxu0 %v8133
    %8303 = vmatprep.subr.bf16.mxu0 %v8138
    %8304 = vmatpush1.bf16.msra.mxu0 %v8137
    %8305 = vmatprep.subr.bf16.mxu0 %v8142
    %8306 = vmatpush1.bf16.msra.mxu0 %v8141
    %8307 = vmatprep.subr.bf16.mxu0 %v8146
    %8308 = vmatpush1.bf16.msra.mxu0 %v8145
    %8309 = vmatprep.subr.bf16.mxu0 0
    %8310 = vmatpush1.bf16.msra.mxu0 0
    %8311 = vmatprep.subr.bf16.mxu0 0
    %8312 = vmatpush1.bf16.msra.mxu0 0
    %8313 = vmatprep.subr.bf16.mxu0 0
    %8314 = vmatpush1.bf16.msra.mxu0 0
    %8315 = vmatprep.subr.bf16.mxu0 0
    %8316 = vmatpush1.bf16.msra.mxu0 0
    %8317 = vmatprep.subr.bf16.mxu0 0
    %8318 = vmatpush1.bf16.msra.mxu0 0
    %8319 = vmatprep.subr.bf16.mxu0 0
    %8320 = vmatpush1.bf16.msra.mxu0 0
    %8321 = vmatprep.subr.bf16.mxu0 0
    %8322 = vmatpush1.bf16.msra.mxu0 0
    %8323 = vmatprep.subr.bf16.mxu0 0
    %8324 = vmatpush1.bf16.msra.mxu0 0
    %8325 = vmatprep.mubr.bf16.mxu0 0
    %8326 = vmatmul.mubr.bf16.gmra.mrb[0].mxu0 %v8292
    %v8327 = vpop.f32.mrb[0].mxu0
    %v8328 = vadd.f32 0.0, %v8327
    %v8329 = vpop.f32.mrb[0].mxu0
    %v8330 = vadd.f32 0.0, %v8329
    %v8331 = vpop.f32.mrb[0].mxu0
    %v8332 = vpop.f32.mrb[0].mxu0
    %8333 = vdwg.mxu0
    %8334 = vmatprep.subr.bf16.mxu0 %v8120
    %8335 = vmatpush1.bf16.msra.mxu0 %v8119
    %8336 = vmatprep.subr.bf16.mxu0 %v8124
    %8337 = vmatpush1.bf16.msra.mxu0 %v8123
    %8338 = vmatprep.subr.bf16.mxu0 %v8128
    %8339 = vmatpush1.bf16.msra.mxu0 %v8127
    %8340 = vmatprep.subr.bf16.mxu0 %v8132
    %8341 = vmatpush1.bf16.msra.mxu0 %v8131
    %8342 = vmatprep.subr.bf16.mxu0 %v8136
    %8343 = vmatpush1.bf16.msra.mxu0 %v8135
    %8344 = vmatprep.subr.bf16.mxu0 %v8140
    %8345 = vmatpush1.bf16.msra.mxu0 %v8139
    %8346 = vmatprep.subr.bf16.mxu0 %v8144
    %8347 = vmatpush1.bf16.msra.mxu0 %v8143
    %8348 = vmatprep.subr.bf16.mxu0 %v8148
    %8349 = vmatpush1.bf16.msra.mxu0 %v8147
    %8350 = vmatprep.subr.bf16.mxu0 0
    %8351 = vmatpush1.bf16.msra.mxu0 0
    %8352 = vmatprep.subr.bf16.mxu0 0
    %8353 = vmatpush1.bf16.msra.mxu0 0
    %8354 = vmatprep.subr.bf16.mxu0 0
    %8355 = vmatpush1.bf16.msra.mxu0 0
    %8356 = vmatprep.subr.bf16.mxu0 0
    %8357 = vmatpush1.bf16.msra.mxu0 0
    %8358 = vmatprep.subr.bf16.mxu0 0
    %8359 = vmatpush1.bf16.msra.mxu0 0
    %8360 = vmatprep.subr.bf16.mxu0 0
    %8361 = vmatpush1.bf16.msra.mxu0 0
    %8362 = vmatprep.subr.bf16.mxu0 0
    %8363 = vmatpush1.bf16.msra.mxu0 0
    %8364 = vmatprep.subr.bf16.mxu0 0
    %8365 = vmatpush1.bf16.msra.mxu0 0
    %8366 = vmatprep.mubr.bf16.mxu0 0
    %8367 = vmatmul.mubr.bf16.gmra.mrb[0].mxu0 %v8292
    %v8368 = vpop.f32.mrb[0].mxu0
    %v8369 = vadd.f32 0.0, %v8368
    %v8370 = vpop.f32.mrb[0].mxu0
    %v8371 = vadd.f32 0.0, %v8370
    %v8372 = vpop.f32.mrb[0].mxu0
    %v8373 = vpop.f32.mrb[0].mxu0
    %8374 = vdwg.mxu0
    %v8375 = vadd.f32 %v7882, %v8328
    %v8376 = vadd.f32 %v7884, %v8330
    %v8377 = vadd.f32 %v7955, %v8369
    %v8378 = vadd.f32 %v7957, %v8371
    %v8379 = vxor.u32 %v8375, 2147483648
    %v8380 = vmul.f32 %v8379, 1.442695
    %v8381 = vpow.pop %v8380
    %v8382 = vadd.f32 %v8381, 1.0
    %v8383 = vrcp.pop %v8382
    %v8384 = vmul.f32 1.0, %v8383
    %v8385 = vxor.u32 %v8376, 2147483648
    %v8386 = vmul.f32 %v8385, 1.442695
    %v8387 = vpow.pop %v8386
    %v8388 = vadd.f32 %v8387, 1.0
    %v8389 = vrcp.pop %v8388
    %v8390 = vmul.f32 1.0, %v8389
    %v8391 = vtanh.pop %v8377
    %v8392 = vxor.u32 %v8378, 2147483648
    %v8393 = vmul.f32 %v8392, 1.442695
    %v8394 = vpow.pop %v8393
    %v8395 = vadd.f32 %v8394, 1.0
    %v8396 = vrcp.pop %v8395
    %v8397 = vmul.f32 1.0, %v8396
    %v8398 = vmul.f32 %v8390, %v8288
    %v8399 = vmul.f32 %v8384, %v8391
    %v8400 = vadd.f32 %v8398, %v8399
    %v8401 = vtanh.pop %v8400
    %v8402 = vmul.f32 %v8397, %v8401
    %8403 = vst [vmem:[%s15 + $0x8] sm:$0xff] %v8402
    %v8404 = vpack.c.bf16 %v8402, %v8402
    %8405 = vmatprep.subr.bf16.mxu0 %v8118
    %8406 = vmatpush1.bf16.msra.mxu0 %v8117
    %8407 = vmatprep.subr.bf16.mxu0 %v8122
    %8408 = vmatpush1.bf16.msra.mxu0 %v8121
    %8409 = vmatprep.subr.bf16.mxu0 %v8126
    %8410 = vmatpush1.bf16.msra.mxu0 %v8125
    %8411 = vmatprep.subr.bf16.mxu0 %v8130
    %8412 = vmatpush1.bf16.msra.mxu0 %v8129
    %8413 = vmatprep.subr.bf16.mxu0 %v8134
    %8414 = vmatpush1.bf16.msra.mxu0 %v8133
    %8415 = vmatprep.subr.bf16.mxu0 %v8138
    %8416 = vmatpush1.bf16.msra.mxu0 %v8137
    %8417 = vmatprep.subr.bf16.mxu0 %v8142
    %8418 = vmatpush1.bf16.msra.mxu0 %v8141
    %8419 = vmatprep.subr.bf16.mxu0 %v8146
    %8420 = vmatpush1.bf16.msra.mxu0 %v8145
    %8421 = vmatprep.subr.bf16.mxu0 0
    %8422 = vmatpush1.bf16.msra.mxu0 0
    %8423 = vmatprep.subr.bf16.mxu0 0
    %8424 = vmatpush1.bf16.msra.mxu0 0
    %8425 = vmatprep.subr.bf16.mxu0 0
    %8426 = vmatpush1.bf16.msra.mxu0 0
    %8427 = vmatprep.subr.bf16.mxu0 0
    %8428 = vmatpush1.bf16.msra.mxu0 0
    %8429 = vmatprep.subr.bf16.mxu0 0
    %8430 = vmatpush1.bf16.msra.mxu0 0
    %8431 = vmatprep.subr.bf16.mxu0 0
    %8432 = vmatpush1.bf16.msra.mxu0 0
    %8433 = vmatprep.subr.bf16.mxu0 0
    %8434 = vmatpush1.bf16.msra.mxu0 0
    %8435 = vmatprep.subr.bf16.mxu0 0
    %8436 = vmatpush1.bf16.msra.mxu0 0
    %8437 = vmatprep.mubr.bf16.mxu0 0
    %8438 = vmatmul.mubr.bf16.gmra.mrb[0].mxu0 %v8404
    %v8439 = vpop.f32.mrb[0].mxu0
    %v8440 = vadd.f32 0.0, %v8439
    %v8441 = vpop.f32.mrb[0].mxu0
    %v8442 = vadd.f32 0.0, %v8441
    %v8443 = vpop.f32.mrb[0].mxu0
    %v8444 = vpop.f32.mrb[0].mxu0
    %8445 = vdwg.mxu0
    %8446 = vmatprep.subr.bf16.mxu0 %v8120
    %8447 = vmatpush1.bf16.msra.mxu0 %v8119
    %8448 = vmatprep.subr.bf16.mxu0 %v8124
    %8449 = vmatpush1.bf16.msra.mxu0 %v8123
    %8450 = vmatprep.subr.bf16.mxu0 %v8128
    %8451 = vmatpush1.bf16.msra.mxu0 %v8127
    %8452 = vmatprep.subr.bf16.mxu0 %v8132
    %8453 = vmatpush1.bf16.msra.mxu0 %v8131
    %8454 = vmatprep.subr.bf16.mxu0 %v8136
    %8455 = vmatpush1.bf16.msra.mxu0 %v8135
    %8456 = vmatprep.subr.bf16.mxu0 %v8140
    %8457 = vmatpush1.bf16.msra.mxu0 %v8139
    %8458 = vmatprep.subr.bf16.mxu0 %v8144
    %8459 = vmatpush1.bf16.msra.mxu0 %v8143
    %8460 = vmatprep.subr.bf16.mxu0 %v8148
    %8461 = vmatpush1.bf16.msra.mxu0 %v8147
    %8462 = vmatprep.subr.bf16.mxu0 0
    %8463 = vmatpush1.bf16.msra.mxu0 0
    %8464 = vmatprep.subr.bf16.mxu0 0
    %8465 = vmatpush1.bf16.msra.mxu0 0
    %8466 = vmatprep.subr.bf16.mxu0 0
    %8467 = vmatpush1.bf16.msra.mxu0 0
    %8468 = vmatprep.subr.bf16.mxu0 0
    %8469 = vmatpush1.bf16.msra.mxu0 0
    %8470 = vmatprep.subr.bf16.mxu0 0
    %8471 = vmatpush1.bf16.msra.mxu0 0
    %8472 = vmatprep.subr.bf16.mxu0 0
    %8473 = vmatpush1.bf16.msra.mxu0 0
    %8474 = vmatprep.subr.bf16.mxu0 0
    %8475 = vmatpush1.bf16.msra.mxu0 0
    %8476 = vmatprep.subr.bf16.mxu0 0
    %8477 = vmatpush1.bf16.msra.mxu0 0
    %8478 = vmatprep.mubr.bf16.mxu0 0
    %8479 = vmatmul.mubr.bf16.gmra.mrb[0].mxu0 %v8404
    %v8480 = vpop.f32.mrb[0].mxu0
    %v8481 = vadd.f32 0.0, %v8480
    %v8482 = vpop.f32.mrb[0].mxu0
    %v8483 = vadd.f32 0.0, %v8482
    %v8484 = vpop.f32.mrb[0].mxu0
    %v8485 = vpop.f32.mrb[0].mxu0
    %8486 = vdwg.mxu0
    %v8487 = vadd.f32 %v7888, %v8440
    %v8488 = vadd.f32 %v7890, %v8442
    %v8489 = vadd.f32 %v7961, %v8481
    %v8490 = vadd.f32 %v7963, %v8483
    %v8491 = vxor.u32 %v8487, 2147483648
    %v8492 = vmul.f32 %v8491, 1.442695
    %v8493 = vpow.pop %v8492
    %v8494 = vadd.f32 %v8493, 1.0
    %v8495 = vrcp.pop %v8494
    %v8496 = vmul.f32 1.0, %v8495
    %v8497 = vxor.u32 %v8488, 2147483648
    %v8498 = vmul.f32 %v8497, 1.442695
    %v8499 = vpow.pop %v8498
    %v8500 = vadd.f32 %v8499, 1.0
    %v8501 = vrcp.pop %v8500
    %v8502 = vmul.f32 1.0, %v8501
    %v8503 = vtanh.pop %v8489
    %v8504 = vxor.u32 %v8490, 2147483648
    %v8505 = vmul.f32 %v8504, 1.442695
    %v8506 = vpow.pop %v8505
    %v8507 = vadd.f32 %v8506, 1.0
    %v8508 = vrcp.pop %v8507
    %v8509 = vmul.f32 1.0, %v8508
    %v8510 = vmul.f32 %v8502, %v8400
    %v8511 = vmul.f32 %v8496, %v8503
    %v8512 = vadd.f32 %v8510, %v8511
    %v8513 = vtanh.pop %v8512
    %v8514 = vmul.f32 %v8509, %v8513
    %8515 = vst [vmem:[%s15 + $0x10] sm:$0xff] %v8514
    %v8516 = vpack.c.bf16 %v8514, %v8514
    %8517 = vmatprep.subr.bf16.mxu0 %v8118
    %8518 = vmatpush1.bf16.msra.mxu0 %v8117
    %8519 = vmatprep.subr.bf16.mxu0 %v8122
    %8520 = vmatpush1.bf16.msra.mxu0 %v8121
    %8521 = vmatprep.subr.bf16.mxu0 %v8126
    %8522 = vmatpush1.bf16.msra.mxu0 %v8125
    %8523 = vmatprep.subr.bf16.mxu0 %v8130
    %8524 = vmatpush1.bf16.msra.mxu0 %v8129
    %8525 = vmatprep.subr.bf16.mxu0 %v8134
    %8526 = vmatpush1.bf16.msra.mxu0 %v8133
    %8527 = vmatprep.subr.bf16.mxu0 %v8138
    %8528 = vmatpush1.bf16.msra.mxu0 %v8137
    %8529 = vmatprep.subr.bf16.mxu0 %v8142
    %8530 = vmatpush1.bf16.msra.mxu0 %v8141
    %8531 = vmatprep.subr.bf16.mxu0 %v8146
    %8532 = vmatpush1.bf16.msra.mxu0 %v8145
    %8533 = vmatprep.subr.bf16.mxu0 0
    %8534 = vmatpush1.bf16.msra.mxu0 0
    %8535 = vmatprep.subr.bf16.mxu0 0
    %8536 = vmatpush1.bf16.msra.mxu0 0
    %8537 = vmatprep.subr.bf16.mxu0 0
    %8538 = vmatpush1.bf16.msra.mxu0 0
    %8539 = vmatprep.subr.bf16.mxu0 0
    %8540 = vmatpush1.bf16.msra.mxu0 0
    %8541 = vmatprep.subr.bf16.mxu0 0
    %8542 = vmatpush1.bf16.msra.mxu0 0
    %8543 = vmatprep.subr.bf16.mxu0 0
    %8544 = vmatpush1.bf16.msra.mxu0 0
    %8545 = vmatprep.subr.bf16.mxu0 0
    %8546 = vmatpush1.bf16.msra.mxu0 0
    %8547 = vmatprep.subr.bf16.mxu0 0
    %8548 = vmatpush1.bf16.msra.mxu0 0
    %8549 = vmatprep.mubr.bf16.mxu0 0
    %8550 = vmatmul.mubr.bf16.gmra.mrb[0].mxu0 %v8516
    %v8551 = vpop.f32.mrb[0].mxu0
    %v8552 = vadd.f32 0.0, %v8551
    %v8553 = vpop.f32.mrb[0].mxu0
    %v8554 = vadd.f32 0.0, %v8553
    %v8555 = vpop.f32.mrb[0].mxu0
    %v8556 = vpop.f32.mrb[0].mxu0
    %8557 = vdwg.mxu0
    %8558 = vmatprep.subr.bf16.mxu0 %v8120
    %8559 = vmatpush1.bf16.msra.mxu0 %v8119
    %8560 = vmatprep.subr.bf16.mxu0 %v8124
    %8561 = vmatpush1.bf16.msra.mxu0 %v8123
    %8562 = vmatprep.subr.bf16.mxu0 %v8128
    %8563 = vmatpush1.bf16.msra.mxu0 %v8127
    %8564 = vmatprep.subr.bf16.mxu0 %v8132
    %8565 = vmatpush1.bf16.msra.mxu0 %v8131
    %8566 = vmatprep.subr.bf16.mxu0 %v8136
    %8567 = vmatpush1.bf16.msra.mxu0 %v8135
    %8568 = vmatprep.subr.bf16.mxu0 %v8140
    %8569 = vmatpush1.bf16.msra.mxu0 %v8139
    %8570 = vmatprep.subr.bf16.mxu0 %v8144
    %8571 = vmatpush1.bf16.msra.mxu0 %v8143
    %8572 = vmatprep.subr.bf16.mxu0 %v8148
    %8573 = vmatpush1.bf16.msra.mxu0 %v8147
    %8574 = vmatprep.subr.bf16.mxu0 0
    %8575 = vmatpush1.bf16.msra.mxu0 0
    %8576 = vmatprep.subr.bf16.mxu0 0
    %8577 = vmatpush1.bf16.msra.mxu0 0
    %8578 = vmatprep.subr.bf16.mxu0 0
    %8579 = vmatpush1.bf16.msra.mxu0 0
    %8580 = vmatprep.subr.bf16.mxu0 0
    %8581 = vmatpush1.bf16.msra.mxu0 0
    %8582 = vmatprep.subr.bf16.mxu0 0
    %8583 = vmatpush1.bf16.msra.mxu0 0
    %8584 = vmatprep.subr.bf16.mxu0 0
    %8585 = vmatpush1.bf16.msra.mxu0 0
    %8586 = vmatprep.subr.bf16.mxu0 0
    %8587 = vmatpush1.bf16.msra.mxu0 0
    %8588 = vmatprep.subr.bf16.mxu0 0
    %8589 = vmatpush1.bf16.msra.mxu0 0
    %8590 = vmatprep.mubr.bf16.mxu0 0
    %8591 = vmatmul.mubr.bf16.gmra.mrb[0].mxu0 %v8516
    %v8592 = vpop.f32.mrb[0].mxu0
    %v8593 = vadd.f32 0.0, %v8592
    %v8594 = vpop.f32.mrb[0].mxu0
    %v8595 = vadd.f32 0.0, %v8594
    %v8596 = vpop.f32.mrb[0].mxu0
    %v8597 = vpop.f32.mrb[0].mxu0
    %8598 = vdwg.mxu0
    %v8599 = vadd.f32 %v7892, %v8552
    %v8600 = vadd.f32 %v7894, %v8554
    %v8601 = vadd.f32 %v7965, %v8593
    %v8602 = vadd.f32 %v7967, %v8595
    %v8603 = vxor.u32 %v8599, 2147483648
    %v8604 = vmul.f32 %v8603, 1.442695
    %v8605 = vpow.pop %v8604
    %v8606 = vadd.f32 %v8605, 1.0
    %v8607 = vrcp.pop %v8606
    %v8608 = vmul.f32 1.0, %v8607
    %v8609 = vxor.u32 %v8600, 2147483648
    %v8610 = vmul.f32 %v8609, 1.442695
    %v8611 = vpow.pop %v8610
    %v8612 = vadd.f32 %v8611, 1.0
    %v8613 = vrcp.pop %v8612
    %v8614 = vmul.f32 1.0, %v8613
    %v8615 = vtanh.pop %v8601
    %v8616 = vxor.u32 %v8602, 2147483648
    %v8617 = vmul.f32 %v8616, 1.442695
    %v8618 = vpow.pop %v8617
    %v8619 = vadd.f32 %v8618, 1.0
    %v8620 = vrcp.pop %v8619
    %v8621 = vmul.f32 1.0, %v8620
    %v8622 = vmul.f32 %v8614, %v8512
    %v8623 = vmul.f32 %v8608, %v8615
    %v8624 = vadd.f32 %v8622, %v8623
    %v8625 = vtanh.pop %v8624
    %v8626 = vmul.f32 %v8621, %v8625
    %8627 = vst [vmem:[%s15 + $0x18] sm:$0xff] %v8626
    %v8628 = vpack.c.bf16 %v8626, %v8626
    %8629 = vmatprep.subr.bf16.mxu0 %v8118
    %8630 = vmatpush1.bf16.msra.mxu0 %v8117
    %8631 = vmatprep.subr.bf16.mxu0 %v8122
    %8632 = vmatpush1.bf16.msra.mxu0 %v8121
    %8633 = vmatprep.subr.bf16.mxu0 %v8126
    %8634 = vmatpush1.bf16.msra.mxu0 %v8125
    %8635 = vmatprep.subr.bf16.mxu0 %v8130
    %8636 = vmatpush1.bf16.msra.mxu0 %v8129
    %8637 = vmatprep.subr.bf16.mxu0 %v8134
    %8638 = vmatpush1.bf16.msra.mxu0 %v8133
    %8639 = vmatprep.subr.bf16.mxu0 %v8138
    %8640 = vmatpush1.bf16.msra.mxu0 %v8137
    %8641 = vmatprep.subr.bf16.mxu0 %v8142
    %8642 = vmatpush1.bf16.msra.mxu0 %v8141
    %8643 = vmatprep.subr.bf16.mxu0 %v8146
    %8644 = vmatpush1.bf16.msra.mxu0 %v8145
    %8645 = vmatprep.subr.bf16.mxu0 0
    %8646 = vmatpush1.bf16.msra.mxu0 0
    %8647 = vmatprep.subr.bf16.mxu0 0
    %8648 = vmatpush1.bf16.msra.mxu0 0
    %8649 = vmatprep.subr.bf16.mxu0 0
    %8650 = vmatpush1.bf16.msra.mxu0 0
    %8651 = vmatprep.subr.bf16.mxu0 0
    %8652 = vmatpush1.bf16.msra.mxu0 0
    %8653 = vmatprep.subr.bf16.mxu0 0
    %8654 = vmatpush1.bf16.msra.mxu0 0
    %8655 = vmatprep.subr.bf16.mxu0 0
    %8656 = vmatpush1.bf16.msra.mxu0 0
    %8657 = vmatprep.subr.bf16.mxu0 0
    %8658 = vmatpush1.bf16.msra.mxu0 0
    %8659 = vmatprep.subr.bf16.mxu0 0
    %8660 = vmatpush1.bf16.msra.mxu0 0
    %8661 = vmatprep.mubr.bf16.mxu0 0
    %8662 = vmatmul.mubr.bf16.gmra.mrb[0].mxu0 %v8628
    %v8663 = vpop.f32.mrb[0].mxu0
    %v8664 = vadd.f32 0.0, %v8663
    %v8665 = vpop.f32.mrb[0].mxu0
    %v8666 = vadd.f32 0.0, %v8665
    %v8667 = vpop.f32.mrb[0].mxu0
    %v8668 = vpop.f32.mrb[0].mxu0
    %8669 = vdwg.mxu0
    %8670 = vmatprep.subr.bf16.mxu0 %v8120
    %8671 = vmatpush1.bf16.msra.mxu0 %v8119
    %8672 = vmatprep.subr.bf16.mxu0 %v8124
    %8673 = vmatpush1.bf16.msra.mxu0 %v8123
    %8674 = vmatprep.subr.bf16.mxu0 %v8128
    %8675 = vmatpush1.bf16.msra.mxu0 %v8127
    %8676 = vmatprep.subr.bf16.mxu0 %v8132
    %8677 = vmatpush1.bf16.msra.mxu0 %v8131
    %8678 = vmatprep.subr.bf16.mxu0 %v8136
    %8679 = vmatpush1.bf16.msra.mxu0 %v8135
    %8680 = vmatprep.subr.bf16.mxu0 %v8140
    %8681 = vmatpush1.bf16.msra.mxu0 %v8139
    %8682 = vmatprep.subr.bf16.mxu0 %v8144
    %8683 = vmatpush1.bf16.msra.mxu0 %v8143
    %8684 = vmatprep.subr.bf16.mxu0 %v8148
    %8685 = vmatpush1.bf16.msra.mxu0 %v8147
    %8686 = vmatprep.subr.bf16.mxu0 0
    %8687 = vmatpush1.bf16.msra.mxu0 0
    %8688 = vmatprep.subr.bf16.mxu0 0
    %8689 = vmatpush1.bf16.msra.mxu0 0
    %8690 = vmatprep.subr.bf16.mxu0 0
    %8691 = vmatpush1.bf16.msra.mxu0 0
    %8692 = vmatprep.subr.bf16.mxu0 0
    %8693 = vmatpush1.bf16.msra.mxu0 0
    %8694 = vmatprep.subr.bf16.mxu0 0
    %8695 = vmatpush1.bf16.msra.mxu0 0
    %8696 = vmatprep.subr.bf16.mxu0 0
    %8697 = vmatpush1.bf16.msra.mxu0 0
    %8698 = vmatprep.subr.bf16.mxu0 0
    %8699 = vmatpush1.bf16.msra.mxu0 0
    %8700 = vmatprep.subr.bf16.mxu0 0
    %8701 = vmatpush1.bf16.msra.mxu0 0
    %8702 = vmatprep.mubr.bf16.mxu0 0
    %8703 = vmatmul.mubr.bf16.gmra.mrb[0].mxu0 %v8628
    %v8704 = vpop.f32.mrb[0].mxu0
    %v8705 = vadd.f32 0.0, %v8704
    %v8706 = vpop.f32.mrb[0].mxu0
    %v8707 = vadd.f32 0.0, %v8706
    %v8708 = vpop.f32.mrb[0].mxu0
    %v8709 = vpop.f32.mrb[0].mxu0
    %8710 = vdwg.mxu0
    %v8711 = vadd.f32 %v7898, %v8664
    %v8712 = vadd.f32 %v7900, %v8666
    %v8713 = vadd.f32 %v7971, %v8705
    %v8714 = vadd.f32 %v7973, %v8707
    %v8715 = vxor.u32 %v8711, 2147483648
    %v8716 = vmul.f32 %v8715, 1.442695
    %v8717 = vpow.pop %v8716
    %v8718 = vadd.f32 %v8717, 1.0
    %v8719 = vrcp.pop %v8718
    %v8720 = vmul.f32 1.0, %v8719
    %v8721 = vxor.u32 %v8712, 2147483648
    %v8722 = vmul.f32 %v8721, 1.442695
    %v8723 = vpow.pop %v8722
    %v8724 = vadd.f32 %v8723, 1.0
    %v8725 = vrcp.pop %v8724
    %v8726 = vmul.f32 1.0, %v8725
    %v8727 = vtanh.pop %v8713
    %v8728 = vxor.u32 %v8714, 2147483648
    %v8729 = vmul.f32 %v8728, 1.442695
    %v8730 = vpow.pop %v8729
    %v8731 = vadd.f32 %v8730, 1.0
    %v8732 = vrcp.pop %v8731
    %v8733 = vmul.f32 1.0, %v8732
    %v8734 = vmul.f32 %v8726, %v8624
    %v8735 = vmul.f32 %v8720, %v8727
    %v8736 = vadd.f32 %v8734, %v8735
    %v8737 = vtanh.pop %v8736
    %v8738 = vmul.f32 %v8733, %v8737
    %8739 = vst [vmem:[%s15 + $0x20] sm:$0xff] %v8738
    %v8740 = vpack.c.bf16 %v8738, %v8738
    %8741 = vmatprep.subr.bf16.mxu0 %v8118
    %8742 = vmatpush1.bf16.msra.mxu0 %v8117
    %8743 = vmatprep.subr.bf16.mxu0 %v8122
    %8744 = vmatpush1.bf16.msra.mxu0 %v8121
    %8745 = vmatprep.subr.bf16.mxu0 %v8126
    %8746 = vmatpush1.bf16.msra.mxu0 %v8125
    %8747 = vmatprep.subr.bf16.mxu0 %v8130
    %8748 = vmatpush1.bf16.msra.mxu0 %v8129
    %8749 = vmatprep.subr.bf16.mxu0 %v8134
    %8750 = vmatpush1.bf16.msra.mxu0 %v8133
    %8751 = vmatprep.subr.bf16.mxu0 %v8138
    %8752 = vmatpush1.bf16.msra.mxu0 %v8137
    %8753 = vmatprep.subr.bf16.mxu0 %v8142
    %8754 = vmatpush1.bf16.msra.mxu0 %v8141
    %8755 = vmatprep.subr.bf16.mxu0 %v8146
    %8756 = vmatpush1.bf16.msra.mxu0 %v8145
    %8757 = vmatprep.subr.bf16.mxu0 0
    %8758 = vmatpush1.bf16.msra.mxu0 0
    %8759 = vmatprep.subr.bf16.mxu0 0
    %8760 = vmatpush1.bf16.msra.mxu0 0
    %8761 = vmatprep.subr.bf16.mxu0 0
    %8762 = vmatpush1.bf16.msra.mxu0 0
    %8763 = vmatprep.subr.bf16.mxu0 0
    %8764 = vmatpush1.bf16.msra.mxu0 0
    %8765 = vmatprep.subr.bf16.mxu0 0
    %8766 = vmatpush1.bf16.msra.mxu0 0
    %8767 = vmatprep.subr.bf16.mxu0 0
    %8768 = vmatpush1.bf16.msra.mxu0 0
    %8769 = vmatprep.subr.bf16.mxu0 0
    %8770 = vmatpush1.bf16.msra.mxu0 0
    %8771 = vmatprep.subr.bf16.mxu0 0
    %8772 = vmatpush1.bf16.msra.mxu0 0
    %8773 = vmatprep.mubr.bf16.mxu0 0
    %8774 = vmatmul.mubr.bf16.gmra.mrb[0].mxu0 %v8740
    %v8775 = vpop.f32.mrb[0].mxu0
    %v8776 = vadd.f32 0.0, %v8775
    %v8777 = vpop.f32.mrb[0].mxu0
    %v8778 = vadd.f32 0.0, %v8777
    %v8779 = vpop.f32.mrb[0].mxu0
    %v8780 = vpop.f32.mrb[0].mxu0
    %8781 = vdwg.mxu0
    %8782 = vmatprep.subr.bf16.mxu0 %v8120
    %8783 = vmatpush1.bf16.msra.mxu0 %v8119
    %8784 = vmatprep.subr.bf16.mxu0 %v8124
    %8785 = vmatpush1.bf16.msra.mxu0 %v8123
    %8786 = vmatprep.subr.bf16.mxu0 %v8128
    %8787 = vmatpush1.bf16.msra.mxu0 %v8127
    %8788 = vmatprep.subr.bf16.mxu0 %v8132
    %8789 = vmatpush1.bf16.msra.mxu0 %v8131
    %8790 = vmatprep.subr.bf16.mxu0 %v8136
    %8791 = vmatpush1.bf16.msra.mxu0 %v8135
    %8792 = vmatprep.subr.bf16.mxu0 %v8140
    %8793 = vmatpush1.bf16.msra.mxu0 %v8139
    %8794 = vmatprep.subr.bf16.mxu0 %v8144
    %8795 = vmatpush1.bf16.msra.mxu0 %v8143
    %8796 = vmatprep.subr.bf16.mxu0 %v8148
    %8797 = vmatpush1.bf16.msra.mxu0 %v8147
    %8798 = vmatprep.subr.bf16.mxu0 0
    %8799 = vmatpush1.bf16.msra.mxu0 0
    %8800 = vmatprep.subr.bf16.mxu0 0
    %8801 = vmatpush1.bf16.msra.mxu0 0
    %8802 = vmatprep.subr.bf16.mxu0 0
    %8803 = vmatpush1.bf16.msra.mxu0 0
    %8804 = vmatprep.subr.bf16.mxu0 0
    %8805 = vmatpush1.bf16.msra.mxu0 0
    %8806 = vmatprep.subr.bf16.mxu0 0
    %8807 = vmatpush1.bf16.msra.mxu0 0
    %8808 = vmatprep.subr.bf16.mxu0 0
    %8809 = vmatpush1.bf16.msra.mxu0 0
    %8810 = vmatprep.subr.bf16.mxu0 0
    %8811 = vmatpush1.bf16.msra.mxu0 0
    %8812 = vmatprep.subr.bf16.mxu0 0
    %8813 = vmatpush1.bf16.msra.mxu0 0
    %8814 = vmatprep.mubr.bf16.mxu0 0
    %8815 = vmatmul.mubr.bf16.gmra.mrb[0].mxu0 %v8740
    %v8816 = vpop.f32.mrb[0].mxu0
    %v8817 = vadd.f32 0.0, %v8816
    %v8818 = vpop.f32.mrb[0].mxu0
    %v8819 = vadd.f32 0.0, %v8818
    %v8820 = vpop.f32.mrb[0].mxu0
    %v8821 = vpop.f32.mrb[0].mxu0
    %8822 = vdwg.mxu0
    %v8823 = vadd.f32 %v7902, %v8776
    %v8824 = vadd.f32 %v7904, %v8778
    %v8825 = vadd.f32 %v7975, %v8817
    %v8826 = vadd.f32 %v7977, %v8819
    %v8827 = vxor.u32 %v8823, 2147483648
    %v8828 = vmul.f32 %v8827, 1.442695
    %v8829 = vpow.pop %v8828
    %v8830 = vadd.f32 %v8829, 1.0
    %v8831 = vrcp.pop %v8830
    %v8832 = vmul.f32 1.0, %v8831
    %v8833 = vxor.u32 %v8824, 2147483648
    %v8834 = vmul.f32 %v8833, 1.442695
    %v8835 = vpow.pop %v8834
    %v8836 = vadd.f32 %v8835, 1.0
    %v8837 = vrcp.pop %v8836
    %v8838 = vmul.f32 1.0, %v8837
    %v8839 = vtanh.pop %v8825
    %v8840 = vxor.u32 %v8826, 2147483648
    %v8841 = vmul.f32 %v8840, 1.442695
    %v8842 = vpow.pop %v8841
    %v8843 = vadd.f32 %v8842, 1.0
    %v8844 = vrcp.pop %v8843
    %v8845 = vmul.f32 1.0, %v8844
    %v8846 = vmul.f32 %v8838, %v8736
    %v8847 = vmul.f32 %v8832, %v8839
    %v8848 = vadd.f32 %v8846, %v8847
    %v8849 = vtanh.pop %v8848
    %v8850 = vmul.f32 %v8845, %v8849
    %8851 = vst [vmem:[%s15 + $0x28] sm:$0xff] %v8850
    %v8852 = vpack.c.bf16 %v8850, %v8850
    %8853 = vmatprep.subr.bf16.mxu0 %v8118
    %8854 = vmatpush1.bf16.msra.mxu0 %v8117
    %8855 = vmatprep.subr.bf16.mxu0 %v8122
    %8856 = vmatpush1.bf16.msra.mxu0 %v8121
    %8857 = vmatprep.subr.bf16.mxu0 %v8126
    %8858 = vmatpush1.bf16.msra.mxu0 %v8125
    %8859 = vmatprep.subr.bf16.mxu0 %v8130
    %8860 = vmatpush1.bf16.msra.mxu0 %v8129
    %8861 = vmatprep.subr.bf16.mxu0 %v8134
    %8862 = vmatpush1.bf16.msra.mxu0 %v8133
    %8863 = vmatprep.subr.bf16.mxu0 %v8138
    %8864 = vmatpush1.bf16.msra.mxu0 %v8137
    %8865 = vmatprep.subr.bf16.mxu0 %v8142
    %8866 = vmatpush1.bf16.msra.mxu0 %v8141
    %8867 = vmatprep.subr.bf16.mxu0 %v8146
    %8868 = vmatpush1.bf16.msra.mxu0 %v8145
    %8869 = vmatprep.subr.bf16.mxu0 0
    %8870 = vmatpush1.bf16.msra.mxu0 0
    %8871 = vmatprep.subr.bf16.mxu0 0
    %8872 = vmatpush1.bf16.msra.mxu0 0
    %8873 = vmatprep.subr.bf16.mxu0 0
    %8874 = vmatpush1.bf16.msra.mxu0 0
    %8875 = vmatprep.subr.bf16.mxu0 0
    %8876 = vmatpush1.bf16.msra.mxu0 0
    %8877 = vmatprep.subr.bf16.mxu0 0
    %8878 = vmatpush1.bf16.msra.mxu0 0
    %8879 = vmatprep.subr.bf16.mxu0 0
    %8880 = vmatpush1.bf16.msra.mxu0 0
    %8881 = vmatprep.subr.bf16.mxu0 0
    %8882 = vmatpush1.bf16.msra.mxu0 0
    %8883 = vmatprep.subr.bf16.mxu0 0
    %8884 = vmatpush1.bf16.msra.mxu0 0
    %8885 = vmatprep.mubr.bf16.mxu0 0
    %8886 = vmatmul.mubr.bf16.gmra.mrb[0].mxu0 %v8852
    %v8887 = vpop.f32.mrb[0].mxu0
    %v8888 = vadd.f32 0.0, %v8887
    %v8889 = vpop.f32.mrb[0].mxu0
    %v8890 = vadd.f32 0.0, %v8889
    %v8891 = vpop.f32.mrb[0].mxu0
    %v8892 = vpop.f32.mrb[0].mxu0
    %8893 = vdwg.mxu0
    %8894 = vmatprep.subr.bf16.mxu0 %v8120
    %8895 = vmatpush1.bf16.msra.mxu0 %v8119
    %8896 = vmatprep.subr.bf16.mxu0 %v8124
    %8897 = vmatpush1.bf16.msra.mxu0 %v8123
    %8898 = vmatprep.subr.bf16.mxu0 %v8128
    %8899 = vmatpush1.bf16.msra.mxu0 %v8127
    %8900 = vmatprep.subr.bf16.mxu0 %v8132
    %8901 = vmatpush1.bf16.msra.mxu0 %v8131
    %8902 = vmatprep.subr.bf16.mxu0 %v8136
    %8903 = vmatpush1.bf16.msra.mxu0 %v8135
    %8904 = vmatprep.subr.bf16.mxu0 %v8140
    %8905 = vmatpush1.bf16.msra.mxu0 %v8139
    %8906 = vmatprep.subr.bf16.mxu0 %v8144
    %8907 = vmatpush1.bf16.msra.mxu0 %v8143
    %8908 = vmatprep.subr.bf16.mxu0 %v8148
    %8909 = vmatpush1.bf16.msra.mxu0 %v8147
    %8910 = vmatprep.subr.bf16.mxu0 0
    %8911 = vmatpush1.bf16.msra.mxu0 0
    %8912 = vmatprep.subr.bf16.mxu0 0
    %8913 = vmatpush1.bf16.msra.mxu0 0
    %8914 = vmatprep.subr.bf16.mxu0 0
    %8915 = vmatpush1.bf16.msra.mxu0 0
    %8916 = vmatprep.subr.bf16.mxu0 0
    %8917 = vmatpush1.bf16.msra.mxu0 0
    %8918 = vmatprep.subr.bf16.mxu0 0
    %8919 = vmatpush1.bf16.msra.mxu0 0
    %8920 = vmatprep.subr.bf16.mxu0 0
    %8921 = vmatpush1.bf16.msra.mxu0 0
    %8922 = vmatprep.subr.bf16.mxu0 0
    %8923 = vmatpush1.bf16.msra.mxu0 0
    %8924 = vmatprep.subr.bf16.mxu0 0
    %8925 = vmatpush1.bf16.msra.mxu0 0
    %8926 = vmatprep.mubr.bf16.mxu0 0
    %8927 = vmatmul.mubr.bf16.gmra.mrb[0].mxu0 %v8852
    %v8928 = vpop.f32.mrb[0].mxu0
    %v8929 = vadd.f32 0.0, %v8928
    %v8930 = vpop.f32.mrb[0].mxu0
    %v8931 = vadd.f32 0.0, %v8930
    %v8932 = vpop.f32.mrb[0].mxu0
    %v8933 = vpop.f32.mrb[0].mxu0
    %8934 = vdwg.mxu0
    %v8935 = vadd.f32 %v7908, %v8888
    %v8936 = vadd.f32 %v7910, %v8890
    %v8937 = vadd.f32 %v7981, %v8929
    %v8938 = vadd.f32 %v7983, %v8931
    %v8939 = vxor.u32 %v8935, 2147483648
    %v8940 = vmul.f32 %v8939, 1.442695
    %v8941 = vpow.pop %v8940
    %v8942 = vadd.f32 %v8941, 1.0
    %v8943 = vrcp.pop %v8942
    %v8944 = vmul.f32 1.0, %v8943
    %v8945 = vxor.u32 %v8936, 2147483648
    %v8946 = vmul.f32 %v8945, 1.442695
    %v8947 = vpow.pop %v8946
    %v8948 = vadd.f32 %v8947, 1.0
    %v8949 = vrcp.pop %v8948
    %v8950 = vmul.f32 1.0, %v8949
    %v8951 = vtanh.pop %v8937
    %v8952 = vxor.u32 %v8938, 2147483648
    %v8953 = vmul.f32 %v8952, 1.442695
    %v8954 = vpow.pop %v8953
    %v8955 = vadd.f32 %v8954, 1.0
    %v8956 = vrcp.pop %v8955
    %v8957 = vmul.f32 1.0, %v8956
    %v8958 = vmul.f32 %v8950, %v8848
    %v8959 = vmul.f32 %v8944, %v8951
    %v8960 = vadd.f32 %v8958, %v8959
    %v8961 = vtanh.pop %v8960
    %v8962 = vmul.f32 %v8957, %v8961
    %8963 = vst [vmem:[%s15 + $0x30] sm:$0xff] %v8962
    %v8964 = vpack.c.bf16 %v8962, %v8962
    %8965 = vmatprep.subr.bf16.mxu0 %v8118
    %8966 = vmatpush1.bf16.msra.mxu0 %v8117
    %8967 = vmatprep.subr.bf16.mxu0 %v8122
    %8968 = vmatpush1.bf16.msra.mxu0 %v8121
    %8969 = vmatprep.subr.bf16.mxu0 %v8126
    %8970 = vmatpush1.bf16.msra.mxu0 %v8125
    %8971 = vmatprep.subr.bf16.mxu0 %v8130
    %8972 = vmatpush1.bf16.msra.mxu0 %v8129
    %8973 = vmatprep.subr.bf16.mxu0 %v8134
    %8974 = vmatpush1.bf16.msra.mxu0 %v8133
    %8975 = vmatprep.subr.bf16.mxu0 %v8138
    %8976 = vmatpush1.bf16.msra.mxu0 %v8137
    %8977 = vmatprep.subr.bf16.mxu0 %v8142
    %8978 = vmatpush1.bf16.msra.mxu0 %v8141
    %8979 = vmatprep.subr.bf16.mxu0 %v8146
    %8980 = vmatpush1.bf16.msra.mxu0 %v8145
    %8981 = vmatprep.subr.bf16.mxu0 0
    %8982 = vmatpush1.bf16.msra.mxu0 0
    %8983 = vmatprep.subr.bf16.mxu0 0
    %8984 = vmatpush1.bf16.msra.mxu0 0
    %8985 = vmatprep.subr.bf16.mxu0 0
    %8986 = vmatpush1.bf16.msra.mxu0 0
    %8987 = vmatprep.subr.bf16.mxu0 0
    %8988 = vmatpush1.bf16.msra.mxu0 0
    %8989 = vmatprep.subr.bf16.mxu0 0
    %8990 = vmatpush1.bf16.msra.mxu0 0
    %8991 = vmatprep.subr.bf16.mxu0 0
    %8992 = vmatpush1.bf16.msra.mxu0 0
    %8993 = vmatprep.subr.bf16.mxu0 0
    %8994 = vmatpush1.bf16.msra.mxu0 0
    %8995 = vmatprep.subr.bf16.mxu0 0
    %8996 = vmatpush1.bf16.msra.mxu0 0
    %8997 = vmatprep.mubr.bf16.mxu0 0
    %8998 = vmatmul.mubr.bf16.gmra.mrb[0].mxu0 %v8964
    %v8999 = vpop.f32.mrb[0].mxu0
    %v9000 = vadd.f32 0.0, %v8999
    %v9001 = vpop.f32.mrb[0].mxu0
    %v9002 = vadd.f32 0.0, %v9001
    %v9003 = vpop.f32.mrb[0].mxu0
    %v9004 = vpop.f32.mrb[0].mxu0
    %9005 = vdwg.mxu0
    %9006 = vmatprep.subr.bf16.mxu0 %v8120
    %9007 = vmatpush1.bf16.msra.mxu0 %v8119
    %9008 = vmatprep.subr.bf16.mxu0 %v8124
    %9009 = vmatpush1.bf16.msra.mxu0 %v8123
    %9010 = vmatprep.subr.bf16.mxu0 %v8128
    %9011 = vmatpush1.bf16.msra.mxu0 %v8127
    %9012 = vmatprep.subr.bf16.mxu0 %v8132
    %9013 = vmatpush1.bf16.msra.mxu0 %v8131
    %9014 = vmatprep.subr.bf16.mxu0 %v8136
    %9015 = vmatpush1.bf16.msra.mxu0 %v8135
    %9016 = vmatprep.subr.bf16.mxu0 %v8140
    %9017 = vmatpush1.bf16.msra.mxu0 %v8139
    %9018 = vmatprep.subr.bf16.mxu0 %v8144
    %9019 = vmatpush1.bf16.msra.mxu0 %v8143
    %9020 = vmatprep.subr.bf16.mxu0 %v8148
    %9021 = vmatpush1.bf16.msra.mxu0 %v8147
    %9022 = vmatprep.subr.bf16.mxu0 0
    %9023 = vmatpush1.bf16.msra.mxu0 0
    %9024 = vmatprep.subr.bf16.mxu0 0
    %9025 = vmatpush1.bf16.msra.mxu0 0
    %9026 = vmatprep.subr.bf16.mxu0 0
    %9027 = vmatpush1.bf16.msra.mxu0 0
    %9028 = vmatprep.subr.bf16.mxu0 0
    %9029 = vmatpush1.bf16.msra.mxu0 0
    %9030 = vmatprep.subr.bf16.mxu0 0
    %9031 = vmatpush1.bf16.msra.mxu0 0
    %9032 = vmatprep.subr.bf16.mxu0 0
    %9033 = vmatpush1.bf16.msra.mxu0 0
    %9034 = vmatprep.subr.bf16.mxu0 0
    %9035 = vmatpush1.bf16.msra.mxu0 0
    %9036 = vmatprep.subr.bf16.mxu0 0
    %9037 = vmatpush1.bf16.msra.mxu0 0
    %9038 = vmatprep.mubr.bf16.mxu0 0
    %9039 = vmatmul.mubr.bf16.gmra.mrb[0].mxu0 %v8964
    %v9040 = vpop.f32.mrb[0].mxu0
    %v9041 = vadd.f32 0.0, %v9040
    %v9042 = vpop.f32.mrb[0].mxu0
    %v9043 = vadd.f32 0.0, %v9042
    %v9044 = vpop.f32.mrb[0].mxu0
    %v9045 = vpop.f32.mrb[0].mxu0
    %9046 = vdwg.mxu0
    %v9047 = vadd.f32 %v7912, %v9000
    %v9048 = vadd.f32 %v7914, %v9002
    %v9049 = vadd.f32 %v7985, %v9041
    %v9050 = vadd.f32 %v7987, %v9043
    %v9051 = vxor.u32 %v9047, 2147483648
    %v9052 = vmul.f32 %v9051, 1.442695
    %v9053 = vpow.pop %v9052
    %v9054 = vadd.f32 %v9053, 1.0
    %v9055 = vrcp.pop %v9054
    %v9056 = vmul.f32 1.0, %v9055
    %v9057 = vxor.u32 %v9048, 2147483648
    %v9058 = vmul.f32 %v9057, 1.442695
    %v9059 = vpow.pop %v9058
    %v9060 = vadd.f32 %v9059, 1.0
    %v9061 = vrcp.pop %v9060
    %v9062 = vmul.f32 1.0, %v9061
    %v9063 = vtanh.pop %v9049
    %v9064 = vxor.u32 %v9050, 2147483648
    %v9065 = vmul.f32 %v9064, 1.442695
    %v9066 = vpow.pop %v9065
    %v9067 = vadd.f32 %v9066, 1.0
    %v9068 = vrcp.pop %v9067
    %v9069 = vmul.f32 1.0, %v9068
    %v9070 = vmul.f32 %v9062, %v8960
    %v9071 = vmul.f32 %v9056, %v9063
    %v9072 = vadd.f32 %v9070, %v9071
    %v9073 = vtanh.pop %v9072
    %v9074 = vmul.f32 %v9069, %v9073
    %9075 = vst [vmem:[%s15 + $0x38] sm:$0xff] %v9074
    // Predicated region
    $region78: #{har_forward.1} parent=1 // pred_check
      _
    $region79: #{har_forward.1} parent=1 // pred_check_branch
      %9077 = sbr.rel (0) target = $region81
    $region80: #{har_forward.1} parent=1 // pred_region
      _
    $region81: #{har_forward.1} parent=1 // pred_fallthru
      _
    // Predicated region
    $region82: #{har_forward.1} parent=1 // pred_check
      _
    $region83: #{har_forward.1} parent=1 // pred_check_branch
      %9079 = sbr.rel (0) target = $region85
    $region84: #{har_forward.1} parent=1 // pred_region
      _
    $region85: #{har_forward.1} parent=1 // pred_fallthru
      _
    %9080 = vsyncpa [#allocation4], 1
    %9081 = vsyncpa [#allocation6], 1
    %9082 = vsyncpa [#allocation9], 1

</llo_original>
